<compile_context>
chip_gen: v7x
topology: tpu7x:2x2x1
jax: 0.10.0
libtpu: 0.0.40
codegen_flags: <defaults>
</compile_context>

<pallas_src>
import functools

import jax
import jax.numpy as jnp
from jax import lax
from jax.experimental import pallas as pl
from jax.experimental.pallas import tpu as pltpu

VMEM_SPEC = pl.BlockSpec(memory_space=pltpu.MemorySpace.VMEM)

# ------------------------------------------------------------------ config
VOCAB_PRODUCT = 43419
EMB_PRODUCT = 500
VOCAB_CATEGORY = 491
EMB_CATEGORY = 20
DA_PRODUCT = 50
DA_CATEGORY = 2
VECTOR_SIZE = EMB_PRODUCT + EMB_CATEGORY + 1 + 1   # 522 (GRU input size)
HIDDEN_SIZE = 32
NUM_LAYERS = 2
FC1_SIZE = 2048
OUTPUT_SIZE = 4
SEQ_LEN = 8


# --------------------------------------------------------- in-kernel helpers
def _attend(x, mask, wq, bq, wk, bk, inv_sqrt_da):
    """A = softmax(QK^T/sqrt(da) + additive mask); returns A @ x."""
    xc = x.astype(wq.dtype)                                   # bf16 cast if needed
    q = jnp.dot(xc, wq, preferred_element_type=jnp.float32) + bq
    k = jnp.dot(xc, wk, preferred_element_type=jnp.float32) + bk
    # contract last dims of both operands (no explicit k.T / XLU transpose)
    scores = lax.dot_general(q, k, (((1,), (1,)), ((), ())),
                             preferred_element_type=jnp.float32)       # (S, S)
    scores = scores * inv_sqrt_da + (mask - 1.0) * 1e9                 # (1,S) bcast
    scores = scores - jnp.max(scores, axis=-1, keepdims=True)
    p = jnp.exp(scores)
    p = p * pl.reciprocal(jnp.sum(p, axis=-1, keepdims=True), approx=True)
    return jnp.dot(p, x, preferred_element_type=jnp.float32)           # (S, D)


# ------------------------------------------------------------- fused kernel
def _fused_kernel(
    ep_ref, ec_ref, bp_ref, mp_ref, mc_ref,
    pwq_ref, pbq_ref, pwk_ref, pbk_ref,
    cwq_ref, cbq_ref, cwk_ref, cbk_ref,
    wih0p_ref, wih0c_ref, wih0bp_ref, bih0_ref, whh0_ref, bhh0_ref,
    wih1_ref, bih1_ref, whh1_ref, bhh1_ref,
    w1_ref, b1_ref, w2_ref, b2_ref,
    o_ref,
    *, seq_len, hidden,
):
    f32 = jnp.float32
    S, H = seq_len, hidden

    # ---------------- self-attention (dropout = identity in eval) ----------
    ep = ep_ref[...]                                        # (S, 500) f32
    ec = ec_ref[...]                                        # (S, 20)  f32
    attn_p = _attend(ep, mp_ref[...], pwq_ref[...], pbq_ref[...],
                     pwk_ref[...], pbk_ref[...], DA_PRODUCT ** -0.5)
    attn_c = _attend(ec, mc_ref[...], cwq_ref[...], cbq_ref[...],
                     cwk_ref[...], cbk_ref[...], DA_CATEGORY ** -0.5)
    bp = bp_ref[...]                                        # (S, 2) [behavior, price]

    # ------- GRU layer-0 input-to-hidden for all timesteps, per-gate slabs --
    # equivalent to concat([attn_p, attn_c, behavior, price]) @ W_ih^T + b_ih
    gi0 = []
    for g in range(3):                                      # gate order r, z, n
        gi0.append(
            jnp.dot(attn_p, wih0p_ref[g], preferred_element_type=f32)
            + jnp.dot(attn_c, wih0c_ref[g], preferred_element_type=f32)
            + jnp.dot(bp, wih0bp_ref[g], preferred_element_type=f32)
            + bih0_ref[g])                                  # (S, H)

    # ------- hoist loop-invariant weight/bias loads out of the recurrence ---
    whh0 = [whh0_ref[g] for g in range(3)]                  # (H, H)
    bhh0 = [bhh0_ref[g] for g in range(3)]                  # (1, H)
    wih1 = [wih1_ref[g] for g in range(3)]
    bih1 = [bih1_ref[g] for g in range(3)]
    whh1 = [whh1_ref[g] for g in range(3)]
    bhh1 = [bhh1_ref[g] for g in range(3)]

    # ------- fully unrolled recurrence, hidden states carried in vregs ------
    h0 = jnp.zeros((1, H), f32)
    h1 = jnp.zeros((1, H), f32)
    outs = []
    for t in range(S):
        # layer 0 step t
        gh_r = jnp.dot(h0, whh0[0], preferred_element_type=f32) + bhh0[0]
        gh_z = jnp.dot(h0, whh0[1], preferred_element_type=f32) + bhh0[1]
        gh_n = jnp.dot(h0, whh0[2], preferred_element_type=f32) + bhh0[2]
        r0 = jax.nn.sigmoid(gi0[0][t:t + 1, :] + gh_r)
        z0 = jax.nn.sigmoid(gi0[1][t:t + 1, :] + gh_z)
        n0 = jnp.tanh(gi0[2][t:t + 1, :] + r0 * gh_n)
        h0 = (1.0 - z0) * n0 + z0 * h0

        # layer 1 step t (inter-layer dropout = identity in eval)
        gi_r = jnp.dot(h0, wih1[0], preferred_element_type=f32) + bih1[0]
        gi_z = jnp.dot(h0, wih1[1], preferred_element_type=f32) + bih1[1]
        gi_n = jnp.dot(h0, wih1[2], preferred_element_type=f32) + bih1[2]
        gh1_r = jnp.dot(h1, whh1[0], preferred_element_type=f32) + bhh1[0]
        gh1_z = jnp.dot(h1, whh1[1], preferred_element_type=f32) + bhh1[1]
        gh1_n = jnp.dot(h1, whh1[2], preferred_element_type=f32) + bhh1[2]
        r1 = jax.nn.sigmoid(gi_r + gh1_r)
        z1 = jax.nn.sigmoid(gi_z + gh1_z)
        n1 = jnp.tanh(gi_n + r1 * gh1_n)
        h1 = (1.0 - z1) * n1 + z1 * h1
        outs.append(h1)

    gru_out = jnp.concatenate(outs, axis=0)                 # (S, H) f32

    # ------------------- fc1 -> ReLU -> fc2 -> ReLU -------------------------
    w1 = w1_ref[...]                                        # (H, 2048) bf16
    hfc = jnp.dot(gru_out.astype(w1.dtype), w1,
                  preferred_element_type=f32) + b1_ref[...]
    hfc = jnp.maximum(hfc, 0.0)
    y = jnp.dot(hfc, w2_ref[...], preferred_element_type=f32) + b2_ref[...]
    o_ref[...] = jnp.maximum(y, 0.0)                        # (S, OUTPUT_SIZE)


# ---------------------------------------------------------------- parameters
def init_torch_style_params(key):
    """Parameters in PyTorch layout (Linear: (out,in), GRU w_ih: (3H,in) [r;z;n])."""
    keys = iter(jax.random.split(key, 32))

    def nrm(shape, scale=0.05):
        return (scale * jax.random.normal(next(keys), shape)).astype(jnp.float32)

    tp = {}
    tp["emb_product"] = nrm((VOCAB_PRODUCT, EMB_PRODUCT), 0.1)
    tp["emb_category"] = nrm((VOCAB_CATEGORY, EMB_CATEGORY), 0.1)
    # selfattention(500, 50, 0.1) / selfattention(20, 2, 0.1)
    tp["attn_p_wq"] = nrm((DA_PRODUCT, EMB_PRODUCT))
    tp["attn_p_bq"] = jnp.zeros((DA_PRODUCT,), jnp.float32)
    tp["attn_p_wk"] = nrm((DA_PRODUCT, EMB_PRODUCT))
    tp["attn_p_bk"] = jnp.zeros((DA_PRODUCT,), jnp.float32)
    tp["attn_c_wq"] = nrm((DA_CATEGORY, EMB_CATEGORY))
    tp["attn_c_bq"] = jnp.zeros((DA_CATEGORY,), jnp.float32)
    tp["attn_c_wk"] = nrm((DA_CATEGORY, EMB_CATEGORY))
    tp["attn_c_bk"] = jnp.zeros((DA_CATEGORY,), jnp.float32)
    # nn.GRU(522, 32, 2, batch_first=True)
    for layer in range(NUM_LAYERS):
        in_size = VECTOR_SIZE if layer == 0 else HIDDEN_SIZE
        tp[f"gru_w_ih_l{layer}"] = nrm((3 * HIDDEN_SIZE, in_size))
        tp[f"gru_w_hh_l{layer}"] = nrm((3 * HIDDEN_SIZE, HIDDEN_SIZE))
        tp[f"gru_b_ih_l{layer}"] = nrm((3 * HIDDEN_SIZE,))
        tp[f"gru_b_hh_l{layer}"] = nrm((3 * HIDDEN_SIZE,))
    # fc1 / fc2
    tp["fc1_w"] = nrm((FC1_SIZE, HIDDEN_SIZE))
    tp["fc1_b"] = nrm((FC1_SIZE,))
    tp["fc2_w"] = nrm((OUTPUT_SIZE, FC1_SIZE))
    tp["fc2_b"] = nrm((OUTPUT_SIZE,))
    return tp


def prepare_params(tp):
    """Convert PyTorch-layout params to kernel layout (done once, outside jit)."""
    H = HIDDEN_SIZE
    p = {}
    p["emb_product"] = tp["emb_product"]
    p["emb_category"] = tp["emb_category"]

    # attention: kernel computes x @ W + b; big product projections in bf16
    p["attn_p_wq"] = tp["attn_p_wq"].T.astype(jnp.bfloat16)
    p["attn_p_bq"] = tp["attn_p_bq"].reshape(1, -1)
    p["attn_p_wk"] = tp["attn_p_wk"].T.astype(jnp.bfloat16)
    p["attn_p_bk"] = tp["attn_p_bk"].reshape(1, -1)
    p["attn_c_wq"] = tp["attn_c_wq"].T
    p["attn_c_bq"] = tp["attn_c_bq"].reshape(1, -1)
    p["attn_c_wk"] = tp["attn_c_wk"].T
    p["attn_c_bk"] = tp["attn_c_bk"].reshape(1, -1)

    def split_gates(w):  # (3H, X) -> [ (H, X) x 3 ]  gate order r, z, n
        return [w[g * H:(g + 1) * H] for g in range(3)]

    # GRU layer 0: split W_ih columns into product / category / (behavior,price)
    gih0 = split_gates(tp["gru_w_ih_l0"])
    p["gru0_wih_prod"] = jnp.stack(
        [g[:, :EMB_PRODUCT].T for g in gih0])                          # (3,500,H)
    p["gru0_wih_cat"] = jnp.stack(
        [g[:, EMB_PRODUCT:EMB_PRODUCT + EMB_CATEGORY].T for g in gih0])  # (3,20,H)
    p["gru0_wih_bp"] = jnp.stack(
        [g[:, EMB_PRODUCT + EMB_CATEGORY:].T for g in gih0])            # (3,2,H)
    p["gru0_bih"] = jnp.stack(
        [tp["gru_b_ih_l0"][g * H:(g + 1) * H].reshape(1, H) for g in range(3)])
    p["gru0_whh"] = jnp.stack([g.T for g in split_gates(tp["gru_w_hh_l0"])])
    p["gru0_bhh"] = jnp.stack(
        [tp["gru_b_hh_l0"][g * H:(g + 1) * H].reshape(1, H) for g in range(3)])

    # GRU layer 1
    p["gru1_wih"] = jnp.stack([g.T for g in split_gates(tp["gru_w_ih_l1"])])
    p["gru1_bih"] = jnp.stack(
        [tp["gru_b_ih_l1"][g * H:(g + 1) * H].reshape(1, H) for g in range(3)])
    p["gru1_whh"] = jnp.stack([g.T for g in split_gates(tp["gru_w_hh_l1"])])
    p["gru1_bhh"] = jnp.stack(
        [tp["gru_b_hh_l1"][g * H:(g + 1) * H].reshape(1, H) for g in range(3)])

    # fc head (fc1 weight in bf16 — biggest single DMA; accumulate f32)
    p["fc1_w"] = tp["fc1_w"].T.astype(jnp.bfloat16)                    # (H, 2048)
    p["fc1_b"] = tp["fc1_b"].reshape(1, -1)
    p["fc2_w"] = tp["fc2_w"].T                                         # (2048, 4)
    p["fc2_b"] = tp["fc2_b"].reshape(1, -1)
    return p


# --------------------------------------------------------------- full forward
def gru_model_forward(params, product, category, behavior, price,
                      x_mask_product, x_mask_category):
    S = product.shape[0]
    # Embedding gather stays in XLA: the 87 MB product table must live in HBM
    # (exceeds VMEM on all generations); only the 8 gathered rows enter VMEM.
    ep = jnp.take(params["emb_product"], product, axis=0).astype(jnp.float32)
    ec = jnp.take(params["emb_category"], category, axis=0).astype(jnp.float32)
    bp = jnp.concatenate([behavior.reshape(S, 1), price.reshape(S, 1)],
                         axis=1).astype(jnp.float32)                    # (S, 2)
    mp = x_mask_product.reshape(1, S).astype(jnp.float32)
    mc = x_mask_category.reshape(1, S).astype(jnp.float32)

    args = [
        ep, ec, bp, mp, mc,
        params["attn_p_wq"], params["attn_p_bq"],
        params["attn_p_wk"], params["attn_p_bk"],
        params["attn_c_wq"], params["attn_c_bq"],
        params["attn_c_wk"], params["attn_c_bk"],
        params["gru0_wih_prod"], params["gru0_wih_cat"], params["gru0_wih_bp"],
        params["gru0_bih"], params["gru0_whh"], params["gru0_bhh"],
        params["gru1_wih"], params["gru1_bih"],
        params["gru1_whh"], params["gru1_bhh"],
        params["fc1_w"], params["fc1_b"], params["fc2_w"], params["fc2_b"],
    ]

    out = pl.pallas_call(
        functools.partial(_fused_kernel, seq_len=S, hidden=HIDDEN_SIZE),
        out_shape=jax.ShapeDtypeStruct((S, OUTPUT_SIZE), jnp.float32),
        in_specs=[VMEM_SPEC] * len(args),
        out_specs=VMEM_SPEC,
    )(*args)
    return out[None]                                        # (1, S, output_size)


# ---------------------------------------------------------------------- main
if __name__ == "__main__":
    root = jax.random.PRNGKey(0)
    k_param, k_prod, k_cat, k_beh, k_pri = jax.random.split(root, 5)

    params = prepare_params(init_torch_style_params(k_param))

    product = jax.random.randint(k_prod, (SEQ_LEN,), 0, VOCAB_PRODUCT, dtype=jnp.int32)
    category = jax.random.randint(k_cat, (SEQ_LEN,), 0, VOCAB_CATEGORY, dtype=jnp.int32)
    behavior = jax.random.normal(k_beh, (1, SEQ_LEN), dtype=jnp.float32)
    price = jax.random.normal(k_pri, (1, SEQ_LEN), dtype=jnp.float32)
    x_mask_product = jnp.array([1, 1, 1, 1, 1, 1, 0, 0], dtype=jnp.float32)
    x_mask_category = jnp.array([1, 1, 1, 1, 1, 1, 0, 0], dtype=jnp.float32)

    fwd = jax.jit(gru_model_forward)
    out = fwd(params, product, category, behavior, price,
              x_mask_product, x_mask_category)
    jax.block_until_ready(out)
    assert out.shape == (1, SEQ_LEN, OUTPUT_SIZE)
    print("KERNEL_OK")
</pallas_src>

<mosaic_0001>
module attributes {stable_mosaic.version = 11 : i64} {
  func.func private @main(%arg0: i32) attributes {dimension_semantics = [#tpu.dimension_semantics<core_parallel>], iteration_bounds = array<i64: 2>, tpu.core_type = #tpu.core_type<sc_scalar_subcore>, window_params = []} {
    return
  }
}

module attributes {stable_mosaic.version = 11 : i64} {
  func.func private @main(%arg0: i32) attributes {dimension_semantics = [#tpu.dimension_semantics<core_parallel>], iteration_bounds = array<i64: 2>, tpu.core_type = #tpu.core_type<sc_scalar_subcore>, window_params = []} {
    return
  }
}

module attributes {stable_mosaic.version = 11 : i64} {
  func.func @_fused_kernel(%arg0: memref<8x500xf32, #tpu.memory_space<vmem>>, %arg1: memref<8x20xf32, #tpu.memory_space<vmem>>, %arg2: memref<8x2xf32, #tpu.memory_space<vmem>>, %arg3: memref<1x8xf32, #tpu.memory_space<vmem>>, %arg4: memref<1x8xf32, #tpu.memory_space<vmem>>, %arg5: memref<500x50xbf16, #tpu.memory_space<vmem>>, %arg6: memref<1x50xf32, #tpu.memory_space<vmem>>, %arg7: memref<500x50xbf16, #tpu.memory_space<vmem>>, %arg8: memref<1x50xf32, #tpu.memory_space<vmem>>, %arg9: memref<20x2xf32, #tpu.memory_space<vmem>>, %arg10: memref<1x2xf32, #tpu.memory_space<vmem>>, %arg11: memref<20x2xf32, #tpu.memory_space<vmem>>, %arg12: memref<1x2xf32, #tpu.memory_space<vmem>>, %arg13: memref<3x500x32xf32, #tpu.memory_space<vmem>>, %arg14: memref<3x20x32xf32, #tpu.memory_space<vmem>>, %arg15: memref<3x2x32xf32, #tpu.memory_space<vmem>>, %arg16: memref<3x1x32xf32, #tpu.memory_space<vmem>>, %arg17: memref<3x32x32xf32, #tpu.memory_space<vmem>>, %arg18: memref<3x1x32xf32, #tpu.memory_space<vmem>>, %arg19: memref<3x32x32xf32, #tpu.memory_space<vmem>>, %arg20: memref<3x1x32xf32, #tpu.memory_space<vmem>>, %arg21: memref<3x32x32xf32, #tpu.memory_space<vmem>>, %arg22: memref<3x1x32xf32, #tpu.memory_space<vmem>>, %arg23: memref<32x2048xbf16, #tpu.memory_space<vmem>>, %arg24: memref<1x2048xf32, #tpu.memory_space<vmem>>, %arg25: memref<2048x4xf32, #tpu.memory_space<vmem>>, %arg26: memref<1x4xf32, #tpu.memory_space<vmem>>, %arg27: memref<8x4xf32, #tpu.memory_space<vmem>>) attributes {dimension_semantics = [], scalar_prefetch = 0 : i64, scratch_operands = 0 : i64, tpu.core_type = #tpu.core_type<tc>} {
    %c0 = arith.constant 0 : index
    %c0_0 = arith.constant 0 : index
    %0 = vector.load %arg0[%c0, %c0_0] : memref<8x500xf32, #tpu.memory_space<vmem>>, vector<8x500xf32>
    %c0_1 = arith.constant 0 : index
    %c0_2 = arith.constant 0 : index
    %1 = vector.load %arg1[%c0_1, %c0_2] : memref<8x20xf32, #tpu.memory_space<vmem>>, vector<8x20xf32>
    %c0_3 = arith.constant 0 : index
    %c0_4 = arith.constant 0 : index
    %2 = vector.load %arg3[%c0_3, %c0_4] : memref<1x8xf32, #tpu.memory_space<vmem>>, vector<1x8xf32>
    %c0_5 = arith.constant 0 : index
    %c0_6 = arith.constant 0 : index
    %3 = vector.load %arg5[%c0_5, %c0_6] : memref<500x50xbf16, #tpu.memory_space<vmem>>, vector<500x50xbf16>
    %c0_7 = arith.constant 0 : index
    %c0_8 = arith.constant 0 : index
    %4 = vector.load %arg6[%c0_7, %c0_8] : memref<1x50xf32, #tpu.memory_space<vmem>>, vector<1x50xf32>
    %c0_9 = arith.constant 0 : index
    %c0_10 = arith.constant 0 : index
    %5 = vector.load %arg7[%c0_9, %c0_10] : memref<500x50xbf16, #tpu.memory_space<vmem>>, vector<500x50xbf16>
    %c0_11 = arith.constant 0 : index
    %c0_12 = arith.constant 0 : index
    %6 = vector.load %arg8[%c0_11, %c0_12] : memref<1x50xf32, #tpu.memory_space<vmem>>, vector<1x50xf32>
    %7 = arith.truncf %0 : vector<8x500xf32> to vector<8x500xbf16>
    %cst = arith.constant dense<0.000000e+00> : vector<8x50xf32>
    %8 = tpu.matmul %7, %3, %cst {dimension_numbers = #tpu.dot_dimension_numbers<[1], [0], [0], [1], [0, 0, 1, 1], [], []>} : vector<8x500xbf16>, vector<500x50xbf16>, vector<8x50xf32> -> vector<8x50xf32>
    %9 = vector.broadcast %4 : vector<1x50xf32> to vector<8x50xf32>
    %10 = arith.addf %8, %9 : vector<8x50xf32>
    %cst_13 = arith.constant dense<0.000000e+00> : vector<8x50xf32>
    %11 = tpu.matmul %7, %5, %cst_13 {dimension_numbers = #tpu.dot_dimension_numbers<[1], [0], [0], [1], [0, 0, 1, 1], [], []>} : vector<8x500xbf16>, vector<500x50xbf16>, vector<8x50xf32> -> vector<8x50xf32>
    %12 = vector.broadcast %6 : vector<1x50xf32> to vector<8x50xf32>
    %13 = arith.addf %11, %12 : vector<8x50xf32>
    %cst_14 = arith.constant dense<0.000000e+00> : vector<8x8xf32>
    %14 = tpu.matmul %10, %13, %cst_14 {dimension_numbers = #tpu.dot_dimension_numbers<[1], [1], [0], [0], [0, 0, 1, 0], [], []>} : vector<8x50xf32>, vector<8x50xf32>, vector<8x8xf32> -> vector<8x8xf32>
    %cst_15 = arith.constant 0.141421363 : f32
    %15 = vector.broadcast %cst_15 : f32 to vector<8x8xf32>
    %16 = arith.mulf %14, %15 : vector<8x8xf32>
    %cst_16 = arith.constant 1.000000e+00 : f32
    %17 = vector.broadcast %cst_16 : f32 to vector<1x8xf32>
    %18 = arith.subf %2, %17 : vector<1x8xf32>
    %cst_17 = arith.constant 1.000000e+09 : f32
    %19 = vector.broadcast %cst_17 : f32 to vector<1x8xf32>
    %20 = arith.mulf %18, %19 : vector<1x8xf32>
    %21 = vector.broadcast %20 : vector<1x8xf32> to vector<8x8xf32>
    %22 = arith.addf %16, %21 : vector<8x8xf32>
    %cst_18 = arith.constant dense<0xFF800000> : vector<8xf32>
    %23 = vector.multi_reduction <maximumf>, %22, %cst_18 [1] : vector<8x8xf32> to vector<8xf32>
    %24 = vector.shape_cast %23 : vector<8xf32> to vector<8x1xf32>
    %25 = vector.broadcast %24 : vector<8x1xf32> to vector<8x8xf32>
    %26 = arith.subf %22, %25 : vector<8x8xf32>
    %27 = math.exp %26 : vector<8x8xf32>
    %cst_19 = arith.constant dense<0.000000e+00> : vector<8xf32>
    %28 = vector.multi_reduction <add>, %27, %cst_19 [1] : vector<8x8xf32> to vector<8xf32>
    %29 = vector.shape_cast %28 : vector<8xf32> to vector<8x1xf32>
    %30 = tpu.reciprocal %29 {approx = true} : vector<8x1xf32> -> vector<8x1xf32>
    %31 = vector.broadcast %30 : vector<8x1xf32> to vector<8x8xf32>
    %32 = arith.mulf %27, %31 : vector<8x8xf32>
    %cst_20 = arith.constant dense<0.000000e+00> : vector<8x500xf32>
    %33 = tpu.matmul %32, %0, %cst_20 {dimension_numbers = #tpu.dot_dimension_numbers<[1], [0], [0], [1], [0, 0, 1, 1], [], []>} : vector<8x8xf32>, vector<8x500xf32>, vector<8x500xf32> -> vector<8x500xf32>
    %c0_21 = arith.constant 0 : index
    %c0_22 = arith.constant 0 : index
    %34 = vector.load %arg4[%c0_21, %c0_22] : memref<1x8xf32, #tpu.memory_space<vmem>>, vector<1x8xf32>
    %c0_23 = arith.constant 0 : index
    %c0_24 = arith.constant 0 : index
    %35 = vector.load %arg9[%c0_23, %c0_24] : memref<20x2xf32, #tpu.memory_space<vmem>>, vector<20x2xf32>
    %c0_25 = arith.constant 0 : index
    %c0_26 = arith.constant 0 : index
    %36 = vector.load %arg10[%c0_25, %c0_26] : memref<1x2xf32, #tpu.memory_space<vmem>>, vector<1x2xf32>
    %c0_27 = arith.constant 0 : index
    %c0_28 = arith.constant 0 : index
    %37 = vector.load %arg11[%c0_27, %c0_28] : memref<20x2xf32, #tpu.memory_space<vmem>>, vector<20x2xf32>
    %c0_29 = arith.constant 0 : index
    %c0_30 = arith.constant 0 : index
    %38 = vector.load %arg12[%c0_29, %c0_30] : memref<1x2xf32, #tpu.memory_space<vmem>>, vector<1x2xf32>
    %cst_31 = arith.constant dense<0.000000e+00> : vector<8x2xf32>
    %39 = tpu.matmul %1, %35, %cst_31 {dimension_numbers = #tpu.dot_dimension_numbers<[1], [0], [0], [1], [0, 0, 1, 1], [], []>} : vector<8x20xf32>, vector<20x2xf32>, vector<8x2xf32> -> vector<8x2xf32>
    %40 = vector.broadcast %36 : vector<1x2xf32> to vector<8x2xf32>
    %41 = arith.addf %39, %40 : vector<8x2xf32>
    %cst_32 = arith.constant dense<0.000000e+00> : vector<8x2xf32>
    %42 = tpu.matmul %1, %37, %cst_32 {dimension_numbers = #tpu.dot_dimension_numbers<[1], [0], [0], [1], [0, 0, 1, 1], [], []>} : vector<8x20xf32>, vector<20x2xf32>, vector<8x2xf32> -> vector<8x2xf32>
    %43 = vector.broadcast %38 : vector<1x2xf32> to vector<8x2xf32>
    %44 = arith.addf %42, %43 : vector<8x2xf32>
    %cst_33 = arith.constant dense<0.000000e+00> : vector<8x8xf32>
    %45 = tpu.matmul %41, %44, %cst_33 {dimension_numbers = #tpu.dot_dimension_numbers<[1], [1], [0], [0], [0, 0, 1, 0], [], []>} : vector<8x2xf32>, vector<8x2xf32>, vector<8x8xf32> -> vector<8x8xf32>
    %cst_34 = arith.constant 0.707106769 : f32
    %46 = vector.broadcast %cst_34 : f32 to vector<8x8xf32>
    %47 = arith.mulf %45, %46 : vector<8x8xf32>
    %cst_35 = arith.constant 1.000000e+00 : f32
    %48 = vector.broadcast %cst_35 : f32 to vector<1x8xf32>
    %49 = arith.subf %34, %48 : vector<1x8xf32>
    %cst_36 = arith.constant 1.000000e+09 : f32
    %50 = vector.broadcast %cst_36 : f32 to vector<1x8xf32>
    %51 = arith.mulf %49, %50 : vector<1x8xf32>
    %52 = vector.broadcast %51 : vector<1x8xf32> to vector<8x8xf32>
    %53 = arith.addf %47, %52 : vector<8x8xf32>
    %cst_37 = arith.constant dense<0xFF800000> : vector<8xf32>
    %54 = vector.multi_reduction <maximumf>, %53, %cst_37 [1] : vector<8x8xf32> to vector<8xf32>
    %55 = vector.shape_cast %54 : vector<8xf32> to vector<8x1xf32>
    %56 = vector.broadcast %55 : vector<8x1xf32> to vector<8x8xf32>
    %57 = arith.subf %53, %56 : vector<8x8xf32>
    %58 = math.exp %57 : vector<8x8xf32>
    %cst_38 = arith.constant dense<0.000000e+00> : vector<8xf32>
    %59 = vector.multi_reduction <add>, %58, %cst_38 [1] : vector<8x8xf32> to vector<8xf32>
    %60 = vector.shape_cast %59 : vector<8xf32> to vector<8x1xf32>
    %61 = tpu.reciprocal %60 {approx = true} : vector<8x1xf32> -> vector<8x1xf32>
    %62 = vector.broadcast %61 : vector<8x1xf32> to vector<8x8xf32>
    %63 = arith.mulf %58, %62 : vector<8x8xf32>
    %cst_39 = arith.constant dense<0.000000e+00> : vector<8x20xf32>
    %64 = tpu.matmul %63, %1, %cst_39 {dimension_numbers = #tpu.dot_dimension_numbers<[1], [0], [0], [1], [0, 0, 1, 1], [], []>} : vector<8x8xf32>, vector<8x20xf32>, vector<8x20xf32> -> vector<8x20xf32>
    %c0_40 = arith.constant 0 : index
    %c0_41 = arith.constant 0 : index
    %65 = vector.load %arg2[%c0_40, %c0_41] : memref<8x2xf32, #tpu.memory_space<vmem>>, vector<8x2xf32>
    %c0_42 = arith.constant 0 : index
    %c0_43 = arith.constant 0 : index
    %c0_44 = arith.constant 0 : index
    %66 = vector.load %arg13[%c0_42, %c0_43, %c0_44] : memref<3x500x32xf32, #tpu.memory_space<vmem>>, vector<1x500x32xf32>
    %67 = vector.shape_cast %66 : vector<1x500x32xf32> to vector<500x32xf32>
    %cst_45 = arith.constant dense<0.000000e+00> : vector<8x32xf32>
    %68 = tpu.matmul %33, %67, %cst_45 {dimension_numbers = #tpu.dot_dimension_numbers<[1], [0], [0], [1], [0, 0, 1, 1], [], []>} : vector<8x500xf32>, vector<500x32xf32>, vector<8x32xf32> -> vector<8x32xf32>
    %c0_46 = arith.constant 0 : index
    %c0_47 = arith.constant 0 : index
    %c0_48 = arith.constant 0 : index
    %69 = vector.load %arg14[%c0_46, %c0_47, %c0_48] : memref<3x20x32xf32, #tpu.memory_space<vmem>>, vector<1x20x32xf32>
    %70 = vector.shape_cast %69 : vector<1x20x32xf32> to vector<20x32xf32>
    %cst_49 = arith.constant dense<0.000000e+00> : vector<8x32xf32>
    %71 = tpu.matmul %64, %70, %cst_49 {dimension_numbers = #tpu.dot_dimension_numbers<[1], [0], [0], [1], [0, 0, 1, 1], [], []>} : vector<8x20xf32>, vector<20x32xf32>, vector<8x32xf32> -> vector<8x32xf32>
    %72 = arith.addf %68, %71 : vector<8x32xf32>
    %c0_50 = arith.constant 0 : index
    %c0_51 = arith.constant 0 : index
    %c0_52 = arith.constant 0 : index
    %73 = vector.load %arg15[%c0_50, %c0_51, %c0_52] : memref<3x2x32xf32, #tpu.memory_space<vmem>>, vector<1x2x32xf32>
    %74 = vector.shape_cast %73 : vector<1x2x32xf32> to vector<2x32xf32>
    %cst_53 = arith.constant dense<0.000000e+00> : vector<8x32xf32>
    %75 = tpu.matmul %65, %74, %cst_53 {dimension_numbers = #tpu.dot_dimension_numbers<[1], [0], [0], [1], [0, 0, 1, 1], [], []>} : vector<8x2xf32>, vector<2x32xf32>, vector<8x32xf32> -> vector<8x32xf32>
    %76 = arith.addf %72, %75 : vector<8x32xf32>
    %c0_54 = arith.constant 0 : index
    %c0_55 = arith.constant 0 : index
    %c0_56 = arith.constant 0 : index
    %77 = vector.load %arg16[%c0_54, %c0_55, %c0_56] : memref<3x1x32xf32, #tpu.memory_space<vmem>>, vector<1x1x32xf32>
    %78 = vector.shape_cast %77 : vector<1x1x32xf32> to vector<1x32xf32>
    %79 = vector.broadcast %78 : vector<1x32xf32> to vector<8x32xf32>
    %80 = arith.addf %76, %79 : vector<8x32xf32>
    %c1 = arith.constant 1 : index
    %c0_57 = arith.constant 0 : index
    %c0_58 = arith.constant 0 : index
    %81 = vector.load %arg13[%c1, %c0_57, %c0_58] : memref<3x500x32xf32, #tpu.memory_space<vmem>>, vector<1x500x32xf32>
    %82 = vector.shape_cast %81 : vector<1x500x32xf32> to vector<500x32xf32>
    %cst_59 = arith.constant dense<0.000000e+00> : vector<8x32xf32>
    %83 = tpu.matmul %33, %82, %cst_59 {dimension_numbers = #tpu.dot_dimension_numbers<[1], [0], [0], [1], [0, 0, 1, 1], [], []>} : vector<8x500xf32>, vector<500x32xf32>, vector<8x32xf32> -> vector<8x32xf32>
    %c1_60 = arith.constant 1 : index
    %c0_61 = arith.constant 0 : index
    %c0_62 = arith.constant 0 : index
    %84 = vector.load %arg14[%c1_60, %c0_61, %c0_62] : memref<3x20x32xf32, #tpu.memory_space<vmem>>, vector<1x20x32xf32>
    %85 = vector.shape_cast %84 : vector<1x20x32xf32> to vector<20x32xf32>
    %cst_63 = arith.constant dense<0.000000e+00> : vector<8x32xf32>
    %86 = tpu.matmul %64, %85, %cst_63 {dimension_numbers = #tpu.dot_dimension_numbers<[1], [0], [0], [1], [0, 0, 1, 1], [], []>} : vector<8x20xf32>, vector<20x32xf32>, vector<8x32xf32> -> vector<8x32xf32>
    %87 = arith.addf %83, %86 : vector<8x32xf32>
    %c1_64 = arith.constant 1 : index
    %c0_65 = arith.constant 0 : index
    %c0_66 = arith.constant 0 : index
    %88 = vector.load %arg15[%c1_64, %c0_65, %c0_66] : memref<3x2x32xf32, #tpu.memory_space<vmem>>, vector<1x2x32xf32>
    %89 = vector.shape_cast %88 : vector<1x2x32xf32> to vector<2x32xf32>
    %cst_67 = arith.constant dense<0.000000e+00> : vector<8x32xf32>
    %90 = tpu.matmul %65, %89, %cst_67 {dimension_numbers = #tpu.dot_dimension_numbers<[1], [0], [0], [1], [0, 0, 1, 1], [], []>} : vector<8x2xf32>, vector<2x32xf32>, vector<8x32xf32> -> vector<8x32xf32>
    %91 = arith.addf %87, %90 : vector<8x32xf32>
    %c1_68 = arith.constant 1 : index
    %c0_69 = arith.constant 0 : index
    %c0_70 = arith.constant 0 : index
    %92 = vector.load %arg16[%c1_68, %c0_69, %c0_70] : memref<3x1x32xf32, #tpu.memory_space<vmem>>, vector<1x1x32xf32>
    %93 = vector.shape_cast %92 : vector<1x1x32xf32> to vector<1x32xf32>
    %94 = vector.broadcast %93 : vector<1x32xf32> to vector<8x32xf32>
    %95 = arith.addf %91, %94 : vector<8x32xf32>
    %c2 = arith.constant 2 : index
    %c0_71 = arith.constant 0 : index
    %c0_72 = arith.constant 0 : index
    %96 = vector.load %arg13[%c2, %c0_71, %c0_72] : memref<3x500x32xf32, #tpu.memory_space<vmem>>, vector<1x500x32xf32>
    %97 = vector.shape_cast %96 : vector<1x500x32xf32> to vector<500x32xf32>
    %cst_73 = arith.constant dense<0.000000e+00> : vector<8x32xf32>
    %98 = tpu.matmul %33, %97, %cst_73 {dimension_numbers = #tpu.dot_dimension_numbers<[1], [0], [0], [1], [0, 0, 1, 1], [], []>} : vector<8x500xf32>, vector<500x32xf32>, vector<8x32xf32> -> vector<8x32xf32>
    %c2_74 = arith.constant 2 : index
    %c0_75 = arith.constant 0 : index
    %c0_76 = arith.constant 0 : index
    %99 = vector.load %arg14[%c2_74, %c0_75, %c0_76] : memref<3x20x32xf32, #tpu.memory_space<vmem>>, vector<1x20x32xf32>
    %100 = vector.shape_cast %99 : vector<1x20x32xf32> to vector<20x32xf32>
    %cst_77 = arith.constant dense<0.000000e+00> : vector<8x32xf32>
    %101 = tpu.matmul %64, %100, %cst_77 {dimension_numbers = #tpu.dot_dimension_numbers<[1], [0], [0], [1], [0, 0, 1, 1], [], []>} : vector<8x20xf32>, vector<20x32xf32>, vector<8x32xf32> -> vector<8x32xf32>
    %102 = arith.addf %98, %101 : vector<8x32xf32>
    %c2_78 = arith.constant 2 : index
    %c0_79 = arith.constant 0 : index
    %c0_80 = arith.constant 0 : index
    %103 = vector.load %arg15[%c2_78, %c0_79, %c0_80] : memref<3x2x32xf32, #tpu.memory_space<vmem>>, vector<1x2x32xf32>
    %104 = vector.shape_cast %103 : vector<1x2x32xf32> to vector<2x32xf32>
    %cst_81 = arith.constant dense<0.000000e+00> : vector<8x32xf32>
    %105 = tpu.matmul %65, %104, %cst_81 {dimension_numbers = #tpu.dot_dimension_numbers<[1], [0], [0], [1], [0, 0, 1, 1], [], []>} : vector<8x2xf32>, vector<2x32xf32>, vector<8x32xf32> -> vector<8x32xf32>
    %106 = arith.addf %102, %105 : vector<8x32xf32>
    %c2_82 = arith.constant 2 : index
    %c0_83 = arith.constant 0 : index
    %c0_84 = arith.constant 0 : index
    %107 = vector.load %arg16[%c2_82, %c0_83, %c0_84] : memref<3x1x32xf32, #tpu.memory_space<vmem>>, vector<1x1x32xf32>
    %108 = vector.shape_cast %107 : vector<1x1x32xf32> to vector<1x32xf32>
    %109 = vector.broadcast %108 : vector<1x32xf32> to vector<8x32xf32>
    %110 = arith.addf %106, %109 : vector<8x32xf32>
    %c0_85 = arith.constant 0 : index
    %c0_86 = arith.constant 0 : index
    %c0_87 = arith.constant 0 : index
    %111 = vector.load %arg17[%c0_85, %c0_86, %c0_87] : memref<3x32x32xf32, #tpu.memory_space<vmem>>, vector<1x32x32xf32>
    %112 = vector.shape_cast %111 : vector<1x32x32xf32> to vector<32x32xf32>
    %c1_88 = arith.constant 1 : index
    %c0_89 = arith.constant 0 : index
    %c0_90 = arith.constant 0 : index
    %113 = vector.load %arg17[%c1_88, %c0_89, %c0_90] : memref<3x32x32xf32, #tpu.memory_space<vmem>>, vector<1x32x32xf32>
    %114 = vector.shape_cast %113 : vector<1x32x32xf32> to vector<32x32xf32>
    %c2_91 = arith.constant 2 : index
    %c0_92 = arith.constant 0 : index
    %c0_93 = arith.constant 0 : index
    %115 = vector.load %arg17[%c2_91, %c0_92, %c0_93] : memref<3x32x32xf32, #tpu.memory_space<vmem>>, vector<1x32x32xf32>
    %116 = vector.shape_cast %115 : vector<1x32x32xf32> to vector<32x32xf32>
    %c0_94 = arith.constant 0 : index
    %c0_95 = arith.constant 0 : index
    %c0_96 = arith.constant 0 : index
    %117 = vector.load %arg18[%c0_94, %c0_95, %c0_96] : memref<3x1x32xf32, #tpu.memory_space<vmem>>, vector<1x1x32xf32>
    %118 = vector.shape_cast %117 : vector<1x1x32xf32> to vector<1x32xf32>
    %c1_97 = arith.constant 1 : index
    %c0_98 = arith.constant 0 : index
    %c0_99 = arith.constant 0 : index
    %119 = vector.load %arg18[%c1_97, %c0_98, %c0_99] : memref<3x1x32xf32, #tpu.memory_space<vmem>>, vector<1x1x32xf32>
    %120 = vector.shape_cast %119 : vector<1x1x32xf32> to vector<1x32xf32>
    %c2_100 = arith.constant 2 : index
    %c0_101 = arith.constant 0 : index
    %c0_102 = arith.constant 0 : index
    %121 = vector.load %arg18[%c2_100, %c0_101, %c0_102] : memref<3x1x32xf32, #tpu.memory_space<vmem>>, vector<1x1x32xf32>
    %122 = vector.shape_cast %121 : vector<1x1x32xf32> to vector<1x32xf32>
    %c0_103 = arith.constant 0 : index
    %c0_104 = arith.constant 0 : index
    %c0_105 = arith.constant 0 : index
    %123 = vector.load %arg19[%c0_103, %c0_104, %c0_105] : memref<3x32x32xf32, #tpu.memory_space<vmem>>, vector<1x32x32xf32>
    %124 = vector.shape_cast %123 : vector<1x32x32xf32> to vector<32x32xf32>
    %c1_106 = arith.constant 1 : index
    %c0_107 = arith.constant 0 : index
    %c0_108 = arith.constant 0 : index
    %125 = vector.load %arg19[%c1_106, %c0_107, %c0_108] : memref<3x32x32xf32, #tpu.memory_space<vmem>>, vector<1x32x32xf32>
    %126 = vector.shape_cast %125 : vector<1x32x32xf32> to vector<32x32xf32>
    %c2_109 = arith.constant 2 : index
    %c0_110 = arith.constant 0 : index
    %c0_111 = arith.constant 0 : index
    %127 = vector.load %arg19[%c2_109, %c0_110, %c0_111] : memref<3x32x32xf32, #tpu.memory_space<vmem>>, vector<1x32x32xf32>
    %128 = vector.shape_cast %127 : vector<1x32x32xf32> to vector<32x32xf32>
    %c0_112 = arith.constant 0 : index
    %c0_113 = arith.constant 0 : index
    %c0_114 = arith.constant 0 : index
    %129 = vector.load %arg20[%c0_112, %c0_113, %c0_114] : memref<3x1x32xf32, #tpu.memory_space<vmem>>, vector<1x1x32xf32>
    %130 = vector.shape_cast %129 : vector<1x1x32xf32> to vector<1x32xf32>
    %c1_115 = arith.constant 1 : index
    %c0_116 = arith.constant 0 : index
    %c0_117 = arith.constant 0 : index
    %131 = vector.load %arg20[%c1_115, %c0_116, %c0_117] : memref<3x1x32xf32, #tpu.memory_space<vmem>>, vector<1x1x32xf32>
    %132 = vector.shape_cast %131 : vector<1x1x32xf32> to vector<1x32xf32>
    %c2_118 = arith.constant 2 : index
    %c0_119 = arith.constant 0 : index
    %c0_120 = arith.constant 0 : index
    %133 = vector.load %arg20[%c2_118, %c0_119, %c0_120] : memref<3x1x32xf32, #tpu.memory_space<vmem>>, vector<1x1x32xf32>
    %134 = vector.shape_cast %133 : vector<1x1x32xf32> to vector<1x32xf32>
    %c0_121 = arith.constant 0 : index
    %c0_122 = arith.constant 0 : index
    %c0_123 = arith.constant 0 : index
    %135 = vector.load %arg21[%c0_121, %c0_122, %c0_123] : memref<3x32x32xf32, #tpu.memory_space<vmem>>, vector<1x32x32xf32>
    %136 = vector.shape_cast %135 : vector<1x32x32xf32> to vector<32x32xf32>
    %c1_124 = arith.constant 1 : index
    %c0_125 = arith.constant 0 : index
    %c0_126 = arith.constant 0 : index
    %137 = vector.load %arg21[%c1_124, %c0_125, %c0_126] : memref<3x32x32xf32, #tpu.memory_space<vmem>>, vector<1x32x32xf32>
    %138 = vector.shape_cast %137 : vector<1x32x32xf32> to vector<32x32xf32>
    %c2_127 = arith.constant 2 : index
    %c0_128 = arith.constant 0 : index
    %c0_129 = arith.constant 0 : index
    %139 = vector.load %arg21[%c2_127, %c0_128, %c0_129] : memref<3x32x32xf32, #tpu.memory_space<vmem>>, vector<1x32x32xf32>
    %140 = vector.shape_cast %139 : vector<1x32x32xf32> to vector<32x32xf32>
    %c0_130 = arith.constant 0 : index
    %c0_131 = arith.constant 0 : index
    %c0_132 = arith.constant 0 : index
    %141 = vector.load %arg22[%c0_130, %c0_131, %c0_132] : memref<3x1x32xf32, #tpu.memory_space<vmem>>, vector<1x1x32xf32>
    %142 = vector.shape_cast %141 : vector<1x1x32xf32> to vector<1x32xf32>
    %c1_133 = arith.constant 1 : index
    %c0_134 = arith.constant 0 : index
    %c0_135 = arith.constant 0 : index
    %143 = vector.load %arg22[%c1_133, %c0_134, %c0_135] : memref<3x1x32xf32, #tpu.memory_space<vmem>>, vector<1x1x32xf32>
    %144 = vector.shape_cast %143 : vector<1x1x32xf32> to vector<1x32xf32>
    %c2_136 = arith.constant 2 : index
    %c0_137 = arith.constant 0 : index
    %c0_138 = arith.constant 0 : index
    %145 = vector.load %arg22[%c2_136, %c0_137, %c0_138] : memref<3x1x32xf32, #tpu.memory_space<vmem>>, vector<1x1x32xf32>
    %146 = vector.shape_cast %145 : vector<1x1x32xf32> to vector<1x32xf32>
    %cst_139 = arith.constant 0.000000e+00 : f32
    %147 = vector.broadcast %cst_139 : f32 to vector<1x32xf32>
    %cst_140 = arith.constant 0.000000e+00 : f32
    %148 = vector.broadcast %cst_140 : f32 to vector<1x32xf32>
    %cst_141 = arith.constant dense<0.000000e+00> : vector<1x32xf32>
    %149 = tpu.matmul %147, %112, %cst_141 {dimension_numbers = #tpu.dot_dimension_numbers<[1], [0], [0], [1], [0, 0, 1, 1], [], []>} : vector<1x32xf32>, vector<32x32xf32>, vector<1x32xf32> -> vector<1x32xf32>
    %150 = arith.addf %149, %118 : vector<1x32xf32>
    %cst_142 = arith.constant dense<0.000000e+00> : vector<1x32xf32>
    %151 = tpu.matmul %147, %114, %cst_142 {dimension_numbers = #tpu.dot_dimension_numbers<[1], [0], [0], [1], [0, 0, 1, 1], [], []>} : vector<1x32xf32>, vector<32x32xf32>, vector<1x32xf32> -> vector<1x32xf32>
    %152 = arith.addf %151, %120 : vector<1x32xf32>
    %cst_143 = arith.constant dense<0.000000e+00> : vector<1x32xf32>
    %153 = tpu.matmul %147, %116, %cst_143 {dimension_numbers = #tpu.dot_dimension_numbers<[1], [0], [0], [1], [0, 0, 1, 1], [], []>} : vector<1x32xf32>, vector<32x32xf32>, vector<1x32xf32> -> vector<1x32xf32>
    %154 = arith.addf %153, %122 : vector<1x32xf32>
    %155 = vector.extract_strided_slice %80 {offsets = [0, 0], sizes = [1, 32], strides = [1, 1]} : vector<8x32xf32> to vector<1x32xf32>
    %156 = arith.addf %155, %150 : vector<1x32xf32>
    %157 = arith.negf %156 : vector<1x32xf32>
    %158 = math.exp %157 : vector<1x32xf32>
    %cst_144 = arith.constant 1.000000e+00 : f32
    %159 = vector.broadcast %cst_144 : f32 to vector<1x32xf32>
    %160 = arith.addf %159, %158 : vector<1x32xf32>
    %161 = arith.divf %159, %160 : vector<1x32xf32>
    %162 = vector.extract_strided_slice %95 {offsets = [0, 0], sizes = [1, 32], strides = [1, 1]} : vector<8x32xf32> to vector<1x32xf32>
    %163 = arith.addf %162, %152 : vector<1x32xf32>
    %164 = arith.negf %163 : vector<1x32xf32>
    %165 = math.exp %164 : vector<1x32xf32>
    %cst_145 = arith.constant 1.000000e+00 : f32
    %166 = vector.broadcast %cst_145 : f32 to vector<1x32xf32>
    %167 = arith.addf %166, %165 : vector<1x32xf32>
    %168 = arith.divf %166, %167 : vector<1x32xf32>
    %169 = vector.extract_strided_slice %110 {offsets = [0, 0], sizes = [1, 32], strides = [1, 1]} : vector<8x32xf32> to vector<1x32xf32>
    %170 = arith.mulf %161, %154 : vector<1x32xf32>
    %171 = arith.addf %169, %170 : vector<1x32xf32>
    %172 = math.tanh %171 : vector<1x32xf32>
    %cst_146 = arith.constant 1.000000e+00 : f32
    %173 = vector.broadcast %cst_146 : f32 to vector<1x32xf32>
    %174 = arith.subf %173, %168 : vector<1x32xf32>
    %175 = arith.mulf %174, %172 : vector<1x32xf32>
    %176 = arith.mulf %168, %147 : vector<1x32xf32>
    %177 = arith.addf %175, %176 : vector<1x32xf32>
    %cst_147 = arith.constant dense<0.000000e+00> : vector<1x32xf32>
    %178 = tpu.matmul %177, %124, %cst_147 {dimension_numbers = #tpu.dot_dimension_numbers<[1], [0], [0], [1], [0, 0, 1, 1], [], []>} : vector<1x32xf32>, vector<32x32xf32>, vector<1x32xf32> -> vector<1x32xf32>
    %179 = arith.addf %178, %130 : vector<1x32xf32>
    %cst_148 = arith.constant dense<0.000000e+00> : vector<1x32xf32>
    %180 = tpu.matmul %177, %126, %cst_148 {dimension_numbers = #tpu.dot_dimension_numbers<[1], [0], [0], [1], [0, 0, 1, 1], [], []>} : vector<1x32xf32>, vector<32x32xf32>, vector<1x32xf32> -> vector<1x32xf32>
    %181 = arith.addf %180, %132 : vector<1x32xf32>
    %cst_149 = arith.constant dense<0.000000e+00> : vector<1x32xf32>
    %182 = tpu.matmul %177, %128, %cst_149 {dimension_numbers = #tpu.dot_dimension_numbers<[1], [0], [0], [1], [0, 0, 1, 1], [], []>} : vector<1x32xf32>, vector<32x32xf32>, vector<1x32xf32> -> vector<1x32xf32>
    %183 = arith.addf %182, %134 : vector<1x32xf32>
    %cst_150 = arith.constant dense<0.000000e+00> : vector<1x32xf32>
    %184 = tpu.matmul %148, %136, %cst_150 {dimension_numbers = #tpu.dot_dimension_numbers<[1], [0], [0], [1], [0, 0, 1, 1], [], []>} : vector<1x32xf32>, vector<32x32xf32>, vector<1x32xf32> -> vector<1x32xf32>
    %185 = arith.addf %184, %142 : vector<1x32xf32>
    %cst_151 = arith.constant dense<0.000000e+00> : vector<1x32xf32>
    %186 = tpu.matmul %148, %138, %cst_151 {dimension_numbers = #tpu.dot_dimension_numbers<[1], [0], [0], [1], [0, 0, 1, 1], [], []>} : vector<1x32xf32>, vector<32x32xf32>, vector<1x32xf32> -> vector<1x32xf32>
    %187 = arith.addf %186, %144 : vector<1x32xf32>
    %cst_152 = arith.constant dense<0.000000e+00> : vector<1x32xf32>
    %188 = tpu.matmul %148, %140, %cst_152 {dimension_numbers = #tpu.dot_dimension_numbers<[1], [0], [0], [1], [0, 0, 1, 1], [], []>} : vector<1x32xf32>, vector<32x32xf32>, vector<1x32xf32> -> vector<1x32xf32>
    %189 = arith.addf %188, %146 : vector<1x32xf32>
    %190 = arith.addf %179, %185 : vector<1x32xf32>
    %191 = arith.negf %190 : vector<1x32xf32>
    %192 = math.exp %191 : vector<1x32xf32>
    %cst_153 = arith.constant 1.000000e+00 : f32
    %193 = vector.broadcast %cst_153 : f32 to vector<1x32xf32>
    %194 = arith.addf %193, %192 : vector<1x32xf32>
    %195 = arith.divf %193, %194 : vector<1x32xf32>
    %196 = arith.addf %181, %187 : vector<1x32xf32>
    %197 = arith.negf %196 : vector<1x32xf32>
    %198 = math.exp %197 : vector<1x32xf32>
    %cst_154 = arith.constant 1.000000e+00 : f32
    %199 = vector.broadcast %cst_154 : f32 to vector<1x32xf32>
    %200 = arith.addf %199, %198 : vector<1x32xf32>
    %201 = arith.divf %199, %200 : vector<1x32xf32>
    %202 = arith.mulf %195, %189 : vector<1x32xf32>
    %203 = arith.addf %183, %202 : vector<1x32xf32>
    %204 = math.tanh %203 : vector<1x32xf32>
    %cst_155 = arith.constant 1.000000e+00 : f32
    %205 = vector.broadcast %cst_155 : f32 to vector<1x32xf32>
    %206 = arith.subf %205, %201 : vector<1x32xf32>
    %207 = arith.mulf %206, %204 : vector<1x32xf32>
    %208 = arith.mulf %201, %148 : vector<1x32xf32>
    %209 = arith.addf %207, %208 : vector<1x32xf32>
    %cst_156 = arith.constant dense<0.000000e+00> : vector<1x32xf32>
    %210 = tpu.matmul %177, %112, %cst_156 {dimension_numbers = #tpu.dot_dimension_numbers<[1], [0], [0], [1], [0, 0, 1, 1], [], []>} : vector<1x32xf32>, vector<32x32xf32>, vector<1x32xf32> -> vector<1x32xf32>
    %211 = arith.addf %210, %118 : vector<1x32xf32>
    %cst_157 = arith.constant dense<0.000000e+00> : vector<1x32xf32>
    %212 = tpu.matmul %177, %114, %cst_157 {dimension_numbers = #tpu.dot_dimension_numbers<[1], [0], [0], [1], [0, 0, 1, 1], [], []>} : vector<1x32xf32>, vector<32x32xf32>, vector<1x32xf32> -> vector<1x32xf32>
    %213 = arith.addf %212, %120 : vector<1x32xf32>
    %cst_158 = arith.constant dense<0.000000e+00> : vector<1x32xf32>
    %214 = tpu.matmul %177, %116, %cst_158 {dimension_numbers = #tpu.dot_dimension_numbers<[1], [0], [0], [1], [0, 0, 1, 1], [], []>} : vector<1x32xf32>, vector<32x32xf32>, vector<1x32xf32> -> vector<1x32xf32>
    %215 = arith.addf %214, %122 : vector<1x32xf32>
    %216 = vector.extract_strided_slice %80 {offsets = [1, 0], sizes = [1, 32], strides = [1, 1]} : vector<8x32xf32> to vector<1x32xf32>
    %217 = arith.addf %216, %211 : vector<1x32xf32>
    %218 = arith.negf %217 : vector<1x32xf32>
    %219 = math.exp %218 : vector<1x32xf32>
    %cst_159 = arith.constant 1.000000e+00 : f32
    %220 = vector.broadcast %cst_159 : f32 to vector<1x32xf32>
    %221 = arith.addf %220, %219 : vector<1x32xf32>
    %222 = arith.divf %220, %221 : vector<1x32xf32>
    %223 = vector.extract_strided_slice %95 {offsets = [1, 0], sizes = [1, 32], strides = [1, 1]} : vector<8x32xf32> to vector<1x32xf32>
    %224 = arith.addf %223, %213 : vector<1x32xf32>
    %225 = arith.negf %224 : vector<1x32xf32>
    %226 = math.exp %225 : vector<1x32xf32>
    %cst_160 = arith.constant 1.000000e+00 : f32
    %227 = vector.broadcast %cst_160 : f32 to vector<1x32xf32>
    %228 = arith.addf %227, %226 : vector<1x32xf32>
    %229 = arith.divf %227, %228 : vector<1x32xf32>
    %230 = vector.extract_strided_slice %110 {offsets = [1, 0], sizes = [1, 32], strides = [1, 1]} : vector<8x32xf32> to vector<1x32xf32>
    %231 = arith.mulf %222, %215 : vector<1x32xf32>
    %232 = arith.addf %230, %231 : vector<1x32xf32>
    %233 = math.tanh %232 : vector<1x32xf32>
    %cst_161 = arith.constant 1.000000e+00 : f32
    %234 = vector.broadcast %cst_161 : f32 to vector<1x32xf32>
    %235 = arith.subf %234, %229 : vector<1x32xf32>
    %236 = arith.mulf %235, %233 : vector<1x32xf32>
    %237 = arith.mulf %229, %177 : vector<1x32xf32>
    %238 = arith.addf %236, %237 : vector<1x32xf32>
    %cst_162 = arith.constant dense<0.000000e+00> : vector<1x32xf32>
    %239 = tpu.matmul %238, %124, %cst_162 {dimension_numbers = #tpu.dot_dimension_numbers<[1], [0], [0], [1], [0, 0, 1, 1], [], []>} : vector<1x32xf32>, vector<32x32xf32>, vector<1x32xf32> -> vector<1x32xf32>
    %240 = arith.addf %239, %130 : vector<1x32xf32>
    %cst_163 = arith.constant dense<0.000000e+00> : vector<1x32xf32>
    %241 = tpu.matmul %238, %126, %cst_163 {dimension_numbers = #tpu.dot_dimension_numbers<[1], [0], [0], [1], [0, 0, 1, 1], [], []>} : vector<1x32xf32>, vector<32x32xf32>, vector<1x32xf32> -> vector<1x32xf32>
    %242 = arith.addf %241, %132 : vector<1x32xf32>
    %cst_164 = arith.constant dense<0.000000e+00> : vector<1x32xf32>
    %243 = tpu.matmul %238, %128, %cst_164 {dimension_numbers = #tpu.dot_dimension_numbers<[1], [0], [0], [1], [0, 0, 1, 1], [], []>} : vector<1x32xf32>, vector<32x32xf32>, vector<1x32xf32> -> vector<1x32xf32>
    %244 = arith.addf %243, %134 : vector<1x32xf32>
    %cst_165 = arith.constant dense<0.000000e+00> : vector<1x32xf32>
    %245 = tpu.matmul %209, %136, %cst_165 {dimension_numbers = #tpu.dot_dimension_numbers<[1], [0], [0], [1], [0, 0, 1, 1], [], []>} : vector<1x32xf32>, vector<32x32xf32>, vector<1x32xf32> -> vector<1x32xf32>
    %246 = arith.addf %245, %142 : vector<1x32xf32>
    %cst_166 = arith.constant dense<0.000000e+00> : vector<1x32xf32>
    %247 = tpu.matmul %209, %138, %cst_166 {dimension_numbers = #tpu.dot_dimension_numbers<[1], [0], [0], [1], [0, 0, 1, 1], [], []>} : vector<1x32xf32>, vector<32x32xf32>, vector<1x32xf32> -> vector<1x32xf32>
    %248 = arith.addf %247, %144 : vector<1x32xf32>
    %cst_167 = arith.constant dense<0.000000e+00> : vector<1x32xf32>
    %249 = tpu.matmul %209, %140, %cst_167 {dimension_numbers = #tpu.dot_dimension_numbers<[1], [0], [0], [1], [0, 0, 1, 1], [], []>} : vector<1x32xf32>, vector<32x32xf32>, vector<1x32xf32> -> vector<1x32xf32>
    %250 = arith.addf %249, %146 : vector<1x32xf32>
    %251 = arith.addf %240, %246 : vector<1x32xf32>
    %252 = arith.negf %251 : vector<1x32xf32>
    %253 = math.exp %252 : vector<1x32xf32>
    %cst_168 = arith.constant 1.000000e+00 : f32
    %254 = vector.broadcast %cst_168 : f32 to vector<1x32xf32>
    %255 = arith.addf %254, %253 : vector<1x32xf32>
    %256 = arith.divf %254, %255 : vector<1x32xf32>
    %257 = arith.addf %242, %248 : vector<1x32xf32>
    %258 = arith.negf %257 : vector<1x32xf32>
    %259 = math.exp %258 : vector<1x32xf32>
    %cst_169 = arith.constant 1.000000e+00 : f32
    %260 = vector.broadcast %cst_169 : f32 to vector<1x32xf32>
    %261 = arith.addf %260, %259 : vector<1x32xf32>
    %262 = arith.divf %260, %261 : vector<1x32xf32>
    %263 = arith.mulf %256, %250 : vector<1x32xf32>
    %264 = arith.addf %244, %263 : vector<1x32xf32>
    %265 = math.tanh %264 : vector<1x32xf32>
    %cst_170 = arith.constant 1.000000e+00 : f32
    %266 = vector.broadcast %cst_170 : f32 to vector<1x32xf32>
    %267 = arith.subf %266, %262 : vector<1x32xf32>
    %268 = arith.mulf %267, %265 : vector<1x32xf32>
    %269 = arith.mulf %262, %209 : vector<1x32xf32>
    %270 = arith.addf %268, %269 : vector<1x32xf32>
    %cst_171 = arith.constant dense<0.000000e+00> : vector<1x32xf32>
    %271 = tpu.matmul %238, %112, %cst_171 {dimension_numbers = #tpu.dot_dimension_numbers<[1], [0], [0], [1], [0, 0, 1, 1], [], []>} : vector<1x32xf32>, vector<32x32xf32>, vector<1x32xf32> -> vector<1x32xf32>
    %272 = arith.addf %271, %118 : vector<1x32xf32>
    %cst_172 = arith.constant dense<0.000000e+00> : vector<1x32xf32>
    %273 = tpu.matmul %238, %114, %cst_172 {dimension_numbers = #tpu.dot_dimension_numbers<[1], [0], [0], [1], [0, 0, 1, 1], [], []>} : vector<1x32xf32>, vector<32x32xf32>, vector<1x32xf32> -> vector<1x32xf32>
    %274 = arith.addf %273, %120 : vector<1x32xf32>
    %cst_173 = arith.constant dense<0.000000e+00> : vector<1x32xf32>
    %275 = tpu.matmul %238, %116, %cst_173 {dimension_numbers = #tpu.dot_dimension_numbers<[1], [0], [0], [1], [0, 0, 1, 1], [], []>} : vector<1x32xf32>, vector<32x32xf32>, vector<1x32xf32> -> vector<1x32xf32>
    %276 = arith.addf %275, %122 : vector<1x32xf32>
    %277 = vector.extract_strided_slice %80 {offsets = [2, 0], sizes = [1, 32], strides = [1, 1]} : vector<8x32xf32> to vector<1x32xf32>
    %278 = arith.addf %277, %272 : vector<1x32xf32>
    %279 = arith.negf %278 : vector<1x32xf32>
    %280 = math.exp %279 : vector<1x32xf32>
    %cst_174 = arith.constant 1.000000e+00 : f32
    %281 = vector.broadcast %cst_174 : f32 to vector<1x32xf32>
    %282 = arith.addf %281, %280 : vector<1x32xf32>
    %283 = arith.divf %281, %282 : vector<1x32xf32>
    %284 = vector.extract_strided_slice %95 {offsets = [2, 0], sizes = [1, 32], strides = [1, 1]} : vector<8x32xf32> to vector<1x32xf32>
    %285 = arith.addf %284, %274 : vector<1x32xf32>
    %286 = arith.negf %285 : vector<1x32xf32>
    %287 = math.exp %286 : vector<1x32xf32>
    %cst_175 = arith.constant 1.000000e+00 : f32
    %288 = vector.broadcast %cst_175 : f32 to vector<1x32xf32>
    %289 = arith.addf %288, %287 : vector<1x32xf32>
    %290 = arith.divf %288, %289 : vector<1x32xf32>
    %291 = vector.extract_strided_slice %110 {offsets = [2, 0], sizes = [1, 32], strides = [1, 1]} : vector<8x32xf32> to vector<1x32xf32>
    %292 = arith.mulf %283, %276 : vector<1x32xf32>
    %293 = arith.addf %291, %292 : vector<1x32xf32>
    %294 = math.tanh %293 : vector<1x32xf32>
    %cst_176 = arith.constant 1.000000e+00 : f32
    %295 = vector.broadcast %cst_176 : f32 to vector<1x32xf32>
    %296 = arith.subf %295, %290 : vector<1x32xf32>
    %297 = arith.mulf %296, %294 : vector<1x32xf32>
    %298 = arith.mulf %290, %238 : vector<1x32xf32>
    %299 = arith.addf %297, %298 : vector<1x32xf32>
    %cst_177 = arith.constant dense<0.000000e+00> : vector<1x32xf32>
    %300 = tpu.matmul %299, %124, %cst_177 {dimension_numbers = #tpu.dot_dimension_numbers<[1], [0], [0], [1], [0, 0, 1, 1], [], []>} : vector<1x32xf32>, vector<32x32xf32>, vector<1x32xf32> -> vector<1x32xf32>
    %301 = arith.addf %300, %130 : vector<1x32xf32>
    %cst_178 = arith.constant dense<0.000000e+00> : vector<1x32xf32>
    %302 = tpu.matmul %299, %126, %cst_178 {dimension_numbers = #tpu.dot_dimension_numbers<[1], [0], [0], [1], [0, 0, 1, 1], [], []>} : vector<1x32xf32>, vector<32x32xf32>, vector<1x32xf32> -> vector<1x32xf32>
    %303 = arith.addf %302, %132 : vector<1x32xf32>
    %cst_179 = arith.constant dense<0.000000e+00> : vector<1x32xf32>
    %304 = tpu.matmul %299, %128, %cst_179 {dimension_numbers = #tpu.dot_dimension_numbers<[1], [0], [0], [1], [0, 0, 1, 1], [], []>} : vector<1x32xf32>, vector<32x32xf32>, vector<1x32xf32> -> vector<1x32xf32>
    %305 = arith.addf %304, %134 : vector<1x32xf32>
    %cst_180 = arith.constant dense<0.000000e+00> : vector<1x32xf32>
    %306 = tpu.matmul %270, %136, %cst_180 {dimension_numbers = #tpu.dot_dimension_numbers<[1], [0], [0], [1], [0, 0, 1, 1], [], []>} : vector<1x32xf32>, vector<32x32xf32>, vector<1x32xf32> -> vector<1x32xf32>
    %307 = arith.addf %306, %142 : vector<1x32xf32>
    %cst_181 = arith.constant dense<0.000000e+00> : vector<1x32xf32>
    %308 = tpu.matmul %270, %138, %cst_181 {dimension_numbers = #tpu.dot_dimension_numbers<[1], [0], [0], [1], [0, 0, 1, 1], [], []>} : vector<1x32xf32>, vector<32x32xf32>, vector<1x32xf32> -> vector<1x32xf32>
    %309 = arith.addf %308, %144 : vector<1x32xf32>
    %cst_182 = arith.constant dense<0.000000e+00> : vector<1x32xf32>
    %310 = tpu.matmul %270, %140, %cst_182 {dimension_numbers = #tpu.dot_dimension_numbers<[1], [0], [0], [1], [0, 0, 1, 1], [], []>} : vector<1x32xf32>, vector<32x32xf32>, vector<1x32xf32> -> vector<1x32xf32>
    %311 = arith.addf %310, %146 : vector<1x32xf32>
    %312 = arith.addf %301, %307 : vector<1x32xf32>
    %313 = arith.negf %312 : vector<1x32xf32>
    %314 = math.exp %313 : vector<1x32xf32>
    %cst_183 = arith.constant 1.000000e+00 : f32
    %315 = vector.broadcast %cst_183 : f32 to vector<1x32xf32>
    %316 = arith.addf %315, %314 : vector<1x32xf32>
    %317 = arith.divf %315, %316 : vector<1x32xf32>
    %318 = arith.addf %303, %309 : vector<1x32xf32>
    %319 = arith.negf %318 : vector<1x32xf32>
    %320 = math.exp %319 : vector<1x32xf32>
    %cst_184 = arith.constant 1.000000e+00 : f32
    %321 = vector.broadcast %cst_184 : f32 to vector<1x32xf32>
    %322 = arith.addf %321, %320 : vector<1x32xf32>
    %323 = arith.divf %321, %322 : vector<1x32xf32>
    %324 = arith.mulf %317, %311 : vector<1x32xf32>
    %325 = arith.addf %305, %324 : vector<1x32xf32>
    %326 = math.tanh %325 : vector<1x32xf32>
    %cst_185 = arith.constant 1.000000e+00 : f32
    %327 = vector.broadcast %cst_185 : f32 to vector<1x32xf32>
    %328 = arith.subf %327, %323 : vector<1x32xf32>
    %329 = arith.mulf %328, %326 : vector<1x32xf32>
    %330 = arith.mulf %323, %270 : vector<1x32xf32>
    %331 = arith.addf %329, %330 : vector<1x32xf32>
    %cst_186 = arith.constant dense<0.000000e+00> : vector<1x32xf32>
    %332 = tpu.matmul %299, %112, %cst_186 {dimension_numbers = #tpu.dot_dimension_numbers<[1], [0], [0], [1], [0, 0, 1, 1], [], []>} : vector<1x32xf32>, vector<32x32xf32>, vector<1x32xf32> -> vector<1x32xf32>
    %333 = arith.addf %332, %118 : vector<1x32xf32>
    %cst_187 = arith.constant dense<0.000000e+00> : vector<1x32xf32>
    %334 = tpu.matmul %299, %114, %cst_187 {dimension_numbers = #tpu.dot_dimension_numbers<[1], [0], [0], [1], [0, 0, 1, 1], [], []>} : vector<1x32xf32>, vector<32x32xf32>, vector<1x32xf32> -> vector<1x32xf32>
    %335 = arith.addf %334, %120 : vector<1x32xf32>
    %cst_188 = arith.constant dense<0.000000e+00> : vector<1x32xf32>
    %336 = tpu.matmul %299, %116, %cst_188 {dimension_numbers = #tpu.dot_dimension_numbers<[1], [0], [0], [1], [0, 0, 1, 1], [], []>} : vector<1x32xf32>, vector<32x32xf32>, vector<1x32xf32> -> vector<1x32xf32>
    %337 = arith.addf %336, %122 : vector<1x32xf32>
    %338 = vector.extract_strided_slice %80 {offsets = [3, 0], sizes = [1, 32], strides = [1, 1]} : vector<8x32xf32> to vector<1x32xf32>
    %339 = arith.addf %338, %333 : vector<1x32xf32>
    %340 = arith.negf %339 : vector<1x32xf32>
    %341 = math.exp %340 : vector<1x32xf32>
    %cst_189 = arith.constant 1.000000e+00 : f32
    %342 = vector.broadcast %cst_189 : f32 to vector<1x32xf32>
    %343 = arith.addf %342, %341 : vector<1x32xf32>
    %344 = arith.divf %342, %343 : vector<1x32xf32>
    %345 = vector.extract_strided_slice %95 {offsets = [3, 0], sizes = [1, 32], strides = [1, 1]} : vector<8x32xf32> to vector<1x32xf32>
    %346 = arith.addf %345, %335 : vector<1x32xf32>
    %347 = arith.negf %346 : vector<1x32xf32>
    %348 = math.exp %347 : vector<1x32xf32>
    %cst_190 = arith.constant 1.000000e+00 : f32
    %349 = vector.broadcast %cst_190 : f32 to vector<1x32xf32>
    %350 = arith.addf %349, %348 : vector<1x32xf32>
    %351 = arith.divf %349, %350 : vector<1x32xf32>
    %352 = vector.extract_strided_slice %110 {offsets = [3, 0], sizes = [1, 32], strides = [1, 1]} : vector<8x32xf32> to vector<1x32xf32>
    %353 = arith.mulf %344, %337 : vector<1x32xf32>
    %354 = arith.addf %352, %353 : vector<1x32xf32>
    %355 = math.tanh %354 : vector<1x32xf32>
    %cst_191 = arith.constant 1.000000e+00 : f32
    %356 = vector.broadcast %cst_191 : f32 to vector<1x32xf32>
    %357 = arith.subf %356, %351 : vector<1x32xf32>
    %358 = arith.mulf %357, %355 : vector<1x32xf32>
    %359 = arith.mulf %351, %299 : vector<1x32xf32>
    %360 = arith.addf %358, %359 : vector<1x32xf32>
    %cst_192 = arith.constant dense<0.000000e+00> : vector<1x32xf32>
    %361 = tpu.matmul %360, %124, %cst_192 {dimension_numbers = #tpu.dot_dimension_numbers<[1], [0], [0], [1], [0, 0, 1, 1], [], []>} : vector<1x32xf32>, vector<32x32xf32>, vector<1x32xf32> -> vector<1x32xf32>
    %362 = arith.addf %361, %130 : vector<1x32xf32>
    %cst_193 = arith.constant dense<0.000000e+00> : vector<1x32xf32>
    %363 = tpu.matmul %360, %126, %cst_193 {dimension_numbers = #tpu.dot_dimension_numbers<[1], [0], [0], [1], [0, 0, 1, 1], [], []>} : vector<1x32xf32>, vector<32x32xf32>, vector<1x32xf32> -> vector<1x32xf32>
    %364 = arith.addf %363, %132 : vector<1x32xf32>
    %cst_194 = arith.constant dense<0.000000e+00> : vector<1x32xf32>
    %365 = tpu.matmul %360, %128, %cst_194 {dimension_numbers = #tpu.dot_dimension_numbers<[1], [0], [0], [1], [0, 0, 1, 1], [], []>} : vector<1x32xf32>, vector<32x32xf32>, vector<1x32xf32> -> vector<1x32xf32>
    %366 = arith.addf %365, %134 : vector<1x32xf32>
    %cst_195 = arith.constant dense<0.000000e+00> : vector<1x32xf32>
    %367 = tpu.matmul %331, %136, %cst_195 {dimension_numbers = #tpu.dot_dimension_numbers<[1], [0], [0], [1], [0, 0, 1, 1], [], []>} : vector<1x32xf32>, vector<32x32xf32>, vector<1x32xf32> -> vector<1x32xf32>
    %368 = arith.addf %367, %142 : vector<1x32xf32>
    %cst_196 = arith.constant dense<0.000000e+00> : vector<1x32xf32>
    %369 = tpu.matmul %331, %138, %cst_196 {dimension_numbers = #tpu.dot_dimension_numbers<[1], [0], [0], [1], [0, 0, 1, 1], [], []>} : vector<1x32xf32>, vector<32x32xf32>, vector<1x32xf32> -> vector<1x32xf32>
    %370 = arith.addf %369, %144 : vector<1x32xf32>
    %cst_197 = arith.constant dense<0.000000e+00> : vector<1x32xf32>
    %371 = tpu.matmul %331, %140, %cst_197 {dimension_numbers = #tpu.dot_dimension_numbers<[1], [0], [0], [1], [0, 0, 1, 1], [], []>} : vector<1x32xf32>, vector<32x32xf32>, vector<1x32xf32> -> vector<1x32xf32>
    %372 = arith.addf %371, %146 : vector<1x32xf32>
    %373 = arith.addf %362, %368 : vector<1x32xf32>
    %374 = arith.negf %373 : vector<1x32xf32>
    %375 = math.exp %374 : vector<1x32xf32>
    %cst_198 = arith.constant 1.000000e+00 : f32
    %376 = vector.broadcast %cst_198 : f32 to vector<1x32xf32>
    %377 = arith.addf %376, %375 : vector<1x32xf32>
    %378 = arith.divf %376, %377 : vector<1x32xf32>
    %379 = arith.addf %364, %370 : vector<1x32xf32>
    %380 = arith.negf %379 : vector<1x32xf32>
    %381 = math.exp %380 : vector<1x32xf32>
    %cst_199 = arith.constant 1.000000e+00 : f32
    %382 = vector.broadcast %cst_199 : f32 to vector<1x32xf32>
    %383 = arith.addf %382, %381 : vector<1x32xf32>
    %384 = arith.divf %382, %383 : vector<1x32xf32>
    %385 = arith.mulf %378, %372 : vector<1x32xf32>
    %386 = arith.addf %366, %385 : vector<1x32xf32>
    %387 = math.tanh %386 : vector<1x32xf32>
    %cst_200 = arith.constant 1.000000e+00 : f32
    %388 = vector.broadcast %cst_200 : f32 to vector<1x32xf32>
    %389 = arith.subf %388, %384 : vector<1x32xf32>
    %390 = arith.mulf %389, %387 : vector<1x32xf32>
    %391 = arith.mulf %384, %331 : vector<1x32xf32>
    %392 = arith.addf %390, %391 : vector<1x32xf32>
    %cst_201 = arith.constant dense<0.000000e+00> : vector<1x32xf32>
    %393 = tpu.matmul %360, %112, %cst_201 {dimension_numbers = #tpu.dot_dimension_numbers<[1], [0], [0], [1], [0, 0, 1, 1], [], []>} : vector<1x32xf32>, vector<32x32xf32>, vector<1x32xf32> -> vector<1x32xf32>
    %394 = arith.addf %393, %118 : vector<1x32xf32>
    %cst_202 = arith.constant dense<0.000000e+00> : vector<1x32xf32>
    %395 = tpu.matmul %360, %114, %cst_202 {dimension_numbers = #tpu.dot_dimension_numbers<[1], [0], [0], [1], [0, 0, 1, 1], [], []>} : vector<1x32xf32>, vector<32x32xf32>, vector<1x32xf32> -> vector<1x32xf32>
    %396 = arith.addf %395, %120 : vector<1x32xf32>
    %cst_203 = arith.constant dense<0.000000e+00> : vector<1x32xf32>
    %397 = tpu.matmul %360, %116, %cst_203 {dimension_numbers = #tpu.dot_dimension_numbers<[1], [0], [0], [1], [0, 0, 1, 1], [], []>} : vector<1x32xf32>, vector<32x32xf32>, vector<1x32xf32> -> vector<1x32xf32>
    %398 = arith.addf %397, %122 : vector<1x32xf32>
    %399 = vector.extract_strided_slice %80 {offsets = [4, 0], sizes = [1, 32], strides = [1, 1]} : vector<8x32xf32> to vector<1x32xf32>
    %400 = arith.addf %399, %394 : vector<1x32xf32>
    %401 = arith.negf %400 : vector<1x32xf32>
    %402 = math.exp %401 : vector<1x32xf32>
    %cst_204 = arith.constant 1.000000e+00 : f32
    %403 = vector.broadcast %cst_204 : f32 to vector<1x32xf32>
    %404 = arith.addf %403, %402 : vector<1x32xf32>
    %405 = arith.divf %403, %404 : vector<1x32xf32>
    %406 = vector.extract_strided_slice %95 {offsets = [4, 0], sizes = [1, 32], strides = [1, 1]} : vector<8x32xf32> to vector<1x32xf32>
    %407 = arith.addf %406, %396 : vector<1x32xf32>
    %408 = arith.negf %407 : vector<1x32xf32>
    %409 = math.exp %408 : vector<1x32xf32>
    %cst_205 = arith.constant 1.000000e+00 : f32
    %410 = vector.broadcast %cst_205 : f32 to vector<1x32xf32>
    %411 = arith.addf %410, %409 : vector<1x32xf32>
    %412 = arith.divf %410, %411 : vector<1x32xf32>
    %413 = vector.extract_strided_slice %110 {offsets = [4, 0], sizes = [1, 32], strides = [1, 1]} : vector<8x32xf32> to vector<1x32xf32>
    %414 = arith.mulf %405, %398 : vector<1x32xf32>
    %415 = arith.addf %413, %414 : vector<1x32xf32>
    %416 = math.tanh %415 : vector<1x32xf32>
    %cst_206 = arith.constant 1.000000e+00 : f32
    %417 = vector.broadcast %cst_206 : f32 to vector<1x32xf32>
    %418 = arith.subf %417, %412 : vector<1x32xf32>
    %419 = arith.mulf %418, %416 : vector<1x32xf32>
    %420 = arith.mulf %412, %360 : vector<1x32xf32>
    %421 = arith.addf %419, %420 : vector<1x32xf32>
    %cst_207 = arith.constant dense<0.000000e+00> : vector<1x32xf32>
    %422 = tpu.matmul %421, %124, %cst_207 {dimension_numbers = #tpu.dot_dimension_numbers<[1], [0], [0], [1], [0, 0, 1, 1], [], []>} : vector<1x32xf32>, vector<32x32xf32>, vector<1x32xf32> -> vector<1x32xf32>
    %423 = arith.addf %422, %130 : vector<1x32xf32>
    %cst_208 = arith.constant dense<0.000000e+00> : vector<1x32xf32>
    %424 = tpu.matmul %421, %126, %cst_208 {dimension_numbers = #tpu.dot_dimension_numbers<[1], [0], [0], [1], [0, 0, 1, 1], [], []>} : vector<1x32xf32>, vector<32x32xf32>, vector<1x32xf32> -> vector<1x32xf32>
    %425 = arith.addf %424, %132 : vector<1x32xf32>
    %cst_209 = arith.constant dense<0.000000e+00> : vector<1x32xf32>
    %426 = tpu.matmul %421, %128, %cst_209 {dimension_numbers = #tpu.dot_dimension_numbers<[1], [0], [0], [1], [0, 0, 1, 1], [], []>} : vector<1x32xf32>, vector<32x32xf32>, vector<1x32xf32> -> vector<1x32xf32>
    %427 = arith.addf %426, %134 : vector<1x32xf32>
    %cst_210 = arith.constant dense<0.000000e+00> : vector<1x32xf32>
    %428 = tpu.matmul %392, %136, %cst_210 {dimension_numbers = #tpu.dot_dimension_numbers<[1], [0], [0], [1], [0, 0, 1, 1], [], []>} : vector<1x32xf32>, vector<32x32xf32>, vector<1x32xf32> -> vector<1x32xf32>
    %429 = arith.addf %428, %142 : vector<1x32xf32>
    %cst_211 = arith.constant dense<0.000000e+00> : vector<1x32xf32>
    %430 = tpu.matmul %392, %138, %cst_211 {dimension_numbers = #tpu.dot_dimension_numbers<[1], [0], [0], [1], [0, 0, 1, 1], [], []>} : vector<1x32xf32>, vector<32x32xf32>, vector<1x32xf32> -> vector<1x32xf32>
    %431 = arith.addf %430, %144 : vector<1x32xf32>
    %cst_212 = arith.constant dense<0.000000e+00> : vector<1x32xf32>
    %432 = tpu.matmul %392, %140, %cst_212 {dimension_numbers = #tpu.dot_dimension_numbers<[1], [0], [0], [1], [0, 0, 1, 1], [], []>} : vector<1x32xf32>, vector<32x32xf32>, vector<1x32xf32> -> vector<1x32xf32>
    %433 = arith.addf %432, %146 : vector<1x32xf32>
    %434 = arith.addf %423, %429 : vector<1x32xf32>
    %435 = arith.negf %434 : vector<1x32xf32>
    %436 = math.exp %435 : vector<1x32xf32>
    %cst_213 = arith.constant 1.000000e+00 : f32
    %437 = vector.broadcast %cst_213 : f32 to vector<1x32xf32>
    %438 = arith.addf %437, %436 : vector<1x32xf32>
    %439 = arith.divf %437, %438 : vector<1x32xf32>
    %440 = arith.addf %425, %431 : vector<1x32xf32>
    %441 = arith.negf %440 : vector<1x32xf32>
    %442 = math.exp %441 : vector<1x32xf32>
    %cst_214 = arith.constant 1.000000e+00 : f32
    %443 = vector.broadcast %cst_214 : f32 to vector<1x32xf32>
    %444 = arith.addf %443, %442 : vector<1x32xf32>
    %445 = arith.divf %443, %444 : vector<1x32xf32>
    %446 = arith.mulf %439, %433 : vector<1x32xf32>
    %447 = arith.addf %427, %446 : vector<1x32xf32>
    %448 = math.tanh %447 : vector<1x32xf32>
    %cst_215 = arith.constant 1.000000e+00 : f32
    %449 = vector.broadcast %cst_215 : f32 to vector<1x32xf32>
    %450 = arith.subf %449, %445 : vector<1x32xf32>
    %451 = arith.mulf %450, %448 : vector<1x32xf32>
    %452 = arith.mulf %445, %392 : vector<1x32xf32>
    %453 = arith.addf %451, %452 : vector<1x32xf32>
    %cst_216 = arith.constant dense<0.000000e+00> : vector<1x32xf32>
    %454 = tpu.matmul %421, %112, %cst_216 {dimension_numbers = #tpu.dot_dimension_numbers<[1], [0], [0], [1], [0, 0, 1, 1], [], []>} : vector<1x32xf32>, vector<32x32xf32>, vector<1x32xf32> -> vector<1x32xf32>
    %455 = arith.addf %454, %118 : vector<1x32xf32>
    %cst_217 = arith.constant dense<0.000000e+00> : vector<1x32xf32>
    %456 = tpu.matmul %421, %114, %cst_217 {dimension_numbers = #tpu.dot_dimension_numbers<[1], [0], [0], [1], [0, 0, 1, 1], [], []>} : vector<1x32xf32>, vector<32x32xf32>, vector<1x32xf32> -> vector<1x32xf32>
    %457 = arith.addf %456, %120 : vector<1x32xf32>
    %cst_218 = arith.constant dense<0.000000e+00> : vector<1x32xf32>
    %458 = tpu.matmul %421, %116, %cst_218 {dimension_numbers = #tpu.dot_dimension_numbers<[1], [0], [0], [1], [0, 0, 1, 1], [], []>} : vector<1x32xf32>, vector<32x32xf32>, vector<1x32xf32> -> vector<1x32xf32>
    %459 = arith.addf %458, %122 : vector<1x32xf32>
    %460 = vector.extract_strided_slice %80 {offsets = [5, 0], sizes = [1, 32], strides = [1, 1]} : vector<8x32xf32> to vector<1x32xf32>
    %461 = arith.addf %460, %455 : vector<1x32xf32>
    %462 = arith.negf %461 : vector<1x32xf32>
    %463 = math.exp %462 : vector<1x32xf32>
    %cst_219 = arith.constant 1.000000e+00 : f32
    %464 = vector.broadcast %cst_219 : f32 to vector<1x32xf32>
    %465 = arith.addf %464, %463 : vector<1x32xf32>
    %466 = arith.divf %464, %465 : vector<1x32xf32>
    %467 = vector.extract_strided_slice %95 {offsets = [5, 0], sizes = [1, 32], strides = [1, 1]} : vector<8x32xf32> to vector<1x32xf32>
    %468 = arith.addf %467, %457 : vector<1x32xf32>
    %469 = arith.negf %468 : vector<1x32xf32>
    %470 = math.exp %469 : vector<1x32xf32>
    %cst_220 = arith.constant 1.000000e+00 : f32
    %471 = vector.broadcast %cst_220 : f32 to vector<1x32xf32>
    %472 = arith.addf %471, %470 : vector<1x32xf32>
    %473 = arith.divf %471, %472 : vector<1x32xf32>
    %474 = vector.extract_strided_slice %110 {offsets = [5, 0], sizes = [1, 32], strides = [1, 1]} : vector<8x32xf32> to vector<1x32xf32>
    %475 = arith.mulf %466, %459 : vector<1x32xf32>
    %476 = arith.addf %474, %475 : vector<1x32xf32>
    %477 = math.tanh %476 : vector<1x32xf32>
    %cst_221 = arith.constant 1.000000e+00 : f32
    %478 = vector.broadcast %cst_221 : f32 to vector<1x32xf32>
    %479 = arith.subf %478, %473 : vector<1x32xf32>
    %480 = arith.mulf %479, %477 : vector<1x32xf32>
    %481 = arith.mulf %473, %421 : vector<1x32xf32>
    %482 = arith.addf %480, %481 : vector<1x32xf32>
    %cst_222 = arith.constant dense<0.000000e+00> : vector<1x32xf32>
    %483 = tpu.matmul %482, %124, %cst_222 {dimension_numbers = #tpu.dot_dimension_numbers<[1], [0], [0], [1], [0, 0, 1, 1], [], []>} : vector<1x32xf32>, vector<32x32xf32>, vector<1x32xf32> -> vector<1x32xf32>
    %484 = arith.addf %483, %130 : vector<1x32xf32>
    %cst_223 = arith.constant dense<0.000000e+00> : vector<1x32xf32>
    %485 = tpu.matmul %482, %126, %cst_223 {dimension_numbers = #tpu.dot_dimension_numbers<[1], [0], [0], [1], [0, 0, 1, 1], [], []>} : vector<1x32xf32>, vector<32x32xf32>, vector<1x32xf32> -> vector<1x32xf32>
    %486 = arith.addf %485, %132 : vector<1x32xf32>
    %cst_224 = arith.constant dense<0.000000e+00> : vector<1x32xf32>
    %487 = tpu.matmul %482, %128, %cst_224 {dimension_numbers = #tpu.dot_dimension_numbers<[1], [0], [0], [1], [0, 0, 1, 1], [], []>} : vector<1x32xf32>, vector<32x32xf32>, vector<1x32xf32> -> vector<1x32xf32>
    %488 = arith.addf %487, %134 : vector<1x32xf32>
    %cst_225 = arith.constant dense<0.000000e+00> : vector<1x32xf32>
    %489 = tpu.matmul %453, %136, %cst_225 {dimension_numbers = #tpu.dot_dimension_numbers<[1], [0], [0], [1], [0, 0, 1, 1], [], []>} : vector<1x32xf32>, vector<32x32xf32>, vector<1x32xf32> -> vector<1x32xf32>
    %490 = arith.addf %489, %142 : vector<1x32xf32>
    %cst_226 = arith.constant dense<0.000000e+00> : vector<1x32xf32>
    %491 = tpu.matmul %453, %138, %cst_226 {dimension_numbers = #tpu.dot_dimension_numbers<[1], [0], [0], [1], [0, 0, 1, 1], [], []>} : vector<1x32xf32>, vector<32x32xf32>, vector<1x32xf32> -> vector<1x32xf32>
    %492 = arith.addf %491, %144 : vector<1x32xf32>
    %cst_227 = arith.constant dense<0.000000e+00> : vector<1x32xf32>
    %493 = tpu.matmul %453, %140, %cst_227 {dimension_numbers = #tpu.dot_dimension_numbers<[1], [0], [0], [1], [0, 0, 1, 1], [], []>} : vector<1x32xf32>, vector<32x32xf32>, vector<1x32xf32> -> vector<1x32xf32>
    %494 = arith.addf %493, %146 : vector<1x32xf32>
    %495 = arith.addf %484, %490 : vector<1x32xf32>
    %496 = arith.negf %495 : vector<1x32xf32>
    %497 = math.exp %496 : vector<1x32xf32>
    %cst_228 = arith.constant 1.000000e+00 : f32
    %498 = vector.broadcast %cst_228 : f32 to vector<1x32xf32>
    %499 = arith.addf %498, %497 : vector<1x32xf32>
    %500 = arith.divf %498, %499 : vector<1x32xf32>
    %501 = arith.addf %486, %492 : vector<1x32xf32>
    %502 = arith.negf %501 : vector<1x32xf32>
    %503 = math.exp %502 : vector<1x32xf32>
    %cst_229 = arith.constant 1.000000e+00 : f32
    %504 = vector.broadcast %cst_229 : f32 to vector<1x32xf32>
    %505 = arith.addf %504, %503 : vector<1x32xf32>
    %506 = arith.divf %504, %505 : vector<1x32xf32>
    %507 = arith.mulf %500, %494 : vector<1x32xf32>
    %508 = arith.addf %488, %507 : vector<1x32xf32>
    %509 = math.tanh %508 : vector<1x32xf32>
    %cst_230 = arith.constant 1.000000e+00 : f32
    %510 = vector.broadcast %cst_230 : f32 to vector<1x32xf32>
    %511 = arith.subf %510, %506 : vector<1x32xf32>
    %512 = arith.mulf %511, %509 : vector<1x32xf32>
    %513 = arith.mulf %506, %453 : vector<1x32xf32>
    %514 = arith.addf %512, %513 : vector<1x32xf32>
    %cst_231 = arith.constant dense<0.000000e+00> : vector<1x32xf32>
    %515 = tpu.matmul %482, %112, %cst_231 {dimension_numbers = #tpu.dot_dimension_numbers<[1], [0], [0], [1], [0, 0, 1, 1], [], []>} : vector<1x32xf32>, vector<32x32xf32>, vector<1x32xf32> -> vector<1x32xf32>
    %516 = arith.addf %515, %118 : vector<1x32xf32>
    %cst_232 = arith.constant dense<0.000000e+00> : vector<1x32xf32>
    %517 = tpu.matmul %482, %114, %cst_232 {dimension_numbers = #tpu.dot_dimension_numbers<[1], [0], [0], [1], [0, 0, 1, 1], [], []>} : vector<1x32xf32>, vector<32x32xf32>, vector<1x32xf32> -> vector<1x32xf32>
    %518 = arith.addf %517, %120 : vector<1x32xf32>
    %cst_233 = arith.constant dense<0.000000e+00> : vector<1x32xf32>
    %519 = tpu.matmul %482, %116, %cst_233 {dimension_numbers = #tpu.dot_dimension_numbers<[1], [0], [0], [1], [0, 0, 1, 1], [], []>} : vector<1x32xf32>, vector<32x32xf32>, vector<1x32xf32> -> vector<1x32xf32>
    %520 = arith.addf %519, %122 : vector<1x32xf32>
    %521 = vector.extract_strided_slice %80 {offsets = [6, 0], sizes = [1, 32], strides = [1, 1]} : vector<8x32xf32> to vector<1x32xf32>
    %522 = arith.addf %521, %516 : vector<1x32xf32>
    %523 = arith.negf %522 : vector<1x32xf32>
    %524 = math.exp %523 : vector<1x32xf32>
    %cst_234 = arith.constant 1.000000e+00 : f32
    %525 = vector.broadcast %cst_234 : f32 to vector<1x32xf32>
    %526 = arith.addf %525, %524 : vector<1x32xf32>
    %527 = arith.divf %525, %526 : vector<1x32xf32>
    %528 = vector.extract_strided_slice %95 {offsets = [6, 0], sizes = [1, 32], strides = [1, 1]} : vector<8x32xf32> to vector<1x32xf32>
    %529 = arith.addf %528, %518 : vector<1x32xf32>
    %530 = arith.negf %529 : vector<1x32xf32>
    %531 = math.exp %530 : vector<1x32xf32>
    %cst_235 = arith.constant 1.000000e+00 : f32
    %532 = vector.broadcast %cst_235 : f32 to vector<1x32xf32>
    %533 = arith.addf %532, %531 : vector<1x32xf32>
    %534 = arith.divf %532, %533 : vector<1x32xf32>
    %535 = vector.extract_strided_slice %110 {offsets = [6, 0], sizes = [1, 32], strides = [1, 1]} : vector<8x32xf32> to vector<1x32xf32>
    %536 = arith.mulf %527, %520 : vector<1x32xf32>
    %537 = arith.addf %535, %536 : vector<1x32xf32>
    %538 = math.tanh %537 : vector<1x32xf32>
    %cst_236 = arith.constant 1.000000e+00 : f32
    %539 = vector.broadcast %cst_236 : f32 to vector<1x32xf32>
    %540 = arith.subf %539, %534 : vector<1x32xf32>
    %541 = arith.mulf %540, %538 : vector<1x32xf32>
    %542 = arith.mulf %534, %482 : vector<1x32xf32>
    %543 = arith.addf %541, %542 : vector<1x32xf32>
    %cst_237 = arith.constant dense<0.000000e+00> : vector<1x32xf32>
    %544 = tpu.matmul %543, %124, %cst_237 {dimension_numbers = #tpu.dot_dimension_numbers<[1], [0], [0], [1], [0, 0, 1, 1], [], []>} : vector<1x32xf32>, vector<32x32xf32>, vector<1x32xf32> -> vector<1x32xf32>
    %545 = arith.addf %544, %130 : vector<1x32xf32>
    %cst_238 = arith.constant dense<0.000000e+00> : vector<1x32xf32>
    %546 = tpu.matmul %543, %126, %cst_238 {dimension_numbers = #tpu.dot_dimension_numbers<[1], [0], [0], [1], [0, 0, 1, 1], [], []>} : vector<1x32xf32>, vector<32x32xf32>, vector<1x32xf32> -> vector<1x32xf32>
    %547 = arith.addf %546, %132 : vector<1x32xf32>
    %cst_239 = arith.constant dense<0.000000e+00> : vector<1x32xf32>
    %548 = tpu.matmul %543, %128, %cst_239 {dimension_numbers = #tpu.dot_dimension_numbers<[1], [0], [0], [1], [0, 0, 1, 1], [], []>} : vector<1x32xf32>, vector<32x32xf32>, vector<1x32xf32> -> vector<1x32xf32>
    %549 = arith.addf %548, %134 : vector<1x32xf32>
    %cst_240 = arith.constant dense<0.000000e+00> : vector<1x32xf32>
    %550 = tpu.matmul %514, %136, %cst_240 {dimension_numbers = #tpu.dot_dimension_numbers<[1], [0], [0], [1], [0, 0, 1, 1], [], []>} : vector<1x32xf32>, vector<32x32xf32>, vector<1x32xf32> -> vector<1x32xf32>
    %551 = arith.addf %550, %142 : vector<1x32xf32>
    %cst_241 = arith.constant dense<0.000000e+00> : vector<1x32xf32>
    %552 = tpu.matmul %514, %138, %cst_241 {dimension_numbers = #tpu.dot_dimension_numbers<[1], [0], [0], [1], [0, 0, 1, 1], [], []>} : vector<1x32xf32>, vector<32x32xf32>, vector<1x32xf32> -> vector<1x32xf32>
    %553 = arith.addf %552, %144 : vector<1x32xf32>
    %cst_242 = arith.constant dense<0.000000e+00> : vector<1x32xf32>
    %554 = tpu.matmul %514, %140, %cst_242 {dimension_numbers = #tpu.dot_dimension_numbers<[1], [0], [0], [1], [0, 0, 1, 1], [], []>} : vector<1x32xf32>, vector<32x32xf32>, vector<1x32xf32> -> vector<1x32xf32>
    %555 = arith.addf %554, %146 : vector<1x32xf32>
    %556 = arith.addf %545, %551 : vector<1x32xf32>
    %557 = arith.negf %556 : vector<1x32xf32>
    %558 = math.exp %557 : vector<1x32xf32>
    %cst_243 = arith.constant 1.000000e+00 : f32
    %559 = vector.broadcast %cst_243 : f32 to vector<1x32xf32>
    %560 = arith.addf %559, %558 : vector<1x32xf32>
    %561 = arith.divf %559, %560 : vector<1x32xf32>
    %562 = arith.addf %547, %553 : vector<1x32xf32>
    %563 = arith.negf %562 : vector<1x32xf32>
    %564 = math.exp %563 : vector<1x32xf32>
    %cst_244 = arith.constant 1.000000e+00 : f32
    %565 = vector.broadcast %cst_244 : f32 to vector<1x32xf32>
    %566 = arith.addf %565, %564 : vector<1x32xf32>
    %567 = arith.divf %565, %566 : vector<1x32xf32>
    %568 = arith.mulf %561, %555 : vector<1x32xf32>
    %569 = arith.addf %549, %568 : vector<1x32xf32>
    %570 = math.tanh %569 : vector<1x32xf32>
    %cst_245 = arith.constant 1.000000e+00 : f32
    %571 = vector.broadcast %cst_245 : f32 to vector<1x32xf32>
    %572 = arith.subf %571, %567 : vector<1x32xf32>
    %573 = arith.mulf %572, %570 : vector<1x32xf32>
    %574 = arith.mulf %567, %514 : vector<1x32xf32>
    %575 = arith.addf %573, %574 : vector<1x32xf32>
    %cst_246 = arith.constant dense<0.000000e+00> : vector<1x32xf32>
    %576 = tpu.matmul %543, %112, %cst_246 {dimension_numbers = #tpu.dot_dimension_numbers<[1], [0], [0], [1], [0, 0, 1, 1], [], []>} : vector<1x32xf32>, vector<32x32xf32>, vector<1x32xf32> -> vector<1x32xf32>
    %577 = arith.addf %576, %118 : vector<1x32xf32>
    %cst_247 = arith.constant dense<0.000000e+00> : vector<1x32xf32>
    %578 = tpu.matmul %543, %114, %cst_247 {dimension_numbers = #tpu.dot_dimension_numbers<[1], [0], [0], [1], [0, 0, 1, 1], [], []>} : vector<1x32xf32>, vector<32x32xf32>, vector<1x32xf32> -> vector<1x32xf32>
    %579 = arith.addf %578, %120 : vector<1x32xf32>
    %cst_248 = arith.constant dense<0.000000e+00> : vector<1x32xf32>
    %580 = tpu.matmul %543, %116, %cst_248 {dimension_numbers = #tpu.dot_dimension_numbers<[1], [0], [0], [1], [0, 0, 1, 1], [], []>} : vector<1x32xf32>, vector<32x32xf32>, vector<1x32xf32> -> vector<1x32xf32>
    %581 = arith.addf %580, %122 : vector<1x32xf32>
    %582 = vector.extract_strided_slice %80 {offsets = [7, 0], sizes = [1, 32], strides = [1, 1]} : vector<8x32xf32> to vector<1x32xf32>
    %583 = arith.addf %582, %577 : vector<1x32xf32>
    %584 = arith.negf %583 : vector<1x32xf32>
    %585 = math.exp %584 : vector<1x32xf32>
    %cst_249 = arith.constant 1.000000e+00 : f32
    %586 = vector.broadcast %cst_249 : f32 to vector<1x32xf32>
    %587 = arith.addf %586, %585 : vector<1x32xf32>
    %588 = arith.divf %586, %587 : vector<1x32xf32>
    %589 = vector.extract_strided_slice %95 {offsets = [7, 0], sizes = [1, 32], strides = [1, 1]} : vector<8x32xf32> to vector<1x32xf32>
    %590 = arith.addf %589, %579 : vector<1x32xf32>
    %591 = arith.negf %590 : vector<1x32xf32>
    %592 = math.exp %591 : vector<1x32xf32>
    %cst_250 = arith.constant 1.000000e+00 : f32
    %593 = vector.broadcast %cst_250 : f32 to vector<1x32xf32>
    %594 = arith.addf %593, %592 : vector<1x32xf32>
    %595 = arith.divf %593, %594 : vector<1x32xf32>
    %596 = vector.extract_strided_slice %110 {offsets = [7, 0], sizes = [1, 32], strides = [1, 1]} : vector<8x32xf32> to vector<1x32xf32>
    %597 = arith.mulf %588, %581 : vector<1x32xf32>
    %598 = arith.addf %596, %597 : vector<1x32xf32>
    %599 = math.tanh %598 : vector<1x32xf32>
    %cst_251 = arith.constant 1.000000e+00 : f32
    %600 = vector.broadcast %cst_251 : f32 to vector<1x32xf32>
    %601 = arith.subf %600, %595 : vector<1x32xf32>
    %602 = arith.mulf %601, %599 : vector<1x32xf32>
    %603 = arith.mulf %595, %543 : vector<1x32xf32>
    %604 = arith.addf %602, %603 : vector<1x32xf32>
    %cst_252 = arith.constant dense<0.000000e+00> : vector<1x32xf32>
    %605 = tpu.matmul %604, %124, %cst_252 {dimension_numbers = #tpu.dot_dimension_numbers<[1], [0], [0], [1], [0, 0, 1, 1], [], []>} : vector<1x32xf32>, vector<32x32xf32>, vector<1x32xf32> -> vector<1x32xf32>
    %606 = arith.addf %605, %130 : vector<1x32xf32>
    %cst_253 = arith.constant dense<0.000000e+00> : vector<1x32xf32>
    %607 = tpu.matmul %604, %126, %cst_253 {dimension_numbers = #tpu.dot_dimension_numbers<[1], [0], [0], [1], [0, 0, 1, 1], [], []>} : vector<1x32xf32>, vector<32x32xf32>, vector<1x32xf32> -> vector<1x32xf32>
    %608 = arith.addf %607, %132 : vector<1x32xf32>
    %cst_254 = arith.constant dense<0.000000e+00> : vector<1x32xf32>
    %609 = tpu.matmul %604, %128, %cst_254 {dimension_numbers = #tpu.dot_dimension_numbers<[1], [0], [0], [1], [0, 0, 1, 1], [], []>} : vector<1x32xf32>, vector<32x32xf32>, vector<1x32xf32> -> vector<1x32xf32>
    %610 = arith.addf %609, %134 : vector<1x32xf32>
    %cst_255 = arith.constant dense<0.000000e+00> : vector<1x32xf32>
    %611 = tpu.matmul %575, %136, %cst_255 {dimension_numbers = #tpu.dot_dimension_numbers<[1], [0], [0], [1], [0, 0, 1, 1], [], []>} : vector<1x32xf32>, vector<32x32xf32>, vector<1x32xf32> -> vector<1x32xf32>
    %612 = arith.addf %611, %142 : vector<1x32xf32>
    %cst_256 = arith.constant dense<0.000000e+00> : vector<1x32xf32>
    %613 = tpu.matmul %575, %138, %cst_256 {dimension_numbers = #tpu.dot_dimension_numbers<[1], [0], [0], [1], [0, 0, 1, 1], [], []>} : vector<1x32xf32>, vector<32x32xf32>, vector<1x32xf32> -> vector<1x32xf32>
    %614 = arith.addf %613, %144 : vector<1x32xf32>
    %cst_257 = arith.constant dense<0.000000e+00> : vector<1x32xf32>
    %615 = tpu.matmul %575, %140, %cst_257 {dimension_numbers = #tpu.dot_dimension_numbers<[1], [0], [0], [1], [0, 0, 1, 1], [], []>} : vector<1x32xf32>, vector<32x32xf32>, vector<1x32xf32> -> vector<1x32xf32>
    %616 = arith.addf %615, %146 : vector<1x32xf32>
    %617 = arith.addf %606, %612 : vector<1x32xf32>
    %618 = arith.negf %617 : vector<1x32xf32>
    %619 = math.exp %618 : vector<1x32xf32>
    %cst_258 = arith.constant 1.000000e+00 : f32
    %620 = vector.broadcast %cst_258 : f32 to vector<1x32xf32>
    %621 = arith.addf %620, %619 : vector<1x32xf32>
    %622 = arith.divf %620, %621 : vector<1x32xf32>
    %623 = arith.addf %608, %614 : vector<1x32xf32>
    %624 = arith.negf %623 : vector<1x32xf32>
    %625 = math.exp %624 : vector<1x32xf32>
    %cst_259 = arith.constant 1.000000e+00 : f32
    %626 = vector.broadcast %cst_259 : f32 to vector<1x32xf32>
    %627 = arith.addf %626, %625 : vector<1x32xf32>
    %628 = arith.divf %626, %627 : vector<1x32xf32>
    %629 = arith.mulf %622, %616 : vector<1x32xf32>
    %630 = arith.addf %610, %629 : vector<1x32xf32>
    %631 = math.tanh %630 : vector<1x32xf32>
    %cst_260 = arith.constant 1.000000e+00 : f32
    %632 = vector.broadcast %cst_260 : f32 to vector<1x32xf32>
    %633 = arith.subf %632, %628 : vector<1x32xf32>
    %634 = arith.mulf %633, %631 : vector<1x32xf32>
    %635 = arith.mulf %628, %575 : vector<1x32xf32>
    %636 = arith.addf %634, %635 : vector<1x32xf32>
    %637 = tpu.concatenate %209, %270, %331, %392, %453, %514, %575, %636 in 0 : vector<1x32xf32>, vector<1x32xf32>, vector<1x32xf32>, vector<1x32xf32>, vector<1x32xf32>, vector<1x32xf32>, vector<1x32xf32>, vector<1x32xf32> -> vector<8x32xf32>
    %c0_261 = arith.constant 0 : index
    %c0_262 = arith.constant 0 : index
    %638 = vector.load %arg23[%c0_261, %c0_262] : memref<32x2048xbf16, #tpu.memory_space<vmem>>, vector<32x2048xbf16>
    %639 = arith.truncf %637 : vector<8x32xf32> to vector<8x32xbf16>
    %cst_263 = arith.constant dense<0.000000e+00> : vector<8x2048xf32>
    %640 = tpu.matmul %639, %638, %cst_263 {dimension_numbers = #tpu.dot_dimension_numbers<[1], [0], [0], [1], [0, 0, 1, 1], [], []>} : vector<8x32xbf16>, vector<32x2048xbf16>, vector<8x2048xf32> -> vector<8x2048xf32>
    %c0_264 = arith.constant 0 : index
    %c0_265 = arith.constant 0 : index
    %641 = vector.load %arg24[%c0_264, %c0_265] : memref<1x2048xf32, #tpu.memory_space<vmem>>, vector<1x2048xf32>
    %642 = vector.broadcast %641 : vector<1x2048xf32> to vector<8x2048xf32>
    %643 = arith.addf %640, %642 : vector<8x2048xf32>
    %cst_266 = arith.constant 0.000000e+00 : f32
    %644 = vector.broadcast %cst_266 : f32 to vector<8x2048xf32>
    %645 = arith.maximumf %643, %644 : vector<8x2048xf32>
    %c0_267 = arith.constant 0 : index
    %c0_268 = arith.constant 0 : index
    %646 = vector.load %arg25[%c0_267, %c0_268] : memref<2048x4xf32, #tpu.memory_space<vmem>>, vector<2048x4xf32>
    %cst_269 = arith.constant dense<0.000000e+00> : vector<8x4xf32>
    %647 = tpu.matmul %645, %646, %cst_269 {dimension_numbers = #tpu.dot_dimension_numbers<[1], [0], [0], [1], [0, 0, 1, 1], [], []>} : vector<8x2048xf32>, vector<2048x4xf32>, vector<8x4xf32> -> vector<8x4xf32>
    %c0_270 = arith.constant 0 : index
    %c0_271 = arith.constant 0 : index
    %648 = vector.load %arg26[%c0_270, %c0_271] : memref<1x4xf32, #tpu.memory_space<vmem>>, vector<1x4xf32>
    %649 = vector.broadcast %648 : vector<1x4xf32> to vector<8x4xf32>
    %650 = arith.addf %647, %649 : vector<8x4xf32>
    %cst_272 = arith.constant 0.000000e+00 : f32
    %651 = vector.broadcast %cst_272 : f32 to vector<8x4xf32>
    %652 = arith.maximumf %650, %651 : vector<8x4xf32>
    %c0_273 = arith.constant 0 : index
    %c0_274 = arith.constant 0 : index
    %653 = vector.load %arg27[%c0_273, %c0_274] : memref<8x4xf32, #tpu.memory_space<vmem>>, vector<8x4xf32>
    tpu.vector_store %arg27[%c0_273, %c0_274], %652 {strides = array<i32>} : memref<8x4xf32, #tpu.memory_space<vmem>>, vector<8x4xf32>,
    return
  }
}

</mosaic_0001>

<llo_original>
// kernel: gru_model_forward.1
$region0: #{gru_model_forward.1}
  #allocation0 [shape = 'u32[]', space=smem, size = 0x4, offset = 0x4, fixed_abs, tag = 'smem constant byte address 0x4 - core index']
  #allocation1 [shape = 'u32[144,128]{1,0:T(1,128)}', space=vmem, size = 0x12000, scoped, tag = 'internal scratch']
  %s0 = inlined_call_operand.vmem [shape: f32[8,500], index: 0, kind: input, shape index: {}]
  %s1 = inlined_call_operand.vmem [shape: f32[8,20], index: 1, kind: input, shape index: {}]
  %s2 = inlined_call_operand.vmem [shape: f32[8,2], index: 2, kind: input, shape index: {}]
  %s3 = inlined_call_operand.vmem [shape: f32[1,8], index: 3, kind: input, shape index: {}]
  %s4 = inlined_call_operand.vmem [shape: f32[1,8], index: 4, kind: input, shape index: {}]
  %s5 = inlined_call_operand.vmem [shape: bf16[500,50], index: 5, kind: input, shape index: {}]
  %s6 = inlined_call_operand.vmem [shape: f32[1,50], index: 6, kind: input, shape index: {}]
  %s7 = inlined_call_operand.vmem [shape: bf16[500,50], index: 7, kind: input, shape index: {}]
  %s8 = inlined_call_operand.vmem [shape: f32[1,50], index: 8, kind: input, shape index: {}]
  %s9 = inlined_call_operand.vmem [shape: f32[20,2], index: 9, kind: input, shape index: {}]
  %s10 = inlined_call_operand.vmem [shape: f32[1,2], index: 10, kind: input, shape index: {}]
  %s11 = inlined_call_operand.vmem [shape: f32[20,2], index: 11, kind: input, shape index: {}]
  %s12 = inlined_call_operand.vmem [shape: f32[1,2], index: 12, kind: input, shape index: {}]
  %s13 = inlined_call_operand.vmem [shape: f32[3,500,32], index: 13, kind: input, shape index: {}]
  %s14 = inlined_call_operand.vmem [shape: f32[3,20,32], index: 14, kind: input, shape index: {}]
  %s15 = inlined_call_operand.vmem [shape: f32[3,2,32], index: 15, kind: input, shape index: {}]
  %s16 = inlined_call_operand.vmem [shape: f32[3,1,32], index: 16, kind: input, shape index: {}]
  %s17 = inlined_call_operand.vmem [shape: f32[3,32,32], index: 17, kind: input, shape index: {}]
  %s18 = inlined_call_operand.vmem [shape: f32[3,1,32], index: 18, kind: input, shape index: {}]
  %s19 = inlined_call_operand.vmem [shape: f32[3,32,32], index: 19, kind: input, shape index: {}]
  %s20 = inlined_call_operand.vmem [shape: f32[3,1,32], index: 20, kind: input, shape index: {}]
  %s21 = inlined_call_operand.vmem [shape: f32[3,32,32], index: 21, kind: input, shape index: {}]
  %s22 = inlined_call_operand.vmem [shape: f32[3,1,32], index: 22, kind: input, shape index: {}]
  %s23 = inlined_call_operand.vmem [shape: bf16[32,2048], index: 23, kind: input, shape index: {}]
  %s24 = inlined_call_operand.vmem [shape: f32[1,2048], index: 24, kind: input, shape index: {}]
  %s25 = inlined_call_operand.vmem [shape: f32[2048,4], index: 25, kind: input, shape index: {}]
  %s26 = inlined_call_operand.vmem [shape: f32[1,4], index: 26, kind: input, shape index: {}]
  %s27 = inlined_call_operand.vmem [shape: f32[8,4], index: 27, kind: output, shape index: {}]
  %s28 = sld [smem:[#allocation0]]
  $region118: #{gru_model_forward.1} parent=0
    _
  %s30 = ssub.s32 1, %s28
  %s31 = scalar_select 0, %s30, %s28
  // Predicated region
  $region2: #{gru_model_forward.1} parent=0 // pred_check
    _
  $region3: #{gru_model_forward.1} parent=0 // pred_check_branch
    %33 = sbr.rel (0) target = $region5
  $region4: #{gru_model_forward.1} parent=0 // pred_region
    _
  $region5: #{gru_model_forward.1} parent=0 // pred_fallthru
    _
  // Predicated region
  $region6: #{gru_model_forward.1} parent=0 // pred_check
    _
  $region7: #{gru_model_forward.1} parent=0 // pred_check_branch
    %35 = sbr.rel (0) target = $region9
  $region8: #{gru_model_forward.1} parent=0 // pred_region
    _
  $region9: #{gru_model_forward.1} parent=0 // pred_fallthru
    _
  // Predicated region
  $region10: #{gru_model_forward.1} parent=0 // pred_check
    _
  $region11: #{gru_model_forward.1} parent=0 // pred_check_branch
    %37 = sbr.rel (0) target = $region13
  $region12: #{gru_model_forward.1} parent=0 // pred_region
    _
  $region13: #{gru_model_forward.1} parent=0 // pred_fallthru
    _
  // Predicated region
  $region14: #{gru_model_forward.1} parent=0 // pred_check
    _
  $region15: #{gru_model_forward.1} parent=0 // pred_check_branch
    %39 = sbr.rel (0) target = $region17
  $region16: #{gru_model_forward.1} parent=0 // pred_region
    _
  $region17: #{gru_model_forward.1} parent=0 // pred_fallthru
    _
  // Predicated region
  $region18: #{gru_model_forward.1} parent=0 // pred_check
    _
  $region19: #{gru_model_forward.1} parent=0 // pred_check_branch
    %41 = sbr.rel (0) target = $region21
  $region20: #{gru_model_forward.1} parent=0 // pred_region
    _
  $region21: #{gru_model_forward.1} parent=0 // pred_fallthru
    _
  // Predicated region
  $region22: #{gru_model_forward.1} parent=0 // pred_check
    _
  $region23: #{gru_model_forward.1} parent=0 // pred_check_branch
    %43 = sbr.rel (0) target = $region25
  $region24: #{gru_model_forward.1} parent=0 // pred_region
    _
  $region25: #{gru_model_forward.1} parent=0 // pred_fallthru
    _
  // Predicated region
  $region26: #{gru_model_forward.1} parent=0 // pred_check
    _
  $region27: #{gru_model_forward.1} parent=0 // pred_check_branch
    %45 = sbr.rel (0) target = $region29
  $region28: #{gru_model_forward.1} parent=0 // pred_region
    _
  $region29: #{gru_model_forward.1} parent=0 // pred_fallthru
    _
  // Predicated region
  $region30: #{gru_model_forward.1} parent=0 // pred_check
    _
  $region31: #{gru_model_forward.1} parent=0 // pred_check_branch
    %47 = sbr.rel (0) target = $region33
  $region32: #{gru_model_forward.1} parent=0 // pred_region
    _
  $region33: #{gru_model_forward.1} parent=0 // pred_fallthru
    _
  // Predicated region
  $region34: #{gru_model_forward.1} parent=0 // pred_check
    _
  $region35: #{gru_model_forward.1} parent=0 // pred_check_branch
    %49 = sbr.rel (0) target = $region37
  $region36: #{gru_model_forward.1} parent=0 // pred_region
    _
  $region37: #{gru_model_forward.1} parent=0 // pred_fallthru
    _
  // Predicated region
  $region38: #{gru_model_forward.1} parent=0 // pred_check
    _
  $region39: #{gru_model_forward.1} parent=0 // pred_check_branch
    %51 = sbr.rel (0) target = $region41
  $region40: #{gru_model_forward.1} parent=0 // pred_region
    _
  $region41: #{gru_model_forward.1} parent=0 // pred_fallthru
    _
  // Predicated region
  $region42: #{gru_model_forward.1} parent=0 // pred_check
    _
  $region43: #{gru_model_forward.1} parent=0 // pred_check_branch
    %53 = sbr.rel (0) target = $region45
  $region44: #{gru_model_forward.1} parent=0 // pred_region
    _
  $region45: #{gru_model_forward.1} parent=0 // pred_fallthru
    _
  // Predicated region
  $region46: #{gru_model_forward.1} parent=0 // pred_check
    _
  $region47: #{gru_model_forward.1} parent=0 // pred_check_branch
    %55 = sbr.rel (0) target = $region49
  $region48: #{gru_model_forward.1} parent=0 // pred_region
    _
  $region49: #{gru_model_forward.1} parent=0 // pred_fallthru
    _
  // Predicated region
  $region50: #{gru_model_forward.1} parent=0 // pred_check
    _
  $region51: #{gru_model_forward.1} parent=0 // pred_check_branch
    %57 = sbr.rel (0) target = $region53
  $region52: #{gru_model_forward.1} parent=0 // pred_region
    _
  $region53: #{gru_model_forward.1} parent=0 // pred_fallthru
    _
  // Predicated region
  $region54: #{gru_model_forward.1} parent=0 // pred_check
    _
  $region55: #{gru_model_forward.1} parent=0 // pred_check_branch
    %59 = sbr.rel (0) target = $region57
  $region56: #{gru_model_forward.1} parent=0 // pred_region
    _
  $region57: #{gru_model_forward.1} parent=0 // pred_fallthru
    _
  // Predicated region
  $region58: #{gru_model_forward.1} parent=0 // pred_check
    _
  $region59: #{gru_model_forward.1} parent=0 // pred_check_branch
    %61 = sbr.rel (0) target = $region61
  $region60: #{gru_model_forward.1} parent=0 // pred_region
    _
  $region61: #{gru_model_forward.1} parent=0 // pred_fallthru
    _
  // Predicated region
  $region62: #{gru_model_forward.1} parent=0 // pred_check
    _
  $region63: #{gru_model_forward.1} parent=0 // pred_check_branch
    %63 = sbr.rel (0) target = $region65
  $region64: #{gru_model_forward.1} parent=0 // pred_region
    _
  $region65: #{gru_model_forward.1} parent=0 // pred_fallthru
    _
  // Predicated region
  $region66: #{gru_model_forward.1} parent=0 // pred_check
    _
  $region67: #{gru_model_forward.1} parent=0 // pred_check_branch
    %65 = sbr.rel (0) target = $region69
  $region68: #{gru_model_forward.1} parent=0 // pred_region
    _
  $region69: #{gru_model_forward.1} parent=0 // pred_fallthru
    _
  // Predicated region
  $region70: #{gru_model_forward.1} parent=0 // pred_check
    _
  $region71: #{gru_model_forward.1} parent=0 // pred_check_branch
    %67 = sbr.rel (0) target = $region73
  $region72: #{gru_model_forward.1} parent=0 // pred_region
    _
  $region73: #{gru_model_forward.1} parent=0 // pred_fallthru
    _
  // Predicated region
  $region74: #{gru_model_forward.1} parent=0 // pred_check
    _
  $region75: #{gru_model_forward.1} parent=0 // pred_check_branch
    %69 = sbr.rel (0) target = $region77
  $region76: #{gru_model_forward.1} parent=0 // pred_region
    _
  $region77: #{gru_model_forward.1} parent=0 // pred_fallthru
    _
  // Predicated region
  $region78: #{gru_model_forward.1} parent=0 // pred_check
    _
  $region79: #{gru_model_forward.1} parent=0 // pred_check_branch
    %71 = sbr.rel (0) target = $region81
  $region80: #{gru_model_forward.1} parent=0 // pred_region
    _
  $region81: #{gru_model_forward.1} parent=0 // pred_fallthru
    _
  // Predicated region
  $region82: #{gru_model_forward.1} parent=0 // pred_check
    _
  $region83: #{gru_model_forward.1} parent=0 // pred_check_branch
    %73 = sbr.rel (0) target = $region85
  $region84: #{gru_model_forward.1} parent=0 // pred_region
    _
  $region85: #{gru_model_forward.1} parent=0 // pred_fallthru
    _
  // Predicated region
  $region86: #{gru_model_forward.1} parent=0 // pred_check
    _
  $region87: #{gru_model_forward.1} parent=0 // pred_check_branch
    %75 = sbr.rel (0) target = $region89
  $region88: #{gru_model_forward.1} parent=0 // pred_region
    _
  $region89: #{gru_model_forward.1} parent=0 // pred_fallthru
    _
  // Predicated region
  $region90: #{gru_model_forward.1} parent=0 // pred_check
    _
  $region91: #{gru_model_forward.1} parent=0 // pred_check_branch
    %77 = sbr.rel (0) target = $region93
  $region92: #{gru_model_forward.1} parent=0 // pred_region
    _
  $region93: #{gru_model_forward.1} parent=0 // pred_fallthru
    _
  // Predicated region
  $region94: #{gru_model_forward.1} parent=0 // pred_check
    _
  $region95: #{gru_model_forward.1} parent=0 // pred_check_branch
    %79 = sbr.rel (0) target = $region97
  $region96: #{gru_model_forward.1} parent=0 // pred_region
    _
  $region97: #{gru_model_forward.1} parent=0 // pred_fallthru
    _
  // Predicated region
  $region98: #{gru_model_forward.1} parent=0 // pred_check
    _
  $region99: #{gru_model_forward.1} parent=0 // pred_check_branch
    %81 = sbr.rel (0) target = $region101
  $region100: #{gru_model_forward.1} parent=0 // pred_region
    _
  $region101: #{gru_model_forward.1} parent=0 // pred_fallthru
    _
  // Predicated region
  $region102: #{gru_model_forward.1} parent=0 // pred_check
    _
  $region103: #{gru_model_forward.1} parent=0 // pred_check_branch
    %83 = sbr.rel (0) target = $region105
  $region104: #{gru_model_forward.1} parent=0 // pred_region
    _
  $region105: #{gru_model_forward.1} parent=0 // pred_fallthru
    _
  // Predicated region
  $region106: #{gru_model_forward.1} parent=0 // pred_check
    _
  $region107: #{gru_model_forward.1} parent=0 // pred_check_branch
    %85 = sbr.rel (0) target = $region109
  $region108: #{gru_model_forward.1} parent=0 // pred_region
    _
  $region109: #{gru_model_forward.1} parent=0 // pred_fallthru
    _
  %v87 = vld [vmem:[%s0] sm:$0xff]
  %v88 = vld [vmem:[%s0 + $0x8] sm:$0xff]
  %v89 = vld [vmem:[%s0 + $0x10] sm:$0xff]
  %v90 = vld [vmem:[%s0 + $0x18] sm:$0xff]
  %v91 = vld [vmem:[%s1] sm:$0xff]
  %v92 = vld [vmem:[%s3] sm:$0x1]
  %v93 = vld [vmem:[%s5] sm:$0xf]
  %v94 = vld [vmem:[%s5 + $0x4] sm:$0xf]
  %v95 = vld [vmem:[%s5 + $0x8] sm:$0xf]
  %v96 = vld [vmem:[%s5 + $0xc] sm:$0xf]
  %v97 = vld [vmem:[%s5 + $0x10] sm:$0xf]
  %v98 = vld [vmem:[%s5 + $0x14] sm:$0xf]
  %v99 = vld [vmem:[%s5 + $0x18] sm:$0xf]
  %v100 = vld [vmem:[%s5 + $0x1c] sm:$0xf]
  %v101 = vld [vmem:[%s5 + $0x20] sm:$0xf]
  %v102 = vld [vmem:[%s5 + $0x24] sm:$0xf]
  %v103 = vld [vmem:[%s5 + $0x28] sm:$0xf]
  %v104 = vld [vmem:[%s5 + $0x2c] sm:$0xf]
  %v105 = vld [vmem:[%s5 + $0x30] sm:$0xf]
  %v106 = vld [vmem:[%s5 + $0x34] sm:$0xf]
  %v107 = vld [vmem:[%s5 + $0x38] sm:$0xf]
  %v108 = vld [vmem:[%s5 + $0x3c] sm:$0xf]
  %v109 = vld [vmem:[%s5 + $0x40] sm:$0xf]
  %v110 = vld [vmem:[%s5 + $0x44] sm:$0xf]
  %v111 = vld [vmem:[%s5 + $0x48] sm:$0xf]
  %v112 = vld [vmem:[%s5 + $0x4c] sm:$0xf]
  %v113 = vld [vmem:[%s5 + $0x50] sm:$0xf]
  %v114 = vld [vmem:[%s5 + $0x54] sm:$0xf]
  %v115 = vld [vmem:[%s5 + $0x58] sm:$0xf]
  %v116 = vld [vmem:[%s5 + $0x5c] sm:$0xf]
  %v117 = vld [vmem:[%s5 + $0x60] sm:$0xf]
  %v118 = vld [vmem:[%s5 + $0x64] sm:$0xf]
  %v119 = vld [vmem:[%s5 + $0x68] sm:$0xf]
  %v120 = vld [vmem:[%s5 + $0x6c] sm:$0xf]
  %v121 = vld [vmem:[%s5 + $0x70] sm:$0xf]
  %v122 = vld [vmem:[%s5 + $0x74] sm:$0xf]
  %v123 = vld [vmem:[%s5 + $0x78] sm:$0xf]
  %v124 = vld [vmem:[%s5 + $0x7c] sm:$0xf]
  %v125 = vld [vmem:[%s5 + $0x80] sm:$0xf]
  %v126 = vld [vmem:[%s5 + $0x84] sm:$0xf]
  %v127 = vld [vmem:[%s5 + $0x88] sm:$0xf]
  %v128 = vld [vmem:[%s5 + $0x8c] sm:$0xf]
  %v129 = vld [vmem:[%s5 + $0x90] sm:$0xf]
  %v130 = vld [vmem:[%s5 + $0x94] sm:$0xf]
  %v131 = vld [vmem:[%s5 + $0x98] sm:$0xf]
  %v132 = vld [vmem:[%s5 + $0x9c] sm:$0xf]
  %v133 = vld [vmem:[%s5 + $0xa0] sm:$0xf]
  %v134 = vld [vmem:[%s5 + $0xa4] sm:$0xf]
  %v135 = vld [vmem:[%s5 + $0xa8] sm:$0xf]
  %v136 = vld [vmem:[%s5 + $0xac] sm:$0xf]
  %v137 = vld [vmem:[%s5 + $0xb0] sm:$0xf]
  %v138 = vld [vmem:[%s5 + $0xb4] sm:$0xf]
  %v139 = vld [vmem:[%s5 + $0xb8] sm:$0xf]
  %v140 = vld [vmem:[%s5 + $0xbc] sm:$0xf]
  %v141 = vld [vmem:[%s5 + $0xc0] sm:$0xf]
  %v142 = vld [vmem:[%s5 + $0xc4] sm:$0xf]
  %v143 = vld [vmem:[%s5 + $0xc8] sm:$0xf]
  %v144 = vld [vmem:[%s5 + $0xcc] sm:$0xf]
  %v145 = vld [vmem:[%s5 + $0xd0] sm:$0xf]
  %v146 = vld [vmem:[%s5 + $0xd4] sm:$0xf]
  %v147 = vld [vmem:[%s5 + $0xd8] sm:$0xf]
  %v148 = vld [vmem:[%s5 + $0xdc] sm:$0xf]
  %v149 = vld [vmem:[%s5 + $0xe0] sm:$0xf]
  %v150 = vld [vmem:[%s5 + $0xe4] sm:$0xf]
  %v151 = vld [vmem:[%s5 + $0xe8] sm:$0xf]
  %v152 = vld [vmem:[%s5 + $0xec] sm:$0xf]
  %v153 = vld [vmem:[%s5 + $0xf0] sm:$0xf]
  %v154 = vld [vmem:[%s5 + $0xf4] sm:$0xf]
  %v155 = vld [vmem:[%s5 + $0xf8] sm:$0x3]
  %v156 = vld [vmem:[%s6] sm:$0x1]
  %v157 = vld [vmem:[%s7] sm:$0xf]
  %v158 = vld [vmem:[%s7 + $0x4] sm:$0xf]
  %v159 = vld [vmem:[%s7 + $0x8] sm:$0xf]
  %v160 = vld [vmem:[%s7 + $0xc] sm:$0xf]
  %v161 = vld [vmem:[%s7 + $0x10] sm:$0xf]
  %v162 = vld [vmem:[%s7 + $0x14] sm:$0xf]
  %v163 = vld [vmem:[%s7 + $0x18] sm:$0xf]
  %v164 = vld [vmem:[%s7 + $0x1c] sm:$0xf]
  %v165 = vld [vmem:[%s7 + $0x20] sm:$0xf]
  %v166 = vld [vmem:[%s7 + $0x24] sm:$0xf]
  %v167 = vld [vmem:[%s7 + $0x28] sm:$0xf]
  %v168 = vld [vmem:[%s7 + $0x2c] sm:$0xf]
  %v169 = vld [vmem:[%s7 + $0x30] sm:$0xf]
  %v170 = vld [vmem:[%s7 + $0x34] sm:$0xf]
  %v171 = vld [vmem:[%s7 + $0x38] sm:$0xf]
  %v172 = vld [vmem:[%s7 + $0x3c] sm:$0xf]
  %v173 = vld [vmem:[%s7 + $0x40] sm:$0xf]
  %v174 = vld [vmem:[%s7 + $0x44] sm:$0xf]
  %v175 = vld [vmem:[%s7 + $0x48] sm:$0xf]
  %v176 = vld [vmem:[%s7 + $0x4c] sm:$0xf]
  %v177 = vld [vmem:[%s7 + $0x50] sm:$0xf]
  %v178 = vld [vmem:[%s7 + $0x54] sm:$0xf]
  %v179 = vld [vmem:[%s7 + $0x58] sm:$0xf]
  %v180 = vld [vmem:[%s7 + $0x5c] sm:$0xf]
  %v181 = vld [vmem:[%s7 + $0x60] sm:$0xf]
  %v182 = vld [vmem:[%s7 + $0x64] sm:$0xf]
  %v183 = vld [vmem:[%s7 + $0x68] sm:$0xf]
  %v184 = vld [vmem:[%s7 + $0x6c] sm:$0xf]
  %v185 = vld [vmem:[%s7 + $0x70] sm:$0xf]
  %v186 = vld [vmem:[%s7 + $0x74] sm:$0xf]
  %v187 = vld [vmem:[%s7 + $0x78] sm:$0xf]
  %v188 = vld [vmem:[%s7 + $0x7c] sm:$0xf]
  %v189 = vld [vmem:[%s7 + $0x80] sm:$0xf]
  %v190 = vld [vmem:[%s7 + $0x84] sm:$0xf]
  %v191 = vld [vmem:[%s7 + $0x88] sm:$0xf]
  %v192 = vld [vmem:[%s7 + $0x8c] sm:$0xf]
  %v193 = vld [vmem:[%s7 + $0x90] sm:$0xf]
  %v194 = vld [vmem:[%s7 + $0x94] sm:$0xf]
  %v195 = vld [vmem:[%s7 + $0x98] sm:$0xf]
  %v196 = vld [vmem:[%s7 + $0x9c] sm:$0xf]
  %v197 = vld [vmem:[%s7 + $0xa0] sm:$0xf]
  %v198 = vld [vmem:[%s7 + $0xa4] sm:$0xf]
  %v199 = vld [vmem:[%s7 + $0xa8] sm:$0xf]
  %v200 = vld [vmem:[%s7 + $0xac] sm:$0xf]
  %v201 = vld [vmem:[%s7 + $0xb0] sm:$0xf]
  %v202 = vld [vmem:[%s7 + $0xb4] sm:$0xf]
  %v203 = vld [vmem:[%s7 + $0xb8] sm:$0xf]
  %v204 = vld [vmem:[%s7 + $0xbc] sm:$0xf]
  %v205 = vld [vmem:[%s7 + $0xc0] sm:$0xf]
  %v206 = vld [vmem:[%s7 + $0xc4] sm:$0xf]
  %v207 = vld [vmem:[%s7 + $0xc8] sm:$0xf]
  %v208 = vld [vmem:[%s7 + $0xcc] sm:$0xf]
  %v209 = vld [vmem:[%s7 + $0xd0] sm:$0xf]
  %v210 = vld [vmem:[%s7 + $0xd4] sm:$0xf]
  %v211 = vld [vmem:[%s7 + $0xd8] sm:$0xf]
  %v212 = vld [vmem:[%s7 + $0xdc] sm:$0xf]
  %v213 = vld [vmem:[%s7 + $0xe0] sm:$0xf]
  %v214 = vld [vmem:[%s7 + $0xe4] sm:$0xf]
  %v215 = vld [vmem:[%s7 + $0xe8] sm:$0xf]
  %v216 = vld [vmem:[%s7 + $0xec] sm:$0xf]
  %v217 = vld [vmem:[%s7 + $0xf0] sm:$0xf]
  %v218 = vld [vmem:[%s7 + $0xf4] sm:$0xf]
  %v219 = vld [vmem:[%s7 + $0xf8] sm:$0x3]
  %v220 = vld [vmem:[%s8] sm:$0x1]
  %v221 = vpack.c.bf16 %v87, %v87
  %v222 = vpack.c.bf16 %v88, %v88
  %v223 = vpack.c.bf16 %v89, %v89
  %v224 = vpack.c.bf16 %v90, %v90
  %v226 = vlaneseq
  %v227 = vshrl.u32 %v226, 7
  %v228 = vsub.s32 0, %v227
  %v229 = vrot.slane %v156, %v228
  %v294 = vunpack.c.l.b16 %v93
  %v295 = vunpack.c.l.b16 %v94
  %v296 = vunpack.c.l.b16 %v95
  %v297 = vunpack.c.l.b16 %v96
  %v298 = vunpack.c.l.b16 %v97
  %v299 = vunpack.c.l.b16 %v98
  %v300 = vunpack.c.l.b16 %v99
  %v301 = vunpack.c.l.b16 %v100
  %v302 = vunpack.c.l.b16 %v101
  %v303 = vunpack.c.l.b16 %v102
  %v304 = vunpack.c.l.b16 %v103
  %v305 = vunpack.c.l.b16 %v104
  %v306 = vunpack.c.l.b16 %v105
  %v307 = vunpack.c.l.b16 %v106
  %v308 = vunpack.c.l.b16 %v107
  %v309 = vunpack.c.l.b16 %v108
  %v310 = vunpack.c.l.b16 %v109
  %v311 = vunpack.c.l.b16 %v110
  %v312 = vunpack.c.l.b16 %v111
  %v313 = vunpack.c.l.b16 %v112
  %v314 = vunpack.c.l.b16 %v113
  %v315 = vunpack.c.l.b16 %v114
  %v316 = vunpack.c.l.b16 %v115
  %v317 = vunpack.c.l.b16 %v116
  %v318 = vunpack.c.l.b16 %v117
  %v319 = vunpack.c.l.b16 %v118
  %v320 = vunpack.c.l.b16 %v119
  %v321 = vunpack.c.l.b16 %v120
  %v322 = vunpack.c.l.b16 %v121
  %v323 = vunpack.c.l.b16 %v122
  %v324 = vunpack.c.l.b16 %v123
  %v325 = vunpack.c.l.b16 %v124
  %v326 = vunpack.c.l.b16 %v125
  %v327 = vunpack.c.l.b16 %v126
  %v328 = vunpack.c.l.b16 %v127
  %v329 = vunpack.c.l.b16 %v128
  %v330 = vunpack.c.l.b16 %v129
  %v331 = vunpack.c.l.b16 %v130
  %v332 = vunpack.c.l.b16 %v131
  %v333 = vunpack.c.l.b16 %v132
  %v334 = vunpack.c.l.b16 %v133
  %v335 = vunpack.c.l.b16 %v134
  %v336 = vunpack.c.l.b16 %v135
  %v337 = vunpack.c.l.b16 %v136
  %v338 = vunpack.c.l.b16 %v137
  %v339 = vunpack.c.l.b16 %v138
  %v340 = vunpack.c.l.b16 %v139
  %v341 = vunpack.c.l.b16 %v140
  %v342 = vunpack.c.l.b16 %v141
  %v343 = vunpack.c.l.b16 %v142
  %v344 = vunpack.c.l.b16 %v143
  %v345 = vunpack.c.l.b16 %v144
  %v346 = vunpack.c.l.b16 %v145
  %v347 = vunpack.c.l.b16 %v146
  %v348 = vunpack.c.l.b16 %v147
  %v349 = vunpack.c.l.b16 %v148
  %v350 = vunpack.c.l.b16 %v149
  %v351 = vunpack.c.l.b16 %v150
  %v352 = vunpack.c.l.b16 %v151
  %v353 = vunpack.c.l.b16 %v152
  %v354 = vunpack.c.l.b16 %v153
  %v355 = vunpack.c.l.b16 %v154
  %v356 = vunpack.c.l.b16 %v155
  %v357 = vpack.c.b16 %v295, %v294
  %v358 = vpack.c.b16 %v297, %v296
  %v359 = vpack.c.b16 %v299, %v298
  %v360 = vpack.c.b16 %v301, %v300
  %v361 = vpack.c.b16 %v303, %v302
  %v362 = vpack.c.b16 %v305, %v304
  %v363 = vpack.c.b16 %v307, %v306
  %v364 = vpack.c.b16 %v309, %v308
  %v365 = vpack.c.b16 %v311, %v310
  %v366 = vpack.c.b16 %v313, %v312
  %v367 = vpack.c.b16 %v315, %v314
  %v368 = vpack.c.b16 %v317, %v316
  %v369 = vpack.c.b16 %v319, %v318
  %v370 = vpack.c.b16 %v321, %v320
  %v371 = vpack.c.b16 %v323, %v322
  %v372 = vpack.c.b16 %v325, %v324
  %v373 = vpack.c.b16 %v327, %v326
  %v374 = vpack.c.b16 %v329, %v328
  %v375 = vpack.c.b16 %v331, %v330
  %v376 = vpack.c.b16 %v333, %v332
  %v377 = vpack.c.b16 %v335, %v334
  %v378 = vpack.c.b16 %v337, %v336
  %v379 = vpack.c.b16 %v339, %v338
  %v380 = vpack.c.b16 %v341, %v340
  %v381 = vpack.c.b16 %v343, %v342
  %v382 = vpack.c.b16 %v345, %v344
  %v383 = vpack.c.b16 %v347, %v346
  %v384 = vpack.c.b16 %v349, %v348
  %v385 = vpack.c.b16 %v351, %v350
  %v386 = vpack.c.b16 %v353, %v352
  %v387 = vpack.c.b16 %v355, %v354
  %v388 = vpack.c.b16 %v356, %v356
  %vm420 = vcmask 949248
  %v422 = vsel %vm420, %v224, 0
  %vm424 = vcmask 1041408
  %v426 = vsel %vm424, %v388, 0
  %428 = vmatprep.subr.bf16.mxu0 0
  %429 = vmatpush1.bf16.msra.mxu0 %v357
  %430 = vmatprep.subr.bf16.mxu0 0
  %431 = vmatpush1.bf16.msra.mxu0 %v358
  %432 = vmatprep.subr.bf16.mxu0 0
  %433 = vmatpush1.bf16.msra.mxu0 %v359
  %434 = vmatprep.subr.bf16.mxu0 0
  %435 = vmatpush1.bf16.msra.mxu0 %v360
  %436 = vmatprep.subr.bf16.mxu0 0
  %437 = vmatpush1.bf16.msra.mxu0 %v361
  %438 = vmatprep.subr.bf16.mxu0 0
  %439 = vmatpush1.bf16.msra.mxu0 %v362
  %440 = vmatprep.subr.bf16.mxu0 0
  %441 = vmatpush1.bf16.msra.mxu0 %v363
  %442 = vmatprep.subr.bf16.mxu0 0
  %443 = vmatpush1.bf16.msra.mxu0 %v364
  %444 = vmatprep.subr.bf16.mxu0 0
  %445 = vmatpush1.bf16.msra.mxu0 %v365
  %446 = vmatprep.subr.bf16.mxu0 0
  %447 = vmatpush1.bf16.msra.mxu0 %v366
  %448 = vmatprep.subr.bf16.mxu0 0
  %449 = vmatpush1.bf16.msra.mxu0 %v367
  %450 = vmatprep.subr.bf16.mxu0 0
  %451 = vmatpush1.bf16.msra.mxu0 %v368
  %452 = vmatprep.subr.bf16.mxu0 0
  %453 = vmatpush1.bf16.msra.mxu0 %v369
  %454 = vmatprep.subr.bf16.mxu0 0
  %455 = vmatpush1.bf16.msra.mxu0 %v370
  %456 = vmatprep.subr.bf16.mxu0 0
  %457 = vmatpush1.bf16.msra.mxu0 %v371
  %458 = vmatprep.subr.bf16.mxu0 0
  %459 = vmatpush1.bf16.msra.mxu0 %v372
  %460 = vmatprep.mubr.bf16.mxu0 %v222
  %461 = vmatmul.mubr.bf16.gmra.mrb[0].mxu0 %v221
  %v462 = vpop.f32.mrb[0].mxu0
  %v463 = vadd.f32 %v229, %v462
  %v464 = vpop.f32.mrb[0].mxu0
  %v465 = vpop.f32.mrb[0].mxu0
  %v466 = vpop.f32.mrb[0].mxu0
  %467 = vdwg.mxu0
  %468 = vmatprep.subr.bf16.mxu0 0
  %469 = vmatpush1.bf16.msra.mxu0 %v373
  %470 = vmatprep.subr.bf16.mxu0 0
  %471 = vmatpush1.bf16.msra.mxu0 %v374
  %472 = vmatprep.subr.bf16.mxu0 0
  %473 = vmatpush1.bf16.msra.mxu0 %v375
  %474 = vmatprep.subr.bf16.mxu0 0
  %475 = vmatpush1.bf16.msra.mxu0 %v376
  %476 = vmatprep.subr.bf16.mxu0 0
  %477 = vmatpush1.bf16.msra.mxu0 %v377
  %478 = vmatprep.subr.bf16.mxu0 0
  %479 = vmatpush1.bf16.msra.mxu0 %v378
  %480 = vmatprep.subr.bf16.mxu0 0
  %481 = vmatpush1.bf16.msra.mxu0 %v379
  %482 = vmatprep.subr.bf16.mxu0 0
  %483 = vmatpush1.bf16.msra.mxu0 %v380
  %484 = vmatprep.subr.bf16.mxu0 0
  %485 = vmatpush1.bf16.msra.mxu0 %v381
  %486 = vmatprep.subr.bf16.mxu0 0
  %487 = vmatpush1.bf16.msra.mxu0 %v382
  %488 = vmatprep.subr.bf16.mxu0 0
  %489 = vmatpush1.bf16.msra.mxu0 %v383
  %490 = vmatprep.subr.bf16.mxu0 0
  %491 = vmatpush1.bf16.msra.mxu0 %v384
  %492 = vmatprep.subr.bf16.mxu0 0
  %493 = vmatpush1.bf16.msra.mxu0 %v385
  %494 = vmatprep.subr.bf16.mxu0 0
  %495 = vmatpush1.bf16.msra.mxu0 %v386
  %496 = vmatprep.subr.bf16.mxu0 0
  %497 = vmatpush1.bf16.msra.mxu0 %v387
  %498 = vmatprep.subr.bf16.mxu0 0
  %499 = vmatpush1.bf16.msra.mxu0 %v426
  %500 = vmatprep.mubr.bf16.mxu0 %v422
  %501 = vmatmul.mubr.bf16.gmra.mrb[0].mxu0 %v223
  %v502 = vpop.f32.mrb[0].mxu0
  %v503 = vadd.f32 %v463, %v502
  %v504 = vpop.f32.mrb[0].mxu0
  %v505 = vpop.f32.mrb[0].mxu0
  %v506 = vpop.f32.mrb[0].mxu0
  %507 = vdwg.mxu0
  %v509 = vlaneseq
  %v510 = vshrl.u32 %v509, 7
  %v511 = vsub.s32 0, %v510
  %v512 = vrot.slane %v220, %v511
  %v577 = vunpack.c.l.b16 %v157
  %v578 = vunpack.c.l.b16 %v158
  %v579 = vunpack.c.l.b16 %v159
  %v580 = vunpack.c.l.b16 %v160
  %v581 = vunpack.c.l.b16 %v161
  %v582 = vunpack.c.l.b16 %v162
  %v583 = vunpack.c.l.b16 %v163
  %v584 = vunpack.c.l.b16 %v164
  %v585 = vunpack.c.l.b16 %v165
  %v586 = vunpack.c.l.b16 %v166
  %v587 = vunpack.c.l.b16 %v167
  %v588 = vunpack.c.l.b16 %v168
  %v589 = vunpack.c.l.b16 %v169
  %v590 = vunpack.c.l.b16 %v170
  %v591 = vunpack.c.l.b16 %v171
  %v592 = vunpack.c.l.b16 %v172
  %v593 = vunpack.c.l.b16 %v173
  %v594 = vunpack.c.l.b16 %v174
  %v595 = vunpack.c.l.b16 %v175
  %v596 = vunpack.c.l.b16 %v176
  %v597 = vunpack.c.l.b16 %v177
  %v598 = vunpack.c.l.b16 %v178
  %v599 = vunpack.c.l.b16 %v179
  %v600 = vunpack.c.l.b16 %v180
  %v601 = vunpack.c.l.b16 %v181
  %v602 = vunpack.c.l.b16 %v182
  %v603 = vunpack.c.l.b16 %v183
  %v604 = vunpack.c.l.b16 %v184
  %v605 = vunpack.c.l.b16 %v185
  %v606 = vunpack.c.l.b16 %v186
  %v607 = vunpack.c.l.b16 %v187
  %v608 = vunpack.c.l.b16 %v188
  %v609 = vunpack.c.l.b16 %v189
  %v610 = vunpack.c.l.b16 %v190
  %v611 = vunpack.c.l.b16 %v191
  %v612 = vunpack.c.l.b16 %v192
  %v613 = vunpack.c.l.b16 %v193
  %v614 = vunpack.c.l.b16 %v194
  %v615 = vunpack.c.l.b16 %v195
  %v616 = vunpack.c.l.b16 %v196
  %v617 = vunpack.c.l.b16 %v197
  %v618 = vunpack.c.l.b16 %v198
  %v619 = vunpack.c.l.b16 %v199
  %v620 = vunpack.c.l.b16 %v200
  %v621 = vunpack.c.l.b16 %v201
  %v622 = vunpack.c.l.b16 %v202
  %v623 = vunpack.c.l.b16 %v203
  %v624 = vunpack.c.l.b16 %v204
  %v625 = vunpack.c.l.b16 %v205
  %v626 = vunpack.c.l.b16 %v206
  %v627 = vunpack.c.l.b16 %v207
  %v628 = vunpack.c.l.b16 %v208
  %v629 = vunpack.c.l.b16 %v209
  %v630 = vunpack.c.l.b16 %v210
  %v631 = vunpack.c.l.b16 %v211
  %v632 = vunpack.c.l.b16 %v212
  %v633 = vunpack.c.l.b16 %v213
  %v634 = vunpack.c.l.b16 %v214
  %v635 = vunpack.c.l.b16 %v215
  %v636 = vunpack.c.l.b16 %v216
  %v637 = vunpack.c.l.b16 %v217
  %v638 = vunpack.c.l.b16 %v218
  %v639 = vunpack.c.l.b16 %v219
  %v640 = vpack.c.b16 %v578, %v577
  %v641 = vpack.c.b16 %v580, %v579
  %v642 = vpack.c.b16 %v582, %v581
  %v643 = vpack.c.b16 %v584, %v583
  %v644 = vpack.c.b16 %v586, %v585
  %v645 = vpack.c.b16 %v588, %v587
  %v646 = vpack.c.b16 %v590, %v589
  %v647 = vpack.c.b16 %v592, %v591
  %v648 = vpack.c.b16 %v594, %v593
  %v649 = vpack.c.b16 %v596, %v595
  %v650 = vpack.c.b16 %v598, %v597
  %v651 = vpack.c.b16 %v600, %v599
  %v652 = vpack.c.b16 %v602, %v601
  %v653 = vpack.c.b16 %v604, %v603
  %v654 = vpack.c.b16 %v606, %v605
  %v655 = vpack.c.b16 %v608, %v607
  %v656 = vpack.c.b16 %v610, %v609
  %v657 = vpack.c.b16 %v612, %v611
  %v658 = vpack.c.b16 %v614, %v613
  %v659 = vpack.c.b16 %v616, %v615
  %v660 = vpack.c.b16 %v618, %v617
  %v661 = vpack.c.b16 %v620, %v619
  %v662 = vpack.c.b16 %v622, %v621
  %v663 = vpack.c.b16 %v624, %v623
  %v664 = vpack.c.b16 %v626, %v625
  %v665 = vpack.c.b16 %v628, %v627
  %v666 = vpack.c.b16 %v630, %v629
  %v667 = vpack.c.b16 %v632, %v631
  %v668 = vpack.c.b16 %v634, %v633
  %v669 = vpack.c.b16 %v636, %v635
  %v670 = vpack.c.b16 %v638, %v637
  %v671 = vpack.c.b16 %v639, %v639
  %v704 = vsel %vm424, %v671, 0
  %706 = vmatprep.subr.bf16.mxu0 0
  %707 = vmatpush1.bf16.msra.mxu0 %v640
  %708 = vmatprep.subr.bf16.mxu0 0
  %709 = vmatpush1.bf16.msra.mxu0 %v641
  %710 = vmatprep.subr.bf16.mxu0 0
  %711 = vmatpush1.bf16.msra.mxu0 %v642
  %712 = vmatprep.subr.bf16.mxu0 0
  %713 = vmatpush1.bf16.msra.mxu0 %v643
  %714 = vmatprep.subr.bf16.mxu0 0
  %715 = vmatpush1.bf16.msra.mxu0 %v644
  %716 = vmatprep.subr.bf16.mxu0 0
  %717 = vmatpush1.bf16.msra.mxu0 %v645
  %718 = vmatprep.subr.bf16.mxu0 0
  %719 = vmatpush1.bf16.msra.mxu0 %v646
  %720 = vmatprep.subr.bf16.mxu0 0
  %721 = vmatpush1.bf16.msra.mxu0 %v647
  %722 = vmatprep.subr.bf16.mxu0 0
  %723 = vmatpush1.bf16.msra.mxu0 %v648
  %724 = vmatprep.subr.bf16.mxu0 0
  %725 = vmatpush1.bf16.msra.mxu0 %v649
  %726 = vmatprep.subr.bf16.mxu0 0
  %727 = vmatpush1.bf16.msra.mxu0 %v650
  %728 = vmatprep.subr.bf16.mxu0 0
  %729 = vmatpush1.bf16.msra.mxu0 %v651
  %730 = vmatprep.subr.bf16.mxu0 0
  %731 = vmatpush1.bf16.msra.mxu0 %v652
  %732 = vmatprep.subr.bf16.mxu0 0
  %733 = vmatpush1.bf16.msra.mxu0 %v653
  %734 = vmatprep.subr.bf16.mxu0 0
  %735 = vmatpush1.bf16.msra.mxu0 %v654
  %736 = vmatprep.subr.bf16.mxu0 0
  %737 = vmatpush1.bf16.msra.mxu0 %v655
  %738 = vmatprep.mubr.bf16.mxu0 %v222
  %739 = vmatmul.mubr.bf16.gmra.mrb[0].mxu0 %v221
  %v740 = vpop.f32.mrb[0].mxu0
  %v741 = vadd.f32 %v512, %v740
  %v742 = vpop.f32.mrb[0].mxu0
  %v743 = vpop.f32.mrb[0].mxu0
  %v744 = vpop.f32.mrb[0].mxu0
  %745 = vdwg.mxu0
  %746 = vmatprep.subr.bf16.mxu0 0
  %747 = vmatpush1.bf16.msra.mxu0 %v656
  %748 = vmatprep.subr.bf16.mxu0 0
  %749 = vmatpush1.bf16.msra.mxu0 %v657
  %750 = vmatprep.subr.bf16.mxu0 0
  %751 = vmatpush1.bf16.msra.mxu0 %v658
  %752 = vmatprep.subr.bf16.mxu0 0
  %753 = vmatpush1.bf16.msra.mxu0 %v659
  %754 = vmatprep.subr.bf16.mxu0 0
  %755 = vmatpush1.bf16.msra.mxu0 %v660
  %756 = vmatprep.subr.bf16.mxu0 0
  %757 = vmatpush1.bf16.msra.mxu0 %v661
  %758 = vmatprep.subr.bf16.mxu0 0
  %759 = vmatpush1.bf16.msra.mxu0 %v662
  %760 = vmatprep.subr.bf16.mxu0 0
  %761 = vmatpush1.bf16.msra.mxu0 %v663
  %762 = vmatprep.subr.bf16.mxu0 0
  %763 = vmatpush1.bf16.msra.mxu0 %v664
  %764 = vmatprep.subr.bf16.mxu0 0
  %765 = vmatpush1.bf16.msra.mxu0 %v665
  %766 = vmatprep.subr.bf16.mxu0 0
  %767 = vmatpush1.bf16.msra.mxu0 %v666
  %768 = vmatprep.subr.bf16.mxu0 0
  %769 = vmatpush1.bf16.msra.mxu0 %v667
  %770 = vmatprep.subr.bf16.mxu0 0
  %771 = vmatpush1.bf16.msra.mxu0 %v668
  %772 = vmatprep.subr.bf16.mxu0 0
  %773 = vmatpush1.bf16.msra.mxu0 %v669
  %774 = vmatprep.subr.bf16.mxu0 0
  %775 = vmatpush1.bf16.msra.mxu0 %v670
  %776 = vmatprep.subr.bf16.mxu0 0
  %777 = vmatpush1.bf16.msra.mxu0 %v704
  %778 = vmatprep.mubr.bf16.mxu0 %v422
  %779 = vmatmul.mubr.bf16.gmra.mrb[0].mxu0 %v223
  %v780 = vpop.f32.mrb[0].mxu0
  %v781 = vadd.f32 %v741, %v780
  %v782 = vpop.f32.mrb[0].mxu0
  %v783 = vpop.f32.mrb[0].mxu0
  %v784 = vpop.f32.mrb[0].mxu0
  %785 = vdwg.mxu0
  %vm786 = vcmask 408576
  %v788 = vsel %vm786, %v503, 0
  %v791 = vsel %vm786, %v781, 0
  %793 = vmatprep.subr.mxu0 0.0
  %794 = vmatpush1.xpose.msra.mxu0 %v791
  %795 = vmatprep.subr.mxu0 0.0
  %796 = vmatpush1.xpose.msra.mxu0 0.0
  %797 = vmatprep.subr.mxu0 0.0
  %798 = vmatpush1.xpose.msra.mxu0 0.0
  %799 = vmatprep.subr.mxu0 0.0
  %800 = vmatpush1.xpose.msra.mxu0 0.0
  %801 = vmatprep.subr.mxu0 0.0
  %802 = vmatpush1.xpose.msra.mxu0 0.0
  %803 = vmatprep.subr.mxu0 0.0
  %804 = vmatpush1.xpose.msra.mxu0 0.0
  %805 = vmatprep.subr.mxu0 0.0
  %806 = vmatpush1.xpose.msra.mxu0 0.0
  %807 = vmatprep.subr.mxu0 0.0
  %808 = vmatpush1.xpose.msra.mxu0 0.0
  %809 = vmatprep.subr.mxu0 0.0
  %810 = vmatpush1.xpose.msra.mxu0 0.0
  %811 = vmatprep.subr.mxu0 0.0
  %812 = vmatpush1.xpose.msra.mxu0 0.0
  %813 = vmatprep.subr.mxu0 0.0
  %814 = vmatpush1.xpose.msra.mxu0 0.0
  %815 = vmatprep.subr.mxu0 0.0
  %816 = vmatpush1.xpose.msra.mxu0 0.0
  %817 = vmatprep.subr.mxu0 0.0
  %818 = vmatpush1.xpose.msra.mxu0 0.0
  %819 = vmatprep.subr.mxu0 0.0
  %820 = vmatpush1.xpose.msra.mxu0 0.0
  %821 = vmatprep.subr.mxu0 0.0
  %822 = vmatpush1.xpose.msra.mxu0 0.0
  %823 = vmatprep.subr.mxu0 0.0
  %824 = vmatpush1.xpose.msra.mxu0 0.0
  %825 = vmatprep.subr.mxu0 0.0
  %826 = vmatpush1.xpose.msra.mxu0 0.0
  %827 = vmatprep.subr.mxu0 0.0
  %828 = vmatpush1.xpose.msra.mxu0 0.0
  %829 = vmatprep.subr.mxu0 0.0
  %830 = vmatpush1.xpose.msra.mxu0 0.0
  %831 = vmatprep.subr.mxu0 0.0
  %832 = vmatpush1.xpose.msra.mxu0 0.0
  %833 = vmatprep.subr.mxu0 0.0
  %834 = vmatpush1.xpose.msra.mxu0 0.0
  %835 = vmatprep.subr.mxu0 0.0
  %836 = vmatpush1.xpose.msra.mxu0 0.0
  %837 = vmatprep.subr.mxu0 0.0
  %838 = vmatpush1.xpose.msra.mxu0 0.0
  %839 = vmatprep.subr.mxu0 0.0
  %840 = vmatpush1.xpose.msra.mxu0 0.0
  %841 = vmatprep.subr.mxu0 0.0
  %842 = vmatpush1.xpose.msra.mxu0 0.0
  %843 = vmatprep.subr.mxu0 0.0
  %844 = vmatpush1.xpose.msra.mxu0 0.0
  %845 = vmatprep.subr.mxu0 0.0
  %846 = vmatpush1.xpose.msra.mxu0 0.0
  %847 = vmatprep.subr.mxu0 0.0
  %848 = vmatpush1.xpose.msra.mxu0 0.0
  %849 = vmatprep.subr.mxu0 0.0
  %850 = vmatpush1.xpose.msra.mxu0 0.0
  %851 = vmatprep.subr.mxu0 0.0
  %852 = vmatpush1.xpose.msra.mxu0 0.0
  %853 = vmatprep.subr.mxu0 0.0
  %854 = vmatpush1.xpose.msra.mxu0 0.0
  %855 = vmatprep.subr.mxu0 0.0
  %856 = vmatpush1.xpose.msra.mxu0 0.0
  %857 = vmatprep.mubr.f32.mxu0 0.0
  %858 = vmatmul.mubr.f32.gmra.mrb[0].mxu0 %v788
  %v859 = vpop.f32.mrb[0].mxu0
  %v860 = vadd.f32 0.0, %v859
  %v861 = vpop.f32.mrb[0].mxu0
  %862 = vdwg.mxu0
  %v863 = vmul.f32 %v860, 0.14142136
  %v864 = vsub.f32 %v92, 1.0
  %v865 = vmul.f32 %v864, 1e+09
  %v867 = vlaneseq
  %v868 = vshrl.u32 %v867, 7
  %v869 = vsub.s32 0, %v868
  %v870 = vrot.slane %v865, %v869
  %v872 = vadd.f32 %v863, %v870
  %vm873 = vcmask 64512
  %v874 = vsel %vm873, %v872, -inf
  %875 = vmax.xlane.f32.xlu0 %v874
  %v876 = vpop.xlane.xlu0 %875
  %v877 = vsub.f32 %v872, %v876
  %v878 = vmul.f32 %v877, 1.442695
  %v879 = vpow.pop %v878
  %v880 = vsel %vm873, %v879, 0.0
  %881 = vadd.xlane.f32.xlu0 %v880
  %v882 = vpop.xlane.xlu0 %881
  %v883 = vrcp.pop %v882
  %v884 = vmul.f32 %v879, %v883
  %v886 = vsel %vm873, %v884, 0
  %888 = vmatprep.subr.mxu0 %v88
  %889 = vmatpush1.msra.mxu0 %v87
  %890 = vmatprep.subr.mxu0 0.0
  %891 = vmatpush1.msra.mxu0 0.0
  %892 = vmatprep.subr.mxu0 0.0
  %893 = vmatpush1.msra.mxu0 0.0
  %894 = vmatprep.subr.mxu0 0.0
  %895 = vmatpush1.msra.mxu0 0.0
  %896 = vmatprep.subr.mxu0 0.0
  %897 = vmatpush1.msra.mxu0 0.0
  %898 = vmatprep.subr.mxu0 0.0
  %899 = vmatpush1.msra.mxu0 0.0
  %900 = vmatprep.subr.mxu0 0.0
  %901 = vmatpush1.msra.mxu0 0.0
  %902 = vmatprep.subr.mxu0 0.0
  %903 = vmatpush1.msra.mxu0 0.0
  %904 = vmatprep.subr.mxu0 0.0
  %905 = vmatpush1.msra.mxu0 0.0
  %906 = vmatprep.subr.mxu0 0.0
  %907 = vmatpush1.msra.mxu0 0.0
  %908 = vmatprep.subr.mxu0 0.0
  %909 = vmatpush1.msra.mxu0 0.0
  %910 = vmatprep.subr.mxu0 0.0
  %911 = vmatpush1.msra.mxu0 0.0
  %912 = vmatprep.subr.mxu0 0.0
  %913 = vmatpush1.msra.mxu0 0.0
  %914 = vmatprep.subr.mxu0 0.0
  %915 = vmatpush1.msra.mxu0 0.0
  %916 = vmatprep.subr.mxu0 0.0
  %917 = vmatpush1.msra.mxu0 0.0
  %918 = vmatprep.subr.mxu0 0.0
  %919 = vmatpush1.msra.mxu0 0.0
  %920 = vmatprep.subr.mxu0 0.0
  %921 = vmatpush1.msra.mxu0 0.0
  %922 = vmatprep.subr.mxu0 0.0
  %923 = vmatpush1.msra.mxu0 0.0
  %924 = vmatprep.subr.mxu0 0.0
  %925 = vmatpush1.msra.mxu0 0.0
  %926 = vmatprep.subr.mxu0 0.0
  %927 = vmatpush1.msra.mxu0 0.0
  %928 = vmatprep.subr.mxu0 0.0
  %929 = vmatpush1.msra.mxu0 0.0
  %930 = vmatprep.subr.mxu0 0.0
  %931 = vmatpush1.msra.mxu0 0.0
  %932 = vmatprep.subr.mxu0 0.0
  %933 = vmatpush1.msra.mxu0 0.0
  %934 = vmatprep.subr.mxu0 0.0
  %935 = vmatpush1.msra.mxu0 0.0
  %936 = vmatprep.subr.mxu0 0.0
  %937 = vmatpush1.msra.mxu0 0.0
  %938 = vmatprep.subr.mxu0 0.0
  %939 = vmatpush1.msra.mxu0 0.0
  %940 = vmatprep.subr.mxu0 0.0
  %941 = vmatpush1.msra.mxu0 0.0
  %942 = vmatprep.subr.mxu0 0.0
  %943 = vmatpush1.msra.mxu0 0.0
  %944 = vmatprep.subr.mxu0 0.0
  %945 = vmatpush1.msra.mxu0 0.0
  %946 = vmatprep.subr.mxu0 0.0
  %947 = vmatpush1.msra.mxu0 0.0
  %948 = vmatprep.subr.mxu0 0.0
  %949 = vmatpush1.msra.mxu0 0.0
  %950 = vmatprep.subr.mxu0 0.0
  %951 = vmatpush1.msra.mxu0 0.0
  %952 = vmatprep.mubr.f32.mxu0 0.0
  %953 = vmatmul.mubr.f32.gmra.mrb[0].mxu0 %v886
  %v954 = vpop.f32.mrb[0].mxu0
  %v955 = vadd.f32 0.0, %v954
  %v956 = vpop.f32.mrb[0].mxu0
  %v957 = vadd.f32 0.0, %v956
  %958 = vdwg.mxu0
  %959 = vmatprep.subr.mxu0 %v90
  %960 = vmatpush1.msra.mxu0 %v89
  %961 = vmatprep.subr.mxu0 0.0
  %962 = vmatpush1.msra.mxu0 0.0
  %963 = vmatprep.subr.mxu0 0.0
  %964 = vmatpush1.msra.mxu0 0.0
  %965 = vmatprep.subr.mxu0 0.0
  %966 = vmatpush1.msra.mxu0 0.0
  %967 = vmatprep.subr.mxu0 0.0
  %968 = vmatpush1.msra.mxu0 0.0
  %969 = vmatprep.subr.mxu0 0.0
  %970 = vmatpush1.msra.mxu0 0.0
  %971 = vmatprep.subr.mxu0 0.0
  %972 = vmatpush1.msra.mxu0 0.0
  %973 = vmatprep.subr.mxu0 0.0
  %974 = vmatpush1.msra.mxu0 0.0
  %975 = vmatprep.subr.mxu0 0.0
  %976 = vmatpush1.msra.mxu0 0.0
  %977 = vmatprep.subr.mxu0 0.0
  %978 = vmatpush1.msra.mxu0 0.0
  %979 = vmatprep.subr.mxu0 0.0
  %980 = vmatpush1.msra.mxu0 0.0
  %981 = vmatprep.subr.mxu0 0.0
  %982 = vmatpush1.msra.mxu0 0.0
  %983 = vmatprep.subr.mxu0 0.0
  %984 = vmatpush1.msra.mxu0 0.0
  %985 = vmatprep.subr.mxu0 0.0
  %986 = vmatpush1.msra.mxu0 0.0
  %987 = vmatprep.subr.mxu0 0.0
  %988 = vmatpush1.msra.mxu0 0.0
  %989 = vmatprep.subr.mxu0 0.0
  %990 = vmatpush1.msra.mxu0 0.0
  %991 = vmatprep.subr.mxu0 0.0
  %992 = vmatpush1.msra.mxu0 0.0
  %993 = vmatprep.subr.mxu0 0.0
  %994 = vmatpush1.msra.mxu0 0.0
  %995 = vmatprep.subr.mxu0 0.0
  %996 = vmatpush1.msra.mxu0 0.0
  %997 = vmatprep.subr.mxu0 0.0
  %998 = vmatpush1.msra.mxu0 0.0
  %999 = vmatprep.subr.mxu0 0.0
  %1000 = vmatpush1.msra.mxu0 0.0
  %1001 = vmatprep.subr.mxu0 0.0
  %1002 = vmatpush1.msra.mxu0 0.0
  %1003 = vmatprep.subr.mxu0 0.0
  %1004 = vmatpush1.msra.mxu0 0.0
  %1005 = vmatprep.subr.mxu0 0.0
  %1006 = vmatpush1.msra.mxu0 0.0
  %1007 = vmatprep.subr.mxu0 0.0
  %1008 = vmatpush1.msra.mxu0 0.0
  %1009 = vmatprep.subr.mxu0 0.0
  %1010 = vmatpush1.msra.mxu0 0.0
  %1011 = vmatprep.subr.mxu0 0.0
  %1012 = vmatpush1.msra.mxu0 0.0
  %1013 = vmatprep.subr.mxu0 0.0
  %1014 = vmatpush1.msra.mxu0 0.0
  %1015 = vmatprep.subr.mxu0 0.0
  %1016 = vmatpush1.msra.mxu0 0.0
  %1017 = vmatprep.subr.mxu0 0.0
  %1018 = vmatpush1.msra.mxu0 0.0
  %1019 = vmatprep.subr.mxu0 0.0
  %1020 = vmatpush1.msra.mxu0 0.0
  %1021 = vmatprep.subr.mxu0 0.0
  %1022 = vmatpush1.msra.mxu0 0.0
  %1023 = vmatprep.mubr.f32.mxu0 0.0
  %1024 = vmatmul.mubr.f32.gmra.mrb[0].mxu0 %v886
  %v1025 = vpop.f32.mrb[0].mxu0
  %v1026 = vadd.f32 0.0, %v1025
  %v1027 = vpop.f32.mrb[0].mxu0
  %v1028 = vadd.f32 0.0, %v1027
  %1029 = vdwg.mxu0
  %v1030 = vld [vmem:[%s4] sm:$0x1]
  %v1031 = vld [vmem:[%s9] sm:$0xff]
  %v1032 = vld [vmem:[%s9 + $0x8] sm:$0xff]
  %v1033 = vld [vmem:[%s9 + $0x10] sm:$0xf]
  %v1034 = vld [vmem:[%s10] sm:$0x1]
  %v1035 = vld [vmem:[%s11] sm:$0xff]
  %v1036 = vld [vmem:[%s11 + $0x8] sm:$0xff]
  %v1037 = vld [vmem:[%s11 + $0x10] sm:$0xf]
  %v1038 = vld [vmem:[%s12] sm:$0x1]
  %v1040 = vlaneseq
  %v1041 = vshrl.u32 %v1040, 7
  %v1042 = vsub.s32 0, %v1041
  %v1043 = vrot.slane %v1034, %v1042
  %vm1045 = vcmask 162816
  %v1047 = vsel %vm1045, %v91, 0
  %vm1049 = vcmask 1043456
  %v1051 = vsel %vm1049, %v1033, 0
  %1053 = vmatprep.subr.mxu0 0.0
  %1054 = vmatpush1.msra.mxu0 %v1031
  %1055 = vmatprep.subr.mxu0 0.0
  %1056 = vmatpush1.msra.mxu0 %v1032
  %1057 = vmatprep.subr.mxu0 0.0
  %1058 = vmatpush1.msra.mxu0 %v1051
  %1059 = vmatprep.subr.mxu0 0.0
  %1060 = vmatpush1.msra.mxu0 0.0
  %1061 = vmatprep.subr.mxu0 0.0
  %1062 = vmatpush1.msra.mxu0 0.0
  %1063 = vmatprep.subr.mxu0 0.0
  %1064 = vmatpush1.msra.mxu0 0.0
  %1065 = vmatprep.subr.mxu0 0.0
  %1066 = vmatpush1.msra.mxu0 0.0
  %1067 = vmatprep.subr.mxu0 0.0
  %1068 = vmatpush1.msra.mxu0 0.0
  %1069 = vmatprep.subr.mxu0 0.0
  %1070 = vmatpush1.msra.mxu0 0.0
  %1071 = vmatprep.subr.mxu0 0.0
  %1072 = vmatpush1.msra.mxu0 0.0
  %1073 = vmatprep.subr.mxu0 0.0
  %1074 = vmatpush1.msra.mxu0 0.0
  %1075 = vmatprep.subr.mxu0 0.0
  %1076 = vmatpush1.msra.mxu0 0.0
  %1077 = vmatprep.subr.mxu0 0.0
  %1078 = vmatpush1.msra.mxu0 0.0
  %1079 = vmatprep.subr.mxu0 0.0
  %1080 = vmatpush1.msra.mxu0 0.0
  %1081 = vmatprep.subr.mxu0 0.0
  %1082 = vmatpush1.msra.mxu0 0.0
  %1083 = vmatprep.subr.mxu0 0.0
  %1084 = vmatpush1.msra.mxu0 0.0
  %1085 = vmatprep.subr.mxu0 0.0
  %1086 = vmatpush1.msra.mxu0 0.0
  %1087 = vmatprep.subr.mxu0 0.0
  %1088 = vmatpush1.msra.mxu0 0.0
  %1089 = vmatprep.subr.mxu0 0.0
  %1090 = vmatpush1.msra.mxu0 0.0
  %1091 = vmatprep.subr.mxu0 0.0
  %1092 = vmatpush1.msra.mxu0 0.0
  %1093 = vmatprep.subr.mxu0 0.0
  %1094 = vmatpush1.msra.mxu0 0.0
  %1095 = vmatprep.subr.mxu0 0.0
  %1096 = vmatpush1.msra.mxu0 0.0
  %1097 = vmatprep.subr.mxu0 0.0
  %1098 = vmatpush1.msra.mxu0 0.0
  %1099 = vmatprep.subr.mxu0 0.0
  %1100 = vmatpush1.msra.mxu0 0.0
  %1101 = vmatprep.subr.mxu0 0.0
  %1102 = vmatpush1.msra.mxu0 0.0
  %1103 = vmatprep.subr.mxu0 0.0
  %1104 = vmatpush1.msra.mxu0 0.0
  %1105 = vmatprep.subr.mxu0 0.0
  %1106 = vmatpush1.msra.mxu0 0.0
  %1107 = vmatprep.subr.mxu0 0.0
  %1108 = vmatpush1.msra.mxu0 0.0
  %1109 = vmatprep.subr.mxu0 0.0
  %1110 = vmatpush1.msra.mxu0 0.0
  %1111 = vmatprep.subr.mxu0 0.0
  %1112 = vmatpush1.msra.mxu0 0.0
  %1113 = vmatprep.subr.mxu0 0.0
  %1114 = vmatpush1.msra.mxu0 0.0
  %1115 = vmatprep.subr.mxu0 0.0
  %1116 = vmatpush1.msra.mxu0 0.0
  %1117 = vmatprep.mubr.f32.mxu0 0.0
  %1118 = vmatmul.mubr.f32.gmra.mrb[0].mxu0 %v1047
  %v1119 = vpop.f32.mrb[0].mxu0
  %v1120 = vadd.f32 %v1043, %v1119
  %v1121 = vpop.f32.mrb[0].mxu0
  %1122 = vdwg.mxu0
  %v1124 = vlaneseq
  %v1125 = vshrl.u32 %v1124, 7
  %v1126 = vsub.s32 0, %v1125
  %v1127 = vrot.slane %v1038, %v1126
  %v1130 = vsel %vm1049, %v1037, 0
  %1132 = vmatprep.subr.mxu0 0.0
  %1133 = vmatpush1.msra.mxu0 %v1035
  %1134 = vmatprep.subr.mxu0 0.0
  %1135 = vmatpush1.msra.mxu0 %v1036
  %1136 = vmatprep.subr.mxu0 0.0
  %1137 = vmatpush1.msra.mxu0 %v1130
  %1138 = vmatprep.subr.mxu0 0.0
  %1139 = vmatpush1.msra.mxu0 0.0
  %1140 = vmatprep.subr.mxu0 0.0
  %1141 = vmatpush1.msra.mxu0 0.0
  %1142 = vmatprep.subr.mxu0 0.0
  %1143 = vmatpush1.msra.mxu0 0.0
  %1144 = vmatprep.subr.mxu0 0.0
  %1145 = vmatpush1.msra.mxu0 0.0
  %1146 = vmatprep.subr.mxu0 0.0
  %1147 = vmatpush1.msra.mxu0 0.0
  %1148 = vmatprep.subr.mxu0 0.0
  %1149 = vmatpush1.msra.mxu0 0.0
  %1150 = vmatprep.subr.mxu0 0.0
  %1151 = vmatpush1.msra.mxu0 0.0
  %1152 = vmatprep.subr.mxu0 0.0
  %1153 = vmatpush1.msra.mxu0 0.0
  %1154 = vmatprep.subr.mxu0 0.0
  %1155 = vmatpush1.msra.mxu0 0.0
  %1156 = vmatprep.subr.mxu0 0.0
  %1157 = vmatpush1.msra.mxu0 0.0
  %1158 = vmatprep.subr.mxu0 0.0
  %1159 = vmatpush1.msra.mxu0 0.0
  %1160 = vmatprep.subr.mxu0 0.0
  %1161 = vmatpush1.msra.mxu0 0.0
  %1162 = vmatprep.subr.mxu0 0.0
  %1163 = vmatpush1.msra.mxu0 0.0
  %1164 = vmatprep.subr.mxu0 0.0
  %1165 = vmatpush1.msra.mxu0 0.0
  %1166 = vmatprep.subr.mxu0 0.0
  %1167 = vmatpush1.msra.mxu0 0.0
  %1168 = vmatprep.subr.mxu0 0.0
  %1169 = vmatpush1.msra.mxu0 0.0
  %1170 = vmatprep.subr.mxu0 0.0
  %1171 = vmatpush1.msra.mxu0 0.0
  %1172 = vmatprep.subr.mxu0 0.0
  %1173 = vmatpush1.msra.mxu0 0.0
  %1174 = vmatprep.subr.mxu0 0.0
  %1175 = vmatpush1.msra.mxu0 0.0
  %1176 = vmatprep.subr.mxu0 0.0
  %1177 = vmatpush1.msra.mxu0 0.0
  %1178 = vmatprep.subr.mxu0 0.0
  %1179 = vmatpush1.msra.mxu0 0.0
  %1180 = vmatprep.subr.mxu0 0.0
  %1181 = vmatpush1.msra.mxu0 0.0
  %1182 = vmatprep.subr.mxu0 0.0
  %1183 = vmatpush1.msra.mxu0 0.0
  %1184 = vmatprep.subr.mxu0 0.0
  %1185 = vmatpush1.msra.mxu0 0.0
  %1186 = vmatprep.subr.mxu0 0.0
  %1187 = vmatpush1.msra.mxu0 0.0
  %1188 = vmatprep.subr.mxu0 0.0
  %1189 = vmatpush1.msra.mxu0 0.0
  %1190 = vmatprep.subr.mxu0 0.0
  %1191 = vmatpush1.msra.mxu0 0.0
  %1192 = vmatprep.subr.mxu0 0.0
  %1193 = vmatpush1.msra.mxu0 0.0
  %1194 = vmatprep.subr.mxu0 0.0
  %1195 = vmatpush1.msra.mxu0 0.0
  %1196 = vmatprep.mubr.f32.mxu0 0.0
  %1197 = vmatmul.mubr.f32.gmra.mrb[0].mxu0 %v1047
  %v1198 = vpop.f32.mrb[0].mxu0
  %v1199 = vadd.f32 %v1127, %v1198
  %v1200 = vpop.f32.mrb[0].mxu0
  %1201 = vdwg.mxu0
  %vm1202 = vcmask 15360
  %v1204 = vsel %vm1202, %v1120, 0
  %v1207 = vsel %vm1202, %v1199, 0
  %1209 = vmatprep.subr.mxu0 0.0
  %1210 = vmatpush1.xpose.msra.mxu0 %v1207
  %1211 = vmatprep.subr.mxu0 0.0
  %1212 = vmatpush1.xpose.msra.mxu0 0.0
  %1213 = vmatprep.subr.mxu0 0.0
  %1214 = vmatpush1.xpose.msra.mxu0 0.0
  %1215 = vmatprep.subr.mxu0 0.0
  %1216 = vmatpush1.xpose.msra.mxu0 0.0
  %1217 = vmatprep.subr.mxu0 0.0
  %1218 = vmatpush1.xpose.msra.mxu0 0.0
  %1219 = vmatprep.subr.mxu0 0.0
  %1220 = vmatpush1.xpose.msra.mxu0 0.0
  %1221 = vmatprep.subr.mxu0 0.0
  %1222 = vmatpush1.xpose.msra.mxu0 0.0
  %1223 = vmatprep.subr.mxu0 0.0
  %1224 = vmatpush1.xpose.msra.mxu0 0.0
  %1225 = vmatprep.subr.mxu0 0.0
  %1226 = vmatpush1.xpose.msra.mxu0 0.0
  %1227 = vmatprep.subr.mxu0 0.0
  %1228 = vmatpush1.xpose.msra.mxu0 0.0
  %1229 = vmatprep.subr.mxu0 0.0
  %1230 = vmatpush1.xpose.msra.mxu0 0.0
  %1231 = vmatprep.subr.mxu0 0.0
  %1232 = vmatpush1.xpose.msra.mxu0 0.0
  %1233 = vmatprep.subr.mxu0 0.0
  %1234 = vmatpush1.xpose.msra.mxu0 0.0
  %1235 = vmatprep.subr.mxu0 0.0
  %1236 = vmatpush1.xpose.msra.mxu0 0.0
  %1237 = vmatprep.subr.mxu0 0.0
  %1238 = vmatpush1.xpose.msra.mxu0 0.0
  %1239 = vmatprep.subr.mxu0 0.0
  %1240 = vmatpush1.xpose.msra.mxu0 0.0
  %1241 = vmatprep.subr.mxu0 0.0
  %1242 = vmatpush1.xpose.msra.mxu0 0.0
  %1243 = vmatprep.subr.mxu0 0.0
  %1244 = vmatpush1.xpose.msra.mxu0 0.0
  %1245 = vmatprep.subr.mxu0 0.0
  %1246 = vmatpush1.xpose.msra.mxu0 0.0
  %1247 = vmatprep.subr.mxu0 0.0
  %1248 = vmatpush1.xpose.msra.mxu0 0.0
  %1249 = vmatprep.subr.mxu0 0.0
  %1250 = vmatpush1.xpose.msra.mxu0 0.0
  %1251 = vmatprep.subr.mxu0 0.0
  %1252 = vmatpush1.xpose.msra.mxu0 0.0
  %1253 = vmatprep.subr.mxu0 0.0
  %1254 = vmatpush1.xpose.msra.mxu0 0.0
  %1255 = vmatprep.subr.mxu0 0.0
  %1256 = vmatpush1.xpose.msra.mxu0 0.0
  %1257 = vmatprep.subr.mxu0 0.0
  %1258 = vmatpush1.xpose.msra.mxu0 0.0
  %1259 = vmatprep.subr.mxu0 0.0
  %1260 = vmatpush1.xpose.msra.mxu0 0.0
  %1261 = vmatprep.subr.mxu0 0.0
  %1262 = vmatpush1.xpose.msra.mxu0 0.0
  %1263 = vmatprep.subr.mxu0 0.0
  %1264 = vmatpush1.xpose.msra.mxu0 0.0
  %1265 = vmatprep.subr.mxu0 0.0
  %1266 = vmatpush1.xpose.msra.mxu0 0.0
  %1267 = vmatprep.subr.mxu0 0.0
  %1268 = vmatpush1.xpose.msra.mxu0 0.0
  %1269 = vmatprep.subr.mxu0 0.0
  %1270 = vmatpush1.xpose.msra.mxu0 0.0
  %1271 = vmatprep.subr.mxu0 0.0
  %1272 = vmatpush1.xpose.msra.mxu0 0.0
  %1273 = vmatprep.mubr.f32.mxu0 0.0
  %1274 = vmatmul.mubr.f32.gmra.mrb[0].mxu0 %v1204
  %v1275 = vpop.f32.mrb[0].mxu0
  %v1276 = vadd.f32 0.0, %v1275
  %v1277 = vpop.f32.mrb[0].mxu0
  %1278 = vdwg.mxu0
  %v1279 = vmul.f32 %v1276, 0.70710677
  %v1280 = vsub.f32 %v1030, 1.0
  %v1281 = vmul.f32 %v1280, 1e+09
  %v1283 = vlaneseq
  %v1284 = vshrl.u32 %v1283, 7
  %v1285 = vsub.s32 0, %v1284
  %v1286 = vrot.slane %v1281, %v1285
  %v1288 = vadd.f32 %v1279, %v1286
  %v1289 = vsel %vm873, %v1288, -inf
  %1290 = vmax.xlane.f32.xlu0 %v1289
  %v1291 = vpop.xlane.xlu0 %1290
  %v1292 = vsub.f32 %v1288, %v1291
  %v1293 = vmul.f32 %v1292, 1.442695
  %v1294 = vpow.pop %v1293
  %v1295 = vsel %vm873, %v1294, 0.0
  %1296 = vadd.xlane.f32.xlu0 %v1295
  %v1297 = vpop.xlane.xlu0 %1296
  %v1298 = vrcp.pop %v1297
  %v1299 = vmul.f32 %v1294, %v1298
  %v1301 = vsel %vm873, %v1299, 0
  %1303 = vmatprep.subr.mxu0 0.0
  %1304 = vmatpush1.msra.mxu0 %v91
  %1305 = vmatprep.subr.mxu0 0.0
  %1306 = vmatpush1.msra.mxu0 0.0
  %1307 = vmatprep.subr.mxu0 0.0
  %1308 = vmatpush1.msra.mxu0 0.0
  %1309 = vmatprep.subr.mxu0 0.0
  %1310 = vmatpush1.msra.mxu0 0.0
  %1311 = vmatprep.subr.mxu0 0.0
  %1312 = vmatpush1.msra.mxu0 0.0
  %1313 = vmatprep.subr.mxu0 0.0
  %1314 = vmatpush1.msra.mxu0 0.0
  %1315 = vmatprep.subr.mxu0 0.0
  %1316 = vmatpush1.msra.mxu0 0.0
  %1317 = vmatprep.subr.mxu0 0.0
  %1318 = vmatpush1.msra.mxu0 0.0
  %1319 = vmatprep.subr.mxu0 0.0
  %1320 = vmatpush1.msra.mxu0 0.0
  %1321 = vmatprep.subr.mxu0 0.0
  %1322 = vmatpush1.msra.mxu0 0.0
  %1323 = vmatprep.subr.mxu0 0.0
  %1324 = vmatpush1.msra.mxu0 0.0
  %1325 = vmatprep.subr.mxu0 0.0
  %1326 = vmatpush1.msra.mxu0 0.0
  %1327 = vmatprep.subr.mxu0 0.0
  %1328 = vmatpush1.msra.mxu0 0.0
  %1329 = vmatprep.subr.mxu0 0.0
  %1330 = vmatpush1.msra.mxu0 0.0
  %1331 = vmatprep.subr.mxu0 0.0
  %1332 = vmatpush1.msra.mxu0 0.0
  %1333 = vmatprep.subr.mxu0 0.0
  %1334 = vmatpush1.msra.mxu0 0.0
  %1335 = vmatprep.subr.mxu0 0.0
  %1336 = vmatpush1.msra.mxu0 0.0
  %1337 = vmatprep.subr.mxu0 0.0
  %1338 = vmatpush1.msra.mxu0 0.0
  %1339 = vmatprep.subr.mxu0 0.0
  %1340 = vmatpush1.msra.mxu0 0.0
  %1341 = vmatprep.subr.mxu0 0.0
  %1342 = vmatpush1.msra.mxu0 0.0
  %1343 = vmatprep.subr.mxu0 0.0
  %1344 = vmatpush1.msra.mxu0 0.0
  %1345 = vmatprep.subr.mxu0 0.0
  %1346 = vmatpush1.msra.mxu0 0.0
  %1347 = vmatprep.subr.mxu0 0.0
  %1348 = vmatpush1.msra.mxu0 0.0
  %1349 = vmatprep.subr.mxu0 0.0
  %1350 = vmatpush1.msra.mxu0 0.0
  %1351 = vmatprep.subr.mxu0 0.0
  %1352 = vmatpush1.msra.mxu0 0.0
  %1353 = vmatprep.subr.mxu0 0.0
  %1354 = vmatpush1.msra.mxu0 0.0
  %1355 = vmatprep.subr.mxu0 0.0
  %1356 = vmatpush1.msra.mxu0 0.0
  %1357 = vmatprep.subr.mxu0 0.0
  %1358 = vmatpush1.msra.mxu0 0.0
  %1359 = vmatprep.subr.mxu0 0.0
  %1360 = vmatpush1.msra.mxu0 0.0
  %1361 = vmatprep.subr.mxu0 0.0
  %1362 = vmatpush1.msra.mxu0 0.0
  %1363 = vmatprep.subr.mxu0 0.0
  %1364 = vmatpush1.msra.mxu0 0.0
  %1365 = vmatprep.subr.mxu0 0.0
  %1366 = vmatpush1.msra.mxu0 0.0
  %1367 = vmatprep.mubr.f32.mxu0 0.0
  %1368 = vmatmul.mubr.f32.gmra.mrb[0].mxu0 %v1301
  %v1369 = vpop.f32.mrb[0].mxu0
  %v1370 = vadd.f32 0.0, %v1369
  %v1371 = vpop.f32.mrb[0].mxu0
  %1372 = vdwg.mxu0
  %v1373 = vld [vmem:[%s2] sm:$0xff]
  %v1374 = vld [vmem:[%s13] sm:$0xff]
  %v1375 = vld [vmem:[%s13 + $0x8] sm:$0xff]
  %v1376 = vld [vmem:[%s13 + $0x10] sm:$0xff]
  %v1377 = vld [vmem:[%s13 + $0x18] sm:$0xff]
  %v1378 = vld [vmem:[%s13 + $0x20] sm:$0xff]
  %v1379 = vld [vmem:[%s13 + $0x28] sm:$0xff]
  %v1380 = vld [vmem:[%s13 + $0x30] sm:$0xff]
  %v1381 = vld [vmem:[%s13 + $0x38] sm:$0xff]
  %v1382 = vld [vmem:[%s13 + $0x40] sm:$0xff]
  %v1383 = vld [vmem:[%s13 + $0x48] sm:$0xff]
  %v1384 = vld [vmem:[%s13 + $0x50] sm:$0xff]
  %v1385 = vld [vmem:[%s13 + $0x58] sm:$0xff]
  %v1386 = vld [vmem:[%s13 + $0x60] sm:$0xff]
  %v1387 = vld [vmem:[%s13 + $0x68] sm:$0xff]
  %v1388 = vld [vmem:[%s13 + $0x70] sm:$0xff]
  %v1389 = vld [vmem:[%s13 + $0x78] sm:$0xff]
  %v1390 = vld [vmem:[%s13 + $0x80] sm:$0xff]
  %v1391 = vld [vmem:[%s13 + $0x88] sm:$0xff]
  %v1392 = vld [vmem:[%s13 + $0x90] sm:$0xff]
  %v1393 = vld [vmem:[%s13 + $0x98] sm:$0xff]
  %v1394 = vld [vmem:[%s13 + $0xa0] sm:$0xff]
  %v1395 = vld [vmem:[%s13 + $0xa8] sm:$0xff]
  %v1396 = vld [vmem:[%s13 + $0xb0] sm:$0xff]
  %v1397 = vld [vmem:[%s13 + $0xb8] sm:$0xff]
  %v1398 = vld [vmem:[%s13 + $0xc0] sm:$0xff]
  %v1399 = vld [vmem:[%s13 + $0xc8] sm:$0xff]
  %v1400 = vld [vmem:[%s13 + $0xd0] sm:$0xff]
  %v1401 = vld [vmem:[%s13 + $0xd8] sm:$0xff]
  %v1402 = vld [vmem:[%s13 + $0xe0] sm:$0xff]
  %v1403 = vld [vmem:[%s13 + $0xe8] sm:$0xff]
  %v1404 = vld [vmem:[%s13 + $0xf0] sm:$0xff]
  %v1405 = vld [vmem:[%s13 + $0xf8] sm:$0xff]
  %v1406 = vld [vmem:[%s13 + $0x100] sm:$0xff]
  %v1407 = vld [vmem:[%s13 + $0x108] sm:$0xff]
  %v1408 = vld [vmem:[%s13 + $0x110] sm:$0xff]
  %v1409 = vld [vmem:[%s13 + $0x118] sm:$0xff]
  %v1410 = vld [vmem:[%s13 + $0x120] sm:$0xff]
  %v1411 = vld [vmem:[%s13 + $0x128] sm:$0xff]
  %v1412 = vld [vmem:[%s13 + $0x130] sm:$0xff]
  %v1413 = vld [vmem:[%s13 + $0x138] sm:$0xff]
  %v1414 = vld [vmem:[%s13 + $0x140] sm:$0xff]
  %v1415 = vld [vmem:[%s13 + $0x148] sm:$0xff]
  %v1416 = vld [vmem:[%s13 + $0x150] sm:$0xff]
  %v1417 = vld [vmem:[%s13 + $0x158] sm:$0xff]
  %v1418 = vld [vmem:[%s13 + $0x160] sm:$0xff]
  %v1419 = vld [vmem:[%s13 + $0x168] sm:$0xff]
  %v1420 = vld [vmem:[%s13 + $0x170] sm:$0xff]
  %v1421 = vld [vmem:[%s13 + $0x178] sm:$0xff]
  %v1422 = vld [vmem:[%s13 + $0x180] sm:$0xff]
  %v1423 = vld [vmem:[%s13 + $0x188] sm:$0xff]
  %v1424 = vld [vmem:[%s13 + $0x190] sm:$0xff]
  %v1425 = vld [vmem:[%s13 + $0x198] sm:$0xff]
  %v1426 = vld [vmem:[%s13 + $0x1a0] sm:$0xff]
  %v1427 = vld [vmem:[%s13 + $0x1a8] sm:$0xff]
  %v1428 = vld [vmem:[%s13 + $0x1b0] sm:$0xff]
  %v1429 = vld [vmem:[%s13 + $0x1b8] sm:$0xff]
  %v1430 = vld [vmem:[%s13 + $0x1c0] sm:$0xff]
  %v1431 = vld [vmem:[%s13 + $0x1c8] sm:$0xff]
  %v1432 = vld [vmem:[%s13 + $0x1d0] sm:$0xff]
  %v1433 = vld [vmem:[%s13 + $0x1d8] sm:$0xff]
  %v1434 = vld [vmem:[%s13 + $0x1e0] sm:$0xff]
  %v1435 = vld [vmem:[%s13 + $0x1e8] sm:$0xff]
  %v1436 = vld [vmem:[%s13 + $0x1f0] sm:$0xf]
  %v1437 = vld [vmem:[%s14] sm:$0xff]
  %v1438 = vld [vmem:[%s14 + $0x8] sm:$0xff]
  %v1439 = vld [vmem:[%s14 + $0x10] sm:$0xf]
  %v1441 = vsel %vm1045, %v1370, 0
  %v1444 = vsel %vm1049, %v1439, 0
  %1446 = vmatprep.subr.mxu0 0.0
  %1447 = vmatpush1.msra.mxu0 %v1437
  %1448 = vmatprep.subr.mxu0 0.0
  %1449 = vmatpush1.msra.mxu0 %v1438
  %1450 = vmatprep.subr.mxu0 0.0
  %1451 = vmatpush1.msra.mxu0 %v1444
  %1452 = vmatprep.subr.mxu0 0.0
  %1453 = vmatpush1.msra.mxu0 0.0
  %1454 = vmatprep.subr.mxu0 0.0
  %1455 = vmatpush1.msra.mxu0 0.0
  %1456 = vmatprep.subr.mxu0 0.0
  %1457 = vmatpush1.msra.mxu0 0.0
  %1458 = vmatprep.subr.mxu0 0.0
  %1459 = vmatpush1.msra.mxu0 0.0
  %1460 = vmatprep.subr.mxu0 0.0
  %1461 = vmatpush1.msra.mxu0 0.0
  %1462 = vmatprep.subr.mxu0 0.0
  %1463 = vmatpush1.msra.mxu0 0.0
  %1464 = vmatprep.subr.mxu0 0.0
  %1465 = vmatpush1.msra.mxu0 0.0
  %1466 = vmatprep.subr.mxu0 0.0
  %1467 = vmatpush1.msra.mxu0 0.0
  %1468 = vmatprep.subr.mxu0 0.0
  %1469 = vmatpush1.msra.mxu0 0.0
  %1470 = vmatprep.subr.mxu0 0.0
  %1471 = vmatpush1.msra.mxu0 0.0
  %1472 = vmatprep.subr.mxu0 0.0
  %1473 = vmatpush1.msra.mxu0 0.0
  %1474 = vmatprep.subr.mxu0 0.0
  %1475 = vmatpush1.msra.mxu0 0.0
  %1476 = vmatprep.subr.mxu0 0.0
  %1477 = vmatpush1.msra.mxu0 0.0
  %1478 = vmatprep.subr.mxu0 0.0
  %1479 = vmatpush1.msra.mxu0 0.0
  %1480 = vmatprep.subr.mxu0 0.0
  %1481 = vmatpush1.msra.mxu0 0.0
  %1482 = vmatprep.subr.mxu0 0.0
  %1483 = vmatpush1.msra.mxu0 0.0
  %1484 = vmatprep.subr.mxu0 0.0
  %1485 = vmatpush1.msra.mxu0 0.0
  %1486 = vmatprep.subr.mxu0 0.0
  %1487 = vmatpush1.msra.mxu0 0.0
  %1488 = vmatprep.subr.mxu0 0.0
  %1489 = vmatpush1.msra.mxu0 0.0
  %1490 = vmatprep.subr.mxu0 0.0
  %1491 = vmatpush1.msra.mxu0 0.0
  %1492 = vmatprep.subr.mxu0 0.0
  %1493 = vmatpush1.msra.mxu0 0.0
  %1494 = vmatprep.subr.mxu0 0.0
  %1495 = vmatpush1.msra.mxu0 0.0
  %1496 = vmatprep.subr.mxu0 0.0
  %1497 = vmatpush1.msra.mxu0 0.0
  %1498 = vmatprep.subr.mxu0 0.0
  %1499 = vmatpush1.msra.mxu0 0.0
  %1500 = vmatprep.subr.mxu0 0.0
  %1501 = vmatpush1.msra.mxu0 0.0
  %1502 = vmatprep.subr.mxu0 0.0
  %1503 = vmatpush1.msra.mxu0 0.0
  %1504 = vmatprep.subr.mxu0 0.0
  %1505 = vmatpush1.msra.mxu0 0.0
  %1506 = vmatprep.subr.mxu0 0.0
  %1507 = vmatpush1.msra.mxu0 0.0
  %1508 = vmatprep.subr.mxu0 0.0
  %1509 = vmatpush1.msra.mxu0 0.0
  %1510 = vmatprep.mubr.f32.mxu0 0.0
  %1511 = vmatmul.mubr.f32.gmra.mrb[0].mxu0 %v1441
  %v1512 = vpop.f32.mrb[0].mxu0
  %v1513 = vadd.f32 0.0, %v1512
  %v1514 = vpop.f32.mrb[0].mxu0
  %1515 = vdwg.mxu0
  %v1517 = vsel %vm420, %v1028, 0
  %v1520 = vsel %vm1049, %v1436, 0
  %1522 = vmatprep.subr.mxu0 0.0
  %1523 = vmatpush1.msra.mxu0 %v1374
  %1524 = vmatprep.subr.mxu0 0.0
  %1525 = vmatpush1.msra.mxu0 %v1375
  %1526 = vmatprep.subr.mxu0 0.0
  %1527 = vmatpush1.msra.mxu0 %v1376
  %1528 = vmatprep.subr.mxu0 0.0
  %1529 = vmatpush1.msra.mxu0 %v1377
  %1530 = vmatprep.subr.mxu0 0.0
  %1531 = vmatpush1.msra.mxu0 %v1378
  %1532 = vmatprep.subr.mxu0 0.0
  %1533 = vmatpush1.msra.mxu0 %v1379
  %1534 = vmatprep.subr.mxu0 0.0
  %1535 = vmatpush1.msra.mxu0 %v1380
  %1536 = vmatprep.subr.mxu0 0.0
  %1537 = vmatpush1.msra.mxu0 %v1381
  %1538 = vmatprep.subr.mxu0 0.0
  %1539 = vmatpush1.msra.mxu0 %v1382
  %1540 = vmatprep.subr.mxu0 0.0
  %1541 = vmatpush1.msra.mxu0 %v1383
  %1542 = vmatprep.subr.mxu0 0.0
  %1543 = vmatpush1.msra.mxu0 %v1384
  %1544 = vmatprep.subr.mxu0 0.0
  %1545 = vmatpush1.msra.mxu0 %v1385
  %1546 = vmatprep.subr.mxu0 0.0
  %1547 = vmatpush1.msra.mxu0 %v1386
  %1548 = vmatprep.subr.mxu0 0.0
  %1549 = vmatpush1.msra.mxu0 %v1387
  %1550 = vmatprep.subr.mxu0 0.0
  %1551 = vmatpush1.msra.mxu0 %v1388
  %1552 = vmatprep.subr.mxu0 0.0
  %1553 = vmatpush1.msra.mxu0 %v1389
  %1554 = vmatprep.subr.mxu0 0.0
  %1555 = vmatpush1.msra.mxu0 %v1390
  %1556 = vmatprep.subr.mxu0 0.0
  %1557 = vmatpush1.msra.mxu0 %v1391
  %1558 = vmatprep.subr.mxu0 0.0
  %1559 = vmatpush1.msra.mxu0 %v1392
  %1560 = vmatprep.subr.mxu0 0.0
  %1561 = vmatpush1.msra.mxu0 %v1393
  %1562 = vmatprep.subr.mxu0 0.0
  %1563 = vmatpush1.msra.mxu0 %v1394
  %1564 = vmatprep.subr.mxu0 0.0
  %1565 = vmatpush1.msra.mxu0 %v1395
  %1566 = vmatprep.subr.mxu0 0.0
  %1567 = vmatpush1.msra.mxu0 %v1396
  %1568 = vmatprep.subr.mxu0 0.0
  %1569 = vmatpush1.msra.mxu0 %v1397
  %1570 = vmatprep.subr.mxu0 0.0
  %1571 = vmatpush1.msra.mxu0 %v1398
  %1572 = vmatprep.subr.mxu0 0.0
  %1573 = vmatpush1.msra.mxu0 %v1399
  %1574 = vmatprep.subr.mxu0 0.0
  %1575 = vmatpush1.msra.mxu0 %v1400
  %1576 = vmatprep.subr.mxu0 0.0
  %1577 = vmatpush1.msra.mxu0 %v1401
  %1578 = vmatprep.subr.mxu0 0.0
  %1579 = vmatpush1.msra.mxu0 %v1402
  %1580 = vmatprep.subr.mxu0 0.0
  %1581 = vmatpush1.msra.mxu0 %v1403
  %1582 = vmatprep.subr.mxu0 0.0
  %1583 = vmatpush1.msra.mxu0 %v1404
  %1584 = vmatprep.subr.mxu0 0.0
  %1585 = vmatpush1.msra.mxu0 %v1405
  %1586 = vmatprep.mubr.f32.mxu0 %v957
  %1587 = vmatmul.mubr.f32.gmra.mrb[0].mxu0 %v955
  %v1588 = vpop.f32.mrb[0].mxu0
  %v1589 = vadd.f32 %v1513, %v1588
  %v1590 = vpop.f32.mrb[0].mxu0
  %1591 = vdwg.mxu0
  %1592 = vmatprep.subr.mxu0 0.0
  %1593 = vmatpush1.msra.mxu0 %v1406
  %1594 = vmatprep.subr.mxu0 0.0
  %1595 = vmatpush1.msra.mxu0 %v1407
  %1596 = vmatprep.subr.mxu0 0.0
  %1597 = vmatpush1.msra.mxu0 %v1408
  %1598 = vmatprep.subr.mxu0 0.0
  %1599 = vmatpush1.msra.mxu0 %v1409
  %1600 = vmatprep.subr.mxu0 0.0
  %1601 = vmatpush1.msra.mxu0 %v1410
  %1602 = vmatprep.subr.mxu0 0.0
  %1603 = vmatpush1.msra.mxu0 %v1411
  %1604 = vmatprep.subr.mxu0 0.0
  %1605 = vmatpush1.msra.mxu0 %v1412
  %1606 = vmatprep.subr.mxu0 0.0
  %1607 = vmatpush1.msra.mxu0 %v1413
  %1608 = vmatprep.subr.mxu0 0.0
  %1609 = vmatpush1.msra.mxu0 %v1414
  %1610 = vmatprep.subr.mxu0 0.0
  %1611 = vmatpush1.msra.mxu0 %v1415
  %1612 = vmatprep.subr.mxu0 0.0
  %1613 = vmatpush1.msra.mxu0 %v1416
  %1614 = vmatprep.subr.mxu0 0.0
  %1615 = vmatpush1.msra.mxu0 %v1417
  %1616 = vmatprep.subr.mxu0 0.0
  %1617 = vmatpush1.msra.mxu0 %v1418
  %1618 = vmatprep.subr.mxu0 0.0
  %1619 = vmatpush1.msra.mxu0 %v1419
  %1620 = vmatprep.subr.mxu0 0.0
  %1621 = vmatpush1.msra.mxu0 %v1420
  %1622 = vmatprep.subr.mxu0 0.0
  %1623 = vmatpush1.msra.mxu0 %v1421
  %1624 = vmatprep.subr.mxu0 0.0
  %1625 = vmatpush1.msra.mxu0 %v1422
  %1626 = vmatprep.subr.mxu0 0.0
  %1627 = vmatpush1.msra.mxu0 %v1423
  %1628 = vmatprep.subr.mxu0 0.0
  %1629 = vmatpush1.msra.mxu0 %v1424
  %1630 = vmatprep.subr.mxu0 0.0
  %1631 = vmatpush1.msra.mxu0 %v1425
  %1632 = vmatprep.subr.mxu0 0.0
  %1633 = vmatpush1.msra.mxu0 %v1426
  %1634 = vmatprep.subr.mxu0 0.0
  %1635 = vmatpush1.msra.mxu0 %v1427
  %1636 = vmatprep.subr.mxu0 0.0
  %1637 = vmatpush1.msra.mxu0 %v1428
  %1638 = vmatprep.subr.mxu0 0.0
  %1639 = vmatpush1.msra.mxu0 %v1429
  %1640 = vmatprep.subr.mxu0 0.0
  %1641 = vmatpush1.msra.mxu0 %v1430
  %1642 = vmatprep.subr.mxu0 0.0
  %1643 = vmatpush1.msra.mxu0 %v1431
  %1644 = vmatprep.subr.mxu0 0.0
  %1645 = vmatpush1.msra.mxu0 %v1432
  %1646 = vmatprep.subr.mxu0 0.0
  %1647 = vmatpush1.msra.mxu0 %v1433
  %1648 = vmatprep.subr.mxu0 0.0
  %1649 = vmatpush1.msra.mxu0 %v1434
  %1650 = vmatprep.subr.mxu0 0.0
  %1651 = vmatpush1.msra.mxu0 %v1435
  %1652 = vmatprep.subr.mxu0 0.0
  %1653 = vmatpush1.msra.mxu0 %v1520
  %1654 = vmatprep.subr.mxu0 0.0
  %1655 = vmatpush1.msra.mxu0 0.0
  %1656 = vmatprep.mubr.f32.mxu0 %v1517
  %1657 = vmatmul.mubr.f32.gmra.mrb[0].mxu0 %v1026
  %v1658 = vpop.f32.mrb[0].mxu0
  %v1659 = vadd.f32 %v1589, %v1658
  %v1660 = vpop.f32.mrb[0].mxu0
  %1661 = vdwg.mxu0
  %v1662 = vld [vmem:[%s15] sm:$0x3]
  %v1664 = vsel %vm1202, %v1373, 0
  %v1667 = vsel %vm424, %v1662, 0
  %1669 = vmatprep.subr.mxu0 0.0
  %1670 = vmatpush1.msra.mxu0 %v1667
  %1671 = vmatprep.subr.mxu0 0.0
  %1672 = vmatpush1.msra.mxu0 0.0
  %1673 = vmatprep.subr.mxu0 0.0
  %1674 = vmatpush1.msra.mxu0 0.0
  %1675 = vmatprep.subr.mxu0 0.0
  %1676 = vmatpush1.msra.mxu0 0.0
  %1677 = vmatprep.subr.mxu0 0.0
  %1678 = vmatpush1.msra.mxu0 0.0
  %1679 = vmatprep.subr.mxu0 0.0
  %1680 = vmatpush1.msra.mxu0 0.0
  %1681 = vmatprep.subr.mxu0 0.0
  %1682 = vmatpush1.msra.mxu0 0.0
  %1683 = vmatprep.subr.mxu0 0.0
  %1684 = vmatpush1.msra.mxu0 0.0
  %1685 = vmatprep.subr.mxu0 0.0
  %1686 = vmatpush1.msra.mxu0 0.0
  %1687 = vmatprep.subr.mxu0 0.0
  %1688 = vmatpush1.msra.mxu0 0.0
  %1689 = vmatprep.subr.mxu0 0.0
  %1690 = vmatpush1.msra.mxu0 0.0
  %1691 = vmatprep.subr.mxu0 0.0
  %1692 = vmatpush1.msra.mxu0 0.0
  %1693 = vmatprep.subr.mxu0 0.0
  %1694 = vmatpush1.msra.mxu0 0.0
  %1695 = vmatprep.subr.mxu0 0.0
  %1696 = vmatpush1.msra.mxu0 0.0
  %1697 = vmatprep.subr.mxu0 0.0
  %1698 = vmatpush1.msra.mxu0 0.0
  %1699 = vmatprep.subr.mxu0 0.0
  %1700 = vmatpush1.msra.mxu0 0.0
  %1701 = vmatprep.subr.mxu0 0.0
  %1702 = vmatpush1.msra.mxu0 0.0
  %1703 = vmatprep.subr.mxu0 0.0
  %1704 = vmatpush1.msra.mxu0 0.0
  %1705 = vmatprep.subr.mxu0 0.0
  %1706 = vmatpush1.msra.mxu0 0.0
  %1707 = vmatprep.subr.mxu0 0.0
  %1708 = vmatpush1.msra.mxu0 0.0
  %1709 = vmatprep.subr.mxu0 0.0
  %1710 = vmatpush1.msra.mxu0 0.0
  %1711 = vmatprep.subr.mxu0 0.0
  %1712 = vmatpush1.msra.mxu0 0.0
  %1713 = vmatprep.subr.mxu0 0.0
  %1714 = vmatpush1.msra.mxu0 0.0
  %1715 = vmatprep.subr.mxu0 0.0
  %1716 = vmatpush1.msra.mxu0 0.0
  %1717 = vmatprep.subr.mxu0 0.0
  %1718 = vmatpush1.msra.mxu0 0.0
  %1719 = vmatprep.subr.mxu0 0.0
  %1720 = vmatpush1.msra.mxu0 0.0
  %1721 = vmatprep.subr.mxu0 0.0
  %1722 = vmatpush1.msra.mxu0 0.0
  %1723 = vmatprep.subr.mxu0 0.0
  %1724 = vmatpush1.msra.mxu0 0.0
  %1725 = vmatprep.subr.mxu0 0.0
  %1726 = vmatpush1.msra.mxu0 0.0
  %1727 = vmatprep.subr.mxu0 0.0
  %1728 = vmatpush1.msra.mxu0 0.0
  %1729 = vmatprep.subr.mxu0 0.0
  %1730 = vmatpush1.msra.mxu0 0.0
  %1731 = vmatprep.subr.mxu0 0.0
  %1732 = vmatpush1.msra.mxu0 0.0
  %1733 = vmatprep.mubr.f32.mxu0 0.0
  %1734 = vmatmul.mubr.f32.gmra.mrb[0].mxu0 %v1664
  %v1735 = vpop.f32.mrb[0].mxu0
  %v1736 = vadd.f32 0.0, %v1735
  %v1737 = vpop.f32.mrb[0].mxu0
  %1738 = vdwg.mxu0
  %v1739 = vadd.f32 %v1659, %v1736
  %v1740 = vld [vmem:[%s16] sm:$0x1]
  %v1742 = vlaneseq
  %v1743 = vshrl.u32 %v1742, 7
  %v1744 = vsub.s32 0, %v1743
  %v1745 = vrot.slane %v1740, %v1744
  %v1747 = vadd.f32 %v1739, %v1745
  %s1748 = scalar_lea.vmem %s13, 504
  %v1749 = vld [vmem:[%s1748] sm:$0xff]
  %v1750 = vld [vmem:[%s1748 + $0x8] sm:$0xff]
  %v1751 = vld [vmem:[%s1748 + $0x10] sm:$0xff]
  %v1752 = vld [vmem:[%s1748 + $0x18] sm:$0xff]
  %v1753 = vld [vmem:[%s1748 + $0x20] sm:$0xff]
  %v1754 = vld [vmem:[%s1748 + $0x28] sm:$0xff]
  %v1755 = vld [vmem:[%s1748 + $0x30] sm:$0xff]
  %v1756 = vld [vmem:[%s1748 + $0x38] sm:$0xff]
  %v1757 = vld [vmem:[%s1748 + $0x40] sm:$0xff]
  %v1758 = vld [vmem:[%s1748 + $0x48] sm:$0xff]
  %v1759 = vld [vmem:[%s1748 + $0x50] sm:$0xff]
  %v1760 = vld [vmem:[%s1748 + $0x58] sm:$0xff]
  %v1761 = vld [vmem:[%s1748 + $0x60] sm:$0xff]
  %v1762 = vld [vmem:[%s1748 + $0x68] sm:$0xff]
  %v1763 = vld [vmem:[%s1748 + $0x70] sm:$0xff]
  %v1764 = vld [vmem:[%s1748 + $0x78] sm:$0xff]
  %v1765 = vld [vmem:[%s1748 + $0x80] sm:$0xff]
  %v1766 = vld [vmem:[%s1748 + $0x88] sm:$0xff]
  %v1767 = vld [vmem:[%s1748 + $0x90] sm:$0xff]
  %v1768 = vld [vmem:[%s1748 + $0x98] sm:$0xff]
  %v1769 = vld [vmem:[%s1748 + $0xa0] sm:$0xff]
  %v1770 = vld [vmem:[%s1748 + $0xa8] sm:$0xff]
  %v1771 = vld [vmem:[%s1748 + $0xb0] sm:$0xff]
  %v1772 = vld [vmem:[%s1748 + $0xb8] sm:$0xff]
  %v1773 = vld [vmem:[%s1748 + $0xc0] sm:$0xff]
  %v1774 = vld [vmem:[%s1748 + $0xc8] sm:$0xff]
  %v1775 = vld [vmem:[%s1748 + $0xd0] sm:$0xff]
  %v1776 = vld [vmem:[%s1748 + $0xd8] sm:$0xff]
  %v1777 = vld [vmem:[%s1748 + $0xe0] sm:$0xff]
  %v1778 = vld [vmem:[%s1748 + $0xe8] sm:$0xff]
  %v1779 = vld [vmem:[%s1748 + $0xf0] sm:$0xff]
  %v1780 = vld [vmem:[%s1748 + $0xf8] sm:$0xff]
  %v1781 = vld [vmem:[%s1748 + $0x100] sm:$0xff]
  %v1782 = vld [vmem:[%s1748 + $0x108] sm:$0xff]
  %v1783 = vld [vmem:[%s1748 + $0x110] sm:$0xff]
  %v1784 = vld [vmem:[%s1748 + $0x118] sm:$0xff]
  %v1785 = vld [vmem:[%s1748 + $0x120] sm:$0xff]
  %v1786 = vld [vmem:[%s1748 + $0x128] sm:$0xff]
  %v1787 = vld [vmem:[%s1748 + $0x130] sm:$0xff]
  %v1788 = vld [vmem:[%s1748 + $0x138] sm:$0xff]
  %v1789 = vld [vmem:[%s1748 + $0x140] sm:$0xff]
  %v1790 = vld [vmem:[%s1748 + $0x148] sm:$0xff]
  %v1791 = vld [vmem:[%s1748 + $0x150] sm:$0xff]
  %v1792 = vld [vmem:[%s1748 + $0x158] sm:$0xff]
  %v1793 = vld [vmem:[%s1748 + $0x160] sm:$0xff]
  %v1794 = vld [vmem:[%s1748 + $0x168] sm:$0xff]
  %v1795 = vld [vmem:[%s1748 + $0x170] sm:$0xff]
  %v1796 = vld [vmem:[%s1748 + $0x178] sm:$0xff]
  %v1797 = vld [vmem:[%s1748 + $0x180] sm:$0xff]
  %v1798 = vld [vmem:[%s1748 + $0x188] sm:$0xff]
  %v1799 = vld [vmem:[%s1748 + $0x190] sm:$0xff]
  %v1800 = vld [vmem:[%s1748 + $0x198] sm:$0xff]
  %v1801 = vld [vmem:[%s1748 + $0x1a0] sm:$0xff]
  %v1802 = vld [vmem:[%s1748 + $0x1a8] sm:$0xff]
  %v1803 = vld [vmem:[%s1748 + $0x1b0] sm:$0xff]
  %v1804 = vld [vmem:[%s1748 + $0x1b8] sm:$0xff]
  %v1805 = vld [vmem:[%s1748 + $0x1c0] sm:$0xff]
  %v1806 = vld [vmem:[%s1748 + $0x1c8] sm:$0xff]
  %v1807 = vld [vmem:[%s1748 + $0x1d0] sm:$0xff]
  %v1808 = vld [vmem:[%s1748 + $0x1d8] sm:$0xff]
  %v1809 = vld [vmem:[%s1748 + $0x1e0] sm:$0xff]
  %v1810 = vld [vmem:[%s1748 + $0x1e8] sm:$0xff]
  %v1811 = vld [vmem:[%s1748 + $0x1f0] sm:$0xf]
  %s1812 = scalar_lea.vmem %s14, 24
  %v1813 = vld [vmem:[%s1812] sm:$0xff]
  %v1814 = vld [vmem:[%s1812 + $0x8] sm:$0xff]
  %v1815 = vld [vmem:[%s1812 + $0x10] sm:$0xf]
  %v1817 = vsel %vm1049, %v1815, 0
  %1819 = vmatprep.subr.mxu0 0.0
  %1820 = vmatpush1.msra.mxu0 %v1813
  %1821 = vmatprep.subr.mxu0 0.0
  %1822 = vmatpush1.msra.mxu0 %v1814
  %1823 = vmatprep.subr.mxu0 0.0
  %1824 = vmatpush1.msra.mxu0 %v1817
  %1825 = vmatprep.subr.mxu0 0.0
  %1826 = vmatpush1.msra.mxu0 0.0
  %1827 = vmatprep.subr.mxu0 0.0
  %1828 = vmatpush1.msra.mxu0 0.0
  %1829 = vmatprep.subr.mxu0 0.0
  %1830 = vmatpush1.msra.mxu0 0.0
  %1831 = vmatprep.subr.mxu0 0.0
  %1832 = vmatpush1.msra.mxu0 0.0
  %1833 = vmatprep.subr.mxu0 0.0
  %1834 = vmatpush1.msra.mxu0 0.0
  %1835 = vmatprep.subr.mxu0 0.0
  %1836 = vmatpush1.msra.mxu0 0.0
  %1837 = vmatprep.subr.mxu0 0.0
  %1838 = vmatpush1.msra.mxu0 0.0
  %1839 = vmatprep.subr.mxu0 0.0
  %1840 = vmatpush1.msra.mxu0 0.0
  %1841 = vmatprep.subr.mxu0 0.0
  %1842 = vmatpush1.msra.mxu0 0.0
  %1843 = vmatprep.subr.mxu0 0.0
  %1844 = vmatpush1.msra.mxu0 0.0
  %1845 = vmatprep.subr.mxu0 0.0
  %1846 = vmatpush1.msra.mxu0 0.0
  %1847 = vmatprep.subr.mxu0 0.0
  %1848 = vmatpush1.msra.mxu0 0.0
  %1849 = vmatprep.subr.mxu0 0.0
  %1850 = vmatpush1.msra.mxu0 0.0
  %1851 = vmatprep.subr.mxu0 0.0
  %1852 = vmatpush1.msra.mxu0 0.0
  %1853 = vmatprep.subr.mxu0 0.0
  %1854 = vmatpush1.msra.mxu0 0.0
  %1855 = vmatprep.subr.mxu0 0.0
  %1856 = vmatpush1.msra.mxu0 0.0
  %1857 = vmatprep.subr.mxu0 0.0
  %1858 = vmatpush1.msra.mxu0 0.0
  %1859 = vmatprep.subr.mxu0 0.0
  %1860 = vmatpush1.msra.mxu0 0.0
  %1861 = vmatprep.subr.mxu0 0.0
  %1862 = vmatpush1.msra.mxu0 0.0
  %1863 = vmatprep.subr.mxu0 0.0
  %1864 = vmatpush1.msra.mxu0 0.0
  %1865 = vmatprep.subr.mxu0 0.0
  %1866 = vmatpush1.msra.mxu0 0.0
  %1867 = vmatprep.subr.mxu0 0.0
  %1868 = vmatpush1.msra.mxu0 0.0
  %1869 = vmatprep.subr.mxu0 0.0
  %1870 = vmatpush1.msra.mxu0 0.0
  %1871 = vmatprep.subr.mxu0 0.0
  %1872 = vmatpush1.msra.mxu0 0.0
  %1873 = vmatprep.subr.mxu0 0.0
  %1874 = vmatpush1.msra.mxu0 0.0
  %1875 = vmatprep.subr.mxu0 0.0
  %1876 = vmatpush1.msra.mxu0 0.0
  %1877 = vmatprep.subr.mxu0 0.0
  %1878 = vmatpush1.msra.mxu0 0.0
  %1879 = vmatprep.subr.mxu0 0.0
  %1880 = vmatpush1.msra.mxu0 0.0
  %1881 = vmatprep.subr.mxu0 0.0
  %1882 = vmatpush1.msra.mxu0 0.0
  %1883 = vmatprep.mubr.f32.mxu0 0.0
  %1884 = vmatmul.mubr.f32.gmra.mrb[0].mxu0 %v1441
  %v1885 = vpop.f32.mrb[0].mxu0
  %v1886 = vadd.f32 0.0, %v1885
  %v1887 = vpop.f32.mrb[0].mxu0
  %1888 = vdwg.mxu0
  %v1890 = vsel %vm1049, %v1811, 0
  %1892 = vmatprep.subr.mxu0 0.0
  %1893 = vmatpush1.msra.mxu0 %v1749
  %1894 = vmatprep.subr.mxu0 0.0
  %1895 = vmatpush1.msra.mxu0 %v1750
  %1896 = vmatprep.subr.mxu0 0.0
  %1897 = vmatpush1.msra.mxu0 %v1751
  %1898 = vmatprep.subr.mxu0 0.0
  %1899 = vmatpush1.msra.mxu0 %v1752
  %1900 = vmatprep.subr.mxu0 0.0
  %1901 = vmatpush1.msra.mxu0 %v1753
  %1902 = vmatprep.subr.mxu0 0.0
  %1903 = vmatpush1.msra.mxu0 %v1754
  %1904 = vmatprep.subr.mxu0 0.0
  %1905 = vmatpush1.msra.mxu0 %v1755
  %1906 = vmatprep.subr.mxu0 0.0
  %1907 = vmatpush1.msra.mxu0 %v1756
  %1908 = vmatprep.subr.mxu0 0.0
  %1909 = vmatpush1.msra.mxu0 %v1757
  %1910 = vmatprep.subr.mxu0 0.0
  %1911 = vmatpush1.msra.mxu0 %v1758
  %1912 = vmatprep.subr.mxu0 0.0
  %1913 = vmatpush1.msra.mxu0 %v1759
  %1914 = vmatprep.subr.mxu0 0.0
  %1915 = vmatpush1.msra.mxu0 %v1760
  %1916 = vmatprep.subr.mxu0 0.0
  %1917 = vmatpush1.msra.mxu0 %v1761
  %1918 = vmatprep.subr.mxu0 0.0
  %1919 = vmatpush1.msra.mxu0 %v1762
  %1920 = vmatprep.subr.mxu0 0.0
  %1921 = vmatpush1.msra.mxu0 %v1763
  %1922 = vmatprep.subr.mxu0 0.0
  %1923 = vmatpush1.msra.mxu0 %v1764
  %1924 = vmatprep.subr.mxu0 0.0
  %1925 = vmatpush1.msra.mxu0 %v1765
  %1926 = vmatprep.subr.mxu0 0.0
  %1927 = vmatpush1.msra.mxu0 %v1766
  %1928 = vmatprep.subr.mxu0 0.0
  %1929 = vmatpush1.msra.mxu0 %v1767
  %1930 = vmatprep.subr.mxu0 0.0
  %1931 = vmatpush1.msra.mxu0 %v1768
  %1932 = vmatprep.subr.mxu0 0.0
  %1933 = vmatpush1.msra.mxu0 %v1769
  %1934 = vmatprep.subr.mxu0 0.0
  %1935 = vmatpush1.msra.mxu0 %v1770
  %1936 = vmatprep.subr.mxu0 0.0
  %1937 = vmatpush1.msra.mxu0 %v1771
  %1938 = vmatprep.subr.mxu0 0.0
  %1939 = vmatpush1.msra.mxu0 %v1772
  %1940 = vmatprep.subr.mxu0 0.0
  %1941 = vmatpush1.msra.mxu0 %v1773
  %1942 = vmatprep.subr.mxu0 0.0
  %1943 = vmatpush1.msra.mxu0 %v1774
  %1944 = vmatprep.subr.mxu0 0.0
  %1945 = vmatpush1.msra.mxu0 %v1775
  %1946 = vmatprep.subr.mxu0 0.0
  %1947 = vmatpush1.msra.mxu0 %v1776
  %1948 = vmatprep.subr.mxu0 0.0
  %1949 = vmatpush1.msra.mxu0 %v1777
  %1950 = vmatprep.subr.mxu0 0.0
  %1951 = vmatpush1.msra.mxu0 %v1778
  %1952 = vmatprep.subr.mxu0 0.0
  %1953 = vmatpush1.msra.mxu0 %v1779
  %1954 = vmatprep.subr.mxu0 0.0
  %1955 = vmatpush1.msra.mxu0 %v1780
  %1956 = vmatprep.mubr.f32.mxu0 %v957
  %1957 = vmatmul.mubr.f32.gmra.mrb[0].mxu0 %v955
  %v1958 = vpop.f32.mrb[0].mxu0
  %v1959 = vadd.f32 %v1886, %v1958
  %v1960 = vpop.f32.mrb[0].mxu0
  %1961 = vdwg.mxu0
  %1962 = vmatprep.subr.mxu0 0.0
  %1963 = vmatpush1.msra.mxu0 %v1781
  %1964 = vmatprep.subr.mxu0 0.0
  %1965 = vmatpush1.msra.mxu0 %v1782
  %1966 = vmatprep.subr.mxu0 0.0
  %1967 = vmatpush1.msra.mxu0 %v1783
  %1968 = vmatprep.subr.mxu0 0.0
  %1969 = vmatpush1.msra.mxu0 %v1784
  %1970 = vmatprep.subr.mxu0 0.0
  %1971 = vmatpush1.msra.mxu0 %v1785
  %1972 = vmatprep.subr.mxu0 0.0
  %1973 = vmatpush1.msra.mxu0 %v1786
  %1974 = vmatprep.subr.mxu0 0.0
  %1975 = vmatpush1.msra.mxu0 %v1787
  %1976 = vmatprep.subr.mxu0 0.0
  %1977 = vmatpush1.msra.mxu0 %v1788
  %1978 = vmatprep.subr.mxu0 0.0
  %1979 = vmatpush1.msra.mxu0 %v1789
  %1980 = vmatprep.subr.mxu0 0.0
  %1981 = vmatpush1.msra.mxu0 %v1790
  %1982 = vmatprep.subr.mxu0 0.0
  %1983 = vmatpush1.msra.mxu0 %v1791
  %1984 = vmatprep.subr.mxu0 0.0
  %1985 = vmatpush1.msra.mxu0 %v1792
  %1986 = vmatprep.subr.mxu0 0.0
  %1987 = vmatpush1.msra.mxu0 %v1793
  %1988 = vmatprep.subr.mxu0 0.0
  %1989 = vmatpush1.msra.mxu0 %v1794
  %1990 = vmatprep.subr.mxu0 0.0
  %1991 = vmatpush1.msra.mxu0 %v1795
  %1992 = vmatprep.subr.mxu0 0.0
  %1993 = vmatpush1.msra.mxu0 %v1796
  %1994 = vmatprep.subr.mxu0 0.0
  %1995 = vmatpush1.msra.mxu0 %v1797
  %1996 = vmatprep.subr.mxu0 0.0
  %1997 = vmatpush1.msra.mxu0 %v1798
  %1998 = vmatprep.subr.mxu0 0.0
  %1999 = vmatpush1.msra.mxu0 %v1799
  %2000 = vmatprep.subr.mxu0 0.0
  %2001 = vmatpush1.msra.mxu0 %v1800
  %2002 = vmatprep.subr.mxu0 0.0
  %2003 = vmatpush1.msra.mxu0 %v1801
  %2004 = vmatprep.subr.mxu0 0.0
  %2005 = vmatpush1.msra.mxu0 %v1802
  %2006 = vmatprep.subr.mxu0 0.0
  %2007 = vmatpush1.msra.mxu0 %v1803
  %2008 = vmatprep.subr.mxu0 0.0
  %2009 = vmatpush1.msra.mxu0 %v1804
  %2010 = vmatprep.subr.mxu0 0.0
  %2011 = vmatpush1.msra.mxu0 %v1805
  %2012 = vmatprep.subr.mxu0 0.0
  %2013 = vmatpush1.msra.mxu0 %v1806
  %2014 = vmatprep.subr.mxu0 0.0
  %2015 = vmatpush1.msra.mxu0 %v1807
  %2016 = vmatprep.subr.mxu0 0.0
  %2017 = vmatpush1.msra.mxu0 %v1808
  %2018 = vmatprep.subr.mxu0 0.0
  %2019 = vmatpush1.msra.mxu0 %v1809
  %2020 = vmatprep.subr.mxu0 0.0
  %2021 = vmatpush1.msra.mxu0 %v1810
  %2022 = vmatprep.subr.mxu0 0.0
  %2023 = vmatpush1.msra.mxu0 %v1890
  %2024 = vmatprep.subr.mxu0 0.0
  %2025 = vmatpush1.msra.mxu0 0.0
  %2026 = vmatprep.mubr.f32.mxu0 %v1517
  %2027 = vmatmul.mubr.f32.gmra.mrb[0].mxu0 %v1026
  %v2028 = vpop.f32.mrb[0].mxu0
  %v2029 = vadd.f32 %v1959, %v2028
  %v2030 = vpop.f32.mrb[0].mxu0
  %2031 = vdwg.mxu0
  %s2032 = scalar_lea.vmem %s15, 2
  %v2033 = vld [vmem:[%s2032] sm:$0x3]
  %v2035 = vsel %vm424, %v2033, 0
  %2037 = vmatprep.subr.mxu0 0.0
  %2038 = vmatpush1.msra.mxu0 %v2035
  %2039 = vmatprep.subr.mxu0 0.0
  %2040 = vmatpush1.msra.mxu0 0.0
  %2041 = vmatprep.subr.mxu0 0.0
  %2042 = vmatpush1.msra.mxu0 0.0
  %2043 = vmatprep.subr.mxu0 0.0
  %2044 = vmatpush1.msra.mxu0 0.0
  %2045 = vmatprep.subr.mxu0 0.0
  %2046 = vmatpush1.msra.mxu0 0.0
  %2047 = vmatprep.subr.mxu0 0.0
  %2048 = vmatpush1.msra.mxu0 0.0
  %2049 = vmatprep.subr.mxu0 0.0
  %2050 = vmatpush1.msra.mxu0 0.0
  %2051 = vmatprep.subr.mxu0 0.0
  %2052 = vmatpush1.msra.mxu0 0.0
  %2053 = vmatprep.subr.mxu0 0.0
  %2054 = vmatpush1.msra.mxu0 0.0
  %2055 = vmatprep.subr.mxu0 0.0
  %2056 = vmatpush1.msra.mxu0 0.0
  %2057 = vmatprep.subr.mxu0 0.0
  %2058 = vmatpush1.msra.mxu0 0.0
  %2059 = vmatprep.subr.mxu0 0.0
  %2060 = vmatpush1.msra.mxu0 0.0
  %2061 = vmatprep.subr.mxu0 0.0
  %2062 = vmatpush1.msra.mxu0 0.0
  %2063 = vmatprep.subr.mxu0 0.0
  %2064 = vmatpush1.msra.mxu0 0.0
  %2065 = vmatprep.subr.mxu0 0.0
  %2066 = vmatpush1.msra.mxu0 0.0
  %2067 = vmatprep.subr.mxu0 0.0
  %2068 = vmatpush1.msra.mxu0 0.0
  %2069 = vmatprep.subr.mxu0 0.0
  %2070 = vmatpush1.msra.mxu0 0.0
  %2071 = vmatprep.subr.mxu0 0.0
  %2072 = vmatpush1.msra.mxu0 0.0
  %2073 = vmatprep.subr.mxu0 0.0
  %2074 = vmatpush1.msra.mxu0 0.0
  %2075 = vmatprep.subr.mxu0 0.0
  %2076 = vmatpush1.msra.mxu0 0.0
  %2077 = vmatprep.subr.mxu0 0.0
  %2078 = vmatpush1.msra.mxu0 0.0
  %2079 = vmatprep.subr.mxu0 0.0
  %2080 = vmatpush1.msra.mxu0 0.0
  %2081 = vmatprep.subr.mxu0 0.0
  %2082 = vmatpush1.msra.mxu0 0.0
  %2083 = vmatprep.subr.mxu0 0.0
  %2084 = vmatpush1.msra.mxu0 0.0
  %2085 = vmatprep.subr.mxu0 0.0
  %2086 = vmatpush1.msra.mxu0 0.0
  %2087 = vmatprep.subr.mxu0 0.0
  %2088 = vmatpush1.msra.mxu0 0.0
  %2089 = vmatprep.subr.mxu0 0.0
  %2090 = vmatpush1.msra.mxu0 0.0
  %2091 = vmatprep.subr.mxu0 0.0
  %2092 = vmatpush1.msra.mxu0 0.0
  %2093 = vmatprep.subr.mxu0 0.0
  %2094 = vmatpush1.msra.mxu0 0.0
  %2095 = vmatprep.subr.mxu0 0.0
  %2096 = vmatpush1.msra.mxu0 0.0
  %2097 = vmatprep.subr.mxu0 0.0
  %2098 = vmatpush1.msra.mxu0 0.0
  %2099 = vmatprep.subr.mxu0 0.0
  %2100 = vmatpush1.msra.mxu0 0.0
  %2101 = vmatprep.mubr.f32.mxu0 0.0
  %2102 = vmatmul.mubr.f32.gmra.mrb[0].mxu0 %v1664
  %v2103 = vpop.f32.mrb[0].mxu0
  %v2104 = vadd.f32 0.0, %v2103
  %v2105 = vpop.f32.mrb[0].mxu0
  %2106 = vdwg.mxu0
  %v2107 = vadd.f32 %v2029, %v2104
  %s2108 = scalar_lea.vmem %s16, 1
  %v2109 = vld [vmem:[%s2108] sm:$0x1]
  %v2111 = vlaneseq
  %v2112 = vshrl.u32 %v2111, 7
  %v2113 = vsub.s32 0, %v2112
  %v2114 = vrot.slane %v2109, %v2113
  %v2116 = vadd.f32 %v2107, %v2114
  %s2117 = scalar_lea.vmem %s13, 1008
  %v2118 = vld [vmem:[%s2117] sm:$0xff]
  %v2119 = vld [vmem:[%s2117 + $0x8] sm:$0xff]
  %v2120 = vld [vmem:[%s2117 + $0x10] sm:$0xff]
  %v2121 = vld [vmem:[%s2117 + $0x18] sm:$0xff]
  %v2122 = vld [vmem:[%s2117 + $0x20] sm:$0xff]
  %v2123 = vld [vmem:[%s2117 + $0x28] sm:$0xff]
  %v2124 = vld [vmem:[%s2117 + $0x30] sm:$0xff]
  %v2125 = vld [vmem:[%s2117 + $0x38] sm:$0xff]
  %v2126 = vld [vmem:[%s2117 + $0x40] sm:$0xff]
  %v2127 = vld [vmem:[%s2117 + $0x48] sm:$0xff]
  %v2128 = vld [vmem:[%s2117 + $0x50] sm:$0xff]
  %v2129 = vld [vmem:[%s2117 + $0x58] sm:$0xff]
  %v2130 = vld [vmem:[%s2117 + $0x60] sm:$0xff]
  %v2131 = vld [vmem:[%s2117 + $0x68] sm:$0xff]
  %v2132 = vld [vmem:[%s2117 + $0x70] sm:$0xff]
  %v2133 = vld [vmem:[%s2117 + $0x78] sm:$0xff]
  %v2134 = vld [vmem:[%s2117 + $0x80] sm:$0xff]
  %v2135 = vld [vmem:[%s2117 + $0x88] sm:$0xff]
  %v2136 = vld [vmem:[%s2117 + $0x90] sm:$0xff]
  %v2137 = vld [vmem:[%s2117 + $0x98] sm:$0xff]
  %v2138 = vld [vmem:[%s2117 + $0xa0] sm:$0xff]
  %v2139 = vld [vmem:[%s2117 + $0xa8] sm:$0xff]
  %v2140 = vld [vmem:[%s2117 + $0xb0] sm:$0xff]
  %v2141 = vld [vmem:[%s2117 + $0xb8] sm:$0xff]
  %v2142 = vld [vmem:[%s2117 + $0xc0] sm:$0xff]
  %v2143 = vld [vmem:[%s2117 + $0xc8] sm:$0xff]
  %v2144 = vld [vmem:[%s2117 + $0xd0] sm:$0xff]
  %v2145 = vld [vmem:[%s2117 + $0xd8] sm:$0xff]
  %v2146 = vld [vmem:[%s2117 + $0xe0] sm:$0xff]
  %v2147 = vld [vmem:[%s2117 + $0xe8] sm:$0xff]
  %v2148 = vld [vmem:[%s2117 + $0xf0] sm:$0xff]
  %v2149 = vld [vmem:[%s2117 + $0xf8] sm:$0xff]
  %v2150 = vld [vmem:[%s2117 + $0x100] sm:$0xff]
  %v2151 = vld [vmem:[%s2117 + $0x108] sm:$0xff]
  %v2152 = vld [vmem:[%s2117 + $0x110] sm:$0xff]
  %v2153 = vld [vmem:[%s2117 + $0x118] sm:$0xff]
  %v2154 = vld [vmem:[%s2117 + $0x120] sm:$0xff]
  %v2155 = vld [vmem:[%s2117 + $0x128] sm:$0xff]
  %v2156 = vld [vmem:[%s2117 + $0x130] sm:$0xff]
  %v2157 = vld [vmem:[%s2117 + $0x138] sm:$0xff]
  %v2158 = vld [vmem:[%s2117 + $0x140] sm:$0xff]
  %v2159 = vld [vmem:[%s2117 + $0x148] sm:$0xff]
  %v2160 = vld [vmem:[%s2117 + $0x150] sm:$0xff]
  %v2161 = vld [vmem:[%s2117 + $0x158] sm:$0xff]
  %v2162 = vld [vmem:[%s2117 + $0x160] sm:$0xff]
  %v2163 = vld [vmem:[%s2117 + $0x168] sm:$0xff]
  %v2164 = vld [vmem:[%s2117 + $0x170] sm:$0xff]
  %v2165 = vld [vmem:[%s2117 + $0x178] sm:$0xff]
  %v2166 = vld [vmem:[%s2117 + $0x180] sm:$0xff]
  %v2167 = vld [vmem:[%s2117 + $0x188] sm:$0xff]
  %v2168 = vld [vmem:[%s2117 + $0x190] sm:$0xff]
  %v2169 = vld [vmem:[%s2117 + $0x198] sm:$0xff]
  %v2170 = vld [vmem:[%s2117 + $0x1a0] sm:$0xff]
  %v2171 = vld [vmem:[%s2117 + $0x1a8] sm:$0xff]
  %v2172 = vld [vmem:[%s2117 + $0x1b0] sm:$0xff]
  %v2173 = vld [vmem:[%s2117 + $0x1b8] sm:$0xff]
  %v2174 = vld [vmem:[%s2117 + $0x1c0] sm:$0xff]
  %v2175 = vld [vmem:[%s2117 + $0x1c8] sm:$0xff]
  %v2176 = vld [vmem:[%s2117 + $0x1d0] sm:$0xff]
  %v2177 = vld [vmem:[%s2117 + $0x1d8] sm:$0xff]
  %v2178 = vld [vmem:[%s2117 + $0x1e0] sm:$0xff]
  %v2179 = vld [vmem:[%s2117 + $0x1e8] sm:$0xff]
  %v2180 = vld [vmem:[%s2117 + $0x1f0] sm:$0xf]
  %s2181 = scalar_lea.vmem %s14, 48
  %v2182 = vld [vmem:[%s2181] sm:$0xff]
  %v2183 = vld [vmem:[%s2181 + $0x8] sm:$0xff]
  %v2184 = vld [vmem:[%s2181 + $0x10] sm:$0xf]
  %v2186 = vsel %vm1049, %v2184, 0
  %2188 = vmatprep.subr.mxu0 0.0
  %2189 = vmatpush1.msra.mxu0 %v2182
  %2190 = vmatprep.subr.mxu0 0.0
  %2191 = vmatpush1.msra.mxu0 %v2183
  %2192 = vmatprep.subr.mxu0 0.0
  %2193 = vmatpush1.msra.mxu0 %v2186
  %2194 = vmatprep.subr.mxu0 0.0
  %2195 = vmatpush1.msra.mxu0 0.0
  %2196 = vmatprep.subr.mxu0 0.0
  %2197 = vmatpush1.msra.mxu0 0.0
  %2198 = vmatprep.subr.mxu0 0.0
  %2199 = vmatpush1.msra.mxu0 0.0
  %2200 = vmatprep.subr.mxu0 0.0
  %2201 = vmatpush1.msra.mxu0 0.0
  %2202 = vmatprep.subr.mxu0 0.0
  %2203 = vmatpush1.msra.mxu0 0.0
  %2204 = vmatprep.subr.mxu0 0.0
  %2205 = vmatpush1.msra.mxu0 0.0
  %2206 = vmatprep.subr.mxu0 0.0
  %2207 = vmatpush1.msra.mxu0 0.0
  %2208 = vmatprep.subr.mxu0 0.0
  %2209 = vmatpush1.msra.mxu0 0.0
  %2210 = vmatprep.subr.mxu0 0.0
  %2211 = vmatpush1.msra.mxu0 0.0
  %2212 = vmatprep.subr.mxu0 0.0
  %2213 = vmatpush1.msra.mxu0 0.0
  %2214 = vmatprep.subr.mxu0 0.0
  %2215 = vmatpush1.msra.mxu0 0.0
  %2216 = vmatprep.subr.mxu0 0.0
  %2217 = vmatpush1.msra.mxu0 0.0
  %2218 = vmatprep.subr.mxu0 0.0
  %2219 = vmatpush1.msra.mxu0 0.0
  %2220 = vmatprep.subr.mxu0 0.0
  %2221 = vmatpush1.msra.mxu0 0.0
  %2222 = vmatprep.subr.mxu0 0.0
  %2223 = vmatpush1.msra.mxu0 0.0
  %2224 = vmatprep.subr.mxu0 0.0
  %2225 = vmatpush1.msra.mxu0 0.0
  %2226 = vmatprep.subr.mxu0 0.0
  %2227 = vmatpush1.msra.mxu0 0.0
  %2228 = vmatprep.subr.mxu0 0.0
  %2229 = vmatpush1.msra.mxu0 0.0
  %2230 = vmatprep.subr.mxu0 0.0
  %2231 = vmatpush1.msra.mxu0 0.0
  %2232 = vmatprep.subr.mxu0 0.0
  %2233 = vmatpush1.msra.mxu0 0.0
  %2234 = vmatprep.subr.mxu0 0.0
  %2235 = vmatpush1.msra.mxu0 0.0
  %2236 = vmatprep.subr.mxu0 0.0
  %2237 = vmatpush1.msra.mxu0 0.0
  %2238 = vmatprep.subr.mxu0 0.0
  %2239 = vmatpush1.msra.mxu0 0.0
  %2240 = vmatprep.subr.mxu0 0.0
  %2241 = vmatpush1.msra.mxu0 0.0
  %2242 = vmatprep.subr.mxu0 0.0
  %2243 = vmatpush1.msra.mxu0 0.0
  %2244 = vmatprep.subr.mxu0 0.0
  %2245 = vmatpush1.msra.mxu0 0.0
  %2246 = vmatprep.subr.mxu0 0.0
  %2247 = vmatpush1.msra.mxu0 0.0
  %2248 = vmatprep.subr.mxu0 0.0
  %2249 = vmatpush1.msra.mxu0 0.0
  %2250 = vmatprep.subr.mxu0 0.0
  %2251 = vmatpush1.msra.mxu0 0.0
  %2252 = vmatprep.mubr.f32.mxu0 0.0
  %2253 = vmatmul.mubr.f32.gmra.mrb[0].mxu0 %v1441
  %v2254 = vpop.f32.mrb[0].mxu0
  %v2255 = vadd.f32 0.0, %v2254
  %v2256 = vpop.f32.mrb[0].mxu0
  %2257 = vdwg.mxu0
  %v2259 = vsel %vm1049, %v2180, 0
  %2261 = vmatprep.subr.mxu0 0.0
  %2262 = vmatpush1.msra.mxu0 %v2118
  %2263 = vmatprep.subr.mxu0 0.0
  %2264 = vmatpush1.msra.mxu0 %v2119
  %2265 = vmatprep.subr.mxu0 0.0
  %2266 = vmatpush1.msra.mxu0 %v2120
  %2267 = vmatprep.subr.mxu0 0.0
  %2268 = vmatpush1.msra.mxu0 %v2121
  %2269 = vmatprep.subr.mxu0 0.0
  %2270 = vmatpush1.msra.mxu0 %v2122
  %2271 = vmatprep.subr.mxu0 0.0
  %2272 = vmatpush1.msra.mxu0 %v2123
  %2273 = vmatprep.subr.mxu0 0.0
  %2274 = vmatpush1.msra.mxu0 %v2124
  %2275 = vmatprep.subr.mxu0 0.0
  %2276 = vmatpush1.msra.mxu0 %v2125
  %2277 = vmatprep.subr.mxu0 0.0
  %2278 = vmatpush1.msra.mxu0 %v2126
  %2279 = vmatprep.subr.mxu0 0.0
  %2280 = vmatpush1.msra.mxu0 %v2127
  %2281 = vmatprep.subr.mxu0 0.0
  %2282 = vmatpush1.msra.mxu0 %v2128
  %2283 = vmatprep.subr.mxu0 0.0
  %2284 = vmatpush1.msra.mxu0 %v2129
  %2285 = vmatprep.subr.mxu0 0.0
  %2286 = vmatpush1.msra.mxu0 %v2130
  %2287 = vmatprep.subr.mxu0 0.0
  %2288 = vmatpush1.msra.mxu0 %v2131
  %2289 = vmatprep.subr.mxu0 0.0
  %2290 = vmatpush1.msra.mxu0 %v2132
  %2291 = vmatprep.subr.mxu0 0.0
  %2292 = vmatpush1.msra.mxu0 %v2133
  %2293 = vmatprep.subr.mxu0 0.0
  %2294 = vmatpush1.msra.mxu0 %v2134
  %2295 = vmatprep.subr.mxu0 0.0
  %2296 = vmatpush1.msra.mxu0 %v2135
  %2297 = vmatprep.subr.mxu0 0.0
  %2298 = vmatpush1.msra.mxu0 %v2136
  %2299 = vmatprep.subr.mxu0 0.0
  %2300 = vmatpush1.msra.mxu0 %v2137
  %2301 = vmatprep.subr.mxu0 0.0
  %2302 = vmatpush1.msra.mxu0 %v2138
  %2303 = vmatprep.subr.mxu0 0.0
  %2304 = vmatpush1.msra.mxu0 %v2139
  %2305 = vmatprep.subr.mxu0 0.0
  %2306 = vmatpush1.msra.mxu0 %v2140
  %2307 = vmatprep.subr.mxu0 0.0
  %2308 = vmatpush1.msra.mxu0 %v2141
  %2309 = vmatprep.subr.mxu0 0.0
  %2310 = vmatpush1.msra.mxu0 %v2142
  %2311 = vmatprep.subr.mxu0 0.0
  %2312 = vmatpush1.msra.mxu0 %v2143
  %2313 = vmatprep.subr.mxu0 0.0
  %2314 = vmatpush1.msra.mxu0 %v2144
  %2315 = vmatprep.subr.mxu0 0.0
  %2316 = vmatpush1.msra.mxu0 %v2145
  %2317 = vmatprep.subr.mxu0 0.0
  %2318 = vmatpush1.msra.mxu0 %v2146
  %2319 = vmatprep.subr.mxu0 0.0
  %2320 = vmatpush1.msra.mxu0 %v2147
  %2321 = vmatprep.subr.mxu0 0.0
  %2322 = vmatpush1.msra.mxu0 %v2148
  %2323 = vmatprep.subr.mxu0 0.0
  %2324 = vmatpush1.msra.mxu0 %v2149
  %2325 = vmatprep.mubr.f32.mxu0 %v957
  %2326 = vmatmul.mubr.f32.gmra.mrb[0].mxu0 %v955
  %v2327 = vpop.f32.mrb[0].mxu0
  %v2328 = vadd.f32 %v2255, %v2327
  %v2329 = vpop.f32.mrb[0].mxu0
  %2330 = vdwg.mxu0
  %2331 = vmatprep.subr.mxu0 0.0
  %2332 = vmatpush1.msra.mxu0 %v2150
  %2333 = vmatprep.subr.mxu0 0.0
  %2334 = vmatpush1.msra.mxu0 %v2151
  %2335 = vmatprep.subr.mxu0 0.0
  %2336 = vmatpush1.msra.mxu0 %v2152
  %2337 = vmatprep.subr.mxu0 0.0
  %2338 = vmatpush1.msra.mxu0 %v2153
  %2339 = vmatprep.subr.mxu0 0.0
  %2340 = vmatpush1.msra.mxu0 %v2154
  %2341 = vmatprep.subr.mxu0 0.0
  %2342 = vmatpush1.msra.mxu0 %v2155
  %2343 = vmatprep.subr.mxu0 0.0
  %2344 = vmatpush1.msra.mxu0 %v2156
  %2345 = vmatprep.subr.mxu0 0.0
  %2346 = vmatpush1.msra.mxu0 %v2157
  %2347 = vmatprep.subr.mxu0 0.0
  %2348 = vmatpush1.msra.mxu0 %v2158
  %2349 = vmatprep.subr.mxu0 0.0
  %2350 = vmatpush1.msra.mxu0 %v2159
  %2351 = vmatprep.subr.mxu0 0.0
  %2352 = vmatpush1.msra.mxu0 %v2160
  %2353 = vmatprep.subr.mxu0 0.0
  %2354 = vmatpush1.msra.mxu0 %v2161
  %2355 = vmatprep.subr.mxu0 0.0
  %2356 = vmatpush1.msra.mxu0 %v2162
  %2357 = vmatprep.subr.mxu0 0.0
  %2358 = vmatpush1.msra.mxu0 %v2163
  %2359 = vmatprep.subr.mxu0 0.0
  %2360 = vmatpush1.msra.mxu0 %v2164
  %2361 = vmatprep.subr.mxu0 0.0
  %2362 = vmatpush1.msra.mxu0 %v2165
  %2363 = vmatprep.subr.mxu0 0.0
  %2364 = vmatpush1.msra.mxu0 %v2166
  %2365 = vmatprep.subr.mxu0 0.0
  %2366 = vmatpush1.msra.mxu0 %v2167
  %2367 = vmatprep.subr.mxu0 0.0
  %2368 = vmatpush1.msra.mxu0 %v2168
  %2369 = vmatprep.subr.mxu0 0.0
  %2370 = vmatpush1.msra.mxu0 %v2169
  %2371 = vmatprep.subr.mxu0 0.0
  %2372 = vmatpush1.msra.mxu0 %v2170
  %2373 = vmatprep.subr.mxu0 0.0
  %2374 = vmatpush1.msra.mxu0 %v2171
  %2375 = vmatprep.subr.mxu0 0.0
  %2376 = vmatpush1.msra.mxu0 %v2172
  %2377 = vmatprep.subr.mxu0 0.0
  %2378 = vmatpush1.msra.mxu0 %v2173
  %2379 = vmatprep.subr.mxu0 0.0
  %2380 = vmatpush1.msra.mxu0 %v2174
  %2381 = vmatprep.subr.mxu0 0.0
  %2382 = vmatpush1.msra.mxu0 %v2175
  %2383 = vmatprep.subr.mxu0 0.0
  %2384 = vmatpush1.msra.mxu0 %v2176
  %2385 = vmatprep.subr.mxu0 0.0
  %2386 = vmatpush1.msra.mxu0 %v2177
  %2387 = vmatprep.subr.mxu0 0.0
  %2388 = vmatpush1.msra.mxu0 %v2178
  %2389 = vmatprep.subr.mxu0 0.0
  %2390 = vmatpush1.msra.mxu0 %v2179
  %2391 = vmatprep.subr.mxu0 0.0
  %2392 = vmatpush1.msra.mxu0 %v2259
  %2393 = vmatprep.subr.mxu0 0.0
  %2394 = vmatpush1.msra.mxu0 0.0
  %2395 = vmatprep.mubr.f32.mxu0 %v1517
  %2396 = vmatmul.mubr.f32.gmra.mrb[0].mxu0 %v1026
  %v2397 = vpop.f32.mrb[0].mxu0
  %v2398 = vadd.f32 %v2328, %v2397
  %v2399 = vpop.f32.mrb[0].mxu0
  %2400 = vdwg.mxu0
  %s2401 = scalar_lea.vmem %s15, 4
  %v2402 = vld [vmem:[%s2401] sm:$0x3]
  %v2404 = vsel %vm424, %v2402, 0
  %2406 = vmatprep.subr.mxu0 0.0
  %2407 = vmatpush1.msra.mxu0 %v2404
  %2408 = vmatprep.subr.mxu0 0.0
  %2409 = vmatpush1.msra.mxu0 0.0
  %2410 = vmatprep.subr.mxu0 0.0
  %2411 = vmatpush1.msra.mxu0 0.0
  %2412 = vmatprep.subr.mxu0 0.0
  %2413 = vmatpush1.msra.mxu0 0.0
  %2414 = vmatprep.subr.mxu0 0.0
  %2415 = vmatpush1.msra.mxu0 0.0
  %2416 = vmatprep.subr.mxu0 0.0
  %2417 = vmatpush1.msra.mxu0 0.0
  %2418 = vmatprep.subr.mxu0 0.0
  %2419 = vmatpush1.msra.mxu0 0.0
  %2420 = vmatprep.subr.mxu0 0.0
  %2421 = vmatpush1.msra.mxu0 0.0
  %2422 = vmatprep.subr.mxu0 0.0
  %2423 = vmatpush1.msra.mxu0 0.0
  %2424 = vmatprep.subr.mxu0 0.0
  %2425 = vmatpush1.msra.mxu0 0.0
  %2426 = vmatprep.subr.mxu0 0.0
  %2427 = vmatpush1.msra.mxu0 0.0
  %2428 = vmatprep.subr.mxu0 0.0
  %2429 = vmatpush1.msra.mxu0 0.0
  %2430 = vmatprep.subr.mxu0 0.0
  %2431 = vmatpush1.msra.mxu0 0.0
  %2432 = vmatprep.subr.mxu0 0.0
  %2433 = vmatpush1.msra.mxu0 0.0
  %2434 = vmatprep.subr.mxu0 0.0
  %2435 = vmatpush1.msra.mxu0 0.0
  %2436 = vmatprep.subr.mxu0 0.0
  %2437 = vmatpush1.msra.mxu0 0.0
  %2438 = vmatprep.subr.mxu0 0.0
  %2439 = vmatpush1.msra.mxu0 0.0
  %2440 = vmatprep.subr.mxu0 0.0
  %2441 = vmatpush1.msra.mxu0 0.0
  %2442 = vmatprep.subr.mxu0 0.0
  %2443 = vmatpush1.msra.mxu0 0.0
  %2444 = vmatprep.subr.mxu0 0.0
  %2445 = vmatpush1.msra.mxu0 0.0
  %2446 = vmatprep.subr.mxu0 0.0
  %2447 = vmatpush1.msra.mxu0 0.0
  %2448 = vmatprep.subr.mxu0 0.0
  %2449 = vmatpush1.msra.mxu0 0.0
  %2450 = vmatprep.subr.mxu0 0.0
  %2451 = vmatpush1.msra.mxu0 0.0
  %2452 = vmatprep.subr.mxu0 0.0
  %2453 = vmatpush1.msra.mxu0 0.0
  %2454 = vmatprep.subr.mxu0 0.0
  %2455 = vmatpush1.msra.mxu0 0.0
  %2456 = vmatprep.subr.mxu0 0.0
  %2457 = vmatpush1.msra.mxu0 0.0
  %2458 = vmatprep.subr.mxu0 0.0
  %2459 = vmatpush1.msra.mxu0 0.0
  %2460 = vmatprep.subr.mxu0 0.0
  %2461 = vmatpush1.msra.mxu0 0.0
  %2462 = vmatprep.subr.mxu0 0.0
  %2463 = vmatpush1.msra.mxu0 0.0
  %2464 = vmatprep.subr.mxu0 0.0
  %2465 = vmatpush1.msra.mxu0 0.0
  %2466 = vmatprep.subr.mxu0 0.0
  %2467 = vmatpush1.msra.mxu0 0.0
  %2468 = vmatprep.subr.mxu0 0.0
  %2469 = vmatpush1.msra.mxu0 0.0
  %2470 = vmatprep.mubr.f32.mxu0 0.0
  %2471 = vmatmul.mubr.f32.gmra.mrb[0].mxu0 %v1664
  %v2472 = vpop.f32.mrb[0].mxu0
  %v2473 = vadd.f32 0.0, %v2472
  %v2474 = vpop.f32.mrb[0].mxu0
  %2475 = vdwg.mxu0
  %v2476 = vadd.f32 %v2398, %v2473
  %s2477 = scalar_lea.vmem %s16, 2
  %v2478 = vld [vmem:[%s2477] sm:$0x1]
  %v2480 = vlaneseq
  %v2481 = vshrl.u32 %v2480, 7
  %v2482 = vsub.s32 0, %v2481
  %v2483 = vrot.slane %v2478, %v2482
  %v2485 = vadd.f32 %v2476, %v2483
  %v2486 = vld [vmem:[%s17] sm:$0xff]
  %v2487 = vld [vmem:[%s17 + $0x8] sm:$0xff]
  %v2488 = vld [vmem:[%s17 + $0x10] sm:$0xff]
  %v2489 = vld [vmem:[%s17 + $0x18] sm:$0xff]
  %s2490 = scalar_lea.vmem %s17, 32
  %v2491 = vld [vmem:[%s2490] sm:$0xff]
  %v2492 = vld [vmem:[%s2490 + $0x8] sm:$0xff]
  %v2493 = vld [vmem:[%s2490 + $0x10] sm:$0xff]
  %v2494 = vld [vmem:[%s2490 + $0x18] sm:$0xff]
  %s2495 = scalar_lea.vmem %s17, 64
  %v2496 = vld [vmem:[%s2495] sm:$0xff]
  %v2497 = vld [vmem:[%s2495 + $0x8] sm:$0xff]
  %v2498 = vld [vmem:[%s2495 + $0x10] sm:$0xff]
  %v2499 = vld [vmem:[%s2495 + $0x18] sm:$0xff]
  %v2500 = vld [vmem:[%s18] sm:$0x1]
  %s2501 = scalar_lea.vmem %s18, 1
  %v2502 = vld [vmem:[%s2501] sm:$0x1]
  %s2503 = scalar_lea.vmem %s18, 2
  %v2504 = vld [vmem:[%s2503] sm:$0x1]
  %v2505 = vld [vmem:[%s19] sm:$0xff]
  %v2506 = vld [vmem:[%s19 + $0x8] sm:$0xff]
  %v2507 = vld [vmem:[%s19 + $0x10] sm:$0xff]
  %v2508 = vld [vmem:[%s19 + $0x18] sm:$0xff]
  %s2509 = scalar_lea.vmem %s19, 32
  %v2510 = vld [vmem:[%s2509] sm:$0xff]
  %v2511 = vld [vmem:[%s2509 + $0x8] sm:$0xff]
  %v2512 = vld [vmem:[%s2509 + $0x10] sm:$0xff]
  %v2513 = vld [vmem:[%s2509 + $0x18] sm:$0xff]
  %s2514 = scalar_lea.vmem %s19, 64
  %v2515 = vld [vmem:[%s2514] sm:$0xff]
  %v2516 = vld [vmem:[%s2514 + $0x8] sm:$0xff]
  %v2517 = vld [vmem:[%s2514 + $0x10] sm:$0xff]
  %v2518 = vld [vmem:[%s2514 + $0x18] sm:$0xff]
  %v2519 = vld [vmem:[%s20] sm:$0x1]
  %s2520 = scalar_lea.vmem %s20, 1
  %v2521 = vld [vmem:[%s2520] sm:$0x1]
  %s2522 = scalar_lea.vmem %s20, 2
  %v2523 = vld [vmem:[%s2522] sm:$0x1]
  %v2524 = vld [vmem:[%s21] sm:$0xff]
  %v2525 = vld [vmem:[%s21 + $0x8] sm:$0xff]
  %v2526 = vld [vmem:[%s21 + $0x10] sm:$0xff]
  %v2527 = vld [vmem:[%s21 + $0x18] sm:$0xff]
  %s2528 = scalar_lea.vmem %s21, 32
  %v2529 = vld [vmem:[%s2528] sm:$0xff]
  %v2530 = vld [vmem:[%s2528 + $0x8] sm:$0xff]
  %v2531 = vld [vmem:[%s2528 + $0x10] sm:$0xff]
  %v2532 = vld [vmem:[%s2528 + $0x18] sm:$0xff]
  %s2533 = scalar_lea.vmem %s21, 64
  %v2534 = vld [vmem:[%s2533] sm:$0xff]
  %v2535 = vld [vmem:[%s2533 + $0x8] sm:$0xff]
  %v2536 = vld [vmem:[%s2533 + $0x10] sm:$0xff]
  %v2537 = vld [vmem:[%s2533 + $0x18] sm:$0xff]
  %v2538 = vld [vmem:[%s22] sm:$0x1]
  %s2539 = scalar_lea.vmem %s22, 1
  %v2540 = vld [vmem:[%s2539] sm:$0x1]
  %s2541 = scalar_lea.vmem %s22, 2
  %v2542 = vld [vmem:[%s2541] sm:$0x1]
  %vm2543 = vcmask 261120
  %v2545 = vsel %vm2543, 0.0, 0
  %2547 = vmatprep.subr.mxu0 0.0
  %2548 = vmatpush1.msra.mxu0 %v2486
  %2549 = vmatprep.subr.mxu0 0.0
  %2550 = vmatpush1.msra.mxu0 %v2487
  %2551 = vmatprep.subr.mxu0 0.0
  %2552 = vmatpush1.msra.mxu0 %v2488
  %2553 = vmatprep.subr.mxu0 0.0
  %2554 = vmatpush1.msra.mxu0 %v2489
  %2555 = vmatprep.subr.mxu0 0.0
  %2556 = vmatpush1.msra.mxu0 0.0
  %2557 = vmatprep.subr.mxu0 0.0
  %2558 = vmatpush1.msra.mxu0 0.0
  %2559 = vmatprep.subr.mxu0 0.0
  %2560 = vmatpush1.msra.mxu0 0.0
  %2561 = vmatprep.subr.mxu0 0.0
  %2562 = vmatpush1.msra.mxu0 0.0
  %2563 = vmatprep.subr.mxu0 0.0
  %2564 = vmatpush1.msra.mxu0 0.0
  %2565 = vmatprep.subr.mxu0 0.0
  %2566 = vmatpush1.msra.mxu0 0.0
  %2567 = vmatprep.subr.mxu0 0.0
  %2568 = vmatpush1.msra.mxu0 0.0
  %2569 = vmatprep.subr.mxu0 0.0
  %2570 = vmatpush1.msra.mxu0 0.0
  %2571 = vmatprep.subr.mxu0 0.0
  %2572 = vmatpush1.msra.mxu0 0.0
  %2573 = vmatprep.subr.mxu0 0.0
  %2574 = vmatpush1.msra.mxu0 0.0
  %2575 = vmatprep.subr.mxu0 0.0
  %2576 = vmatpush1.msra.mxu0 0.0
  %2577 = vmatprep.subr.mxu0 0.0
  %2578 = vmatpush1.msra.mxu0 0.0
  %2579 = vmatprep.subr.mxu0 0.0
  %2580 = vmatpush1.msra.mxu0 0.0
  %2581 = vmatprep.subr.mxu0 0.0
  %2582 = vmatpush1.msra.mxu0 0.0
  %2583 = vmatprep.subr.mxu0 0.0
  %2584 = vmatpush1.msra.mxu0 0.0
  %2585 = vmatprep.subr.mxu0 0.0
  %2586 = vmatpush1.msra.mxu0 0.0
  %2587 = vmatprep.subr.mxu0 0.0
  %2588 = vmatpush1.msra.mxu0 0.0
  %2589 = vmatprep.subr.mxu0 0.0
  %2590 = vmatpush1.msra.mxu0 0.0
  %2591 = vmatprep.subr.mxu0 0.0
  %2592 = vmatpush1.msra.mxu0 0.0
  %2593 = vmatprep.subr.mxu0 0.0
  %2594 = vmatpush1.msra.mxu0 0.0
  %2595 = vmatprep.subr.mxu0 0.0
  %2596 = vmatpush1.msra.mxu0 0.0
  %2597 = vmatprep.subr.mxu0 0.0
  %2598 = vmatpush1.msra.mxu0 0.0
  %2599 = vmatprep.subr.mxu0 0.0
  %2600 = vmatpush1.msra.mxu0 0.0
  %2601 = vmatprep.subr.mxu0 0.0
  %2602 = vmatpush1.msra.mxu0 0.0
  %2603 = vmatprep.subr.mxu0 0.0
  %2604 = vmatpush1.msra.mxu0 0.0
  %2605 = vmatprep.subr.mxu0 0.0
  %2606 = vmatpush1.msra.mxu0 0.0
  %2607 = vmatprep.subr.mxu0 0.0
  %2608 = vmatpush1.msra.mxu0 0.0
  %2609 = vmatprep.subr.mxu0 0.0
  %2610 = vmatpush1.msra.mxu0 0.0
  %2611 = vmatprep.mubr.f32.mxu0 0.0
  %2612 = vmatmul.mubr.f32.gmra.mrb[0].mxu0 %v2545
  %v2613 = vpop.f32.mrb[0].mxu0
  %v2614 = vadd.f32 %v2500, %v2613
  %v2615 = vpop.f32.mrb[0].mxu0
  %2616 = vdwg.mxu0
  %2617 = vmatprep.subr.mxu0 0.0
  %2618 = vmatpush1.msra.mxu0 %v2491
  %2619 = vmatprep.subr.mxu0 0.0
  %2620 = vmatpush1.msra.mxu0 %v2492
  %2621 = vmatprep.subr.mxu0 0.0
  %2622 = vmatpush1.msra.mxu0 %v2493
  %2623 = vmatprep.subr.mxu0 0.0
  %2624 = vmatpush1.msra.mxu0 %v2494
  %2625 = vmatprep.subr.mxu0 0.0
  %2626 = vmatpush1.msra.mxu0 0.0
  %2627 = vmatprep.subr.mxu0 0.0
  %2628 = vmatpush1.msra.mxu0 0.0
  %2629 = vmatprep.subr.mxu0 0.0
  %2630 = vmatpush1.msra.mxu0 0.0
  %2631 = vmatprep.subr.mxu0 0.0
  %2632 = vmatpush1.msra.mxu0 0.0
  %2633 = vmatprep.subr.mxu0 0.0
  %2634 = vmatpush1.msra.mxu0 0.0
  %2635 = vmatprep.subr.mxu0 0.0
  %2636 = vmatpush1.msra.mxu0 0.0
  %2637 = vmatprep.subr.mxu0 0.0
  %2638 = vmatpush1.msra.mxu0 0.0
  %2639 = vmatprep.subr.mxu0 0.0
  %2640 = vmatpush1.msra.mxu0 0.0
  %2641 = vmatprep.subr.mxu0 0.0
  %2642 = vmatpush1.msra.mxu0 0.0
  %2643 = vmatprep.subr.mxu0 0.0
  %2644 = vmatpush1.msra.mxu0 0.0
  %2645 = vmatprep.subr.mxu0 0.0
  %2646 = vmatpush1.msra.mxu0 0.0
  %2647 = vmatprep.subr.mxu0 0.0
  %2648 = vmatpush1.msra.mxu0 0.0
  %2649 = vmatprep.subr.mxu0 0.0
  %2650 = vmatpush1.msra.mxu0 0.0
  %2651 = vmatprep.subr.mxu0 0.0
  %2652 = vmatpush1.msra.mxu0 0.0
  %2653 = vmatprep.subr.mxu0 0.0
  %2654 = vmatpush1.msra.mxu0 0.0
  %2655 = vmatprep.subr.mxu0 0.0
  %2656 = vmatpush1.msra.mxu0 0.0
  %2657 = vmatprep.subr.mxu0 0.0
  %2658 = vmatpush1.msra.mxu0 0.0
  %2659 = vmatprep.subr.mxu0 0.0
  %2660 = vmatpush1.msra.mxu0 0.0
  %2661 = vmatprep.subr.mxu0 0.0
  %2662 = vmatpush1.msra.mxu0 0.0
  %2663 = vmatprep.subr.mxu0 0.0
  %2664 = vmatpush1.msra.mxu0 0.0
  %2665 = vmatprep.subr.mxu0 0.0
  %2666 = vmatpush1.msra.mxu0 0.0
  %2667 = vmatprep.subr.mxu0 0.0
  %2668 = vmatpush1.msra.mxu0 0.0
  %2669 = vmatprep.subr.mxu0 0.0
  %2670 = vmatpush1.msra.mxu0 0.0
  %2671 = vmatprep.subr.mxu0 0.0
  %2672 = vmatpush1.msra.mxu0 0.0
  %2673 = vmatprep.subr.mxu0 0.0
  %2674 = vmatpush1.msra.mxu0 0.0
  %2675 = vmatprep.subr.mxu0 0.0
  %2676 = vmatpush1.msra.mxu0 0.0
  %2677 = vmatprep.subr.mxu0 0.0
  %2678 = vmatpush1.msra.mxu0 0.0
  %2679 = vmatprep.subr.mxu0 0.0
  %2680 = vmatpush1.msra.mxu0 0.0
  %2681 = vmatprep.mubr.f32.mxu0 0.0
  %2682 = vmatmul.mubr.f32.gmra.mrb[0].mxu0 %v2545
  %v2683 = vpop.f32.mrb[0].mxu0
  %v2684 = vadd.f32 %v2502, %v2683
  %v2685 = vpop.f32.mrb[0].mxu0
  %2686 = vdwg.mxu0
  %2687 = vmatprep.subr.mxu0 0.0
  %2688 = vmatpush1.msra.mxu0 %v2496
  %2689 = vmatprep.subr.mxu0 0.0
  %2690 = vmatpush1.msra.mxu0 %v2497
  %2691 = vmatprep.subr.mxu0 0.0
  %2692 = vmatpush1.msra.mxu0 %v2498
  %2693 = vmatprep.subr.mxu0 0.0
  %2694 = vmatpush1.msra.mxu0 %v2499
  %2695 = vmatprep.subr.mxu0 0.0
  %2696 = vmatpush1.msra.mxu0 0.0
  %2697 = vmatprep.subr.mxu0 0.0
  %2698 = vmatpush1.msra.mxu0 0.0
  %2699 = vmatprep.subr.mxu0 0.0
  %2700 = vmatpush1.msra.mxu0 0.0
  %2701 = vmatprep.subr.mxu0 0.0
  %2702 = vmatpush1.msra.mxu0 0.0
  %2703 = vmatprep.subr.mxu0 0.0
  %2704 = vmatpush1.msra.mxu0 0.0
  %2705 = vmatprep.subr.mxu0 0.0
  %2706 = vmatpush1.msra.mxu0 0.0
  %2707 = vmatprep.subr.mxu0 0.0
  %2708 = vmatpush1.msra.mxu0 0.0
  %2709 = vmatprep.subr.mxu0 0.0
  %2710 = vmatpush1.msra.mxu0 0.0
  %2711 = vmatprep.subr.mxu0 0.0
  %2712 = vmatpush1.msra.mxu0 0.0
  %2713 = vmatprep.subr.mxu0 0.0
  %2714 = vmatpush1.msra.mxu0 0.0
  %2715 = vmatprep.subr.mxu0 0.0
  %2716 = vmatpush1.msra.mxu0 0.0
  %2717 = vmatprep.subr.mxu0 0.0
  %2718 = vmatpush1.msra.mxu0 0.0
  %2719 = vmatprep.subr.mxu0 0.0
  %2720 = vmatpush1.msra.mxu0 0.0
  %2721 = vmatprep.subr.mxu0 0.0
  %2722 = vmatpush1.msra.mxu0 0.0
  %2723 = vmatprep.subr.mxu0 0.0
  %2724 = vmatpush1.msra.mxu0 0.0
  %2725 = vmatprep.subr.mxu0 0.0
  %2726 = vmatpush1.msra.mxu0 0.0
  %2727 = vmatprep.subr.mxu0 0.0
  %2728 = vmatpush1.msra.mxu0 0.0
  %2729 = vmatprep.subr.mxu0 0.0
  %2730 = vmatpush1.msra.mxu0 0.0
  %2731 = vmatprep.subr.mxu0 0.0
  %2732 = vmatpush1.msra.mxu0 0.0
  %2733 = vmatprep.subr.mxu0 0.0
  %2734 = vmatpush1.msra.mxu0 0.0
  %2735 = vmatprep.subr.mxu0 0.0
  %2736 = vmatpush1.msra.mxu0 0.0
  %2737 = vmatprep.subr.mxu0 0.0
  %2738 = vmatpush1.msra.mxu0 0.0
  %2739 = vmatprep.subr.mxu0 0.0
  %2740 = vmatpush1.msra.mxu0 0.0
  %2741 = vmatprep.subr.mxu0 0.0
  %2742 = vmatpush1.msra.mxu0 0.0
  %2743 = vmatprep.subr.mxu0 0.0
  %2744 = vmatpush1.msra.mxu0 0.0
  %2745 = vmatprep.subr.mxu0 0.0
  %2746 = vmatpush1.msra.mxu0 0.0
  %2747 = vmatprep.subr.mxu0 0.0
  %2748 = vmatpush1.msra.mxu0 0.0
  %2749 = vmatprep.subr.mxu0 0.0
  %2750 = vmatpush1.msra.mxu0 0.0
  %2751 = vmatprep.mubr.f32.mxu0 0.0
  %2752 = vmatmul.mubr.f32.gmra.mrb[0].mxu0 %v2545
  %v2753 = vpop.f32.mrb[0].mxu0
  %v2754 = vadd.f32 %v2504, %v2753
  %v2755 = vpop.f32.mrb[0].mxu0
  %2756 = vdwg.mxu0
  %v2757 = vadd.f32 %v1747, %v2614
  %v2758 = vxor.u32 %v2757, 2147483648
  %v2759 = vmul.f32 %v2758, 1.442695
  %v2760 = vpow.pop %v2759
  %v2761 = vadd.f32 %v2760, 1.0
  %v2762 = vrcp.pop %v2761
  %v2763 = vmul.f32 1.0, %v2762
  %v2764 = vadd.f32 %v2116, %v2684
  %v2765 = vxor.u32 %v2764, 2147483648
  %v2766 = vmul.f32 %v2765, 1.442695
  %v2767 = vpow.pop %v2766
  %v2768 = vadd.f32 %v2767, 1.0
  %v2769 = vrcp.pop %v2768
  %v2770 = vmul.f32 1.0, %v2769
  %v2771 = vmul.f32 %v2763, %v2754
  %v2772 = vadd.f32 %v2485, %v2771
  %v2773 = vtanh.pop %v2772
  %v2774 = vsub.f32 1.0, %v2770
  %v2775 = vmul.f32 %v2774, %v2773
  %v2776 = vmul.f32 %v2770, 0.0
  %v2777 = vadd.f32 %v2775, %v2776
  %v2779 = vsel %vm2543, %v2777, 0
  %2781 = vmatprep.subr.mxu0 0.0
  %2782 = vmatpush1.msra.mxu0 %v2505
  %2783 = vmatprep.subr.mxu0 0.0
  %2784 = vmatpush1.msra.mxu0 %v2506
  %2785 = vmatprep.subr.mxu0 0.0
  %2786 = vmatpush1.msra.mxu0 %v2507
  %2787 = vmatprep.subr.mxu0 0.0
  %2788 = vmatpush1.msra.mxu0 %v2508
  %2789 = vmatprep.subr.mxu0 0.0
  %2790 = vmatpush1.msra.mxu0 0.0
  %2791 = vmatprep.subr.mxu0 0.0
  %2792 = vmatpush1.msra.mxu0 0.0
  %2793 = vmatprep.subr.mxu0 0.0
  %2794 = vmatpush1.msra.mxu0 0.0
  %2795 = vmatprep.subr.mxu0 0.0
  %2796 = vmatpush1.msra.mxu0 0.0
  %2797 = vmatprep.subr.mxu0 0.0
  %2798 = vmatpush1.msra.mxu0 0.0
  %2799 = vmatprep.subr.mxu0 0.0
  %2800 = vmatpush1.msra.mxu0 0.0
  %2801 = vmatprep.subr.mxu0 0.0
  %2802 = vmatpush1.msra.mxu0 0.0
  %2803 = vmatprep.subr.mxu0 0.0
  %2804 = vmatpush1.msra.mxu0 0.0
  %2805 = vmatprep.subr.mxu0 0.0
  %2806 = vmatpush1.msra.mxu0 0.0
  %2807 = vmatprep.subr.mxu0 0.0
  %2808 = vmatpush1.msra.mxu0 0.0
  %2809 = vmatprep.subr.mxu0 0.0
  %2810 = vmatpush1.msra.mxu0 0.0
  %2811 = vmatprep.subr.mxu0 0.0
  %2812 = vmatpush1.msra.mxu0 0.0
  %2813 = vmatprep.subr.mxu0 0.0
  %2814 = vmatpush1.msra.mxu0 0.0
  %2815 = vmatprep.subr.mxu0 0.0
  %2816 = vmatpush1.msra.mxu0 0.0
  %2817 = vmatprep.subr.mxu0 0.0
  %2818 = vmatpush1.msra.mxu0 0.0
  %2819 = vmatprep.subr.mxu0 0.0
  %2820 = vmatpush1.msra.mxu0 0.0
  %2821 = vmatprep.subr.mxu0 0.0
  %2822 = vmatpush1.msra.mxu0 0.0
  %2823 = vmatprep.subr.mxu0 0.0
  %2824 = vmatpush1.msra.mxu0 0.0
  %2825 = vmatprep.subr.mxu0 0.0
  %2826 = vmatpush1.msra.mxu0 0.0
  %2827 = vmatprep.subr.mxu0 0.0
  %2828 = vmatpush1.msra.mxu0 0.0
  %2829 = vmatprep.subr.mxu0 0.0
  %2830 = vmatpush1.msra.mxu0 0.0
  %2831 = vmatprep.subr.mxu0 0.0
  %2832 = vmatpush1.msra.mxu0 0.0
  %2833 = vmatprep.subr.mxu0 0.0
  %2834 = vmatpush1.msra.mxu0 0.0
  %2835 = vmatprep.subr.mxu0 0.0
  %2836 = vmatpush1.msra.mxu0 0.0
  %2837 = vmatprep.subr.mxu0 0.0
  %2838 = vmatpush1.msra.mxu0 0.0
  %2839 = vmatprep.subr.mxu0 0.0
  %2840 = vmatpush1.msra.mxu0 0.0
  %2841 = vmatprep.subr.mxu0 0.0
  %2842 = vmatpush1.msra.mxu0 0.0
  %2843 = vmatprep.subr.mxu0 0.0
  %2844 = vmatpush1.msra.mxu0 0.0
  %2845 = vmatprep.mubr.f32.mxu0 0.0
  %2846 = vmatmul.mubr.f32.gmra.mrb[0].mxu0 %v2779
  %v2847 = vpop.f32.mrb[0].mxu0
  %v2848 = vadd.f32 %v2519, %v2847
  %v2849 = vpop.f32.mrb[0].mxu0
  %2850 = vdwg.mxu0
  %2851 = vmatprep.subr.mxu0 0.0
  %2852 = vmatpush1.msra.mxu0 %v2510
  %2853 = vmatprep.subr.mxu0 0.0
  %2854 = vmatpush1.msra.mxu0 %v2511
  %2855 = vmatprep.subr.mxu0 0.0
  %2856 = vmatpush1.msra.mxu0 %v2512
  %2857 = vmatprep.subr.mxu0 0.0
  %2858 = vmatpush1.msra.mxu0 %v2513
  %2859 = vmatprep.subr.mxu0 0.0
  %2860 = vmatpush1.msra.mxu0 0.0
  %2861 = vmatprep.subr.mxu0 0.0
  %2862 = vmatpush1.msra.mxu0 0.0
  %2863 = vmatprep.subr.mxu0 0.0
  %2864 = vmatpush1.msra.mxu0 0.0
  %2865 = vmatprep.subr.mxu0 0.0
  %2866 = vmatpush1.msra.mxu0 0.0
  %2867 = vmatprep.subr.mxu0 0.0
  %2868 = vmatpush1.msra.mxu0 0.0
  %2869 = vmatprep.subr.mxu0 0.0
  %2870 = vmatpush1.msra.mxu0 0.0
  %2871 = vmatprep.subr.mxu0 0.0
  %2872 = vmatpush1.msra.mxu0 0.0
  %2873 = vmatprep.subr.mxu0 0.0
  %2874 = vmatpush1.msra.mxu0 0.0
  %2875 = vmatprep.subr.mxu0 0.0
  %2876 = vmatpush1.msra.mxu0 0.0
  %2877 = vmatprep.subr.mxu0 0.0
  %2878 = vmatpush1.msra.mxu0 0.0
  %2879 = vmatprep.subr.mxu0 0.0
  %2880 = vmatpush1.msra.mxu0 0.0
  %2881 = vmatprep.subr.mxu0 0.0
  %2882 = vmatpush1.msra.mxu0 0.0
  %2883 = vmatprep.subr.mxu0 0.0
  %2884 = vmatpush1.msra.mxu0 0.0
  %2885 = vmatprep.subr.mxu0 0.0
  %2886 = vmatpush1.msra.mxu0 0.0
  %2887 = vmatprep.subr.mxu0 0.0
  %2888 = vmatpush1.msra.mxu0 0.0
  %2889 = vmatprep.subr.mxu0 0.0
  %2890 = vmatpush1.msra.mxu0 0.0
  %2891 = vmatprep.subr.mxu0 0.0
  %2892 = vmatpush1.msra.mxu0 0.0
  %2893 = vmatprep.subr.mxu0 0.0
  %2894 = vmatpush1.msra.mxu0 0.0
  %2895 = vmatprep.subr.mxu0 0.0
  %2896 = vmatpush1.msra.mxu0 0.0
  %2897 = vmatprep.subr.mxu0 0.0
  %2898 = vmatpush1.msra.mxu0 0.0
  %2899 = vmatprep.subr.mxu0 0.0
  %2900 = vmatpush1.msra.mxu0 0.0
  %2901 = vmatprep.subr.mxu0 0.0
  %2902 = vmatpush1.msra.mxu0 0.0
  %2903 = vmatprep.subr.mxu0 0.0
  %2904 = vmatpush1.msra.mxu0 0.0
  %2905 = vmatprep.subr.mxu0 0.0
  %2906 = vmatpush1.msra.mxu0 0.0
  %2907 = vmatprep.subr.mxu0 0.0
  %2908 = vmatpush1.msra.mxu0 0.0
  %2909 = vmatprep.subr.mxu0 0.0
  %2910 = vmatpush1.msra.mxu0 0.0
  %2911 = vmatprep.subr.mxu0 0.0
  %2912 = vmatpush1.msra.mxu0 0.0
  %2913 = vmatprep.subr.mxu0 0.0
  %2914 = vmatpush1.msra.mxu0 0.0
  %2915 = vmatprep.mubr.f32.mxu0 0.0
  %2916 = vmatmul.mubr.f32.gmra.mrb[0].mxu0 %v2779
  %v2917 = vpop.f32.mrb[0].mxu0
  %v2918 = vadd.f32 %v2521, %v2917
  %v2919 = vpop.f32.mrb[0].mxu0
  %2920 = vdwg.mxu0
  %2921 = vmatprep.subr.mxu0 0.0
  %2922 = vmatpush1.msra.mxu0 %v2515
  %2923 = vmatprep.subr.mxu0 0.0
  %2924 = vmatpush1.msra.mxu0 %v2516
  %2925 = vmatprep.subr.mxu0 0.0
  %2926 = vmatpush1.msra.mxu0 %v2517
  %2927 = vmatprep.subr.mxu0 0.0
  %2928 = vmatpush1.msra.mxu0 %v2518
  %2929 = vmatprep.subr.mxu0 0.0
  %2930 = vmatpush1.msra.mxu0 0.0
  %2931 = vmatprep.subr.mxu0 0.0
  %2932 = vmatpush1.msra.mxu0 0.0
  %2933 = vmatprep.subr.mxu0 0.0
  %2934 = vmatpush1.msra.mxu0 0.0
  %2935 = vmatprep.subr.mxu0 0.0
  %2936 = vmatpush1.msra.mxu0 0.0
  %2937 = vmatprep.subr.mxu0 0.0
  %2938 = vmatpush1.msra.mxu0 0.0
  %2939 = vmatprep.subr.mxu0 0.0
  %2940 = vmatpush1.msra.mxu0 0.0
  %2941 = vmatprep.subr.mxu0 0.0
  %2942 = vmatpush1.msra.mxu0 0.0
  %2943 = vmatprep.subr.mxu0 0.0
  %2944 = vmatpush1.msra.mxu0 0.0
  %2945 = vmatprep.subr.mxu0 0.0
  %2946 = vmatpush1.msra.mxu0 0.0
  %2947 = vmatprep.subr.mxu0 0.0
  %2948 = vmatpush1.msra.mxu0 0.0
  %2949 = vmatprep.subr.mxu0 0.0
  %2950 = vmatpush1.msra.mxu0 0.0
  %2951 = vmatprep.subr.mxu0 0.0
  %2952 = vmatpush1.msra.mxu0 0.0
  %2953 = vmatprep.subr.mxu0 0.0
  %2954 = vmatpush1.msra.mxu0 0.0
  %2955 = vmatprep.subr.mxu0 0.0
  %2956 = vmatpush1.msra.mxu0 0.0
  %2957 = vmatprep.subr.mxu0 0.0
  %2958 = vmatpush1.msra.mxu0 0.0
  %2959 = vmatprep.subr.mxu0 0.0
  %2960 = vmatpush1.msra.mxu0 0.0
  %2961 = vmatprep.subr.mxu0 0.0
  %2962 = vmatpush1.msra.mxu0 0.0
  %2963 = vmatprep.subr.mxu0 0.0
  %2964 = vmatpush1.msra.mxu0 0.0
  %2965 = vmatprep.subr.mxu0 0.0
  %2966 = vmatpush1.msra.mxu0 0.0
  %2967 = vmatprep.subr.mxu0 0.0
  %2968 = vmatpush1.msra.mxu0 0.0
  %2969 = vmatprep.subr.mxu0 0.0
  %2970 = vmatpush1.msra.mxu0 0.0
  %2971 = vmatprep.subr.mxu0 0.0
  %2972 = vmatpush1.msra.mxu0 0.0
  %2973 = vmatprep.subr.mxu0 0.0
  %2974 = vmatpush1.msra.mxu0 0.0
  %2975 = vmatprep.subr.mxu0 0.0
  %2976 = vmatpush1.msra.mxu0 0.0
  %2977 = vmatprep.subr.mxu0 0.0
  %2978 = vmatpush1.msra.mxu0 0.0
  %2979 = vmatprep.subr.mxu0 0.0
  %2980 = vmatpush1.msra.mxu0 0.0
  %2981 = vmatprep.subr.mxu0 0.0
  %2982 = vmatpush1.msra.mxu0 0.0
  %2983 = vmatprep.subr.mxu0 0.0
  %2984 = vmatpush1.msra.mxu0 0.0
  %2985 = vmatprep.mubr.f32.mxu0 0.0
  %2986 = vmatmul.mubr.f32.gmra.mrb[0].mxu0 %v2779
  %v2987 = vpop.f32.mrb[0].mxu0
  %v2988 = vadd.f32 %v2523, %v2987
  %v2989 = vpop.f32.mrb[0].mxu0
  %2990 = vdwg.mxu0
  %2991 = vmatprep.subr.mxu0 0.0
  %2992 = vmatpush1.msra.mxu0 %v2524
  %2993 = vmatprep.subr.mxu0 0.0
  %2994 = vmatpush1.msra.mxu0 %v2525
  %2995 = vmatprep.subr.mxu0 0.0
  %2996 = vmatpush1.msra.mxu0 %v2526
  %2997 = vmatprep.subr.mxu0 0.0
  %2998 = vmatpush1.msra.mxu0 %v2527
  %2999 = vmatprep.subr.mxu0 0.0
  %3000 = vmatpush1.msra.mxu0 0.0
  %3001 = vmatprep.subr.mxu0 0.0
  %3002 = vmatpush1.msra.mxu0 0.0
  %3003 = vmatprep.subr.mxu0 0.0
  %3004 = vmatpush1.msra.mxu0 0.0
  %3005 = vmatprep.subr.mxu0 0.0
  %3006 = vmatpush1.msra.mxu0 0.0
  %3007 = vmatprep.subr.mxu0 0.0
  %3008 = vmatpush1.msra.mxu0 0.0
  %3009 = vmatprep.subr.mxu0 0.0
  %3010 = vmatpush1.msra.mxu0 0.0
  %3011 = vmatprep.subr.mxu0 0.0
  %3012 = vmatpush1.msra.mxu0 0.0
  %3013 = vmatprep.subr.mxu0 0.0
  %3014 = vmatpush1.msra.mxu0 0.0
  %3015 = vmatprep.subr.mxu0 0.0
  %3016 = vmatpush1.msra.mxu0 0.0
  %3017 = vmatprep.subr.mxu0 0.0
  %3018 = vmatpush1.msra.mxu0 0.0
  %3019 = vmatprep.subr.mxu0 0.0
  %3020 = vmatpush1.msra.mxu0 0.0
  %3021 = vmatprep.subr.mxu0 0.0
  %3022 = vmatpush1.msra.mxu0 0.0
  %3023 = vmatprep.subr.mxu0 0.0
  %3024 = vmatpush1.msra.mxu0 0.0
  %3025 = vmatprep.subr.mxu0 0.0
  %3026 = vmatpush1.msra.mxu0 0.0
  %3027 = vmatprep.subr.mxu0 0.0
  %3028 = vmatpush1.msra.mxu0 0.0
  %3029 = vmatprep.subr.mxu0 0.0
  %3030 = vmatpush1.msra.mxu0 0.0
  %3031 = vmatprep.subr.mxu0 0.0
  %3032 = vmatpush1.msra.mxu0 0.0
  %3033 = vmatprep.subr.mxu0 0.0
  %3034 = vmatpush1.msra.mxu0 0.0
  %3035 = vmatprep.subr.mxu0 0.0
  %3036 = vmatpush1.msra.mxu0 0.0
  %3037 = vmatprep.subr.mxu0 0.0
  %3038 = vmatpush1.msra.mxu0 0.0
  %3039 = vmatprep.subr.mxu0 0.0
  %3040 = vmatpush1.msra.mxu0 0.0
  %3041 = vmatprep.subr.mxu0 0.0
  %3042 = vmatpush1.msra.mxu0 0.0
  %3043 = vmatprep.subr.mxu0 0.0
  %3044 = vmatpush1.msra.mxu0 0.0
  %3045 = vmatprep.subr.mxu0 0.0
  %3046 = vmatpush1.msra.mxu0 0.0
  %3047 = vmatprep.subr.mxu0 0.0
  %3048 = vmatpush1.msra.mxu0 0.0
  %3049 = vmatprep.subr.mxu0 0.0
  %3050 = vmatpush1.msra.mxu0 0.0
  %3051 = vmatprep.subr.mxu0 0.0
  %3052 = vmatpush1.msra.mxu0 0.0
  %3053 = vmatprep.subr.mxu0 0.0
  %3054 = vmatpush1.msra.mxu0 0.0
  %3055 = vmatprep.mubr.f32.mxu0 0.0
  %3056 = vmatmul.mubr.f32.gmra.mrb[0].mxu0 %v2545
  %v3057 = vpop.f32.mrb[0].mxu0
  %v3058 = vadd.f32 %v2538, %v3057
  %v3059 = vpop.f32.mrb[0].mxu0
  %3060 = vdwg.mxu0
  %3061 = vmatprep.subr.mxu0 0.0
  %3062 = vmatpush1.msra.mxu0 %v2529
  %3063 = vmatprep.subr.mxu0 0.0
  %3064 = vmatpush1.msra.mxu0 %v2530
  %3065 = vmatprep.subr.mxu0 0.0
  %3066 = vmatpush1.msra.mxu0 %v2531
  %3067 = vmatprep.subr.mxu0 0.0
  %3068 = vmatpush1.msra.mxu0 %v2532
  %3069 = vmatprep.subr.mxu0 0.0
  %3070 = vmatpush1.msra.mxu0 0.0
  %3071 = vmatprep.subr.mxu0 0.0
  %3072 = vmatpush1.msra.mxu0 0.0
  %3073 = vmatprep.subr.mxu0 0.0
  %3074 = vmatpush1.msra.mxu0 0.0
  %3075 = vmatprep.subr.mxu0 0.0
  %3076 = vmatpush1.msra.mxu0 0.0
  %3077 = vmatprep.subr.mxu0 0.0
  %3078 = vmatpush1.msra.mxu0 0.0
  %3079 = vmatprep.subr.mxu0 0.0
  %3080 = vmatpush1.msra.mxu0 0.0
  %3081 = vmatprep.subr.mxu0 0.0
  %3082 = vmatpush1.msra.mxu0 0.0
  %3083 = vmatprep.subr.mxu0 0.0
  %3084 = vmatpush1.msra.mxu0 0.0
  %3085 = vmatprep.subr.mxu0 0.0
  %3086 = vmatpush1.msra.mxu0 0.0
  %3087 = vmatprep.subr.mxu0 0.0
  %3088 = vmatpush1.msra.mxu0 0.0
  %3089 = vmatprep.subr.mxu0 0.0
  %3090 = vmatpush1.msra.mxu0 0.0
  %3091 = vmatprep.subr.mxu0 0.0
  %3092 = vmatpush1.msra.mxu0 0.0
  %3093 = vmatprep.subr.mxu0 0.0
  %3094 = vmatpush1.msra.mxu0 0.0
  %3095 = vmatprep.subr.mxu0 0.0
  %3096 = vmatpush1.msra.mxu0 0.0
  %3097 = vmatprep.subr.mxu0 0.0
  %3098 = vmatpush1.msra.mxu0 0.0
  %3099 = vmatprep.subr.mxu0 0.0
  %3100 = vmatpush1.msra.mxu0 0.0
  %3101 = vmatprep.subr.mxu0 0.0
  %3102 = vmatpush1.msra.mxu0 0.0
  %3103 = vmatprep.subr.mxu0 0.0
  %3104 = vmatpush1.msra.mxu0 0.0
  %3105 = vmatprep.subr.mxu0 0.0
  %3106 = vmatpush1.msra.mxu0 0.0
  %3107 = vmatprep.subr.mxu0 0.0
  %3108 = vmatpush1.msra.mxu0 0.0
  %3109 = vmatprep.subr.mxu0 0.0
  %3110 = vmatpush1.msra.mxu0 0.0
  %3111 = vmatprep.subr.mxu0 0.0
  %3112 = vmatpush1.msra.mxu0 0.0
  %3113 = vmatprep.subr.mxu0 0.0
  %3114 = vmatpush1.msra.mxu0 0.0
  %3115 = vmatprep.subr.mxu0 0.0
  %3116 = vmatpush1.msra.mxu0 0.0
  %3117 = vmatprep.subr.mxu0 0.0
  %3118 = vmatpush1.msra.mxu0 0.0
  %3119 = vmatprep.subr.mxu0 0.0
  %3120 = vmatpush1.msra.mxu0 0.0
  %3121 = vmatprep.subr.mxu0 0.0
  %3122 = vmatpush1.msra.mxu0 0.0
  %3123 = vmatprep.subr.mxu0 0.0
  %3124 = vmatpush1.msra.mxu0 0.0
  %3125 = vmatprep.mubr.f32.mxu0 0.0
  %3126 = vmatmul.mubr.f32.gmra.mrb[0].mxu0 %v2545
  %v3127 = vpop.f32.mrb[0].mxu0
  %v3128 = vadd.f32 %v2540, %v3127
  %v3129 = vpop.f32.mrb[0].mxu0
  %3130 = vdwg.mxu0
  %3131 = vmatprep.subr.mxu0 0.0
  %3132 = vmatpush1.msra.mxu0 %v2534
  %3133 = vmatprep.subr.mxu0 0.0
  %3134 = vmatpush1.msra.mxu0 %v2535
  %3135 = vmatprep.subr.mxu0 0.0
  %3136 = vmatpush1.msra.mxu0 %v2536
  %3137 = vmatprep.subr.mxu0 0.0
  %3138 = vmatpush1.msra.mxu0 %v2537
  %3139 = vmatprep.subr.mxu0 0.0
  %3140 = vmatpush1.msra.mxu0 0.0
  %3141 = vmatprep.subr.mxu0 0.0
  %3142 = vmatpush1.msra.mxu0 0.0
  %3143 = vmatprep.subr.mxu0 0.0
  %3144 = vmatpush1.msra.mxu0 0.0
  %3145 = vmatprep.subr.mxu0 0.0
  %3146 = vmatpush1.msra.mxu0 0.0
  %3147 = vmatprep.subr.mxu0 0.0
  %3148 = vmatpush1.msra.mxu0 0.0
  %3149 = vmatprep.subr.mxu0 0.0
  %3150 = vmatpush1.msra.mxu0 0.0
  %3151 = vmatprep.subr.mxu0 0.0
  %3152 = vmatpush1.msra.mxu0 0.0
  %3153 = vmatprep.subr.mxu0 0.0
  %3154 = vmatpush1.msra.mxu0 0.0
  %3155 = vmatprep.subr.mxu0 0.0
  %3156 = vmatpush1.msra.mxu0 0.0
  %3157 = vmatprep.subr.mxu0 0.0
  %3158 = vmatpush1.msra.mxu0 0.0
  %3159 = vmatprep.subr.mxu0 0.0
  %3160 = vmatpush1.msra.mxu0 0.0
  %3161 = vmatprep.subr.mxu0 0.0
  %3162 = vmatpush1.msra.mxu0 0.0
  %3163 = vmatprep.subr.mxu0 0.0
  %3164 = vmatpush1.msra.mxu0 0.0
  %3165 = vmatprep.subr.mxu0 0.0
  %3166 = vmatpush1.msra.mxu0 0.0
  %3167 = vmatprep.subr.mxu0 0.0
  %3168 = vmatpush1.msra.mxu0 0.0
  %3169 = vmatprep.subr.mxu0 0.0
  %3170 = vmatpush1.msra.mxu0 0.0
  %3171 = vmatprep.subr.mxu0 0.0
  %3172 = vmatpush1.msra.mxu0 0.0
  %3173 = vmatprep.subr.mxu0 0.0
  %3174 = vmatpush1.msra.mxu0 0.0
  %3175 = vmatprep.subr.mxu0 0.0
  %3176 = vmatpush1.msra.mxu0 0.0
  %3177 = vmatprep.subr.mxu0 0.0
  %3178 = vmatpush1.msra.mxu0 0.0
  %3179 = vmatprep.subr.mxu0 0.0
  %3180 = vmatpush1.msra.mxu0 0.0
  %3181 = vmatprep.subr.mxu0 0.0
  %3182 = vmatpush1.msra.mxu0 0.0
  %3183 = vmatprep.subr.mxu0 0.0
  %3184 = vmatpush1.msra.mxu0 0.0
  %3185 = vmatprep.subr.mxu0 0.0
  %3186 = vmatpush1.msra.mxu0 0.0
  %3187 = vmatprep.subr.mxu0 0.0
  %3188 = vmatpush1.msra.mxu0 0.0
  %3189 = vmatprep.subr.mxu0 0.0
  %3190 = vmatpush1.msra.mxu0 0.0
  %3191 = vmatprep.subr.mxu0 0.0
  %3192 = vmatpush1.msra.mxu0 0.0
  %3193 = vmatprep.subr.mxu0 0.0
  %3194 = vmatpush1.msra.mxu0 0.0
  %3195 = vmatprep.mubr.f32.mxu0 0.0
  %3196 = vmatmul.mubr.f32.gmra.mrb[0].mxu0 %v2545
  %v3197 = vpop.f32.mrb[0].mxu0
  %v3198 = vadd.f32 %v2542, %v3197
  %v3199 = vpop.f32.mrb[0].mxu0
  %3200 = vdwg.mxu0
  %v3201 = vadd.f32 %v2848, %v3058
  %v3202 = vxor.u32 %v3201, 2147483648
  %v3203 = vmul.f32 %v3202, 1.442695
  %v3204 = vpow.pop %v3203
  %v3205 = vadd.f32 %v3204, 1.0
  %v3206 = vrcp.pop %v3205
  %v3207 = vmul.f32 1.0, %v3206
  %v3208 = vadd.f32 %v2918, %v3128
  %v3209 = vxor.u32 %v3208, 2147483648
  %v3210 = vmul.f32 %v3209, 1.442695
  %v3211 = vpow.pop %v3210
  %v3212 = vadd.f32 %v3211, 1.0
  %v3213 = vrcp.pop %v3212
  %v3214 = vmul.f32 1.0, %v3213
  %v3215 = vmul.f32 %v3207, %v3198
  %v3216 = vadd.f32 %v2988, %v3215
  %v3217 = vtanh.pop %v3216
  %v3218 = vsub.f32 1.0, %v3214
  %v3219 = vmul.f32 %v3218, %v3217
  %v3220 = vmul.f32 %v3214, 0.0
  %v3221 = vadd.f32 %v3219, %v3220
  %3222 = vmatprep.subr.mxu0 0.0
  %3223 = vmatpush1.msra.mxu0 %v2486
  %3224 = vmatprep.subr.mxu0 0.0
  %3225 = vmatpush1.msra.mxu0 %v2487
  %3226 = vmatprep.subr.mxu0 0.0
  %3227 = vmatpush1.msra.mxu0 %v2488
  %3228 = vmatprep.subr.mxu0 0.0
  %3229 = vmatpush1.msra.mxu0 %v2489
  %3230 = vmatprep.subr.mxu0 0.0
  %3231 = vmatpush1.msra.mxu0 0.0
  %3232 = vmatprep.subr.mxu0 0.0
  %3233 = vmatpush1.msra.mxu0 0.0
  %3234 = vmatprep.subr.mxu0 0.0
  %3235 = vmatpush1.msra.mxu0 0.0
  %3236 = vmatprep.subr.mxu0 0.0
  %3237 = vmatpush1.msra.mxu0 0.0
  %3238 = vmatprep.subr.mxu0 0.0
  %3239 = vmatpush1.msra.mxu0 0.0
  %3240 = vmatprep.subr.mxu0 0.0
  %3241 = vmatpush1.msra.mxu0 0.0
  %3242 = vmatprep.subr.mxu0 0.0
  %3243 = vmatpush1.msra.mxu0 0.0
  %3244 = vmatprep.subr.mxu0 0.0
  %3245 = vmatpush1.msra.mxu0 0.0
  %3246 = vmatprep.subr.mxu0 0.0
  %3247 = vmatpush1.msra.mxu0 0.0
  %3248 = vmatprep.subr.mxu0 0.0
  %3249 = vmatpush1.msra.mxu0 0.0
  %3250 = vmatprep.subr.mxu0 0.0
  %3251 = vmatpush1.msra.mxu0 0.0
  %3252 = vmatprep.subr.mxu0 0.0
  %3253 = vmatpush1.msra.mxu0 0.0
  %3254 = vmatprep.subr.mxu0 0.0
  %3255 = vmatpush1.msra.mxu0 0.0
  %3256 = vmatprep.subr.mxu0 0.0
  %3257 = vmatpush1.msra.mxu0 0.0
  %3258 = vmatprep.subr.mxu0 0.0
  %3259 = vmatpush1.msra.mxu0 0.0
  %3260 = vmatprep.subr.mxu0 0.0
  %3261 = vmatpush1.msra.mxu0 0.0
  %3262 = vmatprep.subr.mxu0 0.0
  %3263 = vmatpush1.msra.mxu0 0.0
  %3264 = vmatprep.subr.mxu0 0.0
  %3265 = vmatpush1.msra.mxu0 0.0
  %3266 = vmatprep.subr.mxu0 0.0
  %3267 = vmatpush1.msra.mxu0 0.0
  %3268 = vmatprep.subr.mxu0 0.0
  %3269 = vmatpush1.msra.mxu0 0.0
  %3270 = vmatprep.subr.mxu0 0.0
  %3271 = vmatpush1.msra.mxu0 0.0
  %3272 = vmatprep.subr.mxu0 0.0
  %3273 = vmatpush1.msra.mxu0 0.0
  %3274 = vmatprep.subr.mxu0 0.0
  %3275 = vmatpush1.msra.mxu0 0.0
  %3276 = vmatprep.subr.mxu0 0.0
  %3277 = vmatpush1.msra.mxu0 0.0
  %3278 = vmatprep.subr.mxu0 0.0
  %3279 = vmatpush1.msra.mxu0 0.0
  %3280 = vmatprep.subr.mxu0 0.0
  %3281 = vmatpush1.msra.mxu0 0.0
  %3282 = vmatprep.subr.mxu0 0.0
  %3283 = vmatpush1.msra.mxu0 0.0
  %3284 = vmatprep.subr.mxu0 0.0
  %3285 = vmatpush1.msra.mxu0 0.0
  %3286 = vmatprep.mubr.f32.mxu0 0.0
  %3287 = vmatmul.mubr.f32.gmra.mrb[0].mxu0 %v2779
  %v3288 = vpop.f32.mrb[0].mxu0
  %v3289 = vadd.f32 %v2500, %v3288
  %v3290 = vpop.f32.mrb[0].mxu0
  %3291 = vdwg.mxu0
  %3292 = vmatprep.subr.mxu0 0.0
  %3293 = vmatpush1.msra.mxu0 %v2491
  %3294 = vmatprep.subr.mxu0 0.0
  %3295 = vmatpush1.msra.mxu0 %v2492
  %3296 = vmatprep.subr.mxu0 0.0
  %3297 = vmatpush1.msra.mxu0 %v2493
  %3298 = vmatprep.subr.mxu0 0.0
  %3299 = vmatpush1.msra.mxu0 %v2494
  %3300 = vmatprep.subr.mxu0 0.0
  %3301 = vmatpush1.msra.mxu0 0.0
  %3302 = vmatprep.subr.mxu0 0.0
  %3303 = vmatpush1.msra.mxu0 0.0
  %3304 = vmatprep.subr.mxu0 0.0
  %3305 = vmatpush1.msra.mxu0 0.0
  %3306 = vmatprep.subr.mxu0 0.0
  %3307 = vmatpush1.msra.mxu0 0.0
  %3308 = vmatprep.subr.mxu0 0.0
  %3309 = vmatpush1.msra.mxu0 0.0
  %3310 = vmatprep.subr.mxu0 0.0
  %3311 = vmatpush1.msra.mxu0 0.0
  %3312 = vmatprep.subr.mxu0 0.0
  %3313 = vmatpush1.msra.mxu0 0.0
  %3314 = vmatprep.subr.mxu0 0.0
  %3315 = vmatpush1.msra.mxu0 0.0
  %3316 = vmatprep.subr.mxu0 0.0
  %3317 = vmatpush1.msra.mxu0 0.0
  %3318 = vmatprep.subr.mxu0 0.0
  %3319 = vmatpush1.msra.mxu0 0.0
  %3320 = vmatprep.subr.mxu0 0.0
  %3321 = vmatpush1.msra.mxu0 0.0
  %3322 = vmatprep.subr.mxu0 0.0
  %3323 = vmatpush1.msra.mxu0 0.0
  %3324 = vmatprep.subr.mxu0 0.0
  %3325 = vmatpush1.msra.mxu0 0.0
  %3326 = vmatprep.subr.mxu0 0.0
  %3327 = vmatpush1.msra.mxu0 0.0
  %3328 = vmatprep.subr.mxu0 0.0
  %3329 = vmatpush1.msra.mxu0 0.0
  %3330 = vmatprep.subr.mxu0 0.0
  %3331 = vmatpush1.msra.mxu0 0.0
  %3332 = vmatprep.subr.mxu0 0.0
  %3333 = vmatpush1.msra.mxu0 0.0
  %3334 = vmatprep.subr.mxu0 0.0
  %3335 = vmatpush1.msra.mxu0 0.0
  %3336 = vmatprep.subr.mxu0 0.0
  %3337 = vmatpush1.msra.mxu0 0.0
  %3338 = vmatprep.subr.mxu0 0.0
  %3339 = vmatpush1.msra.mxu0 0.0
  %3340 = vmatprep.subr.mxu0 0.0
  %3341 = vmatpush1.msra.mxu0 0.0
  %3342 = vmatprep.subr.mxu0 0.0
  %3343 = vmatpush1.msra.mxu0 0.0
  %3344 = vmatprep.subr.mxu0 0.0
  %3345 = vmatpush1.msra.mxu0 0.0
  %3346 = vmatprep.subr.mxu0 0.0
  %3347 = vmatpush1.msra.mxu0 0.0
  %3348 = vmatprep.subr.mxu0 0.0
  %3349 = vmatpush1.msra.mxu0 0.0
  %3350 = vmatprep.subr.mxu0 0.0
  %3351 = vmatpush1.msra.mxu0 0.0
  %3352 = vmatprep.subr.mxu0 0.0
  %3353 = vmatpush1.msra.mxu0 0.0
  %3354 = vmatprep.subr.mxu0 0.0
  %3355 = vmatpush1.msra.mxu0 0.0
  %3356 = vmatprep.mubr.f32.mxu0 0.0
  %3357 = vmatmul.mubr.f32.gmra.mrb[0].mxu0 %v2779
  %v3358 = vpop.f32.mrb[0].mxu0
  %v3359 = vadd.f32 %v2502, %v3358
  %v3360 = vpop.f32.mrb[0].mxu0
  %3361 = vdwg.mxu0
  %3362 = vmatprep.subr.mxu0 0.0
  %3363 = vmatpush1.msra.mxu0 %v2496
  %3364 = vmatprep.subr.mxu0 0.0
  %3365 = vmatpush1.msra.mxu0 %v2497
  %3366 = vmatprep.subr.mxu0 0.0
  %3367 = vmatpush1.msra.mxu0 %v2498
  %3368 = vmatprep.subr.mxu0 0.0
  %3369 = vmatpush1.msra.mxu0 %v2499
  %3370 = vmatprep.subr.mxu0 0.0
  %3371 = vmatpush1.msra.mxu0 0.0
  %3372 = vmatprep.subr.mxu0 0.0
  %3373 = vmatpush1.msra.mxu0 0.0
  %3374 = vmatprep.subr.mxu0 0.0
  %3375 = vmatpush1.msra.mxu0 0.0
  %3376 = vmatprep.subr.mxu0 0.0
  %3377 = vmatpush1.msra.mxu0 0.0
  %3378 = vmatprep.subr.mxu0 0.0
  %3379 = vmatpush1.msra.mxu0 0.0
  %3380 = vmatprep.subr.mxu0 0.0
  %3381 = vmatpush1.msra.mxu0 0.0
  %3382 = vmatprep.subr.mxu0 0.0
  %3383 = vmatpush1.msra.mxu0 0.0
  %3384 = vmatprep.subr.mxu0 0.0
  %3385 = vmatpush1.msra.mxu0 0.0
  %3386 = vmatprep.subr.mxu0 0.0
  %3387 = vmatpush1.msra.mxu0 0.0
  %3388 = vmatprep.subr.mxu0 0.0
  %3389 = vmatpush1.msra.mxu0 0.0
  %3390 = vmatprep.subr.mxu0 0.0
  %3391 = vmatpush1.msra.mxu0 0.0
  %3392 = vmatprep.subr.mxu0 0.0
  %3393 = vmatpush1.msra.mxu0 0.0
  %3394 = vmatprep.subr.mxu0 0.0
  %3395 = vmatpush1.msra.mxu0 0.0
  %3396 = vmatprep.subr.mxu0 0.0
  %3397 = vmatpush1.msra.mxu0 0.0
  %3398 = vmatprep.subr.mxu0 0.0
  %3399 = vmatpush1.msra.mxu0 0.0
  %3400 = vmatprep.subr.mxu0 0.0
  %3401 = vmatpush1.msra.mxu0 0.0
  %3402 = vmatprep.subr.mxu0 0.0
  %3403 = vmatpush1.msra.mxu0 0.0
  %3404 = vmatprep.subr.mxu0 0.0
  %3405 = vmatpush1.msra.mxu0 0.0
  %3406 = vmatprep.subr.mxu0 0.0
  %3407 = vmatpush1.msra.mxu0 0.0
  %3408 = vmatprep.subr.mxu0 0.0
  %3409 = vmatpush1.msra.mxu0 0.0
  %3410 = vmatprep.subr.mxu0 0.0
  %3411 = vmatpush1.msra.mxu0 0.0
  %3412 = vmatprep.subr.mxu0 0.0
  %3413 = vmatpush1.msra.mxu0 0.0
  %3414 = vmatprep.subr.mxu0 0.0
  %3415 = vmatpush1.msra.mxu0 0.0
  %3416 = vmatprep.subr.mxu0 0.0
  %3417 = vmatpush1.msra.mxu0 0.0
  %3418 = vmatprep.subr.mxu0 0.0
  %3419 = vmatpush1.msra.mxu0 0.0
  %3420 = vmatprep.subr.mxu0 0.0
  %3421 = vmatpush1.msra.mxu0 0.0
  %3422 = vmatprep.subr.mxu0 0.0
  %3423 = vmatpush1.msra.mxu0 0.0
  %3424 = vmatprep.subr.mxu0 0.0
  %3425 = vmatpush1.msra.mxu0 0.0
  %3426 = vmatprep.mubr.f32.mxu0 0.0
  %3427 = vmatmul.mubr.f32.gmra.mrb[0].mxu0 %v2779
  %v3428 = vpop.f32.mrb[0].mxu0
  %v3429 = vadd.f32 %v2504, %v3428
  %v3430 = vpop.f32.mrb[0].mxu0
  %3431 = vdwg.mxu0
  %v3433 = vrot.slane %v3289, 7
  %v3435 = vadd.f32 %v1747, %v3433
  %v3436 = vxor.u32 %v3435, 2147483648
  %v3437 = vmul.f32 %v3436, 1.442695
  %v3438 = vpow.pop %v3437
  %v3439 = vadd.f32 %v3438, 1.0
  %v3440 = vrcp.pop %v3439
  %v3441 = vmul.f32 1.0, %v3440
  %v3443 = vrot.slane %v3359, 7
  %v3445 = vadd.f32 %v2116, %v3443
  %v3446 = vxor.u32 %v3445, 2147483648
  %v3447 = vmul.f32 %v3446, 1.442695
  %v3448 = vpow.pop %v3447
  %v3449 = vadd.f32 %v3448, 1.0
  %v3450 = vrcp.pop %v3449
  %v3451 = vmul.f32 1.0, %v3450
  %v3453 = vrot.slane %v3429, 7
  %v3455 = vmul.f32 %v3441, %v3453
  %v3456 = vadd.f32 %v2485, %v3455
  %v3457 = vtanh.pop %v3456
  %v3458 = vsub.f32 1.0, %v3451
  %v3459 = vmul.f32 %v3458, %v3457
  %v3460 = vrot.slane %v2777, 7
  %v3462 = vmul.f32 %v3451, %v3460
  %v3463 = vadd.f32 %v3459, %v3462
  %v3465 = vrot.slane %v3463, 1
  %v3466 = vsel %vm2543, %v3465, 0
  %3468 = vmatprep.subr.mxu0 0.0
  %3469 = vmatpush1.msra.mxu0 %v2505
  %3470 = vmatprep.subr.mxu0 0.0
  %3471 = vmatpush1.msra.mxu0 %v2506
  %3472 = vmatprep.subr.mxu0 0.0
  %3473 = vmatpush1.msra.mxu0 %v2507
  %3474 = vmatprep.subr.mxu0 0.0
  %3475 = vmatpush1.msra.mxu0 %v2508
  %3476 = vmatprep.subr.mxu0 0.0
  %3477 = vmatpush1.msra.mxu0 0.0
  %3478 = vmatprep.subr.mxu0 0.0
  %3479 = vmatpush1.msra.mxu0 0.0
  %3480 = vmatprep.subr.mxu0 0.0
  %3481 = vmatpush1.msra.mxu0 0.0
  %3482 = vmatprep.subr.mxu0 0.0
  %3483 = vmatpush1.msra.mxu0 0.0
  %3484 = vmatprep.subr.mxu0 0.0
  %3485 = vmatpush1.msra.mxu0 0.0
  %3486 = vmatprep.subr.mxu0 0.0
  %3487 = vmatpush1.msra.mxu0 0.0
  %3488 = vmatprep.subr.mxu0 0.0
  %3489 = vmatpush1.msra.mxu0 0.0
  %3490 = vmatprep.subr.mxu0 0.0
  %3491 = vmatpush1.msra.mxu0 0.0
  %3492 = vmatprep.subr.mxu0 0.0
  %3493 = vmatpush1.msra.mxu0 0.0
  %3494 = vmatprep.subr.mxu0 0.0
  %3495 = vmatpush1.msra.mxu0 0.0
  %3496 = vmatprep.subr.mxu0 0.0
  %3497 = vmatpush1.msra.mxu0 0.0
  %3498 = vmatprep.subr.mxu0 0.0
  %3499 = vmatpush1.msra.mxu0 0.0
  %3500 = vmatprep.subr.mxu0 0.0
  %3501 = vmatpush1.msra.mxu0 0.0
  %3502 = vmatprep.subr.mxu0 0.0
  %3503 = vmatpush1.msra.mxu0 0.0
  %3504 = vmatprep.subr.mxu0 0.0
  %3505 = vmatpush1.msra.mxu0 0.0
  %3506 = vmatprep.subr.mxu0 0.0
  %3507 = vmatpush1.msra.mxu0 0.0
  %3508 = vmatprep.subr.mxu0 0.0
  %3509 = vmatpush1.msra.mxu0 0.0
  %3510 = vmatprep.subr.mxu0 0.0
  %3511 = vmatpush1.msra.mxu0 0.0
  %3512 = vmatprep.subr.mxu0 0.0
  %3513 = vmatpush1.msra.mxu0 0.0
  %3514 = vmatprep.subr.mxu0 0.0
  %3515 = vmatpush1.msra.mxu0 0.0
  %3516 = vmatprep.subr.mxu0 0.0
  %3517 = vmatpush1.msra.mxu0 0.0
  %3518 = vmatprep.subr.mxu0 0.0
  %3519 = vmatpush1.msra.mxu0 0.0
  %3520 = vmatprep.subr.mxu0 0.0
  %3521 = vmatpush1.msra.mxu0 0.0
  %3522 = vmatprep.subr.mxu0 0.0
  %3523 = vmatpush1.msra.mxu0 0.0
  %3524 = vmatprep.subr.mxu0 0.0
  %3525 = vmatpush1.msra.mxu0 0.0
  %3526 = vmatprep.subr.mxu0 0.0
  %3527 = vmatpush1.msra.mxu0 0.0
  %3528 = vmatprep.subr.mxu0 0.0
  %3529 = vmatpush1.msra.mxu0 0.0
  %3530 = vmatprep.subr.mxu0 0.0
  %3531 = vmatpush1.msra.mxu0 0.0
  %3532 = vmatprep.mubr.f32.mxu0 0.0
  %3533 = vmatmul.mubr.f32.gmra.mrb[0].mxu0 %v3466
  %v3534 = vpop.f32.mrb[0].mxu0
  %v3535 = vadd.f32 %v2519, %v3534
  %v3536 = vpop.f32.mrb[0].mxu0
  %3537 = vdwg.mxu0
  %3538 = vmatprep.subr.mxu0 0.0
  %3539 = vmatpush1.msra.mxu0 %v2510
  %3540 = vmatprep.subr.mxu0 0.0
  %3541 = vmatpush1.msra.mxu0 %v2511
  %3542 = vmatprep.subr.mxu0 0.0
  %3543 = vmatpush1.msra.mxu0 %v2512
  %3544 = vmatprep.subr.mxu0 0.0
  %3545 = vmatpush1.msra.mxu0 %v2513
  %3546 = vmatprep.subr.mxu0 0.0
  %3547 = vmatpush1.msra.mxu0 0.0
  %3548 = vmatprep.subr.mxu0 0.0
  %3549 = vmatpush1.msra.mxu0 0.0
  %3550 = vmatprep.subr.mxu0 0.0
  %3551 = vmatpush1.msra.mxu0 0.0
  %3552 = vmatprep.subr.mxu0 0.0
  %3553 = vmatpush1.msra.mxu0 0.0
  %3554 = vmatprep.subr.mxu0 0.0
  %3555 = vmatpush1.msra.mxu0 0.0
  %3556 = vmatprep.subr.mxu0 0.0
  %3557 = vmatpush1.msra.mxu0 0.0
  %3558 = vmatprep.subr.mxu0 0.0
  %3559 = vmatpush1.msra.mxu0 0.0
  %3560 = vmatprep.subr.mxu0 0.0
  %3561 = vmatpush1.msra.mxu0 0.0
  %3562 = vmatprep.subr.mxu0 0.0
  %3563 = vmatpush1.msra.mxu0 0.0
  %3564 = vmatprep.subr.mxu0 0.0
  %3565 = vmatpush1.msra.mxu0 0.0
  %3566 = vmatprep.subr.mxu0 0.0
  %3567 = vmatpush1.msra.mxu0 0.0
  %3568 = vmatprep.subr.mxu0 0.0
  %3569 = vmatpush1.msra.mxu0 0.0
  %3570 = vmatprep.subr.mxu0 0.0
  %3571 = vmatpush1.msra.mxu0 0.0
  %3572 = vmatprep.subr.mxu0 0.0
  %3573 = vmatpush1.msra.mxu0 0.0
  %3574 = vmatprep.subr.mxu0 0.0
  %3575 = vmatpush1.msra.mxu0 0.0
  %3576 = vmatprep.subr.mxu0 0.0
  %3577 = vmatpush1.msra.mxu0 0.0
  %3578 = vmatprep.subr.mxu0 0.0
  %3579 = vmatpush1.msra.mxu0 0.0
  %3580 = vmatprep.subr.mxu0 0.0
  %3581 = vmatpush1.msra.mxu0 0.0
  %3582 = vmatprep.subr.mxu0 0.0
  %3583 = vmatpush1.msra.mxu0 0.0
  %3584 = vmatprep.subr.mxu0 0.0
  %3585 = vmatpush1.msra.mxu0 0.0
  %3586 = vmatprep.subr.mxu0 0.0
  %3587 = vmatpush1.msra.mxu0 0.0
  %3588 = vmatprep.subr.mxu0 0.0
  %3589 = vmatpush1.msra.mxu0 0.0
  %3590 = vmatprep.subr.mxu0 0.0
  %3591 = vmatpush1.msra.mxu0 0.0
  %3592 = vmatprep.subr.mxu0 0.0
  %3593 = vmatpush1.msra.mxu0 0.0
  %3594 = vmatprep.subr.mxu0 0.0
  %3595 = vmatpush1.msra.mxu0 0.0
  %3596 = vmatprep.subr.mxu0 0.0
  %3597 = vmatpush1.msra.mxu0 0.0
  %3598 = vmatprep.subr.mxu0 0.0
  %3599 = vmatpush1.msra.mxu0 0.0
  %3600 = vmatprep.subr.mxu0 0.0
  %3601 = vmatpush1.msra.mxu0 0.0
  %3602 = vmatprep.mubr.f32.mxu0 0.0
  %3603 = vmatmul.mubr.f32.gmra.mrb[0].mxu0 %v3466
  %v3604 = vpop.f32.mrb[0].mxu0
  %v3605 = vadd.f32 %v2521, %v3604
  %v3606 = vpop.f32.mrb[0].mxu0
  %3607 = vdwg.mxu0
  %3608 = vmatprep.subr.mxu0 0.0
  %3609 = vmatpush1.msra.mxu0 %v2515
  %3610 = vmatprep.subr.mxu0 0.0
  %3611 = vmatpush1.msra.mxu0 %v2516
  %3612 = vmatprep.subr.mxu0 0.0
  %3613 = vmatpush1.msra.mxu0 %v2517
  %3614 = vmatprep.subr.mxu0 0.0
  %3615 = vmatpush1.msra.mxu0 %v2518
  %3616 = vmatprep.subr.mxu0 0.0
  %3617 = vmatpush1.msra.mxu0 0.0
  %3618 = vmatprep.subr.mxu0 0.0
  %3619 = vmatpush1.msra.mxu0 0.0
  %3620 = vmatprep.subr.mxu0 0.0
  %3621 = vmatpush1.msra.mxu0 0.0
  %3622 = vmatprep.subr.mxu0 0.0
  %3623 = vmatpush1.msra.mxu0 0.0
  %3624 = vmatprep.subr.mxu0 0.0
  %3625 = vmatpush1.msra.mxu0 0.0
  %3626 = vmatprep.subr.mxu0 0.0
  %3627 = vmatpush1.msra.mxu0 0.0
  %3628 = vmatprep.subr.mxu0 0.0
  %3629 = vmatpush1.msra.mxu0 0.0
  %3630 = vmatprep.subr.mxu0 0.0
  %3631 = vmatpush1.msra.mxu0 0.0
  %3632 = vmatprep.subr.mxu0 0.0
  %3633 = vmatpush1.msra.mxu0 0.0
  %3634 = vmatprep.subr.mxu0 0.0
  %3635 = vmatpush1.msra.mxu0 0.0
  %3636 = vmatprep.subr.mxu0 0.0
  %3637 = vmatpush1.msra.mxu0 0.0
  %3638 = vmatprep.subr.mxu0 0.0
  %3639 = vmatpush1.msra.mxu0 0.0
  %3640 = vmatprep.subr.mxu0 0.0
  %3641 = vmatpush1.msra.mxu0 0.0
  %3642 = vmatprep.subr.mxu0 0.0
  %3643 = vmatpush1.msra.mxu0 0.0
  %3644 = vmatprep.subr.mxu0 0.0
  %3645 = vmatpush1.msra.mxu0 0.0
  %3646 = vmatprep.subr.mxu0 0.0
  %3647 = vmatpush1.msra.mxu0 0.0
  %3648 = vmatprep.subr.mxu0 0.0
  %3649 = vmatpush1.msra.mxu0 0.0
  %3650 = vmatprep.subr.mxu0 0.0
  %3651 = vmatpush1.msra.mxu0 0.0
  %3652 = vmatprep.subr.mxu0 0.0
  %3653 = vmatpush1.msra.mxu0 0.0
  %3654 = vmatprep.subr.mxu0 0.0
  %3655 = vmatpush1.msra.mxu0 0.0
  %3656 = vmatprep.subr.mxu0 0.0
  %3657 = vmatpush1.msra.mxu0 0.0
  %3658 = vmatprep.subr.mxu0 0.0
  %3659 = vmatpush1.msra.mxu0 0.0
  %3660 = vmatprep.subr.mxu0 0.0
  %3661 = vmatpush1.msra.mxu0 0.0
  %3662 = vmatprep.subr.mxu0 0.0
  %3663 = vmatpush1.msra.mxu0 0.0
  %3664 = vmatprep.subr.mxu0 0.0
  %3665 = vmatpush1.msra.mxu0 0.0
  %3666 = vmatprep.subr.mxu0 0.0
  %3667 = vmatpush1.msra.mxu0 0.0
  %3668 = vmatprep.subr.mxu0 0.0
  %3669 = vmatpush1.msra.mxu0 0.0
  %3670 = vmatprep.subr.mxu0 0.0
  %3671 = vmatpush1.msra.mxu0 0.0
  %3672 = vmatprep.mubr.f32.mxu0 0.0
  %3673 = vmatmul.mubr.f32.gmra.mrb[0].mxu0 %v3466
  %v3674 = vpop.f32.mrb[0].mxu0
  %v3675 = vadd.f32 %v2523, %v3674
  %v3676 = vpop.f32.mrb[0].mxu0
  %3677 = vdwg.mxu0
  %v3679 = vsel %vm2543, %v3221, 0
  %3681 = vmatprep.subr.mxu0 0.0
  %3682 = vmatpush1.msra.mxu0 %v2524
  %3683 = vmatprep.subr.mxu0 0.0
  %3684 = vmatpush1.msra.mxu0 %v2525
  %3685 = vmatprep.subr.mxu0 0.0
  %3686 = vmatpush1.msra.mxu0 %v2526
  %3687 = vmatprep.subr.mxu0 0.0
  %3688 = vmatpush1.msra.mxu0 %v2527
  %3689 = vmatprep.subr.mxu0 0.0
  %3690 = vmatpush1.msra.mxu0 0.0
  %3691 = vmatprep.subr.mxu0 0.0
  %3692 = vmatpush1.msra.mxu0 0.0
  %3693 = vmatprep.subr.mxu0 0.0
  %3694 = vmatpush1.msra.mxu0 0.0
  %3695 = vmatprep.subr.mxu0 0.0
  %3696 = vmatpush1.msra.mxu0 0.0
  %3697 = vmatprep.subr.mxu0 0.0
  %3698 = vmatpush1.msra.mxu0 0.0
  %3699 = vmatprep.subr.mxu0 0.0
  %3700 = vmatpush1.msra.mxu0 0.0
  %3701 = vmatprep.subr.mxu0 0.0
  %3702 = vmatpush1.msra.mxu0 0.0
  %3703 = vmatprep.subr.mxu0 0.0
  %3704 = vmatpush1.msra.mxu0 0.0
  %3705 = vmatprep.subr.mxu0 0.0
  %3706 = vmatpush1.msra.mxu0 0.0
  %3707 = vmatprep.subr.mxu0 0.0
  %3708 = vmatpush1.msra.mxu0 0.0
  %3709 = vmatprep.subr.mxu0 0.0
  %3710 = vmatpush1.msra.mxu0 0.0
  %3711 = vmatprep.subr.mxu0 0.0
  %3712 = vmatpush1.msra.mxu0 0.0
  %3713 = vmatprep.subr.mxu0 0.0
  %3714 = vmatpush1.msra.mxu0 0.0
  %3715 = vmatprep.subr.mxu0 0.0
  %3716 = vmatpush1.msra.mxu0 0.0
  %3717 = vmatprep.subr.mxu0 0.0
  %3718 = vmatpush1.msra.mxu0 0.0
  %3719 = vmatprep.subr.mxu0 0.0
  %3720 = vmatpush1.msra.mxu0 0.0
  %3721 = vmatprep.subr.mxu0 0.0
  %3722 = vmatpush1.msra.mxu0 0.0
  %3723 = vmatprep.subr.mxu0 0.0
  %3724 = vmatpush1.msra.mxu0 0.0
  %3725 = vmatprep.subr.mxu0 0.0
  %3726 = vmatpush1.msra.mxu0 0.0
  %3727 = vmatprep.subr.mxu0 0.0
  %3728 = vmatpush1.msra.mxu0 0.0
  %3729 = vmatprep.subr.mxu0 0.0
  %3730 = vmatpush1.msra.mxu0 0.0
  %3731 = vmatprep.subr.mxu0 0.0
  %3732 = vmatpush1.msra.mxu0 0.0
  %3733 = vmatprep.subr.mxu0 0.0
  %3734 = vmatpush1.msra.mxu0 0.0
  %3735 = vmatprep.subr.mxu0 0.0
  %3736 = vmatpush1.msra.mxu0 0.0
  %3737 = vmatprep.subr.mxu0 0.0
  %3738 = vmatpush1.msra.mxu0 0.0
  %3739 = vmatprep.subr.mxu0 0.0
  %3740 = vmatpush1.msra.mxu0 0.0
  %3741 = vmatprep.subr.mxu0 0.0
  %3742 = vmatpush1.msra.mxu0 0.0
  %3743 = vmatprep.subr.mxu0 0.0
  %3744 = vmatpush1.msra.mxu0 0.0
  %3745 = vmatprep.mubr.f32.mxu0 0.0
  %3746 = vmatmul.mubr.f32.gmra.mrb[0].mxu0 %v3679
  %v3747 = vpop.f32.mrb[0].mxu0
  %v3748 = vadd.f32 %v2538, %v3747
  %v3749 = vpop.f32.mrb[0].mxu0
  %3750 = vdwg.mxu0
  %3751 = vmatprep.subr.mxu0 0.0
  %3752 = vmatpush1.msra.mxu0 %v2529
  %3753 = vmatprep.subr.mxu0 0.0
  %3754 = vmatpush1.msra.mxu0 %v2530
  %3755 = vmatprep.subr.mxu0 0.0
  %3756 = vmatpush1.msra.mxu0 %v2531
  %3757 = vmatprep.subr.mxu0 0.0
  %3758 = vmatpush1.msra.mxu0 %v2532
  %3759 = vmatprep.subr.mxu0 0.0
  %3760 = vmatpush1.msra.mxu0 0.0
  %3761 = vmatprep.subr.mxu0 0.0
  %3762 = vmatpush1.msra.mxu0 0.0
  %3763 = vmatprep.subr.mxu0 0.0
  %3764 = vmatpush1.msra.mxu0 0.0
  %3765 = vmatprep.subr.mxu0 0.0
  %3766 = vmatpush1.msra.mxu0 0.0
  %3767 = vmatprep.subr.mxu0 0.0
  %3768 = vmatpush1.msra.mxu0 0.0
  %3769 = vmatprep.subr.mxu0 0.0
  %3770 = vmatpush1.msra.mxu0 0.0
  %3771 = vmatprep.subr.mxu0 0.0
  %3772 = vmatpush1.msra.mxu0 0.0
  %3773 = vmatprep.subr.mxu0 0.0
  %3774 = vmatpush1.msra.mxu0 0.0
  %3775 = vmatprep.subr.mxu0 0.0
  %3776 = vmatpush1.msra.mxu0 0.0
  %3777 = vmatprep.subr.mxu0 0.0
  %3778 = vmatpush1.msra.mxu0 0.0
  %3779 = vmatprep.subr.mxu0 0.0
  %3780 = vmatpush1.msra.mxu0 0.0
  %3781 = vmatprep.subr.mxu0 0.0
  %3782 = vmatpush1.msra.mxu0 0.0
  %3783 = vmatprep.subr.mxu0 0.0
  %3784 = vmatpush1.msra.mxu0 0.0
  %3785 = vmatprep.subr.mxu0 0.0
  %3786 = vmatpush1.msra.mxu0 0.0
  %3787 = vmatprep.subr.mxu0 0.0
  %3788 = vmatpush1.msra.mxu0 0.0
  %3789 = vmatprep.subr.mxu0 0.0
  %3790 = vmatpush1.msra.mxu0 0.0
  %3791 = vmatprep.subr.mxu0 0.0
  %3792 = vmatpush1.msra.mxu0 0.0
  %3793 = vmatprep.subr.mxu0 0.0
  %3794 = vmatpush1.msra.mxu0 0.0
  %3795 = vmatprep.subr.mxu0 0.0
  %3796 = vmatpush1.msra.mxu0 0.0
  %3797 = vmatprep.subr.mxu0 0.0
  %3798 = vmatpush1.msra.mxu0 0.0
  %3799 = vmatprep.subr.mxu0 0.0
  %3800 = vmatpush1.msra.mxu0 0.0
  %3801 = vmatprep.subr.mxu0 0.0
  %3802 = vmatpush1.msra.mxu0 0.0
  %3803 = vmatprep.subr.mxu0 0.0
  %3804 = vmatpush1.msra.mxu0 0.0
  %3805 = vmatprep.subr.mxu0 0.0
  %3806 = vmatpush1.msra.mxu0 0.0
  %3807 = vmatprep.subr.mxu0 0.0
  %3808 = vmatpush1.msra.mxu0 0.0
  %3809 = vmatprep.subr.mxu0 0.0
  %3810 = vmatpush1.msra.mxu0 0.0
  %3811 = vmatprep.subr.mxu0 0.0
  %3812 = vmatpush1.msra.mxu0 0.0
  %3813 = vmatprep.subr.mxu0 0.0
  %3814 = vmatpush1.msra.mxu0 0.0
  %3815 = vmatprep.mubr.f32.mxu0 0.0
  %3816 = vmatmul.mubr.f32.gmra.mrb[0].mxu0 %v3679
  %v3817 = vpop.f32.mrb[0].mxu0
  %v3818 = vadd.f32 %v2540, %v3817
  %v3819 = vpop.f32.mrb[0].mxu0
  %3820 = vdwg.mxu0
  %3821 = vmatprep.subr.mxu0 0.0
  %3822 = vmatpush1.msra.mxu0 %v2534
  %3823 = vmatprep.subr.mxu0 0.0
  %3824 = vmatpush1.msra.mxu0 %v2535
  %3825 = vmatprep.subr.mxu0 0.0
  %3826 = vmatpush1.msra.mxu0 %v2536
  %3827 = vmatprep.subr.mxu0 0.0
  %3828 = vmatpush1.msra.mxu0 %v2537
  %3829 = vmatprep.subr.mxu0 0.0
  %3830 = vmatpush1.msra.mxu0 0.0
  %3831 = vmatprep.subr.mxu0 0.0
  %3832 = vmatpush1.msra.mxu0 0.0
  %3833 = vmatprep.subr.mxu0 0.0
  %3834 = vmatpush1.msra.mxu0 0.0
  %3835 = vmatprep.subr.mxu0 0.0
  %3836 = vmatpush1.msra.mxu0 0.0
  %3837 = vmatprep.subr.mxu0 0.0
  %3838 = vmatpush1.msra.mxu0 0.0
  %3839 = vmatprep.subr.mxu0 0.0
  %3840 = vmatpush1.msra.mxu0 0.0
  %3841 = vmatprep.subr.mxu0 0.0
  %3842 = vmatpush1.msra.mxu0 0.0
  %3843 = vmatprep.subr.mxu0 0.0
  %3844 = vmatpush1.msra.mxu0 0.0
  %3845 = vmatprep.subr.mxu0 0.0
  %3846 = vmatpush1.msra.mxu0 0.0
  %3847 = vmatprep.subr.mxu0 0.0
  %3848 = vmatpush1.msra.mxu0 0.0
  %3849 = vmatprep.subr.mxu0 0.0
  %3850 = vmatpush1.msra.mxu0 0.0
  %3851 = vmatprep.subr.mxu0 0.0
  %3852 = vmatpush1.msra.mxu0 0.0
  %3853 = vmatprep.subr.mxu0 0.0
  %3854 = vmatpush1.msra.mxu0 0.0
  %3855 = vmatprep.subr.mxu0 0.0
  %3856 = vmatpush1.msra.mxu0 0.0
  %3857 = vmatprep.subr.mxu0 0.0
  %3858 = vmatpush1.msra.mxu0 0.0
  %3859 = vmatprep.subr.mxu0 0.0
  %3860 = vmatpush1.msra.mxu0 0.0
  %3861 = vmatprep.subr.mxu0 0.0
  %3862 = vmatpush1.msra.mxu0 0.0
  %3863 = vmatprep.subr.mxu0 0.0
  %3864 = vmatpush1.msra.mxu0 0.0
  %3865 = vmatprep.subr.mxu0 0.0
  %3866 = vmatpush1.msra.mxu0 0.0
  %3867 = vmatprep.subr.mxu0 0.0
  %3868 = vmatpush1.msra.mxu0 0.0
  %3869 = vmatprep.subr.mxu0 0.0
  %3870 = vmatpush1.msra.mxu0 0.0
  %3871 = vmatprep.subr.mxu0 0.0
  %3872 = vmatpush1.msra.mxu0 0.0
  %3873 = vmatprep.subr.mxu0 0.0
  %3874 = vmatpush1.msra.mxu0 0.0
  %3875 = vmatprep.subr.mxu0 0.0
  %3876 = vmatpush1.msra.mxu0 0.0
  %3877 = vmatprep.subr.mxu0 0.0
  %3878 = vmatpush1.msra.mxu0 0.0
  %3879 = vmatprep.subr.mxu0 0.0
  %3880 = vmatpush1.msra.mxu0 0.0
  %3881 = vmatprep.subr.mxu0 0.0
  %3882 = vmatpush1.msra.mxu0 0.0
  %3883 = vmatprep.subr.mxu0 0.0
  %3884 = vmatpush1.msra.mxu0 0.0
  %3885 = vmatprep.mubr.f32.mxu0 0.0
  %3886 = vmatmul.mubr.f32.gmra.mrb[0].mxu0 %v3679
  %v3887 = vpop.f32.mrb[0].mxu0
  %v3888 = vadd.f32 %v2542, %v3887
  %v3889 = vpop.f32.mrb[0].mxu0
  %3890 = vdwg.mxu0
  %v3891 = vadd.f32 %v3535, %v3748
  %v3892 = vxor.u32 %v3891, 2147483648
  %v3893 = vmul.f32 %v3892, 1.442695
  %v3894 = vpow.pop %v3893
  %v3895 = vadd.f32 %v3894, 1.0
  %v3896 = vrcp.pop %v3895
  %v3897 = vmul.f32 1.0, %v3896
  %v3898 = vadd.f32 %v3605, %v3818
  %v3899 = vxor.u32 %v3898, 2147483648
  %v3900 = vmul.f32 %v3899, 1.442695
  %v3901 = vpow.pop %v3900
  %v3902 = vadd.f32 %v3901, 1.0
  %v3903 = vrcp.pop %v3902
  %v3904 = vmul.f32 1.0, %v3903
  %v3905 = vmul.f32 %v3897, %v3888
  %v3906 = vadd.f32 %v3675, %v3905
  %v3907 = vtanh.pop %v3906
  %v3908 = vsub.f32 1.0, %v3904
  %v3909 = vmul.f32 %v3908, %v3907
  %v3910 = vmul.f32 %v3904, %v3221
  %v3911 = vadd.f32 %v3909, %v3910
  %3912 = vmatprep.subr.mxu0 0.0
  %3913 = vmatpush1.msra.mxu0 %v2486
  %3914 = vmatprep.subr.mxu0 0.0
  %3915 = vmatpush1.msra.mxu0 %v2487
  %3916 = vmatprep.subr.mxu0 0.0
  %3917 = vmatpush1.msra.mxu0 %v2488
  %3918 = vmatprep.subr.mxu0 0.0
  %3919 = vmatpush1.msra.mxu0 %v2489
  %3920 = vmatprep.subr.mxu0 0.0
  %3921 = vmatpush1.msra.mxu0 0.0
  %3922 = vmatprep.subr.mxu0 0.0
  %3923 = vmatpush1.msra.mxu0 0.0
  %3924 = vmatprep.subr.mxu0 0.0
  %3925 = vmatpush1.msra.mxu0 0.0
  %3926 = vmatprep.subr.mxu0 0.0
  %3927 = vmatpush1.msra.mxu0 0.0
  %3928 = vmatprep.subr.mxu0 0.0
  %3929 = vmatpush1.msra.mxu0 0.0
  %3930 = vmatprep.subr.mxu0 0.0
  %3931 = vmatpush1.msra.mxu0 0.0
  %3932 = vmatprep.subr.mxu0 0.0
  %3933 = vmatpush1.msra.mxu0 0.0
  %3934 = vmatprep.subr.mxu0 0.0
  %3935 = vmatpush1.msra.mxu0 0.0
  %3936 = vmatprep.subr.mxu0 0.0
  %3937 = vmatpush1.msra.mxu0 0.0
  %3938 = vmatprep.subr.mxu0 0.0
  %3939 = vmatpush1.msra.mxu0 0.0
  %3940 = vmatprep.subr.mxu0 0.0
  %3941 = vmatpush1.msra.mxu0 0.0
  %3942 = vmatprep.subr.mxu0 0.0
  %3943 = vmatpush1.msra.mxu0 0.0
  %3944 = vmatprep.subr.mxu0 0.0
  %3945 = vmatpush1.msra.mxu0 0.0
  %3946 = vmatprep.subr.mxu0 0.0
  %3947 = vmatpush1.msra.mxu0 0.0
  %3948 = vmatprep.subr.mxu0 0.0
  %3949 = vmatpush1.msra.mxu0 0.0
  %3950 = vmatprep.subr.mxu0 0.0
  %3951 = vmatpush1.msra.mxu0 0.0
  %3952 = vmatprep.subr.mxu0 0.0
  %3953 = vmatpush1.msra.mxu0 0.0
  %3954 = vmatprep.subr.mxu0 0.0
  %3955 = vmatpush1.msra.mxu0 0.0
  %3956 = vmatprep.subr.mxu0 0.0
  %3957 = vmatpush1.msra.mxu0 0.0
  %3958 = vmatprep.subr.mxu0 0.0
  %3959 = vmatpush1.msra.mxu0 0.0
  %3960 = vmatprep.subr.mxu0 0.0
  %3961 = vmatpush1.msra.mxu0 0.0
  %3962 = vmatprep.subr.mxu0 0.0
  %3963 = vmatpush1.msra.mxu0 0.0
  %3964 = vmatprep.subr.mxu0 0.0
  %3965 = vmatpush1.msra.mxu0 0.0
  %3966 = vmatprep.subr.mxu0 0.0
  %3967 = vmatpush1.msra.mxu0 0.0
  %3968 = vmatprep.subr.mxu0 0.0
  %3969 = vmatpush1.msra.mxu0 0.0
  %3970 = vmatprep.subr.mxu0 0.0
  %3971 = vmatpush1.msra.mxu0 0.0
  %3972 = vmatprep.subr.mxu0 0.0
  %3973 = vmatpush1.msra.mxu0 0.0
  %3974 = vmatprep.subr.mxu0 0.0
  %3975 = vmatpush1.msra.mxu0 0.0
  %3976 = vmatprep.mubr.f32.mxu0 0.0
  %3977 = vmatmul.mubr.f32.gmra.mrb[0].mxu0 %v3466
  %v3978 = vpop.f32.mrb[0].mxu0
  %v3979 = vadd.f32 %v2500, %v3978
  %v3980 = vpop.f32.mrb[0].mxu0
  %3981 = vdwg.mxu0
  %3982 = vmatprep.subr.mxu0 0.0
  %3983 = vmatpush1.msra.mxu0 %v2491
  %3984 = vmatprep.subr.mxu0 0.0
  %3985 = vmatpush1.msra.mxu0 %v2492
  %3986 = vmatprep.subr.mxu0 0.0
  %3987 = vmatpush1.msra.mxu0 %v2493
  %3988 = vmatprep.subr.mxu0 0.0
  %3989 = vmatpush1.msra.mxu0 %v2494
  %3990 = vmatprep.subr.mxu0 0.0
  %3991 = vmatpush1.msra.mxu0 0.0
  %3992 = vmatprep.subr.mxu0 0.0
  %3993 = vmatpush1.msra.mxu0 0.0
  %3994 = vmatprep.subr.mxu0 0.0
  %3995 = vmatpush1.msra.mxu0 0.0
  %3996 = vmatprep.subr.mxu0 0.0
  %3997 = vmatpush1.msra.mxu0 0.0
  %3998 = vmatprep.subr.mxu0 0.0
  %3999 = vmatpush1.msra.mxu0 0.0
  %4000 = vmatprep.subr.mxu0 0.0
  %4001 = vmatpush1.msra.mxu0 0.0
  %4002 = vmatprep.subr.mxu0 0.0
  %4003 = vmatpush1.msra.mxu0 0.0
  %4004 = vmatprep.subr.mxu0 0.0
  %4005 = vmatpush1.msra.mxu0 0.0
  %4006 = vmatprep.subr.mxu0 0.0
  %4007 = vmatpush1.msra.mxu0 0.0
  %4008 = vmatprep.subr.mxu0 0.0
  %4009 = vmatpush1.msra.mxu0 0.0
  %4010 = vmatprep.subr.mxu0 0.0
  %4011 = vmatpush1.msra.mxu0 0.0
  %4012 = vmatprep.subr.mxu0 0.0
  %4013 = vmatpush1.msra.mxu0 0.0
  %4014 = vmatprep.subr.mxu0 0.0
  %4015 = vmatpush1.msra.mxu0 0.0
  %4016 = vmatprep.subr.mxu0 0.0
  %4017 = vmatpush1.msra.mxu0 0.0
  %4018 = vmatprep.subr.mxu0 0.0
  %4019 = vmatpush1.msra.mxu0 0.0
  %4020 = vmatprep.subr.mxu0 0.0
  %4021 = vmatpush1.msra.mxu0 0.0
  %4022 = vmatprep.subr.mxu0 0.0
  %4023 = vmatpush1.msra.mxu0 0.0
  %4024 = vmatprep.subr.mxu0 0.0
  %4025 = vmatpush1.msra.mxu0 0.0
  %4026 = vmatprep.subr.mxu0 0.0
  %4027 = vmatpush1.msra.mxu0 0.0
  %4028 = vmatprep.subr.mxu0 0.0
  %4029 = vmatpush1.msra.mxu0 0.0
  %4030 = vmatprep.subr.mxu0 0.0
  %4031 = vmatpush1.msra.mxu0 0.0
  %4032 = vmatprep.subr.mxu0 0.0
  %4033 = vmatpush1.msra.mxu0 0.0
  %4034 = vmatprep.subr.mxu0 0.0
  %4035 = vmatpush1.msra.mxu0 0.0
  %4036 = vmatprep.subr.mxu0 0.0
  %4037 = vmatpush1.msra.mxu0 0.0
  %4038 = vmatprep.subr.mxu0 0.0
  %4039 = vmatpush1.msra.mxu0 0.0
  %4040 = vmatprep.subr.mxu0 0.0
  %4041 = vmatpush1.msra.mxu0 0.0
  %4042 = vmatprep.subr.mxu0 0.0
  %4043 = vmatpush1.msra.mxu0 0.0
  %4044 = vmatprep.subr.mxu0 0.0
  %4045 = vmatpush1.msra.mxu0 0.0
  %4046 = vmatprep.mubr.f32.mxu0 0.0
  %4047 = vmatmul.mubr.f32.gmra.mrb[0].mxu0 %v3466
  %v4048 = vpop.f32.mrb[0].mxu0
  %v4049 = vadd.f32 %v2502, %v4048
  %v4050 = vpop.f32.mrb[0].mxu0
  %4051 = vdwg.mxu0
  %4052 = vmatprep.subr.mxu0 0.0
  %4053 = vmatpush1.msra.mxu0 %v2496
  %4054 = vmatprep.subr.mxu0 0.0
  %4055 = vmatpush1.msra.mxu0 %v2497
  %4056 = vmatprep.subr.mxu0 0.0
  %4057 = vmatpush1.msra.mxu0 %v2498
  %4058 = vmatprep.subr.mxu0 0.0
  %4059 = vmatpush1.msra.mxu0 %v2499
  %4060 = vmatprep.subr.mxu0 0.0
  %4061 = vmatpush1.msra.mxu0 0.0
  %4062 = vmatprep.subr.mxu0 0.0
  %4063 = vmatpush1.msra.mxu0 0.0
  %4064 = vmatprep.subr.mxu0 0.0
  %4065 = vmatpush1.msra.mxu0 0.0
  %4066 = vmatprep.subr.mxu0 0.0
  %4067 = vmatpush1.msra.mxu0 0.0
  %4068 = vmatprep.subr.mxu0 0.0
  %4069 = vmatpush1.msra.mxu0 0.0
  %4070 = vmatprep.subr.mxu0 0.0
  %4071 = vmatpush1.msra.mxu0 0.0
  %4072 = vmatprep.subr.mxu0 0.0
  %4073 = vmatpush1.msra.mxu0 0.0
  %4074 = vmatprep.subr.mxu0 0.0
  %4075 = vmatpush1.msra.mxu0 0.0
  %4076 = vmatprep.subr.mxu0 0.0
  %4077 = vmatpush1.msra.mxu0 0.0
  %4078 = vmatprep.subr.mxu0 0.0
  %4079 = vmatpush1.msra.mxu0 0.0
  %4080 = vmatprep.subr.mxu0 0.0
  %4081 = vmatpush1.msra.mxu0 0.0
  %4082 = vmatprep.subr.mxu0 0.0
  %4083 = vmatpush1.msra.mxu0 0.0
  %4084 = vmatprep.subr.mxu0 0.0
  %4085 = vmatpush1.msra.mxu0 0.0
  %4086 = vmatprep.subr.mxu0 0.0
  %4087 = vmatpush1.msra.mxu0 0.0
  %4088 = vmatprep.subr.mxu0 0.0
  %4089 = vmatpush1.msra.mxu0 0.0
  %4090 = vmatprep.subr.mxu0 0.0
  %4091 = vmatpush1.msra.mxu0 0.0
  %4092 = vmatprep.subr.mxu0 0.0
  %4093 = vmatpush1.msra.mxu0 0.0
  %4094 = vmatprep.subr.mxu0 0.0
  %4095 = vmatpush1.msra.mxu0 0.0
  %4096 = vmatprep.subr.mxu0 0.0
  %4097 = vmatpush1.msra.mxu0 0.0
  %4098 = vmatprep.subr.mxu0 0.0
  %4099 = vmatpush1.msra.mxu0 0.0
  %4100 = vmatprep.subr.mxu0 0.0
  %4101 = vmatpush1.msra.mxu0 0.0
  %4102 = vmatprep.subr.mxu0 0.0
  %4103 = vmatpush1.msra.mxu0 0.0
  %4104 = vmatprep.subr.mxu0 0.0
  %4105 = vmatpush1.msra.mxu0 0.0
  %4106 = vmatprep.subr.mxu0 0.0
  %4107 = vmatpush1.msra.mxu0 0.0
  %4108 = vmatprep.subr.mxu0 0.0
  %4109 = vmatpush1.msra.mxu0 0.0
  %4110 = vmatprep.subr.mxu0 0.0
  %4111 = vmatpush1.msra.mxu0 0.0
  %4112 = vmatprep.subr.mxu0 0.0
  %4113 = vmatpush1.msra.mxu0 0.0
  %4114 = vmatprep.subr.mxu0 0.0
  %4115 = vmatpush1.msra.mxu0 0.0
  %4116 = vmatprep.mubr.f32.mxu0 0.0
  %4117 = vmatmul.mubr.f32.gmra.mrb[0].mxu0 %v3466
  %v4118 = vpop.f32.mrb[0].mxu0
  %v4119 = vadd.f32 %v2504, %v4118
  %v4120 = vpop.f32.mrb[0].mxu0
  %4121 = vdwg.mxu0
  %v4123 = vrot.slane %v3979, 6
  %v4125 = vadd.f32 %v1747, %v4123
  %v4126 = vxor.u32 %v4125, 2147483648
  %v4127 = vmul.f32 %v4126, 1.442695
  %v4128 = vpow.pop %v4127
  %v4129 = vadd.f32 %v4128, 1.0
  %v4130 = vrcp.pop %v4129
  %v4131 = vmul.f32 1.0, %v4130
  %v4133 = vrot.slane %v4049, 6
  %v4135 = vadd.f32 %v2116, %v4133
  %v4136 = vxor.u32 %v4135, 2147483648
  %v4137 = vmul.f32 %v4136, 1.442695
  %v4138 = vpow.pop %v4137
  %v4139 = vadd.f32 %v4138, 1.0
  %v4140 = vrcp.pop %v4139
  %v4141 = vmul.f32 1.0, %v4140
  %v4143 = vrot.slane %v4119, 6
  %v4145 = vmul.f32 %v4131, %v4143
  %v4146 = vadd.f32 %v2485, %v4145
  %v4147 = vtanh.pop %v4146
  %v4148 = vsub.f32 1.0, %v4141
  %v4149 = vmul.f32 %v4148, %v4147
  %v4150 = vrot.slane %v3463, 7
  %v4152 = vmul.f32 %v4141, %v4150
  %v4153 = vadd.f32 %v4149, %v4152
  %v4155 = vrot.slane %v4153, 2
  %v4156 = vsel %vm2543, %v4155, 0
  %4158 = vmatprep.subr.mxu0 0.0
  %4159 = vmatpush1.msra.mxu0 %v2505
  %4160 = vmatprep.subr.mxu0 0.0
  %4161 = vmatpush1.msra.mxu0 %v2506
  %4162 = vmatprep.subr.mxu0 0.0
  %4163 = vmatpush1.msra.mxu0 %v2507
  %4164 = vmatprep.subr.mxu0 0.0
  %4165 = vmatpush1.msra.mxu0 %v2508
  %4166 = vmatprep.subr.mxu0 0.0
  %4167 = vmatpush1.msra.mxu0 0.0
  %4168 = vmatprep.subr.mxu0 0.0
  %4169 = vmatpush1.msra.mxu0 0.0
  %4170 = vmatprep.subr.mxu0 0.0
  %4171 = vmatpush1.msra.mxu0 0.0
  %4172 = vmatprep.subr.mxu0 0.0
  %4173 = vmatpush1.msra.mxu0 0.0
  %4174 = vmatprep.subr.mxu0 0.0
  %4175 = vmatpush1.msra.mxu0 0.0
  %4176 = vmatprep.subr.mxu0 0.0
  %4177 = vmatpush1.msra.mxu0 0.0
  %4178 = vmatprep.subr.mxu0 0.0
  %4179 = vmatpush1.msra.mxu0 0.0
  %4180 = vmatprep.subr.mxu0 0.0
  %4181 = vmatpush1.msra.mxu0 0.0
  %4182 = vmatprep.subr.mxu0 0.0
  %4183 = vmatpush1.msra.mxu0 0.0
  %4184 = vmatprep.subr.mxu0 0.0
  %4185 = vmatpush1.msra.mxu0 0.0
  %4186 = vmatprep.subr.mxu0 0.0
  %4187 = vmatpush1.msra.mxu0 0.0
  %4188 = vmatprep.subr.mxu0 0.0
  %4189 = vmatpush1.msra.mxu0 0.0
  %4190 = vmatprep.subr.mxu0 0.0
  %4191 = vmatpush1.msra.mxu0 0.0
  %4192 = vmatprep.subr.mxu0 0.0
  %4193 = vmatpush1.msra.mxu0 0.0
  %4194 = vmatprep.subr.mxu0 0.0
  %4195 = vmatpush1.msra.mxu0 0.0
  %4196 = vmatprep.subr.mxu0 0.0
  %4197 = vmatpush1.msra.mxu0 0.0
  %4198 = vmatprep.subr.mxu0 0.0
  %4199 = vmatpush1.msra.mxu0 0.0
  %4200 = vmatprep.subr.mxu0 0.0
  %4201 = vmatpush1.msra.mxu0 0.0
  %4202 = vmatprep.subr.mxu0 0.0
  %4203 = vmatpush1.msra.mxu0 0.0
  %4204 = vmatprep.subr.mxu0 0.0
  %4205 = vmatpush1.msra.mxu0 0.0
  %4206 = vmatprep.subr.mxu0 0.0
  %4207 = vmatpush1.msra.mxu0 0.0
  %4208 = vmatprep.subr.mxu0 0.0
  %4209 = vmatpush1.msra.mxu0 0.0
  %4210 = vmatprep.subr.mxu0 0.0
  %4211 = vmatpush1.msra.mxu0 0.0
  %4212 = vmatprep.subr.mxu0 0.0
  %4213 = vmatpush1.msra.mxu0 0.0
  %4214 = vmatprep.subr.mxu0 0.0
  %4215 = vmatpush1.msra.mxu0 0.0
  %4216 = vmatprep.subr.mxu0 0.0
  %4217 = vmatpush1.msra.mxu0 0.0
  %4218 = vmatprep.subr.mxu0 0.0
  %4219 = vmatpush1.msra.mxu0 0.0
  %4220 = vmatprep.subr.mxu0 0.0
  %4221 = vmatpush1.msra.mxu0 0.0
  %4222 = vmatprep.mubr.f32.mxu0 0.0
  %4223 = vmatmul.mubr.f32.gmra.mrb[0].mxu0 %v4156
  %v4224 = vpop.f32.mrb[0].mxu0
  %v4225 = vadd.f32 %v2519, %v4224
  %v4226 = vpop.f32.mrb[0].mxu0
  %4227 = vdwg.mxu0
  %4228 = vmatprep.subr.mxu0 0.0
  %4229 = vmatpush1.msra.mxu0 %v2510
  %4230 = vmatprep.subr.mxu0 0.0
  %4231 = vmatpush1.msra.mxu0 %v2511
  %4232 = vmatprep.subr.mxu0 0.0
  %4233 = vmatpush1.msra.mxu0 %v2512
  %4234 = vmatprep.subr.mxu0 0.0
  %4235 = vmatpush1.msra.mxu0 %v2513
  %4236 = vmatprep.subr.mxu0 0.0
  %4237 = vmatpush1.msra.mxu0 0.0
  %4238 = vmatprep.subr.mxu0 0.0
  %4239 = vmatpush1.msra.mxu0 0.0
  %4240 = vmatprep.subr.mxu0 0.0
  %4241 = vmatpush1.msra.mxu0 0.0
  %4242 = vmatprep.subr.mxu0 0.0
  %4243 = vmatpush1.msra.mxu0 0.0
  %4244 = vmatprep.subr.mxu0 0.0
  %4245 = vmatpush1.msra.mxu0 0.0
  %4246 = vmatprep.subr.mxu0 0.0
  %4247 = vmatpush1.msra.mxu0 0.0
  %4248 = vmatprep.subr.mxu0 0.0
  %4249 = vmatpush1.msra.mxu0 0.0
  %4250 = vmatprep.subr.mxu0 0.0
  %4251 = vmatpush1.msra.mxu0 0.0
  %4252 = vmatprep.subr.mxu0 0.0
  %4253 = vmatpush1.msra.mxu0 0.0
  %4254 = vmatprep.subr.mxu0 0.0
  %4255 = vmatpush1.msra.mxu0 0.0
  %4256 = vmatprep.subr.mxu0 0.0
  %4257 = vmatpush1.msra.mxu0 0.0
  %4258 = vmatprep.subr.mxu0 0.0
  %4259 = vmatpush1.msra.mxu0 0.0
  %4260 = vmatprep.subr.mxu0 0.0
  %4261 = vmatpush1.msra.mxu0 0.0
  %4262 = vmatprep.subr.mxu0 0.0
  %4263 = vmatpush1.msra.mxu0 0.0
  %4264 = vmatprep.subr.mxu0 0.0
  %4265 = vmatpush1.msra.mxu0 0.0
  %4266 = vmatprep.subr.mxu0 0.0
  %4267 = vmatpush1.msra.mxu0 0.0
  %4268 = vmatprep.subr.mxu0 0.0
  %4269 = vmatpush1.msra.mxu0 0.0
  %4270 = vmatprep.subr.mxu0 0.0
  %4271 = vmatpush1.msra.mxu0 0.0
  %4272 = vmatprep.subr.mxu0 0.0
  %4273 = vmatpush1.msra.mxu0 0.0
  %4274 = vmatprep.subr.mxu0 0.0
  %4275 = vmatpush1.msra.mxu0 0.0
  %4276 = vmatprep.subr.mxu0 0.0
  %4277 = vmatpush1.msra.mxu0 0.0
  %4278 = vmatprep.subr.mxu0 0.0
  %4279 = vmatpush1.msra.mxu0 0.0
  %4280 = vmatprep.subr.mxu0 0.0
  %4281 = vmatpush1.msra.mxu0 0.0
  %4282 = vmatprep.subr.mxu0 0.0
  %4283 = vmatpush1.msra.mxu0 0.0
  %4284 = vmatprep.subr.mxu0 0.0
  %4285 = vmatpush1.msra.mxu0 0.0
  %4286 = vmatprep.subr.mxu0 0.0
  %4287 = vmatpush1.msra.mxu0 0.0
  %4288 = vmatprep.subr.mxu0 0.0
  %4289 = vmatpush1.msra.mxu0 0.0
  %4290 = vmatprep.subr.mxu0 0.0
  %4291 = vmatpush1.msra.mxu0 0.0
  %4292 = vmatprep.mubr.f32.mxu0 0.0
  %4293 = vmatmul.mubr.f32.gmra.mrb[0].mxu0 %v4156
  %v4294 = vpop.f32.mrb[0].mxu0
  %v4295 = vadd.f32 %v2521, %v4294
  %v4296 = vpop.f32.mrb[0].mxu0
  %4297 = vdwg.mxu0
  %4298 = vmatprep.subr.mxu0 0.0
  %4299 = vmatpush1.msra.mxu0 %v2515
  %4300 = vmatprep.subr.mxu0 0.0
  %4301 = vmatpush1.msra.mxu0 %v2516
  %4302 = vmatprep.subr.mxu0 0.0
  %4303 = vmatpush1.msra.mxu0 %v2517
  %4304 = vmatprep.subr.mxu0 0.0
  %4305 = vmatpush1.msra.mxu0 %v2518
  %4306 = vmatprep.subr.mxu0 0.0
  %4307 = vmatpush1.msra.mxu0 0.0
  %4308 = vmatprep.subr.mxu0 0.0
  %4309 = vmatpush1.msra.mxu0 0.0
  %4310 = vmatprep.subr.mxu0 0.0
  %4311 = vmatpush1.msra.mxu0 0.0
  %4312 = vmatprep.subr.mxu0 0.0
  %4313 = vmatpush1.msra.mxu0 0.0
  %4314 = vmatprep.subr.mxu0 0.0
  %4315 = vmatpush1.msra.mxu0 0.0
  %4316 = vmatprep.subr.mxu0 0.0
  %4317 = vmatpush1.msra.mxu0 0.0
  %4318 = vmatprep.subr.mxu0 0.0
  %4319 = vmatpush1.msra.mxu0 0.0
  %4320 = vmatprep.subr.mxu0 0.0
  %4321 = vmatpush1.msra.mxu0 0.0
  %4322 = vmatprep.subr.mxu0 0.0
  %4323 = vmatpush1.msra.mxu0 0.0
  %4324 = vmatprep.subr.mxu0 0.0
  %4325 = vmatpush1.msra.mxu0 0.0
  %4326 = vmatprep.subr.mxu0 0.0
  %4327 = vmatpush1.msra.mxu0 0.0
  %4328 = vmatprep.subr.mxu0 0.0
  %4329 = vmatpush1.msra.mxu0 0.0
  %4330 = vmatprep.subr.mxu0 0.0
  %4331 = vmatpush1.msra.mxu0 0.0
  %4332 = vmatprep.subr.mxu0 0.0
  %4333 = vmatpush1.msra.mxu0 0.0
  %4334 = vmatprep.subr.mxu0 0.0
  %4335 = vmatpush1.msra.mxu0 0.0
  %4336 = vmatprep.subr.mxu0 0.0
  %4337 = vmatpush1.msra.mxu0 0.0
  %4338 = vmatprep.subr.mxu0 0.0
  %4339 = vmatpush1.msra.mxu0 0.0
  %4340 = vmatprep.subr.mxu0 0.0
  %4341 = vmatpush1.msra.mxu0 0.0
  %4342 = vmatprep.subr.mxu0 0.0
  %4343 = vmatpush1.msra.mxu0 0.0
  %4344 = vmatprep.subr.mxu0 0.0
  %4345 = vmatpush1.msra.mxu0 0.0
  %4346 = vmatprep.subr.mxu0 0.0
  %4347 = vmatpush1.msra.mxu0 0.0
  %4348 = vmatprep.subr.mxu0 0.0
  %4349 = vmatpush1.msra.mxu0 0.0
  %4350 = vmatprep.subr.mxu0 0.0
  %4351 = vmatpush1.msra.mxu0 0.0
  %4352 = vmatprep.subr.mxu0 0.0
  %4353 = vmatpush1.msra.mxu0 0.0
  %4354 = vmatprep.subr.mxu0 0.0
  %4355 = vmatpush1.msra.mxu0 0.0
  %4356 = vmatprep.subr.mxu0 0.0
  %4357 = vmatpush1.msra.mxu0 0.0
  %4358 = vmatprep.subr.mxu0 0.0
  %4359 = vmatpush1.msra.mxu0 0.0
  %4360 = vmatprep.subr.mxu0 0.0
  %4361 = vmatpush1.msra.mxu0 0.0
  %4362 = vmatprep.mubr.f32.mxu0 0.0
  %4363 = vmatmul.mubr.f32.gmra.mrb[0].mxu0 %v4156
  %v4364 = vpop.f32.mrb[0].mxu0
  %v4365 = vadd.f32 %v2523, %v4364
  %v4366 = vpop.f32.mrb[0].mxu0
  %4367 = vdwg.mxu0
  %v4369 = vsel %vm2543, %v3911, 0
  %4371 = vmatprep.subr.mxu0 0.0
  %4372 = vmatpush1.msra.mxu0 %v2524
  %4373 = vmatprep.subr.mxu0 0.0
  %4374 = vmatpush1.msra.mxu0 %v2525
  %4375 = vmatprep.subr.mxu0 0.0
  %4376 = vmatpush1.msra.mxu0 %v2526
  %4377 = vmatprep.subr.mxu0 0.0
  %4378 = vmatpush1.msra.mxu0 %v2527
  %4379 = vmatprep.subr.mxu0 0.0
  %4380 = vmatpush1.msra.mxu0 0.0
  %4381 = vmatprep.subr.mxu0 0.0
  %4382 = vmatpush1.msra.mxu0 0.0
  %4383 = vmatprep.subr.mxu0 0.0
  %4384 = vmatpush1.msra.mxu0 0.0
  %4385 = vmatprep.subr.mxu0 0.0
  %4386 = vmatpush1.msra.mxu0 0.0
  %4387 = vmatprep.subr.mxu0 0.0
  %4388 = vmatpush1.msra.mxu0 0.0
  %4389 = vmatprep.subr.mxu0 0.0
  %4390 = vmatpush1.msra.mxu0 0.0
  %4391 = vmatprep.subr.mxu0 0.0
  %4392 = vmatpush1.msra.mxu0 0.0
  %4393 = vmatprep.subr.mxu0 0.0
  %4394 = vmatpush1.msra.mxu0 0.0
  %4395 = vmatprep.subr.mxu0 0.0
  %4396 = vmatpush1.msra.mxu0 0.0
  %4397 = vmatprep.subr.mxu0 0.0
  %4398 = vmatpush1.msra.mxu0 0.0
  %4399 = vmatprep.subr.mxu0 0.0
  %4400 = vmatpush1.msra.mxu0 0.0
  %4401 = vmatprep.subr.mxu0 0.0
  %4402 = vmatpush1.msra.mxu0 0.0
  %4403 = vmatprep.subr.mxu0 0.0
  %4404 = vmatpush1.msra.mxu0 0.0
  %4405 = vmatprep.subr.mxu0 0.0
  %4406 = vmatpush1.msra.mxu0 0.0
  %4407 = vmatprep.subr.mxu0 0.0
  %4408 = vmatpush1.msra.mxu0 0.0
  %4409 = vmatprep.subr.mxu0 0.0
  %4410 = vmatpush1.msra.mxu0 0.0
  %4411 = vmatprep.subr.mxu0 0.0
  %4412 = vmatpush1.msra.mxu0 0.0
  %4413 = vmatprep.subr.mxu0 0.0
  %4414 = vmatpush1.msra.mxu0 0.0
  %4415 = vmatprep.subr.mxu0 0.0
  %4416 = vmatpush1.msra.mxu0 0.0
  %4417 = vmatprep.subr.mxu0 0.0
  %4418 = vmatpush1.msra.mxu0 0.0
  %4419 = vmatprep.subr.mxu0 0.0
  %4420 = vmatpush1.msra.mxu0 0.0
  %4421 = vmatprep.subr.mxu0 0.0
  %4422 = vmatpush1.msra.mxu0 0.0
  %4423 = vmatprep.subr.mxu0 0.0
  %4424 = vmatpush1.msra.mxu0 0.0
  %4425 = vmatprep.subr.mxu0 0.0
  %4426 = vmatpush1.msra.mxu0 0.0
  %4427 = vmatprep.subr.mxu0 0.0
  %4428 = vmatpush1.msra.mxu0 0.0
  %4429 = vmatprep.subr.mxu0 0.0
  %4430 = vmatpush1.msra.mxu0 0.0
  %4431 = vmatprep.subr.mxu0 0.0
  %4432 = vmatpush1.msra.mxu0 0.0
  %4433 = vmatprep.subr.mxu0 0.0
  %4434 = vmatpush1.msra.mxu0 0.0
  %4435 = vmatprep.mubr.f32.mxu0 0.0
  %4436 = vmatmul.mubr.f32.gmra.mrb[0].mxu0 %v4369
  %v4437 = vpop.f32.mrb[0].mxu0
  %v4438 = vadd.f32 %v2538, %v4437
  %v4439 = vpop.f32.mrb[0].mxu0
  %4440 = vdwg.mxu0
  %4441 = vmatprep.subr.mxu0 0.0
  %4442 = vmatpush1.msra.mxu0 %v2529
  %4443 = vmatprep.subr.mxu0 0.0
  %4444 = vmatpush1.msra.mxu0 %v2530
  %4445 = vmatprep.subr.mxu0 0.0
  %4446 = vmatpush1.msra.mxu0 %v2531
  %4447 = vmatprep.subr.mxu0 0.0
  %4448 = vmatpush1.msra.mxu0 %v2532
  %4449 = vmatprep.subr.mxu0 0.0
  %4450 = vmatpush1.msra.mxu0 0.0
  %4451 = vmatprep.subr.mxu0 0.0
  %4452 = vmatpush1.msra.mxu0 0.0
  %4453 = vmatprep.subr.mxu0 0.0
  %4454 = vmatpush1.msra.mxu0 0.0
  %4455 = vmatprep.subr.mxu0 0.0
  %4456 = vmatpush1.msra.mxu0 0.0
  %4457 = vmatprep.subr.mxu0 0.0
  %4458 = vmatpush1.msra.mxu0 0.0
  %4459 = vmatprep.subr.mxu0 0.0
  %4460 = vmatpush1.msra.mxu0 0.0
  %4461 = vmatprep.subr.mxu0 0.0
  %4462 = vmatpush1.msra.mxu0 0.0
  %4463 = vmatprep.subr.mxu0 0.0
  %4464 = vmatpush1.msra.mxu0 0.0
  %4465 = vmatprep.subr.mxu0 0.0
  %4466 = vmatpush1.msra.mxu0 0.0
  %4467 = vmatprep.subr.mxu0 0.0
  %4468 = vmatpush1.msra.mxu0 0.0
  %4469 = vmatprep.subr.mxu0 0.0
  %4470 = vmatpush1.msra.mxu0 0.0
  %4471 = vmatprep.subr.mxu0 0.0
  %4472 = vmatpush1.msra.mxu0 0.0
  %4473 = vmatprep.subr.mxu0 0.0
  %4474 = vmatpush1.msra.mxu0 0.0
  %4475 = vmatprep.subr.mxu0 0.0
  %4476 = vmatpush1.msra.mxu0 0.0
  %4477 = vmatprep.subr.mxu0 0.0
  %4478 = vmatpush1.msra.mxu0 0.0
  %4479 = vmatprep.subr.mxu0 0.0
  %4480 = vmatpush1.msra.mxu0 0.0
  %4481 = vmatprep.subr.mxu0 0.0
  %4482 = vmatpush1.msra.mxu0 0.0
  %4483 = vmatprep.subr.mxu0 0.0
  %4484 = vmatpush1.msra.mxu0 0.0
  %4485 = vmatprep.subr.mxu0 0.0
  %4486 = vmatpush1.msra.mxu0 0.0
  %4487 = vmatprep.subr.mxu0 0.0
  %4488 = vmatpush1.msra.mxu0 0.0
  %4489 = vmatprep.subr.mxu0 0.0
  %4490 = vmatpush1.msra.mxu0 0.0
  %4491 = vmatprep.subr.mxu0 0.0
  %4492 = vmatpush1.msra.mxu0 0.0
  %4493 = vmatprep.subr.mxu0 0.0
  %4494 = vmatpush1.msra.mxu0 0.0
  %4495 = vmatprep.subr.mxu0 0.0
  %4496 = vmatpush1.msra.mxu0 0.0
  %4497 = vmatprep.subr.mxu0 0.0
  %4498 = vmatpush1.msra.mxu0 0.0
  %4499 = vmatprep.subr.mxu0 0.0
  %4500 = vmatpush1.msra.mxu0 0.0
  %4501 = vmatprep.subr.mxu0 0.0
  %4502 = vmatpush1.msra.mxu0 0.0
  %4503 = vmatprep.subr.mxu0 0.0
  %4504 = vmatpush1.msra.mxu0 0.0
  %4505 = vmatprep.mubr.f32.mxu0 0.0
  %4506 = vmatmul.mubr.f32.gmra.mrb[0].mxu0 %v4369
  %v4507 = vpop.f32.mrb[0].mxu0
  %v4508 = vadd.f32 %v2540, %v4507
  %v4509 = vpop.f32.mrb[0].mxu0
  %4510 = vdwg.mxu0
  %4511 = vmatprep.subr.mxu0 0.0
  %4512 = vmatpush1.msra.mxu0 %v2534
  %4513 = vmatprep.subr.mxu0 0.0
  %4514 = vmatpush1.msra.mxu0 %v2535
  %4515 = vmatprep.subr.mxu0 0.0
  %4516 = vmatpush1.msra.mxu0 %v2536
  %4517 = vmatprep.subr.mxu0 0.0
  %4518 = vmatpush1.msra.mxu0 %v2537
  %4519 = vmatprep.subr.mxu0 0.0
  %4520 = vmatpush1.msra.mxu0 0.0
  %4521 = vmatprep.subr.mxu0 0.0
  %4522 = vmatpush1.msra.mxu0 0.0
  %4523 = vmatprep.subr.mxu0 0.0
  %4524 = vmatpush1.msra.mxu0 0.0
  %4525 = vmatprep.subr.mxu0 0.0
  %4526 = vmatpush1.msra.mxu0 0.0
  %4527 = vmatprep.subr.mxu0 0.0
  %4528 = vmatpush1.msra.mxu0 0.0
  %4529 = vmatprep.subr.mxu0 0.0
  %4530 = vmatpush1.msra.mxu0 0.0
  %4531 = vmatprep.subr.mxu0 0.0
  %4532 = vmatpush1.msra.mxu0 0.0
  %4533 = vmatprep.subr.mxu0 0.0
  %4534 = vmatpush1.msra.mxu0 0.0
  %4535 = vmatprep.subr.mxu0 0.0
  %4536 = vmatpush1.msra.mxu0 0.0
  %4537 = vmatprep.subr.mxu0 0.0
  %4538 = vmatpush1.msra.mxu0 0.0
  %4539 = vmatprep.subr.mxu0 0.0
  %4540 = vmatpush1.msra.mxu0 0.0
  %4541 = vmatprep.subr.mxu0 0.0
  %4542 = vmatpush1.msra.mxu0 0.0
  %4543 = vmatprep.subr.mxu0 0.0
  %4544 = vmatpush1.msra.mxu0 0.0
  %4545 = vmatprep.subr.mxu0 0.0
  %4546 = vmatpush1.msra.mxu0 0.0
  %4547 = vmatprep.subr.mxu0 0.0
  %4548 = vmatpush1.msra.mxu0 0.0
  %4549 = vmatprep.subr.mxu0 0.0
  %4550 = vmatpush1.msra.mxu0 0.0
  %4551 = vmatprep.subr.mxu0 0.0
  %4552 = vmatpush1.msra.mxu0 0.0
  %4553 = vmatprep.subr.mxu0 0.0
  %4554 = vmatpush1.msra.mxu0 0.0
  %4555 = vmatprep.subr.mxu0 0.0
  %4556 = vmatpush1.msra.mxu0 0.0
  %4557 = vmatprep.subr.mxu0 0.0
  %4558 = vmatpush1.msra.mxu0 0.0
  %4559 = vmatprep.subr.mxu0 0.0
  %4560 = vmatpush1.msra.mxu0 0.0
  %4561 = vmatprep.subr.mxu0 0.0
  %4562 = vmatpush1.msra.mxu0 0.0
  %4563 = vmatprep.subr.mxu0 0.0
  %4564 = vmatpush1.msra.mxu0 0.0
  %4565 = vmatprep.subr.mxu0 0.0
  %4566 = vmatpush1.msra.mxu0 0.0
  %4567 = vmatprep.subr.mxu0 0.0
  %4568 = vmatpush1.msra.mxu0 0.0
  %4569 = vmatprep.subr.mxu0 0.0
  %4570 = vmatpush1.msra.mxu0 0.0
  %4571 = vmatprep.subr.mxu0 0.0
  %4572 = vmatpush1.msra.mxu0 0.0
  %4573 = vmatprep.subr.mxu0 0.0
  %4574 = vmatpush1.msra.mxu0 0.0
  %4575 = vmatprep.mubr.f32.mxu0 0.0
  %4576 = vmatmul.mubr.f32.gmra.mrb[0].mxu0 %v4369
  %v4577 = vpop.f32.mrb[0].mxu0
  %v4578 = vadd.f32 %v2542, %v4577
  %v4579 = vpop.f32.mrb[0].mxu0
  %4580 = vdwg.mxu0
  %v4581 = vadd.f32 %v4225, %v4438
  %v4582 = vxor.u32 %v4581, 2147483648
  %v4583 = vmul.f32 %v4582, 1.442695
  %v4584 = vpow.pop %v4583
  %v4585 = vadd.f32 %v4584, 1.0
  %v4586 = vrcp.pop %v4585
  %v4587 = vmul.f32 1.0, %v4586
  %v4588 = vadd.f32 %v4295, %v4508
  %v4589 = vxor.u32 %v4588, 2147483648
  %v4590 = vmul.f32 %v4589, 1.442695
  %v4591 = vpow.pop %v4590
  %v4592 = vadd.f32 %v4591, 1.0
  %v4593 = vrcp.pop %v4592
  %v4594 = vmul.f32 1.0, %v4593
  %v4595 = vmul.f32 %v4587, %v4578
  %v4596 = vadd.f32 %v4365, %v4595
  %v4597 = vtanh.pop %v4596
  %v4598 = vsub.f32 1.0, %v4594
  %v4599 = vmul.f32 %v4598, %v4597
  %v4600 = vmul.f32 %v4594, %v3911
  %v4601 = vadd.f32 %v4599, %v4600
  %4602 = vmatprep.subr.mxu0 0.0
  %4603 = vmatpush1.msra.mxu0 %v2486
  %4604 = vmatprep.subr.mxu0 0.0
  %4605 = vmatpush1.msra.mxu0 %v2487
  %4606 = vmatprep.subr.mxu0 0.0
  %4607 = vmatpush1.msra.mxu0 %v2488
  %4608 = vmatprep.subr.mxu0 0.0
  %4609 = vmatpush1.msra.mxu0 %v2489
  %4610 = vmatprep.subr.mxu0 0.0
  %4611 = vmatpush1.msra.mxu0 0.0
  %4612 = vmatprep.subr.mxu0 0.0
  %4613 = vmatpush1.msra.mxu0 0.0
  %4614 = vmatprep.subr.mxu0 0.0
  %4615 = vmatpush1.msra.mxu0 0.0
  %4616 = vmatprep.subr.mxu0 0.0
  %4617 = vmatpush1.msra.mxu0 0.0
  %4618 = vmatprep.subr.mxu0 0.0
  %4619 = vmatpush1.msra.mxu0 0.0
  %4620 = vmatprep.subr.mxu0 0.0
  %4621 = vmatpush1.msra.mxu0 0.0
  %4622 = vmatprep.subr.mxu0 0.0
  %4623 = vmatpush1.msra.mxu0 0.0
  %4624 = vmatprep.subr.mxu0 0.0
  %4625 = vmatpush1.msra.mxu0 0.0
  %4626 = vmatprep.subr.mxu0 0.0
  %4627 = vmatpush1.msra.mxu0 0.0
  %4628 = vmatprep.subr.mxu0 0.0
  %4629 = vmatpush1.msra.mxu0 0.0
  %4630 = vmatprep.subr.mxu0 0.0
  %4631 = vmatpush1.msra.mxu0 0.0
  %4632 = vmatprep.subr.mxu0 0.0
  %4633 = vmatpush1.msra.mxu0 0.0
  %4634 = vmatprep.subr.mxu0 0.0
  %4635 = vmatpush1.msra.mxu0 0.0
  %4636 = vmatprep.subr.mxu0 0.0
  %4637 = vmatpush1.msra.mxu0 0.0
  %4638 = vmatprep.subr.mxu0 0.0
  %4639 = vmatpush1.msra.mxu0 0.0
  %4640 = vmatprep.subr.mxu0 0.0
  %4641 = vmatpush1.msra.mxu0 0.0
  %4642 = vmatprep.subr.mxu0 0.0
  %4643 = vmatpush1.msra.mxu0 0.0
  %4644 = vmatprep.subr.mxu0 0.0
  %4645 = vmatpush1.msra.mxu0 0.0
  %4646 = vmatprep.subr.mxu0 0.0
  %4647 = vmatpush1.msra.mxu0 0.0
  %4648 = vmatprep.subr.mxu0 0.0
  %4649 = vmatpush1.msra.mxu0 0.0
  %4650 = vmatprep.subr.mxu0 0.0
  %4651 = vmatpush1.msra.mxu0 0.0
  %4652 = vmatprep.subr.mxu0 0.0
  %4653 = vmatpush1.msra.mxu0 0.0
  %4654 = vmatprep.subr.mxu0 0.0
  %4655 = vmatpush1.msra.mxu0 0.0
  %4656 = vmatprep.subr.mxu0 0.0
  %4657 = vmatpush1.msra.mxu0 0.0
  %4658 = vmatprep.subr.mxu0 0.0
  %4659 = vmatpush1.msra.mxu0 0.0
  %4660 = vmatprep.subr.mxu0 0.0
  %4661 = vmatpush1.msra.mxu0 0.0
  %4662 = vmatprep.subr.mxu0 0.0
  %4663 = vmatpush1.msra.mxu0 0.0
  %4664 = vmatprep.subr.mxu0 0.0
  %4665 = vmatpush1.msra.mxu0 0.0
  %4666 = vmatprep.mubr.f32.mxu0 0.0
  %4667 = vmatmul.mubr.f32.gmra.mrb[0].mxu0 %v4156
  %v4668 = vpop.f32.mrb[0].mxu0
  %v4669 = vadd.f32 %v2500, %v4668
  %v4670 = vpop.f32.mrb[0].mxu0
  %4671 = vdwg.mxu0
  %4672 = vmatprep.subr.mxu0 0.0
  %4673 = vmatpush1.msra.mxu0 %v2491
  %4674 = vmatprep.subr.mxu0 0.0
  %4675 = vmatpush1.msra.mxu0 %v2492
  %4676 = vmatprep.subr.mxu0 0.0
  %4677 = vmatpush1.msra.mxu0 %v2493
  %4678 = vmatprep.subr.mxu0 0.0
  %4679 = vmatpush1.msra.mxu0 %v2494
  %4680 = vmatprep.subr.mxu0 0.0
  %4681 = vmatpush1.msra.mxu0 0.0
  %4682 = vmatprep.subr.mxu0 0.0
  %4683 = vmatpush1.msra.mxu0 0.0
  %4684 = vmatprep.subr.mxu0 0.0
  %4685 = vmatpush1.msra.mxu0 0.0
  %4686 = vmatprep.subr.mxu0 0.0
  %4687 = vmatpush1.msra.mxu0 0.0
  %4688 = vmatprep.subr.mxu0 0.0
  %4689 = vmatpush1.msra.mxu0 0.0
  %4690 = vmatprep.subr.mxu0 0.0
  %4691 = vmatpush1.msra.mxu0 0.0
  %4692 = vmatprep.subr.mxu0 0.0
  %4693 = vmatpush1.msra.mxu0 0.0
  %4694 = vmatprep.subr.mxu0 0.0
  %4695 = vmatpush1.msra.mxu0 0.0
  %4696 = vmatprep.subr.mxu0 0.0
  %4697 = vmatpush1.msra.mxu0 0.0
  %4698 = vmatprep.subr.mxu0 0.0
  %4699 = vmatpush1.msra.mxu0 0.0
  %4700 = vmatprep.subr.mxu0 0.0
  %4701 = vmatpush1.msra.mxu0 0.0
  %4702 = vmatprep.subr.mxu0 0.0
  %4703 = vmatpush1.msra.mxu0 0.0
  %4704 = vmatprep.subr.mxu0 0.0
  %4705 = vmatpush1.msra.mxu0 0.0
  %4706 = vmatprep.subr.mxu0 0.0
  %4707 = vmatpush1.msra.mxu0 0.0
  %4708 = vmatprep.subr.mxu0 0.0
  %4709 = vmatpush1.msra.mxu0 0.0
  %4710 = vmatprep.subr.mxu0 0.0
  %4711 = vmatpush1.msra.mxu0 0.0
  %4712 = vmatprep.subr.mxu0 0.0
  %4713 = vmatpush1.msra.mxu0 0.0
  %4714 = vmatprep.subr.mxu0 0.0
  %4715 = vmatpush1.msra.mxu0 0.0
  %4716 = vmatprep.subr.mxu0 0.0
  %4717 = vmatpush1.msra.mxu0 0.0
  %4718 = vmatprep.subr.mxu0 0.0
  %4719 = vmatpush1.msra.mxu0 0.0
  %4720 = vmatprep.subr.mxu0 0.0
  %4721 = vmatpush1.msra.mxu0 0.0
  %4722 = vmatprep.subr.mxu0 0.0
  %4723 = vmatpush1.msra.mxu0 0.0
  %4724 = vmatprep.subr.mxu0 0.0
  %4725 = vmatpush1.msra.mxu0 0.0
  %4726 = vmatprep.subr.mxu0 0.0
  %4727 = vmatpush1.msra.mxu0 0.0
  %4728 = vmatprep.subr.mxu0 0.0
  %4729 = vmatpush1.msra.mxu0 0.0
  %4730 = vmatprep.subr.mxu0 0.0
  %4731 = vmatpush1.msra.mxu0 0.0
  %4732 = vmatprep.subr.mxu0 0.0
  %4733 = vmatpush1.msra.mxu0 0.0
  %4734 = vmatprep.subr.mxu0 0.0
  %4735 = vmatpush1.msra.mxu0 0.0
  %4736 = vmatprep.mubr.f32.mxu0 0.0
  %4737 = vmatmul.mubr.f32.gmra.mrb[0].mxu0 %v4156
  %v4738 = vpop.f32.mrb[0].mxu0
  %v4739 = vadd.f32 %v2502, %v4738
  %v4740 = vpop.f32.mrb[0].mxu0
  %4741 = vdwg.mxu0
  %4742 = vmatprep.subr.mxu0 0.0
  %4743 = vmatpush1.msra.mxu0 %v2496
  %4744 = vmatprep.subr.mxu0 0.0
  %4745 = vmatpush1.msra.mxu0 %v2497
  %4746 = vmatprep.subr.mxu0 0.0
  %4747 = vmatpush1.msra.mxu0 %v2498
  %4748 = vmatprep.subr.mxu0 0.0
  %4749 = vmatpush1.msra.mxu0 %v2499
  %4750 = vmatprep.subr.mxu0 0.0
  %4751 = vmatpush1.msra.mxu0 0.0
  %4752 = vmatprep.subr.mxu0 0.0
  %4753 = vmatpush1.msra.mxu0 0.0
  %4754 = vmatprep.subr.mxu0 0.0
  %4755 = vmatpush1.msra.mxu0 0.0
  %4756 = vmatprep.subr.mxu0 0.0
  %4757 = vmatpush1.msra.mxu0 0.0
  %4758 = vmatprep.subr.mxu0 0.0
  %4759 = vmatpush1.msra.mxu0 0.0
  %4760 = vmatprep.subr.mxu0 0.0
  %4761 = vmatpush1.msra.mxu0 0.0
  %4762 = vmatprep.subr.mxu0 0.0
  %4763 = vmatpush1.msra.mxu0 0.0
  %4764 = vmatprep.subr.mxu0 0.0
  %4765 = vmatpush1.msra.mxu0 0.0
  %4766 = vmatprep.subr.mxu0 0.0
  %4767 = vmatpush1.msra.mxu0 0.0
  %4768 = vmatprep.subr.mxu0 0.0
  %4769 = vmatpush1.msra.mxu0 0.0
  %4770 = vmatprep.subr.mxu0 0.0
  %4771 = vmatpush1.msra.mxu0 0.0
  %4772 = vmatprep.subr.mxu0 0.0
  %4773 = vmatpush1.msra.mxu0 0.0
  %4774 = vmatprep.subr.mxu0 0.0
  %4775 = vmatpush1.msra.mxu0 0.0
  %4776 = vmatprep.subr.mxu0 0.0
  %4777 = vmatpush1.msra.mxu0 0.0
  %4778 = vmatprep.subr.mxu0 0.0
  %4779 = vmatpush1.msra.mxu0 0.0
  %4780 = vmatprep.subr.mxu0 0.0
  %4781 = vmatpush1.msra.mxu0 0.0
  %4782 = vmatprep.subr.mxu0 0.0
  %4783 = vmatpush1.msra.mxu0 0.0
  %4784 = vmatprep.subr.mxu0 0.0
  %4785 = vmatpush1.msra.mxu0 0.0
  %4786 = vmatprep.subr.mxu0 0.0
  %4787 = vmatpush1.msra.mxu0 0.0
  %4788 = vmatprep.subr.mxu0 0.0
  %4789 = vmatpush1.msra.mxu0 0.0
  %4790 = vmatprep.subr.mxu0 0.0
  %4791 = vmatpush1.msra.mxu0 0.0
  %4792 = vmatprep.subr.mxu0 0.0
  %4793 = vmatpush1.msra.mxu0 0.0
  %4794 = vmatprep.subr.mxu0 0.0
  %4795 = vmatpush1.msra.mxu0 0.0
  %4796 = vmatprep.subr.mxu0 0.0
  %4797 = vmatpush1.msra.mxu0 0.0
  %4798 = vmatprep.subr.mxu0 0.0
  %4799 = vmatpush1.msra.mxu0 0.0
  %4800 = vmatprep.subr.mxu0 0.0
  %4801 = vmatpush1.msra.mxu0 0.0
  %4802 = vmatprep.subr.mxu0 0.0
  %4803 = vmatpush1.msra.mxu0 0.0
  %4804 = vmatprep.subr.mxu0 0.0
  %4805 = vmatpush1.msra.mxu0 0.0
  %4806 = vmatprep.mubr.f32.mxu0 0.0
  %4807 = vmatmul.mubr.f32.gmra.mrb[0].mxu0 %v4156
  %v4808 = vpop.f32.mrb[0].mxu0
  %v4809 = vadd.f32 %v2504, %v4808
  %v4810 = vpop.f32.mrb[0].mxu0
  %4811 = vdwg.mxu0
  %v4813 = vrot.slane %v4669, 5
  %v4815 = vadd.f32 %v1747, %v4813
  %v4816 = vxor.u32 %v4815, 2147483648
  %v4817 = vmul.f32 %v4816, 1.442695
  %v4818 = vpow.pop %v4817
  %v4819 = vadd.f32 %v4818, 1.0
  %v4820 = vrcp.pop %v4819
  %v4821 = vmul.f32 1.0, %v4820
  %v4823 = vrot.slane %v4739, 5
  %v4825 = vadd.f32 %v2116, %v4823
  %v4826 = vxor.u32 %v4825, 2147483648
  %v4827 = vmul.f32 %v4826, 1.442695
  %v4828 = vpow.pop %v4827
  %v4829 = vadd.f32 %v4828, 1.0
  %v4830 = vrcp.pop %v4829
  %v4831 = vmul.f32 1.0, %v4830
  %v4833 = vrot.slane %v4809, 5
  %v4835 = vmul.f32 %v4821, %v4833
  %v4836 = vadd.f32 %v2485, %v4835
  %v4837 = vtanh.pop %v4836
  %v4838 = vsub.f32 1.0, %v4831
  %v4839 = vmul.f32 %v4838, %v4837
  %v4840 = vrot.slane %v4153, 7
  %v4842 = vmul.f32 %v4831, %v4840
  %v4843 = vadd.f32 %v4839, %v4842
  %v4845 = vrot.slane %v4843, 3
  %v4846 = vsel %vm2543, %v4845, 0
  %4848 = vmatprep.subr.mxu0 0.0
  %4849 = vmatpush1.msra.mxu0 %v2505
  %4850 = vmatprep.subr.mxu0 0.0
  %4851 = vmatpush1.msra.mxu0 %v2506
  %4852 = vmatprep.subr.mxu0 0.0
  %4853 = vmatpush1.msra.mxu0 %v2507
  %4854 = vmatprep.subr.mxu0 0.0
  %4855 = vmatpush1.msra.mxu0 %v2508
  %4856 = vmatprep.subr.mxu0 0.0
  %4857 = vmatpush1.msra.mxu0 0.0
  %4858 = vmatprep.subr.mxu0 0.0
  %4859 = vmatpush1.msra.mxu0 0.0
  %4860 = vmatprep.subr.mxu0 0.0
  %4861 = vmatpush1.msra.mxu0 0.0
  %4862 = vmatprep.subr.mxu0 0.0
  %4863 = vmatpush1.msra.mxu0 0.0
  %4864 = vmatprep.subr.mxu0 0.0
  %4865 = vmatpush1.msra.mxu0 0.0
  %4866 = vmatprep.subr.mxu0 0.0
  %4867 = vmatpush1.msra.mxu0 0.0
  %4868 = vmatprep.subr.mxu0 0.0
  %4869 = vmatpush1.msra.mxu0 0.0
  %4870 = vmatprep.subr.mxu0 0.0
  %4871 = vmatpush1.msra.mxu0 0.0
  %4872 = vmatprep.subr.mxu0 0.0
  %4873 = vmatpush1.msra.mxu0 0.0
  %4874 = vmatprep.subr.mxu0 0.0
  %4875 = vmatpush1.msra.mxu0 0.0
  %4876 = vmatprep.subr.mxu0 0.0
  %4877 = vmatpush1.msra.mxu0 0.0
  %4878 = vmatprep.subr.mxu0 0.0
  %4879 = vmatpush1.msra.mxu0 0.0
  %4880 = vmatprep.subr.mxu0 0.0
  %4881 = vmatpush1.msra.mxu0 0.0
  %4882 = vmatprep.subr.mxu0 0.0
  %4883 = vmatpush1.msra.mxu0 0.0
  %4884 = vmatprep.subr.mxu0 0.0
  %4885 = vmatpush1.msra.mxu0 0.0
  %4886 = vmatprep.subr.mxu0 0.0
  %4887 = vmatpush1.msra.mxu0 0.0
  %4888 = vmatprep.subr.mxu0 0.0
  %4889 = vmatpush1.msra.mxu0 0.0
  %4890 = vmatprep.subr.mxu0 0.0
  %4891 = vmatpush1.msra.mxu0 0.0
  %4892 = vmatprep.subr.mxu0 0.0
  %4893 = vmatpush1.msra.mxu0 0.0
  %4894 = vmatprep.subr.mxu0 0.0
  %4895 = vmatpush1.msra.mxu0 0.0
  %4896 = vmatprep.subr.mxu0 0.0
  %4897 = vmatpush1.msra.mxu0 0.0
  %4898 = vmatprep.subr.mxu0 0.0
  %4899 = vmatpush1.msra.mxu0 0.0
  %4900 = vmatprep.subr.mxu0 0.0
  %4901 = vmatpush1.msra.mxu0 0.0
  %4902 = vmatprep.subr.mxu0 0.0
  %4903 = vmatpush1.msra.mxu0 0.0
  %4904 = vmatprep.subr.mxu0 0.0
  %4905 = vmatpush1.msra.mxu0 0.0
  %4906 = vmatprep.subr.mxu0 0.0
  %4907 = vmatpush1.msra.mxu0 0.0
  %4908 = vmatprep.subr.mxu0 0.0
  %4909 = vmatpush1.msra.mxu0 0.0
  %4910 = vmatprep.subr.mxu0 0.0
  %4911 = vmatpush1.msra.mxu0 0.0
  %4912 = vmatprep.mubr.f32.mxu0 0.0
  %4913 = vmatmul.mubr.f32.gmra.mrb[0].mxu0 %v4846
  %v4914 = vpop.f32.mrb[0].mxu0
  %v4915 = vadd.f32 %v2519, %v4914
  %v4916 = vpop.f32.mrb[0].mxu0
  %4917 = vdwg.mxu0
  %4918 = vmatprep.subr.mxu0 0.0
  %4919 = vmatpush1.msra.mxu0 %v2510
  %4920 = vmatprep.subr.mxu0 0.0
  %4921 = vmatpush1.msra.mxu0 %v2511
  %4922 = vmatprep.subr.mxu0 0.0
  %4923 = vmatpush1.msra.mxu0 %v2512
  %4924 = vmatprep.subr.mxu0 0.0
  %4925 = vmatpush1.msra.mxu0 %v2513
  %4926 = vmatprep.subr.mxu0 0.0
  %4927 = vmatpush1.msra.mxu0 0.0
  %4928 = vmatprep.subr.mxu0 0.0
  %4929 = vmatpush1.msra.mxu0 0.0
  %4930 = vmatprep.subr.mxu0 0.0
  %4931 = vmatpush1.msra.mxu0 0.0
  %4932 = vmatprep.subr.mxu0 0.0
  %4933 = vmatpush1.msra.mxu0 0.0
  %4934 = vmatprep.subr.mxu0 0.0
  %4935 = vmatpush1.msra.mxu0 0.0
  %4936 = vmatprep.subr.mxu0 0.0
  %4937 = vmatpush1.msra.mxu0 0.0
  %4938 = vmatprep.subr.mxu0 0.0
  %4939 = vmatpush1.msra.mxu0 0.0
  %4940 = vmatprep.subr.mxu0 0.0
  %4941 = vmatpush1.msra.mxu0 0.0
  %4942 = vmatprep.subr.mxu0 0.0
  %4943 = vmatpush1.msra.mxu0 0.0
  %4944 = vmatprep.subr.mxu0 0.0
  %4945 = vmatpush1.msra.mxu0 0.0
  %4946 = vmatprep.subr.mxu0 0.0
  %4947 = vmatpush1.msra.mxu0 0.0
  %4948 = vmatprep.subr.mxu0 0.0
  %4949 = vmatpush1.msra.mxu0 0.0
  %4950 = vmatprep.subr.mxu0 0.0
  %4951 = vmatpush1.msra.mxu0 0.0
  %4952 = vmatprep.subr.mxu0 0.0
  %4953 = vmatpush1.msra.mxu0 0.0
  %4954 = vmatprep.subr.mxu0 0.0
  %4955 = vmatpush1.msra.mxu0 0.0
  %4956 = vmatprep.subr.mxu0 0.0
  %4957 = vmatpush1.msra.mxu0 0.0
  %4958 = vmatprep.subr.mxu0 0.0
  %4959 = vmatpush1.msra.mxu0 0.0
  %4960 = vmatprep.subr.mxu0 0.0
  %4961 = vmatpush1.msra.mxu0 0.0
  %4962 = vmatprep.subr.mxu0 0.0
  %4963 = vmatpush1.msra.mxu0 0.0
  %4964 = vmatprep.subr.mxu0 0.0
  %4965 = vmatpush1.msra.mxu0 0.0
  %4966 = vmatprep.subr.mxu0 0.0
  %4967 = vmatpush1.msra.mxu0 0.0
  %4968 = vmatprep.subr.mxu0 0.0
  %4969 = vmatpush1.msra.mxu0 0.0
  %4970 = vmatprep.subr.mxu0 0.0
  %4971 = vmatpush1.msra.mxu0 0.0
  %4972 = vmatprep.subr.mxu0 0.0
  %4973 = vmatpush1.msra.mxu0 0.0
  %4974 = vmatprep.subr.mxu0 0.0
  %4975 = vmatpush1.msra.mxu0 0.0
  %4976 = vmatprep.subr.mxu0 0.0
  %4977 = vmatpush1.msra.mxu0 0.0
  %4978 = vmatprep.subr.mxu0 0.0
  %4979 = vmatpush1.msra.mxu0 0.0
  %4980 = vmatprep.subr.mxu0 0.0
  %4981 = vmatpush1.msra.mxu0 0.0
  %4982 = vmatprep.mubr.f32.mxu0 0.0
  %4983 = vmatmul.mubr.f32.gmra.mrb[0].mxu0 %v4846
  %v4984 = vpop.f32.mrb[0].mxu0
  %v4985 = vadd.f32 %v2521, %v4984
  %v4986 = vpop.f32.mrb[0].mxu0
  %4987 = vdwg.mxu0
  %4988 = vmatprep.subr.mxu0 0.0
  %4989 = vmatpush1.msra.mxu0 %v2515
  %4990 = vmatprep.subr.mxu0 0.0
  %4991 = vmatpush1.msra.mxu0 %v2516
  %4992 = vmatprep.subr.mxu0 0.0
  %4993 = vmatpush1.msra.mxu0 %v2517
  %4994 = vmatprep.subr.mxu0 0.0
  %4995 = vmatpush1.msra.mxu0 %v2518
  %4996 = vmatprep.subr.mxu0 0.0
  %4997 = vmatpush1.msra.mxu0 0.0
  %4998 = vmatprep.subr.mxu0 0.0
  %4999 = vmatpush1.msra.mxu0 0.0
  %5000 = vmatprep.subr.mxu0 0.0
  %5001 = vmatpush1.msra.mxu0 0.0
  %5002 = vmatprep.subr.mxu0 0.0
  %5003 = vmatpush1.msra.mxu0 0.0
  %5004 = vmatprep.subr.mxu0 0.0
  %5005 = vmatpush1.msra.mxu0 0.0
  %5006 = vmatprep.subr.mxu0 0.0
  %5007 = vmatpush1.msra.mxu0 0.0
  %5008 = vmatprep.subr.mxu0 0.0
  %5009 = vmatpush1.msra.mxu0 0.0
  %5010 = vmatprep.subr.mxu0 0.0
  %5011 = vmatpush1.msra.mxu0 0.0
  %5012 = vmatprep.subr.mxu0 0.0
  %5013 = vmatpush1.msra.mxu0 0.0
  %5014 = vmatprep.subr.mxu0 0.0
  %5015 = vmatpush1.msra.mxu0 0.0
  %5016 = vmatprep.subr.mxu0 0.0
  %5017 = vmatpush1.msra.mxu0 0.0
  %5018 = vmatprep.subr.mxu0 0.0
  %5019 = vmatpush1.msra.mxu0 0.0
  %5020 = vmatprep.subr.mxu0 0.0
  %5021 = vmatpush1.msra.mxu0 0.0
  %5022 = vmatprep.subr.mxu0 0.0
  %5023 = vmatpush1.msra.mxu0 0.0
  %5024 = vmatprep.subr.mxu0 0.0
  %5025 = vmatpush1.msra.mxu0 0.0
  %5026 = vmatprep.subr.mxu0 0.0
  %5027 = vmatpush1.msra.mxu0 0.0
  %5028 = vmatprep.subr.mxu0 0.0
  %5029 = vmatpush1.msra.mxu0 0.0
  %5030 = vmatprep.subr.mxu0 0.0
  %5031 = vmatpush1.msra.mxu0 0.0
  %5032 = vmatprep.subr.mxu0 0.0
  %5033 = vmatpush1.msra.mxu0 0.0
  %5034 = vmatprep.subr.mxu0 0.0
  %5035 = vmatpush1.msra.mxu0 0.0
  %5036 = vmatprep.subr.mxu0 0.0
  %5037 = vmatpush1.msra.mxu0 0.0
  %5038 = vmatprep.subr.mxu0 0.0
  %5039 = vmatpush1.msra.mxu0 0.0
  %5040 = vmatprep.subr.mxu0 0.0
  %5041 = vmatpush1.msra.mxu0 0.0
  %5042 = vmatprep.subr.mxu0 0.0
  %5043 = vmatpush1.msra.mxu0 0.0
  %5044 = vmatprep.subr.mxu0 0.0
  %5045 = vmatpush1.msra.mxu0 0.0
  %5046 = vmatprep.subr.mxu0 0.0
  %5047 = vmatpush1.msra.mxu0 0.0
  %5048 = vmatprep.subr.mxu0 0.0
  %5049 = vmatpush1.msra.mxu0 0.0
  %5050 = vmatprep.subr.mxu0 0.0
  %5051 = vmatpush1.msra.mxu0 0.0
  %5052 = vmatprep.mubr.f32.mxu0 0.0
  %5053 = vmatmul.mubr.f32.gmra.mrb[0].mxu0 %v4846
  %v5054 = vpop.f32.mrb[0].mxu0
  %v5055 = vadd.f32 %v2523, %v5054
  %v5056 = vpop.f32.mrb[0].mxu0
  %5057 = vdwg.mxu0
  %v5059 = vsel %vm2543, %v4601, 0
  %5061 = vmatprep.subr.mxu0 0.0
  %5062 = vmatpush1.msra.mxu0 %v2524
  %5063 = vmatprep.subr.mxu0 0.0
  %5064 = vmatpush1.msra.mxu0 %v2525
  %5065 = vmatprep.subr.mxu0 0.0
  %5066 = vmatpush1.msra.mxu0 %v2526
  %5067 = vmatprep.subr.mxu0 0.0
  %5068 = vmatpush1.msra.mxu0 %v2527
  %5069 = vmatprep.subr.mxu0 0.0
  %5070 = vmatpush1.msra.mxu0 0.0
  %5071 = vmatprep.subr.mxu0 0.0
  %5072 = vmatpush1.msra.mxu0 0.0
  %5073 = vmatprep.subr.mxu0 0.0
  %5074 = vmatpush1.msra.mxu0 0.0
  %5075 = vmatprep.subr.mxu0 0.0
  %5076 = vmatpush1.msra.mxu0 0.0
  %5077 = vmatprep.subr.mxu0 0.0
  %5078 = vmatpush1.msra.mxu0 0.0
  %5079 = vmatprep.subr.mxu0 0.0
  %5080 = vmatpush1.msra.mxu0 0.0
  %5081 = vmatprep.subr.mxu0 0.0
  %5082 = vmatpush1.msra.mxu0 0.0
  %5083 = vmatprep.subr.mxu0 0.0
  %5084 = vmatpush1.msra.mxu0 0.0
  %5085 = vmatprep.subr.mxu0 0.0
  %5086 = vmatpush1.msra.mxu0 0.0
  %5087 = vmatprep.subr.mxu0 0.0
  %5088 = vmatpush1.msra.mxu0 0.0
  %5089 = vmatprep.subr.mxu0 0.0
  %5090 = vmatpush1.msra.mxu0 0.0
  %5091 = vmatprep.subr.mxu0 0.0
  %5092 = vmatpush1.msra.mxu0 0.0
  %5093 = vmatprep.subr.mxu0 0.0
  %5094 = vmatpush1.msra.mxu0 0.0
  %5095 = vmatprep.subr.mxu0 0.0
  %5096 = vmatpush1.msra.mxu0 0.0
  %5097 = vmatprep.subr.mxu0 0.0
  %5098 = vmatpush1.msra.mxu0 0.0
  %5099 = vmatprep.subr.mxu0 0.0
  %5100 = vmatpush1.msra.mxu0 0.0
  %5101 = vmatprep.subr.mxu0 0.0
  %5102 = vmatpush1.msra.mxu0 0.0
  %5103 = vmatprep.subr.mxu0 0.0
  %5104 = vmatpush1.msra.mxu0 0.0
  %5105 = vmatprep.subr.mxu0 0.0
  %5106 = vmatpush1.msra.mxu0 0.0
  %5107 = vmatprep.subr.mxu0 0.0
  %5108 = vmatpush1.msra.mxu0 0.0
  %5109 = vmatprep.subr.mxu0 0.0
  %5110 = vmatpush1.msra.mxu0 0.0
  %5111 = vmatprep.subr.mxu0 0.0
  %5112 = vmatpush1.msra.mxu0 0.0
  %5113 = vmatprep.subr.mxu0 0.0
  %5114 = vmatpush1.msra.mxu0 0.0
  %5115 = vmatprep.subr.mxu0 0.0
  %5116 = vmatpush1.msra.mxu0 0.0
  %5117 = vmatprep.subr.mxu0 0.0
  %5118 = vmatpush1.msra.mxu0 0.0
  %5119 = vmatprep.subr.mxu0 0.0
  %5120 = vmatpush1.msra.mxu0 0.0
  %5121 = vmatprep.subr.mxu0 0.0
  %5122 = vmatpush1.msra.mxu0 0.0
  %5123 = vmatprep.subr.mxu0 0.0
  %5124 = vmatpush1.msra.mxu0 0.0
  %5125 = vmatprep.mubr.f32.mxu0 0.0
  %5126 = vmatmul.mubr.f32.gmra.mrb[0].mxu0 %v5059
  %v5127 = vpop.f32.mrb[0].mxu0
  %v5128 = vadd.f32 %v2538, %v5127
  %v5129 = vpop.f32.mrb[0].mxu0
  %5130 = vdwg.mxu0
  %5131 = vmatprep.subr.mxu0 0.0
  %5132 = vmatpush1.msra.mxu0 %v2529
  %5133 = vmatprep.subr.mxu0 0.0
  %5134 = vmatpush1.msra.mxu0 %v2530
  %5135 = vmatprep.subr.mxu0 0.0
  %5136 = vmatpush1.msra.mxu0 %v2531
  %5137 = vmatprep.subr.mxu0 0.0
  %5138 = vmatpush1.msra.mxu0 %v2532
  %5139 = vmatprep.subr.mxu0 0.0
  %5140 = vmatpush1.msra.mxu0 0.0
  %5141 = vmatprep.subr.mxu0 0.0
  %5142 = vmatpush1.msra.mxu0 0.0
  %5143 = vmatprep.subr.mxu0 0.0
  %5144 = vmatpush1.msra.mxu0 0.0
  %5145 = vmatprep.subr.mxu0 0.0
  %5146 = vmatpush1.msra.mxu0 0.0
  %5147 = vmatprep.subr.mxu0 0.0
  %5148 = vmatpush1.msra.mxu0 0.0
  %5149 = vmatprep.subr.mxu0 0.0
  %5150 = vmatpush1.msra.mxu0 0.0
  %5151 = vmatprep.subr.mxu0 0.0
  %5152 = vmatpush1.msra.mxu0 0.0
  %5153 = vmatprep.subr.mxu0 0.0
  %5154 = vmatpush1.msra.mxu0 0.0
  %5155 = vmatprep.subr.mxu0 0.0
  %5156 = vmatpush1.msra.mxu0 0.0
  %5157 = vmatprep.subr.mxu0 0.0
  %5158 = vmatpush1.msra.mxu0 0.0
  %5159 = vmatprep.subr.mxu0 0.0
  %5160 = vmatpush1.msra.mxu0 0.0
  %5161 = vmatprep.subr.mxu0 0.0
  %5162 = vmatpush1.msra.mxu0 0.0
  %5163 = vmatprep.subr.mxu0 0.0
  %5164 = vmatpush1.msra.mxu0 0.0
  %5165 = vmatprep.subr.mxu0 0.0
  %5166 = vmatpush1.msra.mxu0 0.0
  %5167 = vmatprep.subr.mxu0 0.0
  %5168 = vmatpush1.msra.mxu0 0.0
  %5169 = vmatprep.subr.mxu0 0.0
  %5170 = vmatpush1.msra.mxu0 0.0
  %5171 = vmatprep.subr.mxu0 0.0
  %5172 = vmatpush1.msra.mxu0 0.0
  %5173 = vmatprep.subr.mxu0 0.0
  %5174 = vmatpush1.msra.mxu0 0.0
  %5175 = vmatprep.subr.mxu0 0.0
  %5176 = vmatpush1.msra.mxu0 0.0
  %5177 = vmatprep.subr.mxu0 0.0
  %5178 = vmatpush1.msra.mxu0 0.0
  %5179 = vmatprep.subr.mxu0 0.0
  %5180 = vmatpush1.msra.mxu0 0.0
  %5181 = vmatprep.subr.mxu0 0.0
  %5182 = vmatpush1.msra.mxu0 0.0
  %5183 = vmatprep.subr.mxu0 0.0
  %5184 = vmatpush1.msra.mxu0 0.0
  %5185 = vmatprep.subr.mxu0 0.0
  %5186 = vmatpush1.msra.mxu0 0.0
  %5187 = vmatprep.subr.mxu0 0.0
  %5188 = vmatpush1.msra.mxu0 0.0
  %5189 = vmatprep.subr.mxu0 0.0
  %5190 = vmatpush1.msra.mxu0 0.0
  %5191 = vmatprep.subr.mxu0 0.0
  %5192 = vmatpush1.msra.mxu0 0.0
  %5193 = vmatprep.subr.mxu0 0.0
  %5194 = vmatpush1.msra.mxu0 0.0
  %5195 = vmatprep.mubr.f32.mxu0 0.0
  %5196 = vmatmul.mubr.f32.gmra.mrb[0].mxu0 %v5059
  %v5197 = vpop.f32.mrb[0].mxu0
  %v5198 = vadd.f32 %v2540, %v5197
  %v5199 = vpop.f32.mrb[0].mxu0
  %5200 = vdwg.mxu0
  %5201 = vmatprep.subr.mxu0 0.0
  %5202 = vmatpush1.msra.mxu0 %v2534
  %5203 = vmatprep.subr.mxu0 0.0
  %5204 = vmatpush1.msra.mxu0 %v2535
  %5205 = vmatprep.subr.mxu0 0.0
  %5206 = vmatpush1.msra.mxu0 %v2536
  %5207 = vmatprep.subr.mxu0 0.0
  %5208 = vmatpush1.msra.mxu0 %v2537
  %5209 = vmatprep.subr.mxu0 0.0
  %5210 = vmatpush1.msra.mxu0 0.0
  %5211 = vmatprep.subr.mxu0 0.0
  %5212 = vmatpush1.msra.mxu0 0.0
  %5213 = vmatprep.subr.mxu0 0.0
  %5214 = vmatpush1.msra.mxu0 0.0
  %5215 = vmatprep.subr.mxu0 0.0
  %5216 = vmatpush1.msra.mxu0 0.0
  %5217 = vmatprep.subr.mxu0 0.0
  %5218 = vmatpush1.msra.mxu0 0.0
  %5219 = vmatprep.subr.mxu0 0.0
  %5220 = vmatpush1.msra.mxu0 0.0
  %5221 = vmatprep.subr.mxu0 0.0
  %5222 = vmatpush1.msra.mxu0 0.0
  %5223 = vmatprep.subr.mxu0 0.0
  %5224 = vmatpush1.msra.mxu0 0.0
  %5225 = vmatprep.subr.mxu0 0.0
  %5226 = vmatpush1.msra.mxu0 0.0
  %5227 = vmatprep.subr.mxu0 0.0
  %5228 = vmatpush1.msra.mxu0 0.0
  %5229 = vmatprep.subr.mxu0 0.0
  %5230 = vmatpush1.msra.mxu0 0.0
  %5231 = vmatprep.subr.mxu0 0.0
  %5232 = vmatpush1.msra.mxu0 0.0
  %5233 = vmatprep.subr.mxu0 0.0
  %5234 = vmatpush1.msra.mxu0 0.0
  %5235 = vmatprep.subr.mxu0 0.0
  %5236 = vmatpush1.msra.mxu0 0.0
  %5237 = vmatprep.subr.mxu0 0.0
  %5238 = vmatpush1.msra.mxu0 0.0
  %5239 = vmatprep.subr.mxu0 0.0
  %5240 = vmatpush1.msra.mxu0 0.0
  %5241 = vmatprep.subr.mxu0 0.0
  %5242 = vmatpush1.msra.mxu0 0.0
  %5243 = vmatprep.subr.mxu0 0.0
  %5244 = vmatpush1.msra.mxu0 0.0
  %5245 = vmatprep.subr.mxu0 0.0
  %5246 = vmatpush1.msra.mxu0 0.0
  %5247 = vmatprep.subr.mxu0 0.0
  %5248 = vmatpush1.msra.mxu0 0.0
  %5249 = vmatprep.subr.mxu0 0.0
  %5250 = vmatpush1.msra.mxu0 0.0
  %5251 = vmatprep.subr.mxu0 0.0
  %5252 = vmatpush1.msra.mxu0 0.0
  %5253 = vmatprep.subr.mxu0 0.0
  %5254 = vmatpush1.msra.mxu0 0.0
  %5255 = vmatprep.subr.mxu0 0.0
  %5256 = vmatpush1.msra.mxu0 0.0
  %5257 = vmatprep.subr.mxu0 0.0
  %5258 = vmatpush1.msra.mxu0 0.0
  %5259 = vmatprep.subr.mxu0 0.0
  %5260 = vmatpush1.msra.mxu0 0.0
  %5261 = vmatprep.subr.mxu0 0.0
  %5262 = vmatpush1.msra.mxu0 0.0
  %5263 = vmatprep.subr.mxu0 0.0
  %5264 = vmatpush1.msra.mxu0 0.0
  %5265 = vmatprep.mubr.f32.mxu0 0.0
  %5266 = vmatmul.mubr.f32.gmra.mrb[0].mxu0 %v5059
  %v5267 = vpop.f32.mrb[0].mxu0
  %v5268 = vadd.f32 %v2542, %v5267
  %v5269 = vpop.f32.mrb[0].mxu0
  %5270 = vdwg.mxu0
  %v5271 = vadd.f32 %v4915, %v5128
  %v5272 = vxor.u32 %v5271, 2147483648
  %v5273 = vmul.f32 %v5272, 1.442695
  %v5274 = vpow.pop %v5273
  %v5275 = vadd.f32 %v5274, 1.0
  %v5276 = vrcp.pop %v5275
  %v5277 = vmul.f32 1.0, %v5276
  %v5278 = vadd.f32 %v4985, %v5198
  %v5279 = vxor.u32 %v5278, 2147483648
  %v5280 = vmul.f32 %v5279, 1.442695
  %v5281 = vpow.pop %v5280
  %v5282 = vadd.f32 %v5281, 1.0
  %v5283 = vrcp.pop %v5282
  %v5284 = vmul.f32 1.0, %v5283
  %v5285 = vmul.f32 %v5277, %v5268
  %v5286 = vadd.f32 %v5055, %v5285
  %v5287 = vtanh.pop %v5286
  %v5288 = vsub.f32 1.0, %v5284
  %v5289 = vmul.f32 %v5288, %v5287
  %v5290 = vmul.f32 %v5284, %v4601
  %v5291 = vadd.f32 %v5289, %v5290
  %5292 = vmatprep.subr.mxu0 0.0
  %5293 = vmatpush1.msra.mxu0 %v2486
  %5294 = vmatprep.subr.mxu0 0.0
  %5295 = vmatpush1.msra.mxu0 %v2487
  %5296 = vmatprep.subr.mxu0 0.0
  %5297 = vmatpush1.msra.mxu0 %v2488
  %5298 = vmatprep.subr.mxu0 0.0
  %5299 = vmatpush1.msra.mxu0 %v2489
  %5300 = vmatprep.subr.mxu0 0.0
  %5301 = vmatpush1.msra.mxu0 0.0
  %5302 = vmatprep.subr.mxu0 0.0
  %5303 = vmatpush1.msra.mxu0 0.0
  %5304 = vmatprep.subr.mxu0 0.0
  %5305 = vmatpush1.msra.mxu0 0.0
  %5306 = vmatprep.subr.mxu0 0.0
  %5307 = vmatpush1.msra.mxu0 0.0
  %5308 = vmatprep.subr.mxu0 0.0
  %5309 = vmatpush1.msra.mxu0 0.0
  %5310 = vmatprep.subr.mxu0 0.0
  %5311 = vmatpush1.msra.mxu0 0.0
  %5312 = vmatprep.subr.mxu0 0.0
  %5313 = vmatpush1.msra.mxu0 0.0
  %5314 = vmatprep.subr.mxu0 0.0
  %5315 = vmatpush1.msra.mxu0 0.0
  %5316 = vmatprep.subr.mxu0 0.0
  %5317 = vmatpush1.msra.mxu0 0.0
  %5318 = vmatprep.subr.mxu0 0.0
  %5319 = vmatpush1.msra.mxu0 0.0
  %5320 = vmatprep.subr.mxu0 0.0
  %5321 = vmatpush1.msra.mxu0 0.0
  %5322 = vmatprep.subr.mxu0 0.0
  %5323 = vmatpush1.msra.mxu0 0.0
  %5324 = vmatprep.subr.mxu0 0.0
  %5325 = vmatpush1.msra.mxu0 0.0
  %5326 = vmatprep.subr.mxu0 0.0
  %5327 = vmatpush1.msra.mxu0 0.0
  %5328 = vmatprep.subr.mxu0 0.0
  %5329 = vmatpush1.msra.mxu0 0.0
  %5330 = vmatprep.subr.mxu0 0.0
  %5331 = vmatpush1.msra.mxu0 0.0
  %5332 = vmatprep.subr.mxu0 0.0
  %5333 = vmatpush1.msra.mxu0 0.0
  %5334 = vmatprep.subr.mxu0 0.0
  %5335 = vmatpush1.msra.mxu0 0.0
  %5336 = vmatprep.subr.mxu0 0.0
  %5337 = vmatpush1.msra.mxu0 0.0
  %5338 = vmatprep.subr.mxu0 0.0
  %5339 = vmatpush1.msra.mxu0 0.0
  %5340 = vmatprep.subr.mxu0 0.0
  %5341 = vmatpush1.msra.mxu0 0.0
  %5342 = vmatprep.subr.mxu0 0.0
  %5343 = vmatpush1.msra.mxu0 0.0
  %5344 = vmatprep.subr.mxu0 0.0
  %5345 = vmatpush1.msra.mxu0 0.0
  %5346 = vmatprep.subr.mxu0 0.0
  %5347 = vmatpush1.msra.mxu0 0.0
  %5348 = vmatprep.subr.mxu0 0.0
  %5349 = vmatpush1.msra.mxu0 0.0
  %5350 = vmatprep.subr.mxu0 0.0
  %5351 = vmatpush1.msra.mxu0 0.0
  %5352 = vmatprep.subr.mxu0 0.0
  %5353 = vmatpush1.msra.mxu0 0.0
  %5354 = vmatprep.subr.mxu0 0.0
  %5355 = vmatpush1.msra.mxu0 0.0
  %5356 = vmatprep.mubr.f32.mxu0 0.0
  %5357 = vmatmul.mubr.f32.gmra.mrb[0].mxu0 %v4846
  %v5358 = vpop.f32.mrb[0].mxu0
  %v5359 = vadd.f32 %v2500, %v5358
  %v5360 = vpop.f32.mrb[0].mxu0
  %5361 = vdwg.mxu0
  %5362 = vmatprep.subr.mxu0 0.0
  %5363 = vmatpush1.msra.mxu0 %v2491
  %5364 = vmatprep.subr.mxu0 0.0
  %5365 = vmatpush1.msra.mxu0 %v2492
  %5366 = vmatprep.subr.mxu0 0.0
  %5367 = vmatpush1.msra.mxu0 %v2493
  %5368 = vmatprep.subr.mxu0 0.0
  %5369 = vmatpush1.msra.mxu0 %v2494
  %5370 = vmatprep.subr.mxu0 0.0
  %5371 = vmatpush1.msra.mxu0 0.0
  %5372 = vmatprep.subr.mxu0 0.0
  %5373 = vmatpush1.msra.mxu0 0.0
  %5374 = vmatprep.subr.mxu0 0.0
  %5375 = vmatpush1.msra.mxu0 0.0
  %5376 = vmatprep.subr.mxu0 0.0
  %5377 = vmatpush1.msra.mxu0 0.0
  %5378 = vmatprep.subr.mxu0 0.0
  %5379 = vmatpush1.msra.mxu0 0.0
  %5380 = vmatprep.subr.mxu0 0.0
  %5381 = vmatpush1.msra.mxu0 0.0
  %5382 = vmatprep.subr.mxu0 0.0
  %5383 = vmatpush1.msra.mxu0 0.0
  %5384 = vmatprep.subr.mxu0 0.0
  %5385 = vmatpush1.msra.mxu0 0.0
  %5386 = vmatprep.subr.mxu0 0.0
  %5387 = vmatpush1.msra.mxu0 0.0
  %5388 = vmatprep.subr.mxu0 0.0
  %5389 = vmatpush1.msra.mxu0 0.0
  %5390 = vmatprep.subr.mxu0 0.0
  %5391 = vmatpush1.msra.mxu0 0.0
  %5392 = vmatprep.subr.mxu0 0.0
  %5393 = vmatpush1.msra.mxu0 0.0
  %5394 = vmatprep.subr.mxu0 0.0
  %5395 = vmatpush1.msra.mxu0 0.0
  %5396 = vmatprep.subr.mxu0 0.0
  %5397 = vmatpush1.msra.mxu0 0.0
  %5398 = vmatprep.subr.mxu0 0.0
  %5399 = vmatpush1.msra.mxu0 0.0
  %5400 = vmatprep.subr.mxu0 0.0
  %5401 = vmatpush1.msra.mxu0 0.0
  %5402 = vmatprep.subr.mxu0 0.0
  %5403 = vmatpush1.msra.mxu0 0.0
  %5404 = vmatprep.subr.mxu0 0.0
  %5405 = vmatpush1.msra.mxu0 0.0
  %5406 = vmatprep.subr.mxu0 0.0
  %5407 = vmatpush1.msra.mxu0 0.0
  %5408 = vmatprep.subr.mxu0 0.0
  %5409 = vmatpush1.msra.mxu0 0.0
  %5410 = vmatprep.subr.mxu0 0.0
  %5411 = vmatpush1.msra.mxu0 0.0
  %5412 = vmatprep.subr.mxu0 0.0
  %5413 = vmatpush1.msra.mxu0 0.0
  %5414 = vmatprep.subr.mxu0 0.0
  %5415 = vmatpush1.msra.mxu0 0.0
  %5416 = vmatprep.subr.mxu0 0.0
  %5417 = vmatpush1.msra.mxu0 0.0
  %5418 = vmatprep.subr.mxu0 0.0
  %5419 = vmatpush1.msra.mxu0 0.0
  %5420 = vmatprep.subr.mxu0 0.0
  %5421 = vmatpush1.msra.mxu0 0.0
  %5422 = vmatprep.subr.mxu0 0.0
  %5423 = vmatpush1.msra.mxu0 0.0
  %5424 = vmatprep.subr.mxu0 0.0
  %5425 = vmatpush1.msra.mxu0 0.0
  %5426 = vmatprep.mubr.f32.mxu0 0.0
  %5427 = vmatmul.mubr.f32.gmra.mrb[0].mxu0 %v4846
  %v5428 = vpop.f32.mrb[0].mxu0
  %v5429 = vadd.f32 %v2502, %v5428
  %v5430 = vpop.f32.mrb[0].mxu0
  %5431 = vdwg.mxu0
  %5432 = vmatprep.subr.mxu0 0.0
  %5433 = vmatpush1.msra.mxu0 %v2496
  %5434 = vmatprep.subr.mxu0 0.0
  %5435 = vmatpush1.msra.mxu0 %v2497
  %5436 = vmatprep.subr.mxu0 0.0
  %5437 = vmatpush1.msra.mxu0 %v2498
  %5438 = vmatprep.subr.mxu0 0.0
  %5439 = vmatpush1.msra.mxu0 %v2499
  %5440 = vmatprep.subr.mxu0 0.0
  %5441 = vmatpush1.msra.mxu0 0.0
  %5442 = vmatprep.subr.mxu0 0.0
  %5443 = vmatpush1.msra.mxu0 0.0
  %5444 = vmatprep.subr.mxu0 0.0
  %5445 = vmatpush1.msra.mxu0 0.0
  %5446 = vmatprep.subr.mxu0 0.0
  %5447 = vmatpush1.msra.mxu0 0.0
  %5448 = vmatprep.subr.mxu0 0.0
  %5449 = vmatpush1.msra.mxu0 0.0
  %5450 = vmatprep.subr.mxu0 0.0
  %5451 = vmatpush1.msra.mxu0 0.0
  %5452 = vmatprep.subr.mxu0 0.0
  %5453 = vmatpush1.msra.mxu0 0.0
  %5454 = vmatprep.subr.mxu0 0.0
  %5455 = vmatpush1.msra.mxu0 0.0
  %5456 = vmatprep.subr.mxu0 0.0
  %5457 = vmatpush1.msra.mxu0 0.0
  %5458 = vmatprep.subr.mxu0 0.0
  %5459 = vmatpush1.msra.mxu0 0.0
  %5460 = vmatprep.subr.mxu0 0.0
  %5461 = vmatpush1.msra.mxu0 0.0
  %5462 = vmatprep.subr.mxu0 0.0
  %5463 = vmatpush1.msra.mxu0 0.0
  %5464 = vmatprep.subr.mxu0 0.0
  %5465 = vmatpush1.msra.mxu0 0.0
  %5466 = vmatprep.subr.mxu0 0.0
  %5467 = vmatpush1.msra.mxu0 0.0
  %5468 = vmatprep.subr.mxu0 0.0
  %5469 = vmatpush1.msra.mxu0 0.0
  %5470 = vmatprep.subr.mxu0 0.0
  %5471 = vmatpush1.msra.mxu0 0.0
  %5472 = vmatprep.subr.mxu0 0.0
  %5473 = vmatpush1.msra.mxu0 0.0
  %5474 = vmatprep.subr.mxu0 0.0
  %5475 = vmatpush1.msra.mxu0 0.0
  %5476 = vmatprep.subr.mxu0 0.0
  %5477 = vmatpush1.msra.mxu0 0.0
  %5478 = vmatprep.subr.mxu0 0.0
  %5479 = vmatpush1.msra.mxu0 0.0
  %5480 = vmatprep.subr.mxu0 0.0
  %5481 = vmatpush1.msra.mxu0 0.0
  %5482 = vmatprep.subr.mxu0 0.0
  %5483 = vmatpush1.msra.mxu0 0.0
  %5484 = vmatprep.subr.mxu0 0.0
  %5485 = vmatpush1.msra.mxu0 0.0
  %5486 = vmatprep.subr.mxu0 0.0
  %5487 = vmatpush1.msra.mxu0 0.0
  %5488 = vmatprep.subr.mxu0 0.0
  %5489 = vmatpush1.msra.mxu0 0.0
  %5490 = vmatprep.subr.mxu0 0.0
  %5491 = vmatpush1.msra.mxu0 0.0
  %5492 = vmatprep.subr.mxu0 0.0
  %5493 = vmatpush1.msra.mxu0 0.0
  %5494 = vmatprep.subr.mxu0 0.0
  %5495 = vmatpush1.msra.mxu0 0.0
  %5496 = vmatprep.mubr.f32.mxu0 0.0
  %5497 = vmatmul.mubr.f32.gmra.mrb[0].mxu0 %v4846
  %v5498 = vpop.f32.mrb[0].mxu0
  %v5499 = vadd.f32 %v2504, %v5498
  %v5500 = vpop.f32.mrb[0].mxu0
  %5501 = vdwg.mxu0
  %v5503 = vrot.slane %v5359, 4
  %v5505 = vadd.f32 %v1747, %v5503
  %v5506 = vxor.u32 %v5505, 2147483648
  %v5507 = vmul.f32 %v5506, 1.442695
  %v5508 = vpow.pop %v5507
  %v5509 = vadd.f32 %v5508, 1.0
  %v5510 = vrcp.pop %v5509
  %v5511 = vmul.f32 1.0, %v5510
  %v5513 = vrot.slane %v5429, 4
  %v5515 = vadd.f32 %v2116, %v5513
  %v5516 = vxor.u32 %v5515, 2147483648
  %v5517 = vmul.f32 %v5516, 1.442695
  %v5518 = vpow.pop %v5517
  %v5519 = vadd.f32 %v5518, 1.0
  %v5520 = vrcp.pop %v5519
  %v5521 = vmul.f32 1.0, %v5520
  %v5523 = vrot.slane %v5499, 4
  %v5525 = vmul.f32 %v5511, %v5523
  %v5526 = vadd.f32 %v2485, %v5525
  %v5527 = vtanh.pop %v5526
  %v5528 = vsub.f32 1.0, %v5521
  %v5529 = vmul.f32 %v5528, %v5527
  %v5530 = vrot.slane %v4843, 7
  %v5532 = vmul.f32 %v5521, %v5530
  %v5533 = vadd.f32 %v5529, %v5532
  %v5535 = vrot.slane %v5533, 4
  %v5536 = vsel %vm2543, %v5535, 0
  %5538 = vmatprep.subr.mxu0 0.0
  %5539 = vmatpush1.msra.mxu0 %v2505
  %5540 = vmatprep.subr.mxu0 0.0
  %5541 = vmatpush1.msra.mxu0 %v2506
  %5542 = vmatprep.subr.mxu0 0.0
  %5543 = vmatpush1.msra.mxu0 %v2507
  %5544 = vmatprep.subr.mxu0 0.0
  %5545 = vmatpush1.msra.mxu0 %v2508
  %5546 = vmatprep.subr.mxu0 0.0
  %5547 = vmatpush1.msra.mxu0 0.0
  %5548 = vmatprep.subr.mxu0 0.0
  %5549 = vmatpush1.msra.mxu0 0.0
  %5550 = vmatprep.subr.mxu0 0.0
  %5551 = vmatpush1.msra.mxu0 0.0
  %5552 = vmatprep.subr.mxu0 0.0
  %5553 = vmatpush1.msra.mxu0 0.0
  %5554 = vmatprep.subr.mxu0 0.0
  %5555 = vmatpush1.msra.mxu0 0.0
  %5556 = vmatprep.subr.mxu0 0.0
  %5557 = vmatpush1.msra.mxu0 0.0
  %5558 = vmatprep.subr.mxu0 0.0
  %5559 = vmatpush1.msra.mxu0 0.0
  %5560 = vmatprep.subr.mxu0 0.0
  %5561 = vmatpush1.msra.mxu0 0.0
  %5562 = vmatprep.subr.mxu0 0.0
  %5563 = vmatpush1.msra.mxu0 0.0
  %5564 = vmatprep.subr.mxu0 0.0
  %5565 = vmatpush1.msra.mxu0 0.0
  %5566 = vmatprep.subr.mxu0 0.0
  %5567 = vmatpush1.msra.mxu0 0.0
  %5568 = vmatprep.subr.mxu0 0.0
  %5569 = vmatpush1.msra.mxu0 0.0
  %5570 = vmatprep.subr.mxu0 0.0
  %5571 = vmatpush1.msra.mxu0 0.0
  %5572 = vmatprep.subr.mxu0 0.0
  %5573 = vmatpush1.msra.mxu0 0.0
  %5574 = vmatprep.subr.mxu0 0.0
  %5575 = vmatpush1.msra.mxu0 0.0
  %5576 = vmatprep.subr.mxu0 0.0
  %5577 = vmatpush1.msra.mxu0 0.0
  %5578 = vmatprep.subr.mxu0 0.0
  %5579 = vmatpush1.msra.mxu0 0.0
  %5580 = vmatprep.subr.mxu0 0.0
  %5581 = vmatpush1.msra.mxu0 0.0
  %5582 = vmatprep.subr.mxu0 0.0
  %5583 = vmatpush1.msra.mxu0 0.0
  %5584 = vmatprep.subr.mxu0 0.0
  %5585 = vmatpush1.msra.mxu0 0.0
  %5586 = vmatprep.subr.mxu0 0.0
  %5587 = vmatpush1.msra.mxu0 0.0
  %5588 = vmatprep.subr.mxu0 0.0
  %5589 = vmatpush1.msra.mxu0 0.0
  %5590 = vmatprep.subr.mxu0 0.0
  %5591 = vmatpush1.msra.mxu0 0.0
  %5592 = vmatprep.subr.mxu0 0.0
  %5593 = vmatpush1.msra.mxu0 0.0
  %5594 = vmatprep.subr.mxu0 0.0
  %5595 = vmatpush1.msra.mxu0 0.0
  %5596 = vmatprep.subr.mxu0 0.0
  %5597 = vmatpush1.msra.mxu0 0.0
  %5598 = vmatprep.subr.mxu0 0.0
  %5599 = vmatpush1.msra.mxu0 0.0
  %5600 = vmatprep.subr.mxu0 0.0
  %5601 = vmatpush1.msra.mxu0 0.0
  %5602 = vmatprep.mubr.f32.mxu0 0.0
  %5603 = vmatmul.mubr.f32.gmra.mrb[0].mxu0 %v5536
  %v5604 = vpop.f32.mrb[0].mxu0
  %v5605 = vadd.f32 %v2519, %v5604
  %v5606 = vpop.f32.mrb[0].mxu0
  %5607 = vdwg.mxu0
  %5608 = vmatprep.subr.mxu0 0.0
  %5609 = vmatpush1.msra.mxu0 %v2510
  %5610 = vmatprep.subr.mxu0 0.0
  %5611 = vmatpush1.msra.mxu0 %v2511
  %5612 = vmatprep.subr.mxu0 0.0
  %5613 = vmatpush1.msra.mxu0 %v2512
  %5614 = vmatprep.subr.mxu0 0.0
  %5615 = vmatpush1.msra.mxu0 %v2513
  %5616 = vmatprep.subr.mxu0 0.0
  %5617 = vmatpush1.msra.mxu0 0.0
  %5618 = vmatprep.subr.mxu0 0.0
  %5619 = vmatpush1.msra.mxu0 0.0
  %5620 = vmatprep.subr.mxu0 0.0
  %5621 = vmatpush1.msra.mxu0 0.0
  %5622 = vmatprep.subr.mxu0 0.0
  %5623 = vmatpush1.msra.mxu0 0.0
  %5624 = vmatprep.subr.mxu0 0.0
  %5625 = vmatpush1.msra.mxu0 0.0
  %5626 = vmatprep.subr.mxu0 0.0
  %5627 = vmatpush1.msra.mxu0 0.0
  %5628 = vmatprep.subr.mxu0 0.0
  %5629 = vmatpush1.msra.mxu0 0.0
  %5630 = vmatprep.subr.mxu0 0.0
  %5631 = vmatpush1.msra.mxu0 0.0
  %5632 = vmatprep.subr.mxu0 0.0
  %5633 = vmatpush1.msra.mxu0 0.0
  %5634 = vmatprep.subr.mxu0 0.0
  %5635 = vmatpush1.msra.mxu0 0.0
  %5636 = vmatprep.subr.mxu0 0.0
  %5637 = vmatpush1.msra.mxu0 0.0
  %5638 = vmatprep.subr.mxu0 0.0
  %5639 = vmatpush1.msra.mxu0 0.0
  %5640 = vmatprep.subr.mxu0 0.0
  %5641 = vmatpush1.msra.mxu0 0.0
  %5642 = vmatprep.subr.mxu0 0.0
  %5643 = vmatpush1.msra.mxu0 0.0
  %5644 = vmatprep.subr.mxu0 0.0
  %5645 = vmatpush1.msra.mxu0 0.0
  %5646 = vmatprep.subr.mxu0 0.0
  %5647 = vmatpush1.msra.mxu0 0.0
  %5648 = vmatprep.subr.mxu0 0.0
  %5649 = vmatpush1.msra.mxu0 0.0
  %5650 = vmatprep.subr.mxu0 0.0
  %5651 = vmatpush1.msra.mxu0 0.0
  %5652 = vmatprep.subr.mxu0 0.0
  %5653 = vmatpush1.msra.mxu0 0.0
  %5654 = vmatprep.subr.mxu0 0.0
  %5655 = vmatpush1.msra.mxu0 0.0
  %5656 = vmatprep.subr.mxu0 0.0
  %5657 = vmatpush1.msra.mxu0 0.0
  %5658 = vmatprep.subr.mxu0 0.0
  %5659 = vmatpush1.msra.mxu0 0.0
  %5660 = vmatprep.subr.mxu0 0.0
  %5661 = vmatpush1.msra.mxu0 0.0
  %5662 = vmatprep.subr.mxu0 0.0
  %5663 = vmatpush1.msra.mxu0 0.0
  %5664 = vmatprep.subr.mxu0 0.0
  %5665 = vmatpush1.msra.mxu0 0.0
  %5666 = vmatprep.subr.mxu0 0.0
  %5667 = vmatpush1.msra.mxu0 0.0
  %5668 = vmatprep.subr.mxu0 0.0
  %5669 = vmatpush1.msra.mxu0 0.0
  %5670 = vmatprep.subr.mxu0 0.0
  %5671 = vmatpush1.msra.mxu0 0.0
  %5672 = vmatprep.mubr.f32.mxu0 0.0
  %5673 = vmatmul.mubr.f32.gmra.mrb[0].mxu0 %v5536
  %v5674 = vpop.f32.mrb[0].mxu0
  %v5675 = vadd.f32 %v2521, %v5674
  %v5676 = vpop.f32.mrb[0].mxu0
  %5677 = vdwg.mxu0
  %5678 = vmatprep.subr.mxu0 0.0
  %5679 = vmatpush1.msra.mxu0 %v2515
  %5680 = vmatprep.subr.mxu0 0.0
  %5681 = vmatpush1.msra.mxu0 %v2516
  %5682 = vmatprep.subr.mxu0 0.0
  %5683 = vmatpush1.msra.mxu0 %v2517
  %5684 = vmatprep.subr.mxu0 0.0
  %5685 = vmatpush1.msra.mxu0 %v2518
  %5686 = vmatprep.subr.mxu0 0.0
  %5687 = vmatpush1.msra.mxu0 0.0
  %5688 = vmatprep.subr.mxu0 0.0
  %5689 = vmatpush1.msra.mxu0 0.0
  %5690 = vmatprep.subr.mxu0 0.0
  %5691 = vmatpush1.msra.mxu0 0.0
  %5692 = vmatprep.subr.mxu0 0.0
  %5693 = vmatpush1.msra.mxu0 0.0
  %5694 = vmatprep.subr.mxu0 0.0
  %5695 = vmatpush1.msra.mxu0 0.0
  %5696 = vmatprep.subr.mxu0 0.0
  %5697 = vmatpush1.msra.mxu0 0.0
  %5698 = vmatprep.subr.mxu0 0.0
  %5699 = vmatpush1.msra.mxu0 0.0
  %5700 = vmatprep.subr.mxu0 0.0
  %5701 = vmatpush1.msra.mxu0 0.0
  %5702 = vmatprep.subr.mxu0 0.0
  %5703 = vmatpush1.msra.mxu0 0.0
  %5704 = vmatprep.subr.mxu0 0.0
  %5705 = vmatpush1.msra.mxu0 0.0
  %5706 = vmatprep.subr.mxu0 0.0
  %5707 = vmatpush1.msra.mxu0 0.0
  %5708 = vmatprep.subr.mxu0 0.0
  %5709 = vmatpush1.msra.mxu0 0.0
  %5710 = vmatprep.subr.mxu0 0.0
  %5711 = vmatpush1.msra.mxu0 0.0
  %5712 = vmatprep.subr.mxu0 0.0
  %5713 = vmatpush1.msra.mxu0 0.0
  %5714 = vmatprep.subr.mxu0 0.0
  %5715 = vmatpush1.msra.mxu0 0.0
  %5716 = vmatprep.subr.mxu0 0.0
  %5717 = vmatpush1.msra.mxu0 0.0
  %5718 = vmatprep.subr.mxu0 0.0
  %5719 = vmatpush1.msra.mxu0 0.0
  %5720 = vmatprep.subr.mxu0 0.0
  %5721 = vmatpush1.msra.mxu0 0.0
  %5722 = vmatprep.subr.mxu0 0.0
  %5723 = vmatpush1.msra.mxu0 0.0
  %5724 = vmatprep.subr.mxu0 0.0
  %5725 = vmatpush1.msra.mxu0 0.0
  %5726 = vmatprep.subr.mxu0 0.0
  %5727 = vmatpush1.msra.mxu0 0.0
  %5728 = vmatprep.subr.mxu0 0.0
  %5729 = vmatpush1.msra.mxu0 0.0
  %5730 = vmatprep.subr.mxu0 0.0
  %5731 = vmatpush1.msra.mxu0 0.0
  %5732 = vmatprep.subr.mxu0 0.0
  %5733 = vmatpush1.msra.mxu0 0.0
  %5734 = vmatprep.subr.mxu0 0.0
  %5735 = vmatpush1.msra.mxu0 0.0
  %5736 = vmatprep.subr.mxu0 0.0
  %5737 = vmatpush1.msra.mxu0 0.0
  %5738 = vmatprep.subr.mxu0 0.0
  %5739 = vmatpush1.msra.mxu0 0.0
  %5740 = vmatprep.subr.mxu0 0.0
  %5741 = vmatpush1.msra.mxu0 0.0
  %5742 = vmatprep.mubr.f32.mxu0 0.0
  %5743 = vmatmul.mubr.f32.gmra.mrb[0].mxu0 %v5536
  %v5744 = vpop.f32.mrb[0].mxu0
  %v5745 = vadd.f32 %v2523, %v5744
  %v5746 = vpop.f32.mrb[0].mxu0
  %5747 = vdwg.mxu0
  %v5749 = vsel %vm2543, %v5291, 0
  %5751 = vmatprep.subr.mxu0 0.0
  %5752 = vmatpush1.msra.mxu0 %v2524
  %5753 = vmatprep.subr.mxu0 0.0
  %5754 = vmatpush1.msra.mxu0 %v2525
  %5755 = vmatprep.subr.mxu0 0.0
  %5756 = vmatpush1.msra.mxu0 %v2526
  %5757 = vmatprep.subr.mxu0 0.0
  %5758 = vmatpush1.msra.mxu0 %v2527
  %5759 = vmatprep.subr.mxu0 0.0
  %5760 = vmatpush1.msra.mxu0 0.0
  %5761 = vmatprep.subr.mxu0 0.0
  %5762 = vmatpush1.msra.mxu0 0.0
  %5763 = vmatprep.subr.mxu0 0.0
  %5764 = vmatpush1.msra.mxu0 0.0
  %5765 = vmatprep.subr.mxu0 0.0
  %5766 = vmatpush1.msra.mxu0 0.0
  %5767 = vmatprep.subr.mxu0 0.0
  %5768 = vmatpush1.msra.mxu0 0.0
  %5769 = vmatprep.subr.mxu0 0.0
  %5770 = vmatpush1.msra.mxu0 0.0
  %5771 = vmatprep.subr.mxu0 0.0
  %5772 = vmatpush1.msra.mxu0 0.0
  %5773 = vmatprep.subr.mxu0 0.0
  %5774 = vmatpush1.msra.mxu0 0.0
  %5775 = vmatprep.subr.mxu0 0.0
  %5776 = vmatpush1.msra.mxu0 0.0
  %5777 = vmatprep.subr.mxu0 0.0
  %5778 = vmatpush1.msra.mxu0 0.0
  %5779 = vmatprep.subr.mxu0 0.0
  %5780 = vmatpush1.msra.mxu0 0.0
  %5781 = vmatprep.subr.mxu0 0.0
  %5782 = vmatpush1.msra.mxu0 0.0
  %5783 = vmatprep.subr.mxu0 0.0
  %5784 = vmatpush1.msra.mxu0 0.0
  %5785 = vmatprep.subr.mxu0 0.0
  %5786 = vmatpush1.msra.mxu0 0.0
  %5787 = vmatprep.subr.mxu0 0.0
  %5788 = vmatpush1.msra.mxu0 0.0
  %5789 = vmatprep.subr.mxu0 0.0
  %5790 = vmatpush1.msra.mxu0 0.0
  %5791 = vmatprep.subr.mxu0 0.0
  %5792 = vmatpush1.msra.mxu0 0.0
  %5793 = vmatprep.subr.mxu0 0.0
  %5794 = vmatpush1.msra.mxu0 0.0
  %5795 = vmatprep.subr.mxu0 0.0
  %5796 = vmatpush1.msra.mxu0 0.0
  %5797 = vmatprep.subr.mxu0 0.0
  %5798 = vmatpush1.msra.mxu0 0.0
  %5799 = vmatprep.subr.mxu0 0.0
  %5800 = vmatpush1.msra.mxu0 0.0
  %5801 = vmatprep.subr.mxu0 0.0
  %5802 = vmatpush1.msra.mxu0 0.0
  %5803 = vmatprep.subr.mxu0 0.0
  %5804 = vmatpush1.msra.mxu0 0.0
  %5805 = vmatprep.subr.mxu0 0.0
  %5806 = vmatpush1.msra.mxu0 0.0
  %5807 = vmatprep.subr.mxu0 0.0
  %5808 = vmatpush1.msra.mxu0 0.0
  %5809 = vmatprep.subr.mxu0 0.0
  %5810 = vmatpush1.msra.mxu0 0.0
  %5811 = vmatprep.subr.mxu0 0.0
  %5812 = vmatpush1.msra.mxu0 0.0
  %5813 = vmatprep.subr.mxu0 0.0
  %5814 = vmatpush1.msra.mxu0 0.0
  %5815 = vmatprep.mubr.f32.mxu0 0.0
  %5816 = vmatmul.mubr.f32.gmra.mrb[0].mxu0 %v5749
  %v5817 = vpop.f32.mrb[0].mxu0
  %v5818 = vadd.f32 %v2538, %v5817
  %v5819 = vpop.f32.mrb[0].mxu0
  %5820 = vdwg.mxu0
  %5821 = vmatprep.subr.mxu0 0.0
  %5822 = vmatpush1.msra.mxu0 %v2529
  %5823 = vmatprep.subr.mxu0 0.0
  %5824 = vmatpush1.msra.mxu0 %v2530
  %5825 = vmatprep.subr.mxu0 0.0
  %5826 = vmatpush1.msra.mxu0 %v2531
  %5827 = vmatprep.subr.mxu0 0.0
  %5828 = vmatpush1.msra.mxu0 %v2532
  %5829 = vmatprep.subr.mxu0 0.0
  %5830 = vmatpush1.msra.mxu0 0.0
  %5831 = vmatprep.subr.mxu0 0.0
  %5832 = vmatpush1.msra.mxu0 0.0
  %5833 = vmatprep.subr.mxu0 0.0
  %5834 = vmatpush1.msra.mxu0 0.0
  %5835 = vmatprep.subr.mxu0 0.0
  %5836 = vmatpush1.msra.mxu0 0.0
  %5837 = vmatprep.subr.mxu0 0.0
  %5838 = vmatpush1.msra.mxu0 0.0
  %5839 = vmatprep.subr.mxu0 0.0
  %5840 = vmatpush1.msra.mxu0 0.0
  %5841 = vmatprep.subr.mxu0 0.0
  %5842 = vmatpush1.msra.mxu0 0.0
  %5843 = vmatprep.subr.mxu0 0.0
  %5844 = vmatpush1.msra.mxu0 0.0
  %5845 = vmatprep.subr.mxu0 0.0
  %5846 = vmatpush1.msra.mxu0 0.0
  %5847 = vmatprep.subr.mxu0 0.0
  %5848 = vmatpush1.msra.mxu0 0.0
  %5849 = vmatprep.subr.mxu0 0.0
  %5850 = vmatpush1.msra.mxu0 0.0
  %5851 = vmatprep.subr.mxu0 0.0
  %5852 = vmatpush1.msra.mxu0 0.0
  %5853 = vmatprep.subr.mxu0 0.0
  %5854 = vmatpush1.msra.mxu0 0.0
  %5855 = vmatprep.subr.mxu0 0.0
  %5856 = vmatpush1.msra.mxu0 0.0
  %5857 = vmatprep.subr.mxu0 0.0
  %5858 = vmatpush1.msra.mxu0 0.0
  %5859 = vmatprep.subr.mxu0 0.0
  %5860 = vmatpush1.msra.mxu0 0.0
  %5861 = vmatprep.subr.mxu0 0.0
  %5862 = vmatpush1.msra.mxu0 0.0
  %5863 = vmatprep.subr.mxu0 0.0
  %5864 = vmatpush1.msra.mxu0 0.0
  %5865 = vmatprep.subr.mxu0 0.0
  %5866 = vmatpush1.msra.mxu0 0.0
  %5867 = vmatprep.subr.mxu0 0.0
  %5868 = vmatpush1.msra.mxu0 0.0
  %5869 = vmatprep.subr.mxu0 0.0
  %5870 = vmatpush1.msra.mxu0 0.0
  %5871 = vmatprep.subr.mxu0 0.0
  %5872 = vmatpush1.msra.mxu0 0.0
  %5873 = vmatprep.subr.mxu0 0.0
  %5874 = vmatpush1.msra.mxu0 0.0
  %5875 = vmatprep.subr.mxu0 0.0
  %5876 = vmatpush1.msra.mxu0 0.0
  %5877 = vmatprep.subr.mxu0 0.0
  %5878 = vmatpush1.msra.mxu0 0.0
  %5879 = vmatprep.subr.mxu0 0.0
  %5880 = vmatpush1.msra.mxu0 0.0
  %5881 = vmatprep.subr.mxu0 0.0
  %5882 = vmatpush1.msra.mxu0 0.0
  %5883 = vmatprep.subr.mxu0 0.0
  %5884 = vmatpush1.msra.mxu0 0.0
  %5885 = vmatprep.mubr.f32.mxu0 0.0
  %5886 = vmatmul.mubr.f32.gmra.mrb[0].mxu0 %v5749
  %v5887 = vpop.f32.mrb[0].mxu0
  %v5888 = vadd.f32 %v2540, %v5887
  %v5889 = vpop.f32.mrb[0].mxu0
  %5890 = vdwg.mxu0
  %5891 = vmatprep.subr.mxu0 0.0
  %5892 = vmatpush1.msra.mxu0 %v2534
  %5893 = vmatprep.subr.mxu0 0.0
  %5894 = vmatpush1.msra.mxu0 %v2535
  %5895 = vmatprep.subr.mxu0 0.0
  %5896 = vmatpush1.msra.mxu0 %v2536
  %5897 = vmatprep.subr.mxu0 0.0
  %5898 = vmatpush1.msra.mxu0 %v2537
  %5899 = vmatprep.subr.mxu0 0.0
  %5900 = vmatpush1.msra.mxu0 0.0
  %5901 = vmatprep.subr.mxu0 0.0
  %5902 = vmatpush1.msra.mxu0 0.0
  %5903 = vmatprep.subr.mxu0 0.0
  %5904 = vmatpush1.msra.mxu0 0.0
  %5905 = vmatprep.subr.mxu0 0.0
  %5906 = vmatpush1.msra.mxu0 0.0
  %5907 = vmatprep.subr.mxu0 0.0
  %5908 = vmatpush1.msra.mxu0 0.0
  %5909 = vmatprep.subr.mxu0 0.0
  %5910 = vmatpush1.msra.mxu0 0.0
  %5911 = vmatprep.subr.mxu0 0.0
  %5912 = vmatpush1.msra.mxu0 0.0
  %5913 = vmatprep.subr.mxu0 0.0
  %5914 = vmatpush1.msra.mxu0 0.0
  %5915 = vmatprep.subr.mxu0 0.0
  %5916 = vmatpush1.msra.mxu0 0.0
  %5917 = vmatprep.subr.mxu0 0.0
  %5918 = vmatpush1.msra.mxu0 0.0
  %5919 = vmatprep.subr.mxu0 0.0
  %5920 = vmatpush1.msra.mxu0 0.0
  %5921 = vmatprep.subr.mxu0 0.0
  %5922 = vmatpush1.msra.mxu0 0.0
  %5923 = vmatprep.subr.mxu0 0.0
  %5924 = vmatpush1.msra.mxu0 0.0
  %5925 = vmatprep.subr.mxu0 0.0
  %5926 = vmatpush1.msra.mxu0 0.0
  %5927 = vmatprep.subr.mxu0 0.0
  %5928 = vmatpush1.msra.mxu0 0.0
  %5929 = vmatprep.subr.mxu0 0.0
  %5930 = vmatpush1.msra.mxu0 0.0
  %5931 = vmatprep.subr.mxu0 0.0
  %5932 = vmatpush1.msra.mxu0 0.0
  %5933 = vmatprep.subr.mxu0 0.0
  %5934 = vmatpush1.msra.mxu0 0.0
  %5935 = vmatprep.subr.mxu0 0.0
  %5936 = vmatpush1.msra.mxu0 0.0
  %5937 = vmatprep.subr.mxu0 0.0
  %5938 = vmatpush1.msra.mxu0 0.0
  %5939 = vmatprep.subr.mxu0 0.0
  %5940 = vmatpush1.msra.mxu0 0.0
  %5941 = vmatprep.subr.mxu0 0.0
  %5942 = vmatpush1.msra.mxu0 0.0
  %5943 = vmatprep.subr.mxu0 0.0
  %5944 = vmatpush1.msra.mxu0 0.0
  %5945 = vmatprep.subr.mxu0 0.0
  %5946 = vmatpush1.msra.mxu0 0.0
  %5947 = vmatprep.subr.mxu0 0.0
  %5948 = vmatpush1.msra.mxu0 0.0
  %5949 = vmatprep.subr.mxu0 0.0
  %5950 = vmatpush1.msra.mxu0 0.0
  %5951 = vmatprep.subr.mxu0 0.0
  %5952 = vmatpush1.msra.mxu0 0.0
  %5953 = vmatprep.subr.mxu0 0.0
  %5954 = vmatpush1.msra.mxu0 0.0
  %5955 = vmatprep.mubr.f32.mxu0 0.0
  %5956 = vmatmul.mubr.f32.gmra.mrb[0].mxu0 %v5749
  %v5957 = vpop.f32.mrb[0].mxu0
  %v5958 = vadd.f32 %v2542, %v5957
  %v5959 = vpop.f32.mrb[0].mxu0
  %5960 = vdwg.mxu0
  %v5961 = vadd.f32 %v5605, %v5818
  %v5962 = vxor.u32 %v5961, 2147483648
  %v5963 = vmul.f32 %v5962, 1.442695
  %v5964 = vpow.pop %v5963
  %v5965 = vadd.f32 %v5964, 1.0
  %v5966 = vrcp.pop %v5965
  %v5967 = vmul.f32 1.0, %v5966
  %v5968 = vadd.f32 %v5675, %v5888
  %v5969 = vxor.u32 %v5968, 2147483648
  %v5970 = vmul.f32 %v5969, 1.442695
  %v5971 = vpow.pop %v5970
  %v5972 = vadd.f32 %v5971, 1.0
  %v5973 = vrcp.pop %v5972
  %v5974 = vmul.f32 1.0, %v5973
  %v5975 = vmul.f32 %v5967, %v5958
  %v5976 = vadd.f32 %v5745, %v5975
  %v5977 = vtanh.pop %v5976
  %v5978 = vsub.f32 1.0, %v5974
  %v5979 = vmul.f32 %v5978, %v5977
  %v5980 = vmul.f32 %v5974, %v5291
  %v5981 = vadd.f32 %v5979, %v5980
  %5982 = vmatprep.subr.mxu0 0.0
  %5983 = vmatpush1.msra.mxu0 %v2486
  %5984 = vmatprep.subr.mxu0 0.0
  %5985 = vmatpush1.msra.mxu0 %v2487
  %5986 = vmatprep.subr.mxu0 0.0
  %5987 = vmatpush1.msra.mxu0 %v2488
  %5988 = vmatprep.subr.mxu0 0.0
  %5989 = vmatpush1.msra.mxu0 %v2489
  %5990 = vmatprep.subr.mxu0 0.0
  %5991 = vmatpush1.msra.mxu0 0.0
  %5992 = vmatprep.subr.mxu0 0.0
  %5993 = vmatpush1.msra.mxu0 0.0
  %5994 = vmatprep.subr.mxu0 0.0
  %5995 = vmatpush1.msra.mxu0 0.0
  %5996 = vmatprep.subr.mxu0 0.0
  %5997 = vmatpush1.msra.mxu0 0.0
  %5998 = vmatprep.subr.mxu0 0.0
  %5999 = vmatpush1.msra.mxu0 0.0
  %6000 = vmatprep.subr.mxu0 0.0
  %6001 = vmatpush1.msra.mxu0 0.0
  %6002 = vmatprep.subr.mxu0 0.0
  %6003 = vmatpush1.msra.mxu0 0.0
  %6004 = vmatprep.subr.mxu0 0.0
  %6005 = vmatpush1.msra.mxu0 0.0
  %6006 = vmatprep.subr.mxu0 0.0
  %6007 = vmatpush1.msra.mxu0 0.0
  %6008 = vmatprep.subr.mxu0 0.0
  %6009 = vmatpush1.msra.mxu0 0.0
  %6010 = vmatprep.subr.mxu0 0.0
  %6011 = vmatpush1.msra.mxu0 0.0
  %6012 = vmatprep.subr.mxu0 0.0
  %6013 = vmatpush1.msra.mxu0 0.0
  %6014 = vmatprep.subr.mxu0 0.0
  %6015 = vmatpush1.msra.mxu0 0.0
  %6016 = vmatprep.subr.mxu0 0.0
  %6017 = vmatpush1.msra.mxu0 0.0
  %6018 = vmatprep.subr.mxu0 0.0
  %6019 = vmatpush1.msra.mxu0 0.0
  %6020 = vmatprep.subr.mxu0 0.0
  %6021 = vmatpush1.msra.mxu0 0.0
  %6022 = vmatprep.subr.mxu0 0.0
  %6023 = vmatpush1.msra.mxu0 0.0
  %6024 = vmatprep.subr.mxu0 0.0
  %6025 = vmatpush1.msra.mxu0 0.0
  %6026 = vmatprep.subr.mxu0 0.0
  %6027 = vmatpush1.msra.mxu0 0.0
  %6028 = vmatprep.subr.mxu0 0.0
  %6029 = vmatpush1.msra.mxu0 0.0
  %6030 = vmatprep.subr.mxu0 0.0
  %6031 = vmatpush1.msra.mxu0 0.0
  %6032 = vmatprep.subr.mxu0 0.0
  %6033 = vmatpush1.msra.mxu0 0.0
  %6034 = vmatprep.subr.mxu0 0.0
  %6035 = vmatpush1.msra.mxu0 0.0
  %6036 = vmatprep.subr.mxu0 0.0
  %6037 = vmatpush1.msra.mxu0 0.0
  %6038 = vmatprep.subr.mxu0 0.0
  %6039 = vmatpush1.msra.mxu0 0.0
  %6040 = vmatprep.subr.mxu0 0.0
  %6041 = vmatpush1.msra.mxu0 0.0
  %6042 = vmatprep.subr.mxu0 0.0
  %6043 = vmatpush1.msra.mxu0 0.0
  %6044 = vmatprep.subr.mxu0 0.0
  %6045 = vmatpush1.msra.mxu0 0.0
  %6046 = vmatprep.mubr.f32.mxu0 0.0
  %6047 = vmatmul.mubr.f32.gmra.mrb[0].mxu0 %v5536
  %v6048 = vpop.f32.mrb[0].mxu0
  %v6049 = vadd.f32 %v2500, %v6048
  %v6050 = vpop.f32.mrb[0].mxu0
  %6051 = vdwg.mxu0
  %6052 = vmatprep.subr.mxu0 0.0
  %6053 = vmatpush1.msra.mxu0 %v2491
  %6054 = vmatprep.subr.mxu0 0.0
  %6055 = vmatpush1.msra.mxu0 %v2492
  %6056 = vmatprep.subr.mxu0 0.0
  %6057 = vmatpush1.msra.mxu0 %v2493
  %6058 = vmatprep.subr.mxu0 0.0
  %6059 = vmatpush1.msra.mxu0 %v2494
  %6060 = vmatprep.subr.mxu0 0.0
  %6061 = vmatpush1.msra.mxu0 0.0
  %6062 = vmatprep.subr.mxu0 0.0
  %6063 = vmatpush1.msra.mxu0 0.0
  %6064 = vmatprep.subr.mxu0 0.0
  %6065 = vmatpush1.msra.mxu0 0.0
  %6066 = vmatprep.subr.mxu0 0.0
  %6067 = vmatpush1.msra.mxu0 0.0
  %6068 = vmatprep.subr.mxu0 0.0
  %6069 = vmatpush1.msra.mxu0 0.0
  %6070 = vmatprep.subr.mxu0 0.0
  %6071 = vmatpush1.msra.mxu0 0.0
  %6072 = vmatprep.subr.mxu0 0.0
  %6073 = vmatpush1.msra.mxu0 0.0
  %6074 = vmatprep.subr.mxu0 0.0
  %6075 = vmatpush1.msra.mxu0 0.0
  %6076 = vmatprep.subr.mxu0 0.0
  %6077 = vmatpush1.msra.mxu0 0.0
  %6078 = vmatprep.subr.mxu0 0.0
  %6079 = vmatpush1.msra.mxu0 0.0
  %6080 = vmatprep.subr.mxu0 0.0
  %6081 = vmatpush1.msra.mxu0 0.0
  %6082 = vmatprep.subr.mxu0 0.0
  %6083 = vmatpush1.msra.mxu0 0.0
  %6084 = vmatprep.subr.mxu0 0.0
  %6085 = vmatpush1.msra.mxu0 0.0
  %6086 = vmatprep.subr.mxu0 0.0
  %6087 = vmatpush1.msra.mxu0 0.0
  %6088 = vmatprep.subr.mxu0 0.0
  %6089 = vmatpush1.msra.mxu0 0.0
  %6090 = vmatprep.subr.mxu0 0.0
  %6091 = vmatpush1.msra.mxu0 0.0
  %6092 = vmatprep.subr.mxu0 0.0
  %6093 = vmatpush1.msra.mxu0 0.0
  %6094 = vmatprep.subr.mxu0 0.0
  %6095 = vmatpush1.msra.mxu0 0.0
  %6096 = vmatprep.subr.mxu0 0.0
  %6097 = vmatpush1.msra.mxu0 0.0
  %6098 = vmatprep.subr.mxu0 0.0
  %6099 = vmatpush1.msra.mxu0 0.0
  %6100 = vmatprep.subr.mxu0 0.0
  %6101 = vmatpush1.msra.mxu0 0.0
  %6102 = vmatprep.subr.mxu0 0.0
  %6103 = vmatpush1.msra.mxu0 0.0
  %6104 = vmatprep.subr.mxu0 0.0
  %6105 = vmatpush1.msra.mxu0 0.0
  %6106 = vmatprep.subr.mxu0 0.0
  %6107 = vmatpush1.msra.mxu0 0.0
  %6108 = vmatprep.subr.mxu0 0.0
  %6109 = vmatpush1.msra.mxu0 0.0
  %6110 = vmatprep.subr.mxu0 0.0
  %6111 = vmatpush1.msra.mxu0 0.0
  %6112 = vmatprep.subr.mxu0 0.0
  %6113 = vmatpush1.msra.mxu0 0.0
  %6114 = vmatprep.subr.mxu0 0.0
  %6115 = vmatpush1.msra.mxu0 0.0
  %6116 = vmatprep.mubr.f32.mxu0 0.0
  %6117 = vmatmul.mubr.f32.gmra.mrb[0].mxu0 %v5536
  %v6118 = vpop.f32.mrb[0].mxu0
  %v6119 = vadd.f32 %v2502, %v6118
  %v6120 = vpop.f32.mrb[0].mxu0
  %6121 = vdwg.mxu0
  %6122 = vmatprep.subr.mxu0 0.0
  %6123 = vmatpush1.msra.mxu0 %v2496
  %6124 = vmatprep.subr.mxu0 0.0
  %6125 = vmatpush1.msra.mxu0 %v2497
  %6126 = vmatprep.subr.mxu0 0.0
  %6127 = vmatpush1.msra.mxu0 %v2498
  %6128 = vmatprep.subr.mxu0 0.0
  %6129 = vmatpush1.msra.mxu0 %v2499
  %6130 = vmatprep.subr.mxu0 0.0
  %6131 = vmatpush1.msra.mxu0 0.0
  %6132 = vmatprep.subr.mxu0 0.0
  %6133 = vmatpush1.msra.mxu0 0.0
  %6134 = vmatprep.subr.mxu0 0.0
  %6135 = vmatpush1.msra.mxu0 0.0
  %6136 = vmatprep.subr.mxu0 0.0
  %6137 = vmatpush1.msra.mxu0 0.0
  %6138 = vmatprep.subr.mxu0 0.0
  %6139 = vmatpush1.msra.mxu0 0.0
  %6140 = vmatprep.subr.mxu0 0.0
  %6141 = vmatpush1.msra.mxu0 0.0
  %6142 = vmatprep.subr.mxu0 0.0
  %6143 = vmatpush1.msra.mxu0 0.0
  %6144 = vmatprep.subr.mxu0 0.0
  %6145 = vmatpush1.msra.mxu0 0.0
  %6146 = vmatprep.subr.mxu0 0.0
  %6147 = vmatpush1.msra.mxu0 0.0
  %6148 = vmatprep.subr.mxu0 0.0
  %6149 = vmatpush1.msra.mxu0 0.0
  %6150 = vmatprep.subr.mxu0 0.0
  %6151 = vmatpush1.msra.mxu0 0.0
  %6152 = vmatprep.subr.mxu0 0.0
  %6153 = vmatpush1.msra.mxu0 0.0
  %6154 = vmatprep.subr.mxu0 0.0
  %6155 = vmatpush1.msra.mxu0 0.0
  %6156 = vmatprep.subr.mxu0 0.0
  %6157 = vmatpush1.msra.mxu0 0.0
  %6158 = vmatprep.subr.mxu0 0.0
  %6159 = vmatpush1.msra.mxu0 0.0
  %6160 = vmatprep.subr.mxu0 0.0
  %6161 = vmatpush1.msra.mxu0 0.0
  %6162 = vmatprep.subr.mxu0 0.0
  %6163 = vmatpush1.msra.mxu0 0.0
  %6164 = vmatprep.subr.mxu0 0.0
  %6165 = vmatpush1.msra.mxu0 0.0
  %6166 = vmatprep.subr.mxu0 0.0
  %6167 = vmatpush1.msra.mxu0 0.0
  %6168 = vmatprep.subr.mxu0 0.0
  %6169 = vmatpush1.msra.mxu0 0.0
  %6170 = vmatprep.subr.mxu0 0.0
  %6171 = vmatpush1.msra.mxu0 0.0
  %6172 = vmatprep.subr.mxu0 0.0
  %6173 = vmatpush1.msra.mxu0 0.0
  %6174 = vmatprep.subr.mxu0 0.0
  %6175 = vmatpush1.msra.mxu0 0.0
  %6176 = vmatprep.subr.mxu0 0.0
  %6177 = vmatpush1.msra.mxu0 0.0
  %6178 = vmatprep.subr.mxu0 0.0
  %6179 = vmatpush1.msra.mxu0 0.0
  %6180 = vmatprep.subr.mxu0 0.0
  %6181 = vmatpush1.msra.mxu0 0.0
  %6182 = vmatprep.subr.mxu0 0.0
  %6183 = vmatpush1.msra.mxu0 0.0
  %6184 = vmatprep.subr.mxu0 0.0
  %6185 = vmatpush1.msra.mxu0 0.0
  %6186 = vmatprep.mubr.f32.mxu0 0.0
  %6187 = vmatmul.mubr.f32.gmra.mrb[0].mxu0 %v5536
  %v6188 = vpop.f32.mrb[0].mxu0
  %v6189 = vadd.f32 %v2504, %v6188
  %v6190 = vpop.f32.mrb[0].mxu0
  %6191 = vdwg.mxu0
  %v6193 = vrot.slane %v6049, 3
  %v6195 = vadd.f32 %v1747, %v6193
  %v6196 = vxor.u32 %v6195, 2147483648
  %v6197 = vmul.f32 %v6196, 1.442695
  %v6198 = vpow.pop %v6197
  %v6199 = vadd.f32 %v6198, 1.0
  %v6200 = vrcp.pop %v6199
  %v6201 = vmul.f32 1.0, %v6200
  %v6203 = vrot.slane %v6119, 3
  %v6205 = vadd.f32 %v2116, %v6203
  %v6206 = vxor.u32 %v6205, 2147483648
  %v6207 = vmul.f32 %v6206, 1.442695
  %v6208 = vpow.pop %v6207
  %v6209 = vadd.f32 %v6208, 1.0
  %v6210 = vrcp.pop %v6209
  %v6211 = vmul.f32 1.0, %v6210
  %v6213 = vrot.slane %v6189, 3
  %v6215 = vmul.f32 %v6201, %v6213
  %v6216 = vadd.f32 %v2485, %v6215
  %v6217 = vtanh.pop %v6216
  %v6218 = vsub.f32 1.0, %v6211
  %v6219 = vmul.f32 %v6218, %v6217
  %v6220 = vrot.slane %v5533, 7
  %v6222 = vmul.f32 %v6211, %v6220
  %v6223 = vadd.f32 %v6219, %v6222
  %v6225 = vrot.slane %v6223, 5
  %v6226 = vsel %vm2543, %v6225, 0
  %6228 = vmatprep.subr.mxu0 0.0
  %6229 = vmatpush1.msra.mxu0 %v2505
  %6230 = vmatprep.subr.mxu0 0.0
  %6231 = vmatpush1.msra.mxu0 %v2506
  %6232 = vmatprep.subr.mxu0 0.0
  %6233 = vmatpush1.msra.mxu0 %v2507
  %6234 = vmatprep.subr.mxu0 0.0
  %6235 = vmatpush1.msra.mxu0 %v2508
  %6236 = vmatprep.subr.mxu0 0.0
  %6237 = vmatpush1.msra.mxu0 0.0
  %6238 = vmatprep.subr.mxu0 0.0
  %6239 = vmatpush1.msra.mxu0 0.0
  %6240 = vmatprep.subr.mxu0 0.0
  %6241 = vmatpush1.msra.mxu0 0.0
  %6242 = vmatprep.subr.mxu0 0.0
  %6243 = vmatpush1.msra.mxu0 0.0
  %6244 = vmatprep.subr.mxu0 0.0
  %6245 = vmatpush1.msra.mxu0 0.0
  %6246 = vmatprep.subr.mxu0 0.0
  %6247 = vmatpush1.msra.mxu0 0.0
  %6248 = vmatprep.subr.mxu0 0.0
  %6249 = vmatpush1.msra.mxu0 0.0
  %6250 = vmatprep.subr.mxu0 0.0
  %6251 = vmatpush1.msra.mxu0 0.0
  %6252 = vmatprep.subr.mxu0 0.0
  %6253 = vmatpush1.msra.mxu0 0.0
  %6254 = vmatprep.subr.mxu0 0.0
  %6255 = vmatpush1.msra.mxu0 0.0
  %6256 = vmatprep.subr.mxu0 0.0
  %6257 = vmatpush1.msra.mxu0 0.0
  %6258 = vmatprep.subr.mxu0 0.0
  %6259 = vmatpush1.msra.mxu0 0.0
  %6260 = vmatprep.subr.mxu0 0.0
  %6261 = vmatpush1.msra.mxu0 0.0
  %6262 = vmatprep.subr.mxu0 0.0
  %6263 = vmatpush1.msra.mxu0 0.0
  %6264 = vmatprep.subr.mxu0 0.0
  %6265 = vmatpush1.msra.mxu0 0.0
  %6266 = vmatprep.subr.mxu0 0.0
  %6267 = vmatpush1.msra.mxu0 0.0
  %6268 = vmatprep.subr.mxu0 0.0
  %6269 = vmatpush1.msra.mxu0 0.0
  %6270 = vmatprep.subr.mxu0 0.0
  %6271 = vmatpush1.msra.mxu0 0.0
  %6272 = vmatprep.subr.mxu0 0.0
  %6273 = vmatpush1.msra.mxu0 0.0
  %6274 = vmatprep.subr.mxu0 0.0
  %6275 = vmatpush1.msra.mxu0 0.0
  %6276 = vmatprep.subr.mxu0 0.0
  %6277 = vmatpush1.msra.mxu0 0.0
  %6278 = vmatprep.subr.mxu0 0.0
  %6279 = vmatpush1.msra.mxu0 0.0
  %6280 = vmatprep.subr.mxu0 0.0
  %6281 = vmatpush1.msra.mxu0 0.0
  %6282 = vmatprep.subr.mxu0 0.0
  %6283 = vmatpush1.msra.mxu0 0.0
  %6284 = vmatprep.subr.mxu0 0.0
  %6285 = vmatpush1.msra.mxu0 0.0
  %6286 = vmatprep.subr.mxu0 0.0
  %6287 = vmatpush1.msra.mxu0 0.0
  %6288 = vmatprep.subr.mxu0 0.0
  %6289 = vmatpush1.msra.mxu0 0.0
  %6290 = vmatprep.subr.mxu0 0.0
  %6291 = vmatpush1.msra.mxu0 0.0
  %6292 = vmatprep.mubr.f32.mxu0 0.0
  %6293 = vmatmul.mubr.f32.gmra.mrb[0].mxu0 %v6226
  %v6294 = vpop.f32.mrb[0].mxu0
  %v6295 = vadd.f32 %v2519, %v6294
  %v6296 = vpop.f32.mrb[0].mxu0
  %6297 = vdwg.mxu0
  %6298 = vmatprep.subr.mxu0 0.0
  %6299 = vmatpush1.msra.mxu0 %v2510
  %6300 = vmatprep.subr.mxu0 0.0
  %6301 = vmatpush1.msra.mxu0 %v2511
  %6302 = vmatprep.subr.mxu0 0.0
  %6303 = vmatpush1.msra.mxu0 %v2512
  %6304 = vmatprep.subr.mxu0 0.0
  %6305 = vmatpush1.msra.mxu0 %v2513
  %6306 = vmatprep.subr.mxu0 0.0
  %6307 = vmatpush1.msra.mxu0 0.0
  %6308 = vmatprep.subr.mxu0 0.0
  %6309 = vmatpush1.msra.mxu0 0.0
  %6310 = vmatprep.subr.mxu0 0.0
  %6311 = vmatpush1.msra.mxu0 0.0
  %6312 = vmatprep.subr.mxu0 0.0
  %6313 = vmatpush1.msra.mxu0 0.0
  %6314 = vmatprep.subr.mxu0 0.0
  %6315 = vmatpush1.msra.mxu0 0.0
  %6316 = vmatprep.subr.mxu0 0.0
  %6317 = vmatpush1.msra.mxu0 0.0
  %6318 = vmatprep.subr.mxu0 0.0
  %6319 = vmatpush1.msra.mxu0 0.0
  %6320 = vmatprep.subr.mxu0 0.0
  %6321 = vmatpush1.msra.mxu0 0.0
  %6322 = vmatprep.subr.mxu0 0.0
  %6323 = vmatpush1.msra.mxu0 0.0
  %6324 = vmatprep.subr.mxu0 0.0
  %6325 = vmatpush1.msra.mxu0 0.0
  %6326 = vmatprep.subr.mxu0 0.0
  %6327 = vmatpush1.msra.mxu0 0.0
  %6328 = vmatprep.subr.mxu0 0.0
  %6329 = vmatpush1.msra.mxu0 0.0
  %6330 = vmatprep.subr.mxu0 0.0
  %6331 = vmatpush1.msra.mxu0 0.0
  %6332 = vmatprep.subr.mxu0 0.0
  %6333 = vmatpush1.msra.mxu0 0.0
  %6334 = vmatprep.subr.mxu0 0.0
  %6335 = vmatpush1.msra.mxu0 0.0
  %6336 = vmatprep.subr.mxu0 0.0
  %6337 = vmatpush1.msra.mxu0 0.0
  %6338 = vmatprep.subr.mxu0 0.0
  %6339 = vmatpush1.msra.mxu0 0.0
  %6340 = vmatprep.subr.mxu0 0.0
  %6341 = vmatpush1.msra.mxu0 0.0
  %6342 = vmatprep.subr.mxu0 0.0
  %6343 = vmatpush1.msra.mxu0 0.0
  %6344 = vmatprep.subr.mxu0 0.0
  %6345 = vmatpush1.msra.mxu0 0.0
  %6346 = vmatprep.subr.mxu0 0.0
  %6347 = vmatpush1.msra.mxu0 0.0
  %6348 = vmatprep.subr.mxu0 0.0
  %6349 = vmatpush1.msra.mxu0 0.0
  %6350 = vmatprep.subr.mxu0 0.0
  %6351 = vmatpush1.msra.mxu0 0.0
  %6352 = vmatprep.subr.mxu0 0.0
  %6353 = vmatpush1.msra.mxu0 0.0
  %6354 = vmatprep.subr.mxu0 0.0
  %6355 = vmatpush1.msra.mxu0 0.0
  %6356 = vmatprep.subr.mxu0 0.0
  %6357 = vmatpush1.msra.mxu0 0.0
  %6358 = vmatprep.subr.mxu0 0.0
  %6359 = vmatpush1.msra.mxu0 0.0
  %6360 = vmatprep.subr.mxu0 0.0
  %6361 = vmatpush1.msra.mxu0 0.0
  %6362 = vmatprep.mubr.f32.mxu0 0.0
  %6363 = vmatmul.mubr.f32.gmra.mrb[0].mxu0 %v6226
  %v6364 = vpop.f32.mrb[0].mxu0
  %v6365 = vadd.f32 %v2521, %v6364
  %v6366 = vpop.f32.mrb[0].mxu0
  %6367 = vdwg.mxu0
  %6368 = vmatprep.subr.mxu0 0.0
  %6369 = vmatpush1.msra.mxu0 %v2515
  %6370 = vmatprep.subr.mxu0 0.0
  %6371 = vmatpush1.msra.mxu0 %v2516
  %6372 = vmatprep.subr.mxu0 0.0
  %6373 = vmatpush1.msra.mxu0 %v2517
  %6374 = vmatprep.subr.mxu0 0.0
  %6375 = vmatpush1.msra.mxu0 %v2518
  %6376 = vmatprep.subr.mxu0 0.0
  %6377 = vmatpush1.msra.mxu0 0.0
  %6378 = vmatprep.subr.mxu0 0.0
  %6379 = vmatpush1.msra.mxu0 0.0
  %6380 = vmatprep.subr.mxu0 0.0
  %6381 = vmatpush1.msra.mxu0 0.0
  %6382 = vmatprep.subr.mxu0 0.0
  %6383 = vmatpush1.msra.mxu0 0.0
  %6384 = vmatprep.subr.mxu0 0.0
  %6385 = vmatpush1.msra.mxu0 0.0
  %6386 = vmatprep.subr.mxu0 0.0
  %6387 = vmatpush1.msra.mxu0 0.0
  %6388 = vmatprep.subr.mxu0 0.0
  %6389 = vmatpush1.msra.mxu0 0.0
  %6390 = vmatprep.subr.mxu0 0.0
  %6391 = vmatpush1.msra.mxu0 0.0
  %6392 = vmatprep.subr.mxu0 0.0
  %6393 = vmatpush1.msra.mxu0 0.0
  %6394 = vmatprep.subr.mxu0 0.0
  %6395 = vmatpush1.msra.mxu0 0.0
  %6396 = vmatprep.subr.mxu0 0.0
  %6397 = vmatpush1.msra.mxu0 0.0
  %6398 = vmatprep.subr.mxu0 0.0
  %6399 = vmatpush1.msra.mxu0 0.0
  %6400 = vmatprep.subr.mxu0 0.0
  %6401 = vmatpush1.msra.mxu0 0.0
  %6402 = vmatprep.subr.mxu0 0.0
  %6403 = vmatpush1.msra.mxu0 0.0
  %6404 = vmatprep.subr.mxu0 0.0
  %6405 = vmatpush1.msra.mxu0 0.0
  %6406 = vmatprep.subr.mxu0 0.0
  %6407 = vmatpush1.msra.mxu0 0.0
  %6408 = vmatprep.subr.mxu0 0.0
  %6409 = vmatpush1.msra.mxu0 0.0
  %6410 = vmatprep.subr.mxu0 0.0
  %6411 = vmatpush1.msra.mxu0 0.0
  %6412 = vmatprep.subr.mxu0 0.0
  %6413 = vmatpush1.msra.mxu0 0.0
  %6414 = vmatprep.subr.mxu0 0.0
  %6415 = vmatpush1.msra.mxu0 0.0
  %6416 = vmatprep.subr.mxu0 0.0
  %6417 = vmatpush1.msra.mxu0 0.0
  %6418 = vmatprep.subr.mxu0 0.0
  %6419 = vmatpush1.msra.mxu0 0.0
  %6420 = vmatprep.subr.mxu0 0.0
  %6421 = vmatpush1.msra.mxu0 0.0
  %6422 = vmatprep.subr.mxu0 0.0
  %6423 = vmatpush1.msra.mxu0 0.0
  %6424 = vmatprep.subr.mxu0 0.0
  %6425 = vmatpush1.msra.mxu0 0.0
  %6426 = vmatprep.subr.mxu0 0.0
  %6427 = vmatpush1.msra.mxu0 0.0
  %6428 = vmatprep.subr.mxu0 0.0
  %6429 = vmatpush1.msra.mxu0 0.0
  %6430 = vmatprep.subr.mxu0 0.0
  %6431 = vmatpush1.msra.mxu0 0.0
  %6432 = vmatprep.mubr.f32.mxu0 0.0
  %6433 = vmatmul.mubr.f32.gmra.mrb[0].mxu0 %v6226
  %v6434 = vpop.f32.mrb[0].mxu0
  %v6435 = vadd.f32 %v2523, %v6434
  %v6436 = vpop.f32.mrb[0].mxu0
  %6437 = vdwg.mxu0
  %v6439 = vsel %vm2543, %v5981, 0
  %6441 = vmatprep.subr.mxu0 0.0
  %6442 = vmatpush1.msra.mxu0 %v2524
  %6443 = vmatprep.subr.mxu0 0.0
  %6444 = vmatpush1.msra.mxu0 %v2525
  %6445 = vmatprep.subr.mxu0 0.0
  %6446 = vmatpush1.msra.mxu0 %v2526
  %6447 = vmatprep.subr.mxu0 0.0
  %6448 = vmatpush1.msra.mxu0 %v2527
  %6449 = vmatprep.subr.mxu0 0.0
  %6450 = vmatpush1.msra.mxu0 0.0
  %6451 = vmatprep.subr.mxu0 0.0
  %6452 = vmatpush1.msra.mxu0 0.0
  %6453 = vmatprep.subr.mxu0 0.0
  %6454 = vmatpush1.msra.mxu0 0.0
  %6455 = vmatprep.subr.mxu0 0.0
  %6456 = vmatpush1.msra.mxu0 0.0
  %6457 = vmatprep.subr.mxu0 0.0
  %6458 = vmatpush1.msra.mxu0 0.0
  %6459 = vmatprep.subr.mxu0 0.0
  %6460 = vmatpush1.msra.mxu0 0.0
  %6461 = vmatprep.subr.mxu0 0.0
  %6462 = vmatpush1.msra.mxu0 0.0
  %6463 = vmatprep.subr.mxu0 0.0
  %6464 = vmatpush1.msra.mxu0 0.0
  %6465 = vmatprep.subr.mxu0 0.0
  %6466 = vmatpush1.msra.mxu0 0.0
  %6467 = vmatprep.subr.mxu0 0.0
  %6468 = vmatpush1.msra.mxu0 0.0
  %6469 = vmatprep.subr.mxu0 0.0
  %6470 = vmatpush1.msra.mxu0 0.0
  %6471 = vmatprep.subr.mxu0 0.0
  %6472 = vmatpush1.msra.mxu0 0.0
  %6473 = vmatprep.subr.mxu0 0.0
  %6474 = vmatpush1.msra.mxu0 0.0
  %6475 = vmatprep.subr.mxu0 0.0
  %6476 = vmatpush1.msra.mxu0 0.0
  %6477 = vmatprep.subr.mxu0 0.0
  %6478 = vmatpush1.msra.mxu0 0.0
  %6479 = vmatprep.subr.mxu0 0.0
  %6480 = vmatpush1.msra.mxu0 0.0
  %6481 = vmatprep.subr.mxu0 0.0
  %6482 = vmatpush1.msra.mxu0 0.0
  %6483 = vmatprep.subr.mxu0 0.0
  %6484 = vmatpush1.msra.mxu0 0.0
  %6485 = vmatprep.subr.mxu0 0.0
  %6486 = vmatpush1.msra.mxu0 0.0
  %6487 = vmatprep.subr.mxu0 0.0
  %6488 = vmatpush1.msra.mxu0 0.0
  %6489 = vmatprep.subr.mxu0 0.0
  %6490 = vmatpush1.msra.mxu0 0.0
  %6491 = vmatprep.subr.mxu0 0.0
  %6492 = vmatpush1.msra.mxu0 0.0
  %6493 = vmatprep.subr.mxu0 0.0
  %6494 = vmatpush1.msra.mxu0 0.0
  %6495 = vmatprep.subr.mxu0 0.0
  %6496 = vmatpush1.msra.mxu0 0.0
  %6497 = vmatprep.subr.mxu0 0.0
  %6498 = vmatpush1.msra.mxu0 0.0
  %6499 = vmatprep.subr.mxu0 0.0
  %6500 = vmatpush1.msra.mxu0 0.0
  %6501 = vmatprep.subr.mxu0 0.0
  %6502 = vmatpush1.msra.mxu0 0.0
  %6503 = vmatprep.subr.mxu0 0.0
  %6504 = vmatpush1.msra.mxu0 0.0
  %6505 = vmatprep.mubr.f32.mxu0 0.0
  %6506 = vmatmul.mubr.f32.gmra.mrb[0].mxu0 %v6439
  %v6507 = vpop.f32.mrb[0].mxu0
  %v6508 = vadd.f32 %v2538, %v6507
  %v6509 = vpop.f32.mrb[0].mxu0
  %6510 = vdwg.mxu0
  %6511 = vmatprep.subr.mxu0 0.0
  %6512 = vmatpush1.msra.mxu0 %v2529
  %6513 = vmatprep.subr.mxu0 0.0
  %6514 = vmatpush1.msra.mxu0 %v2530
  %6515 = vmatprep.subr.mxu0 0.0
  %6516 = vmatpush1.msra.mxu0 %v2531
  %6517 = vmatprep.subr.mxu0 0.0
  %6518 = vmatpush1.msra.mxu0 %v2532
  %6519 = vmatprep.subr.mxu0 0.0
  %6520 = vmatpush1.msra.mxu0 0.0
  %6521 = vmatprep.subr.mxu0 0.0
  %6522 = vmatpush1.msra.mxu0 0.0
  %6523 = vmatprep.subr.mxu0 0.0
  %6524 = vmatpush1.msra.mxu0 0.0
  %6525 = vmatprep.subr.mxu0 0.0
  %6526 = vmatpush1.msra.mxu0 0.0
  %6527 = vmatprep.subr.mxu0 0.0
  %6528 = vmatpush1.msra.mxu0 0.0
  %6529 = vmatprep.subr.mxu0 0.0
  %6530 = vmatpush1.msra.mxu0 0.0
  %6531 = vmatprep.subr.mxu0 0.0
  %6532 = vmatpush1.msra.mxu0 0.0
  %6533 = vmatprep.subr.mxu0 0.0
  %6534 = vmatpush1.msra.mxu0 0.0
  %6535 = vmatprep.subr.mxu0 0.0
  %6536 = vmatpush1.msra.mxu0 0.0
  %6537 = vmatprep.subr.mxu0 0.0
  %6538 = vmatpush1.msra.mxu0 0.0
  %6539 = vmatprep.subr.mxu0 0.0
  %6540 = vmatpush1.msra.mxu0 0.0
  %6541 = vmatprep.subr.mxu0 0.0
  %6542 = vmatpush1.msra.mxu0 0.0
  %6543 = vmatprep.subr.mxu0 0.0
  %6544 = vmatpush1.msra.mxu0 0.0
  %6545 = vmatprep.subr.mxu0 0.0
  %6546 = vmatpush1.msra.mxu0 0.0
  %6547 = vmatprep.subr.mxu0 0.0
  %6548 = vmatpush1.msra.mxu0 0.0
  %6549 = vmatprep.subr.mxu0 0.0
  %6550 = vmatpush1.msra.mxu0 0.0
  %6551 = vmatprep.subr.mxu0 0.0
  %6552 = vmatpush1.msra.mxu0 0.0
  %6553 = vmatprep.subr.mxu0 0.0
  %6554 = vmatpush1.msra.mxu0 0.0
  %6555 = vmatprep.subr.mxu0 0.0
  %6556 = vmatpush1.msra.mxu0 0.0
  %6557 = vmatprep.subr.mxu0 0.0
  %6558 = vmatpush1.msra.mxu0 0.0
  %6559 = vmatprep.subr.mxu0 0.0
  %6560 = vmatpush1.msra.mxu0 0.0
  %6561 = vmatprep.subr.mxu0 0.0
  %6562 = vmatpush1.msra.mxu0 0.0
  %6563 = vmatprep.subr.mxu0 0.0
  %6564 = vmatpush1.msra.mxu0 0.0
  %6565 = vmatprep.subr.mxu0 0.0
  %6566 = vmatpush1.msra.mxu0 0.0
  %6567 = vmatprep.subr.mxu0 0.0
  %6568 = vmatpush1.msra.mxu0 0.0
  %6569 = vmatprep.subr.mxu0 0.0
  %6570 = vmatpush1.msra.mxu0 0.0
  %6571 = vmatprep.subr.mxu0 0.0
  %6572 = vmatpush1.msra.mxu0 0.0
  %6573 = vmatprep.subr.mxu0 0.0
  %6574 = vmatpush1.msra.mxu0 0.0
  %6575 = vmatprep.mubr.f32.mxu0 0.0
  %6576 = vmatmul.mubr.f32.gmra.mrb[0].mxu0 %v6439
  %v6577 = vpop.f32.mrb[0].mxu0
  %v6578 = vadd.f32 %v2540, %v6577
  %v6579 = vpop.f32.mrb[0].mxu0
  %6580 = vdwg.mxu0
  %6581 = vmatprep.subr.mxu0 0.0
  %6582 = vmatpush1.msra.mxu0 %v2534
  %6583 = vmatprep.subr.mxu0 0.0
  %6584 = vmatpush1.msra.mxu0 %v2535
  %6585 = vmatprep.subr.mxu0 0.0
  %6586 = vmatpush1.msra.mxu0 %v2536
  %6587 = vmatprep.subr.mxu0 0.0
  %6588 = vmatpush1.msra.mxu0 %v2537
  %6589 = vmatprep.subr.mxu0 0.0
  %6590 = vmatpush1.msra.mxu0 0.0
  %6591 = vmatprep.subr.mxu0 0.0
  %6592 = vmatpush1.msra.mxu0 0.0
  %6593 = vmatprep.subr.mxu0 0.0
  %6594 = vmatpush1.msra.mxu0 0.0
  %6595 = vmatprep.subr.mxu0 0.0
  %6596 = vmatpush1.msra.mxu0 0.0
  %6597 = vmatprep.subr.mxu0 0.0
  %6598 = vmatpush1.msra.mxu0 0.0
  %6599 = vmatprep.subr.mxu0 0.0
  %6600 = vmatpush1.msra.mxu0 0.0
  %6601 = vmatprep.subr.mxu0 0.0
  %6602 = vmatpush1.msra.mxu0 0.0
  %6603 = vmatprep.subr.mxu0 0.0
  %6604 = vmatpush1.msra.mxu0 0.0
  %6605 = vmatprep.subr.mxu0 0.0
  %6606 = vmatpush1.msra.mxu0 0.0
  %6607 = vmatprep.subr.mxu0 0.0
  %6608 = vmatpush1.msra.mxu0 0.0
  %6609 = vmatprep.subr.mxu0 0.0
  %6610 = vmatpush1.msra.mxu0 0.0
  %6611 = vmatprep.subr.mxu0 0.0
  %6612 = vmatpush1.msra.mxu0 0.0
  %6613 = vmatprep.subr.mxu0 0.0
  %6614 = vmatpush1.msra.mxu0 0.0
  %6615 = vmatprep.subr.mxu0 0.0
  %6616 = vmatpush1.msra.mxu0 0.0
  %6617 = vmatprep.subr.mxu0 0.0
  %6618 = vmatpush1.msra.mxu0 0.0
  %6619 = vmatprep.subr.mxu0 0.0
  %6620 = vmatpush1.msra.mxu0 0.0
  %6621 = vmatprep.subr.mxu0 0.0
  %6622 = vmatpush1.msra.mxu0 0.0
  %6623 = vmatprep.subr.mxu0 0.0
  %6624 = vmatpush1.msra.mxu0 0.0
  %6625 = vmatprep.subr.mxu0 0.0
  %6626 = vmatpush1.msra.mxu0 0.0
  %6627 = vmatprep.subr.mxu0 0.0
  %6628 = vmatpush1.msra.mxu0 0.0
  %6629 = vmatprep.subr.mxu0 0.0
  %6630 = vmatpush1.msra.mxu0 0.0
  %6631 = vmatprep.subr.mxu0 0.0
  %6632 = vmatpush1.msra.mxu0 0.0
  %6633 = vmatprep.subr.mxu0 0.0
  %6634 = vmatpush1.msra.mxu0 0.0
  %6635 = vmatprep.subr.mxu0 0.0
  %6636 = vmatpush1.msra.mxu0 0.0
  %6637 = vmatprep.subr.mxu0 0.0
  %6638 = vmatpush1.msra.mxu0 0.0
  %6639 = vmatprep.subr.mxu0 0.0
  %6640 = vmatpush1.msra.mxu0 0.0
  %6641 = vmatprep.subr.mxu0 0.0
  %6642 = vmatpush1.msra.mxu0 0.0
  %6643 = vmatprep.subr.mxu0 0.0
  %6644 = vmatpush1.msra.mxu0 0.0
  %6645 = vmatprep.mubr.f32.mxu0 0.0
  %6646 = vmatmul.mubr.f32.gmra.mrb[0].mxu0 %v6439
  %v6647 = vpop.f32.mrb[0].mxu0
  %v6648 = vadd.f32 %v2542, %v6647
  %v6649 = vpop.f32.mrb[0].mxu0
  %6650 = vdwg.mxu0
  %v6651 = vadd.f32 %v6295, %v6508
  %v6652 = vxor.u32 %v6651, 2147483648
  %v6653 = vmul.f32 %v6652, 1.442695
  %v6654 = vpow.pop %v6653
  %v6655 = vadd.f32 %v6654, 1.0
  %v6656 = vrcp.pop %v6655
  %v6657 = vmul.f32 1.0, %v6656
  %v6658 = vadd.f32 %v6365, %v6578
  %v6659 = vxor.u32 %v6658, 2147483648
  %v6660 = vmul.f32 %v6659, 1.442695
  %v6661 = vpow.pop %v6660
  %v6662 = vadd.f32 %v6661, 1.0
  %v6663 = vrcp.pop %v6662
  %v6664 = vmul.f32 1.0, %v6663
  %v6665 = vmul.f32 %v6657, %v6648
  %v6666 = vadd.f32 %v6435, %v6665
  %v6667 = vtanh.pop %v6666
  %v6668 = vsub.f32 1.0, %v6664
  %v6669 = vmul.f32 %v6668, %v6667
  %v6670 = vmul.f32 %v6664, %v5981
  %v6671 = vadd.f32 %v6669, %v6670
  %6672 = vmatprep.subr.mxu0 0.0
  %6673 = vmatpush1.msra.mxu0 %v2486
  %6674 = vmatprep.subr.mxu0 0.0
  %6675 = vmatpush1.msra.mxu0 %v2487
  %6676 = vmatprep.subr.mxu0 0.0
  %6677 = vmatpush1.msra.mxu0 %v2488
  %6678 = vmatprep.subr.mxu0 0.0
  %6679 = vmatpush1.msra.mxu0 %v2489
  %6680 = vmatprep.subr.mxu0 0.0
  %6681 = vmatpush1.msra.mxu0 0.0
  %6682 = vmatprep.subr.mxu0 0.0
  %6683 = vmatpush1.msra.mxu0 0.0
  %6684 = vmatprep.subr.mxu0 0.0
  %6685 = vmatpush1.msra.mxu0 0.0
  %6686 = vmatprep.subr.mxu0 0.0
  %6687 = vmatpush1.msra.mxu0 0.0
  %6688 = vmatprep.subr.mxu0 0.0
  %6689 = vmatpush1.msra.mxu0 0.0
  %6690 = vmatprep.subr.mxu0 0.0
  %6691 = vmatpush1.msra.mxu0 0.0
  %6692 = vmatprep.subr.mxu0 0.0
  %6693 = vmatpush1.msra.mxu0 0.0
  %6694 = vmatprep.subr.mxu0 0.0
  %6695 = vmatpush1.msra.mxu0 0.0
  %6696 = vmatprep.subr.mxu0 0.0
  %6697 = vmatpush1.msra.mxu0 0.0
  %6698 = vmatprep.subr.mxu0 0.0
  %6699 = vmatpush1.msra.mxu0 0.0
  %6700 = vmatprep.subr.mxu0 0.0
  %6701 = vmatpush1.msra.mxu0 0.0
  %6702 = vmatprep.subr.mxu0 0.0
  %6703 = vmatpush1.msra.mxu0 0.0
  %6704 = vmatprep.subr.mxu0 0.0
  %6705 = vmatpush1.msra.mxu0 0.0
  %6706 = vmatprep.subr.mxu0 0.0
  %6707 = vmatpush1.msra.mxu0 0.0
  %6708 = vmatprep.subr.mxu0 0.0
  %6709 = vmatpush1.msra.mxu0 0.0
  %6710 = vmatprep.subr.mxu0 0.0
  %6711 = vmatpush1.msra.mxu0 0.0
  %6712 = vmatprep.subr.mxu0 0.0
  %6713 = vmatpush1.msra.mxu0 0.0
  %6714 = vmatprep.subr.mxu0 0.0
  %6715 = vmatpush1.msra.mxu0 0.0
  %6716 = vmatprep.subr.mxu0 0.0
  %6717 = vmatpush1.msra.mxu0 0.0
  %6718 = vmatprep.subr.mxu0 0.0
  %6719 = vmatpush1.msra.mxu0 0.0
  %6720 = vmatprep.subr.mxu0 0.0
  %6721 = vmatpush1.msra.mxu0 0.0
  %6722 = vmatprep.subr.mxu0 0.0
  %6723 = vmatpush1.msra.mxu0 0.0
  %6724 = vmatprep.subr.mxu0 0.0
  %6725 = vmatpush1.msra.mxu0 0.0
  %6726 = vmatprep.subr.mxu0 0.0
  %6727 = vmatpush1.msra.mxu0 0.0
  %6728 = vmatprep.subr.mxu0 0.0
  %6729 = vmatpush1.msra.mxu0 0.0
  %6730 = vmatprep.subr.mxu0 0.0
  %6731 = vmatpush1.msra.mxu0 0.0
  %6732 = vmatprep.subr.mxu0 0.0
  %6733 = vmatpush1.msra.mxu0 0.0
  %6734 = vmatprep.subr.mxu0 0.0
  %6735 = vmatpush1.msra.mxu0 0.0
  %6736 = vmatprep.mubr.f32.mxu0 0.0
  %6737 = vmatmul.mubr.f32.gmra.mrb[0].mxu0 %v6226
  %v6738 = vpop.f32.mrb[0].mxu0
  %v6739 = vadd.f32 %v2500, %v6738
  %v6740 = vpop.f32.mrb[0].mxu0
  %6741 = vdwg.mxu0
  %6742 = vmatprep.subr.mxu0 0.0
  %6743 = vmatpush1.msra.mxu0 %v2491
  %6744 = vmatprep.subr.mxu0 0.0
  %6745 = vmatpush1.msra.mxu0 %v2492
  %6746 = vmatprep.subr.mxu0 0.0
  %6747 = vmatpush1.msra.mxu0 %v2493
  %6748 = vmatprep.subr.mxu0 0.0
  %6749 = vmatpush1.msra.mxu0 %v2494
  %6750 = vmatprep.subr.mxu0 0.0
  %6751 = vmatpush1.msra.mxu0 0.0
  %6752 = vmatprep.subr.mxu0 0.0
  %6753 = vmatpush1.msra.mxu0 0.0
  %6754 = vmatprep.subr.mxu0 0.0
  %6755 = vmatpush1.msra.mxu0 0.0
  %6756 = vmatprep.subr.mxu0 0.0
  %6757 = vmatpush1.msra.mxu0 0.0
  %6758 = vmatprep.subr.mxu0 0.0
  %6759 = vmatpush1.msra.mxu0 0.0
  %6760 = vmatprep.subr.mxu0 0.0
  %6761 = vmatpush1.msra.mxu0 0.0
  %6762 = vmatprep.subr.mxu0 0.0
  %6763 = vmatpush1.msra.mxu0 0.0
  %6764 = vmatprep.subr.mxu0 0.0
  %6765 = vmatpush1.msra.mxu0 0.0
  %6766 = vmatprep.subr.mxu0 0.0
  %6767 = vmatpush1.msra.mxu0 0.0
  %6768 = vmatprep.subr.mxu0 0.0
  %6769 = vmatpush1.msra.mxu0 0.0
  %6770 = vmatprep.subr.mxu0 0.0
  %6771 = vmatpush1.msra.mxu0 0.0
  %6772 = vmatprep.subr.mxu0 0.0
  %6773 = vmatpush1.msra.mxu0 0.0
  %6774 = vmatprep.subr.mxu0 0.0
  %6775 = vmatpush1.msra.mxu0 0.0
  %6776 = vmatprep.subr.mxu0 0.0
  %6777 = vmatpush1.msra.mxu0 0.0
  %6778 = vmatprep.subr.mxu0 0.0
  %6779 = vmatpush1.msra.mxu0 0.0
  %6780 = vmatprep.subr.mxu0 0.0
  %6781 = vmatpush1.msra.mxu0 0.0
  %6782 = vmatprep.subr.mxu0 0.0
  %6783 = vmatpush1.msra.mxu0 0.0
  %6784 = vmatprep.subr.mxu0 0.0
  %6785 = vmatpush1.msra.mxu0 0.0
  %6786 = vmatprep.subr.mxu0 0.0
  %6787 = vmatpush1.msra.mxu0 0.0
  %6788 = vmatprep.subr.mxu0 0.0
  %6789 = vmatpush1.msra.mxu0 0.0
  %6790 = vmatprep.subr.mxu0 0.0
  %6791 = vmatpush1.msra.mxu0 0.0
  %6792 = vmatprep.subr.mxu0 0.0
  %6793 = vmatpush1.msra.mxu0 0.0
  %6794 = vmatprep.subr.mxu0 0.0
  %6795 = vmatpush1.msra.mxu0 0.0
  %6796 = vmatprep.subr.mxu0 0.0
  %6797 = vmatpush1.msra.mxu0 0.0
  %6798 = vmatprep.subr.mxu0 0.0
  %6799 = vmatpush1.msra.mxu0 0.0
  %6800 = vmatprep.subr.mxu0 0.0
  %6801 = vmatpush1.msra.mxu0 0.0
  %6802 = vmatprep.subr.mxu0 0.0
  %6803 = vmatpush1.msra.mxu0 0.0
  %6804 = vmatprep.subr.mxu0 0.0
  %6805 = vmatpush1.msra.mxu0 0.0
  %6806 = vmatprep.mubr.f32.mxu0 0.0
  %6807 = vmatmul.mubr.f32.gmra.mrb[0].mxu0 %v6226
  %v6808 = vpop.f32.mrb[0].mxu0
  %v6809 = vadd.f32 %v2502, %v6808
  %v6810 = vpop.f32.mrb[0].mxu0
  %6811 = vdwg.mxu0
  %6812 = vmatprep.subr.mxu0 0.0
  %6813 = vmatpush1.msra.mxu0 %v2496
  %6814 = vmatprep.subr.mxu0 0.0
  %6815 = vmatpush1.msra.mxu0 %v2497
  %6816 = vmatprep.subr.mxu0 0.0
  %6817 = vmatpush1.msra.mxu0 %v2498
  %6818 = vmatprep.subr.mxu0 0.0
  %6819 = vmatpush1.msra.mxu0 %v2499
  %6820 = vmatprep.subr.mxu0 0.0
  %6821 = vmatpush1.msra.mxu0 0.0
  %6822 = vmatprep.subr.mxu0 0.0
  %6823 = vmatpush1.msra.mxu0 0.0
  %6824 = vmatprep.subr.mxu0 0.0
  %6825 = vmatpush1.msra.mxu0 0.0
  %6826 = vmatprep.subr.mxu0 0.0
  %6827 = vmatpush1.msra.mxu0 0.0
  %6828 = vmatprep.subr.mxu0 0.0
  %6829 = vmatpush1.msra.mxu0 0.0
  %6830 = vmatprep.subr.mxu0 0.0
  %6831 = vmatpush1.msra.mxu0 0.0
  %6832 = vmatprep.subr.mxu0 0.0
  %6833 = vmatpush1.msra.mxu0 0.0
  %6834 = vmatprep.subr.mxu0 0.0
  %6835 = vmatpush1.msra.mxu0 0.0
  %6836 = vmatprep.subr.mxu0 0.0
  %6837 = vmatpush1.msra.mxu0 0.0
  %6838 = vmatprep.subr.mxu0 0.0
  %6839 = vmatpush1.msra.mxu0 0.0
  %6840 = vmatprep.subr.mxu0 0.0
  %6841 = vmatpush1.msra.mxu0 0.0
  %6842 = vmatprep.subr.mxu0 0.0
  %6843 = vmatpush1.msra.mxu0 0.0
  %6844 = vmatprep.subr.mxu0 0.0
  %6845 = vmatpush1.msra.mxu0 0.0
  %6846 = vmatprep.subr.mxu0 0.0
  %6847 = vmatpush1.msra.mxu0 0.0
  %6848 = vmatprep.subr.mxu0 0.0
  %6849 = vmatpush1.msra.mxu0 0.0
  %6850 = vmatprep.subr.mxu0 0.0
  %6851 = vmatpush1.msra.mxu0 0.0
  %6852 = vmatprep.subr.mxu0 0.0
  %6853 = vmatpush1.msra.mxu0 0.0
  %6854 = vmatprep.subr.mxu0 0.0
  %6855 = vmatpush1.msra.mxu0 0.0
  %6856 = vmatprep.subr.mxu0 0.0
  %6857 = vmatpush1.msra.mxu0 0.0
  %6858 = vmatprep.subr.mxu0 0.0
  %6859 = vmatpush1.msra.mxu0 0.0
  %6860 = vmatprep.subr.mxu0 0.0
  %6861 = vmatpush1.msra.mxu0 0.0
  %6862 = vmatprep.subr.mxu0 0.0
  %6863 = vmatpush1.msra.mxu0 0.0
  %6864 = vmatprep.subr.mxu0 0.0
  %6865 = vmatpush1.msra.mxu0 0.0
  %6866 = vmatprep.subr.mxu0 0.0
  %6867 = vmatpush1.msra.mxu0 0.0
  %6868 = vmatprep.subr.mxu0 0.0
  %6869 = vmatpush1.msra.mxu0 0.0
  %6870 = vmatprep.subr.mxu0 0.0
  %6871 = vmatpush1.msra.mxu0 0.0
  %6872 = vmatprep.subr.mxu0 0.0
  %6873 = vmatpush1.msra.mxu0 0.0
  %6874 = vmatprep.subr.mxu0 0.0
  %6875 = vmatpush1.msra.mxu0 0.0
  %6876 = vmatprep.mubr.f32.mxu0 0.0
  %6877 = vmatmul.mubr.f32.gmra.mrb[0].mxu0 %v6226
  %v6878 = vpop.f32.mrb[0].mxu0
  %v6879 = vadd.f32 %v2504, %v6878
  %v6880 = vpop.f32.mrb[0].mxu0
  %6881 = vdwg.mxu0
  %v6883 = vrot.slane %v6739, 2
  %v6885 = vadd.f32 %v1747, %v6883
  %v6886 = vxor.u32 %v6885, 2147483648
  %v6887 = vmul.f32 %v6886, 1.442695
  %v6888 = vpow.pop %v6887
  %v6889 = vadd.f32 %v6888, 1.0
  %v6890 = vrcp.pop %v6889
  %v6891 = vmul.f32 1.0, %v6890
  %v6893 = vrot.slane %v6809, 2
  %v6895 = vadd.f32 %v2116, %v6893
  %v6896 = vxor.u32 %v6895, 2147483648
  %v6897 = vmul.f32 %v6896, 1.442695
  %v6898 = vpow.pop %v6897
  %v6899 = vadd.f32 %v6898, 1.0
  %v6900 = vrcp.pop %v6899
  %v6901 = vmul.f32 1.0, %v6900
  %v6903 = vrot.slane %v6879, 2
  %v6905 = vmul.f32 %v6891, %v6903
  %v6906 = vadd.f32 %v2485, %v6905
  %v6907 = vtanh.pop %v6906
  %v6908 = vsub.f32 1.0, %v6901
  %v6909 = vmul.f32 %v6908, %v6907
  %v6910 = vrot.slane %v6223, 7
  %v6912 = vmul.f32 %v6901, %v6910
  %v6913 = vadd.f32 %v6909, %v6912
  %v6915 = vrot.slane %v6913, 6
  %v6916 = vsel %vm2543, %v6915, 0
  %6918 = vmatprep.subr.mxu0 0.0
  %6919 = vmatpush1.msra.mxu0 %v2505
  %6920 = vmatprep.subr.mxu0 0.0
  %6921 = vmatpush1.msra.mxu0 %v2506
  %6922 = vmatprep.subr.mxu0 0.0
  %6923 = vmatpush1.msra.mxu0 %v2507
  %6924 = vmatprep.subr.mxu0 0.0
  %6925 = vmatpush1.msra.mxu0 %v2508
  %6926 = vmatprep.subr.mxu0 0.0
  %6927 = vmatpush1.msra.mxu0 0.0
  %6928 = vmatprep.subr.mxu0 0.0
  %6929 = vmatpush1.msra.mxu0 0.0
  %6930 = vmatprep.subr.mxu0 0.0
  %6931 = vmatpush1.msra.mxu0 0.0
  %6932 = vmatprep.subr.mxu0 0.0
  %6933 = vmatpush1.msra.mxu0 0.0
  %6934 = vmatprep.subr.mxu0 0.0
  %6935 = vmatpush1.msra.mxu0 0.0
  %6936 = vmatprep.subr.mxu0 0.0
  %6937 = vmatpush1.msra.mxu0 0.0
  %6938 = vmatprep.subr.mxu0 0.0
  %6939 = vmatpush1.msra.mxu0 0.0
  %6940 = vmatprep.subr.mxu0 0.0
  %6941 = vmatpush1.msra.mxu0 0.0
  %6942 = vmatprep.subr.mxu0 0.0
  %6943 = vmatpush1.msra.mxu0 0.0
  %6944 = vmatprep.subr.mxu0 0.0
  %6945 = vmatpush1.msra.mxu0 0.0
  %6946 = vmatprep.subr.mxu0 0.0
  %6947 = vmatpush1.msra.mxu0 0.0
  %6948 = vmatprep.subr.mxu0 0.0
  %6949 = vmatpush1.msra.mxu0 0.0
  %6950 = vmatprep.subr.mxu0 0.0
  %6951 = vmatpush1.msra.mxu0 0.0
  %6952 = vmatprep.subr.mxu0 0.0
  %6953 = vmatpush1.msra.mxu0 0.0
  %6954 = vmatprep.subr.mxu0 0.0
  %6955 = vmatpush1.msra.mxu0 0.0
  %6956 = vmatprep.subr.mxu0 0.0
  %6957 = vmatpush1.msra.mxu0 0.0
  %6958 = vmatprep.subr.mxu0 0.0
  %6959 = vmatpush1.msra.mxu0 0.0
  %6960 = vmatprep.subr.mxu0 0.0
  %6961 = vmatpush1.msra.mxu0 0.0
  %6962 = vmatprep.subr.mxu0 0.0
  %6963 = vmatpush1.msra.mxu0 0.0
  %6964 = vmatprep.subr.mxu0 0.0
  %6965 = vmatpush1.msra.mxu0 0.0
  %6966 = vmatprep.subr.mxu0 0.0
  %6967 = vmatpush1.msra.mxu0 0.0
  %6968 = vmatprep.subr.mxu0 0.0
  %6969 = vmatpush1.msra.mxu0 0.0
  %6970 = vmatprep.subr.mxu0 0.0
  %6971 = vmatpush1.msra.mxu0 0.0
  %6972 = vmatprep.subr.mxu0 0.0
  %6973 = vmatpush1.msra.mxu0 0.0
  %6974 = vmatprep.subr.mxu0 0.0
  %6975 = vmatpush1.msra.mxu0 0.0
  %6976 = vmatprep.subr.mxu0 0.0
  %6977 = vmatpush1.msra.mxu0 0.0
  %6978 = vmatprep.subr.mxu0 0.0
  %6979 = vmatpush1.msra.mxu0 0.0
  %6980 = vmatprep.subr.mxu0 0.0
  %6981 = vmatpush1.msra.mxu0 0.0
  %6982 = vmatprep.mubr.f32.mxu0 0.0
  %6983 = vmatmul.mubr.f32.gmra.mrb[0].mxu0 %v6916
  %v6984 = vpop.f32.mrb[0].mxu0
  %v6985 = vadd.f32 %v2519, %v6984
  %v6986 = vpop.f32.mrb[0].mxu0
  %6987 = vdwg.mxu0
  %6988 = vmatprep.subr.mxu0 0.0
  %6989 = vmatpush1.msra.mxu0 %v2510
  %6990 = vmatprep.subr.mxu0 0.0
  %6991 = vmatpush1.msra.mxu0 %v2511
  %6992 = vmatprep.subr.mxu0 0.0
  %6993 = vmatpush1.msra.mxu0 %v2512
  %6994 = vmatprep.subr.mxu0 0.0
  %6995 = vmatpush1.msra.mxu0 %v2513
  %6996 = vmatprep.subr.mxu0 0.0
  %6997 = vmatpush1.msra.mxu0 0.0
  %6998 = vmatprep.subr.mxu0 0.0
  %6999 = vmatpush1.msra.mxu0 0.0
  %7000 = vmatprep.subr.mxu0 0.0
  %7001 = vmatpush1.msra.mxu0 0.0
  %7002 = vmatprep.subr.mxu0 0.0
  %7003 = vmatpush1.msra.mxu0 0.0
  %7004 = vmatprep.subr.mxu0 0.0
  %7005 = vmatpush1.msra.mxu0 0.0
  %7006 = vmatprep.subr.mxu0 0.0
  %7007 = vmatpush1.msra.mxu0 0.0
  %7008 = vmatprep.subr.mxu0 0.0
  %7009 = vmatpush1.msra.mxu0 0.0
  %7010 = vmatprep.subr.mxu0 0.0
  %7011 = vmatpush1.msra.mxu0 0.0
  %7012 = vmatprep.subr.mxu0 0.0
  %7013 = vmatpush1.msra.mxu0 0.0
  %7014 = vmatprep.subr.mxu0 0.0
  %7015 = vmatpush1.msra.mxu0 0.0
  %7016 = vmatprep.subr.mxu0 0.0
  %7017 = vmatpush1.msra.mxu0 0.0
  %7018 = vmatprep.subr.mxu0 0.0
  %7019 = vmatpush1.msra.mxu0 0.0
  %7020 = vmatprep.subr.mxu0 0.0
  %7021 = vmatpush1.msra.mxu0 0.0
  %7022 = vmatprep.subr.mxu0 0.0
  %7023 = vmatpush1.msra.mxu0 0.0
  %7024 = vmatprep.subr.mxu0 0.0
  %7025 = vmatpush1.msra.mxu0 0.0
  %7026 = vmatprep.subr.mxu0 0.0
  %7027 = vmatpush1.msra.mxu0 0.0
  %7028 = vmatprep.subr.mxu0 0.0
  %7029 = vmatpush1.msra.mxu0 0.0
  %7030 = vmatprep.subr.mxu0 0.0
  %7031 = vmatpush1.msra.mxu0 0.0
  %7032 = vmatprep.subr.mxu0 0.0
  %7033 = vmatpush1.msra.mxu0 0.0
  %7034 = vmatprep.subr.mxu0 0.0
  %7035 = vmatpush1.msra.mxu0 0.0
  %7036 = vmatprep.subr.mxu0 0.0
  %7037 = vmatpush1.msra.mxu0 0.0
  %7038 = vmatprep.subr.mxu0 0.0
  %7039 = vmatpush1.msra.mxu0 0.0
  %7040 = vmatprep.subr.mxu0 0.0
  %7041 = vmatpush1.msra.mxu0 0.0
  %7042 = vmatprep.subr.mxu0 0.0
  %7043 = vmatpush1.msra.mxu0 0.0
  %7044 = vmatprep.subr.mxu0 0.0
  %7045 = vmatpush1.msra.mxu0 0.0
  %7046 = vmatprep.subr.mxu0 0.0
  %7047 = vmatpush1.msra.mxu0 0.0
  %7048 = vmatprep.subr.mxu0 0.0
  %7049 = vmatpush1.msra.mxu0 0.0
  %7050 = vmatprep.subr.mxu0 0.0
  %7051 = vmatpush1.msra.mxu0 0.0
  %7052 = vmatprep.mubr.f32.mxu0 0.0
  %7053 = vmatmul.mubr.f32.gmra.mrb[0].mxu0 %v6916
  %v7054 = vpop.f32.mrb[0].mxu0
  %v7055 = vadd.f32 %v2521, %v7054
  %v7056 = vpop.f32.mrb[0].mxu0
  %7057 = vdwg.mxu0
  %7058 = vmatprep.subr.mxu0 0.0
  %7059 = vmatpush1.msra.mxu0 %v2515
  %7060 = vmatprep.subr.mxu0 0.0
  %7061 = vmatpush1.msra.mxu0 %v2516
  %7062 = vmatprep.subr.mxu0 0.0
  %7063 = vmatpush1.msra.mxu0 %v2517
  %7064 = vmatprep.subr.mxu0 0.0
  %7065 = vmatpush1.msra.mxu0 %v2518
  %7066 = vmatprep.subr.mxu0 0.0
  %7067 = vmatpush1.msra.mxu0 0.0
  %7068 = vmatprep.subr.mxu0 0.0
  %7069 = vmatpush1.msra.mxu0 0.0
  %7070 = vmatprep.subr.mxu0 0.0
  %7071 = vmatpush1.msra.mxu0 0.0
  %7072 = vmatprep.subr.mxu0 0.0
  %7073 = vmatpush1.msra.mxu0 0.0
  %7074 = vmatprep.subr.mxu0 0.0
  %7075 = vmatpush1.msra.mxu0 0.0
  %7076 = vmatprep.subr.mxu0 0.0
  %7077 = vmatpush1.msra.mxu0 0.0
  %7078 = vmatprep.subr.mxu0 0.0
  %7079 = vmatpush1.msra.mxu0 0.0
  %7080 = vmatprep.subr.mxu0 0.0
  %7081 = vmatpush1.msra.mxu0 0.0
  %7082 = vmatprep.subr.mxu0 0.0
  %7083 = vmatpush1.msra.mxu0 0.0
  %7084 = vmatprep.subr.mxu0 0.0
  %7085 = vmatpush1.msra.mxu0 0.0
  %7086 = vmatprep.subr.mxu0 0.0
  %7087 = vmatpush1.msra.mxu0 0.0
  %7088 = vmatprep.subr.mxu0 0.0
  %7089 = vmatpush1.msra.mxu0 0.0
  %7090 = vmatprep.subr.mxu0 0.0
  %7091 = vmatpush1.msra.mxu0 0.0
  %7092 = vmatprep.subr.mxu0 0.0
  %7093 = vmatpush1.msra.mxu0 0.0
  %7094 = vmatprep.subr.mxu0 0.0
  %7095 = vmatpush1.msra.mxu0 0.0
  %7096 = vmatprep.subr.mxu0 0.0
  %7097 = vmatpush1.msra.mxu0 0.0
  %7098 = vmatprep.subr.mxu0 0.0
  %7099 = vmatpush1.msra.mxu0 0.0
  %7100 = vmatprep.subr.mxu0 0.0
  %7101 = vmatpush1.msra.mxu0 0.0
  %7102 = vmatprep.subr.mxu0 0.0
  %7103 = vmatpush1.msra.mxu0 0.0
  %7104 = vmatprep.subr.mxu0 0.0
  %7105 = vmatpush1.msra.mxu0 0.0
  %7106 = vmatprep.subr.mxu0 0.0
  %7107 = vmatpush1.msra.mxu0 0.0
  %7108 = vmatprep.subr.mxu0 0.0
  %7109 = vmatpush1.msra.mxu0 0.0
  %7110 = vmatprep.subr.mxu0 0.0
  %7111 = vmatpush1.msra.mxu0 0.0
  %7112 = vmatprep.subr.mxu0 0.0
  %7113 = vmatpush1.msra.mxu0 0.0
  %7114 = vmatprep.subr.mxu0 0.0
  %7115 = vmatpush1.msra.mxu0 0.0
  %7116 = vmatprep.subr.mxu0 0.0
  %7117 = vmatpush1.msra.mxu0 0.0
  %7118 = vmatprep.subr.mxu0 0.0
  %7119 = vmatpush1.msra.mxu0 0.0
  %7120 = vmatprep.subr.mxu0 0.0
  %7121 = vmatpush1.msra.mxu0 0.0
  %7122 = vmatprep.mubr.f32.mxu0 0.0
  %7123 = vmatmul.mubr.f32.gmra.mrb[0].mxu0 %v6916
  %v7124 = vpop.f32.mrb[0].mxu0
  %v7125 = vadd.f32 %v2523, %v7124
  %v7126 = vpop.f32.mrb[0].mxu0
  %7127 = vdwg.mxu0
  %v7129 = vsel %vm2543, %v6671, 0
  %7131 = vmatprep.subr.mxu0 0.0
  %7132 = vmatpush1.msra.mxu0 %v2524
  %7133 = vmatprep.subr.mxu0 0.0
  %7134 = vmatpush1.msra.mxu0 %v2525
  %7135 = vmatprep.subr.mxu0 0.0
  %7136 = vmatpush1.msra.mxu0 %v2526
  %7137 = vmatprep.subr.mxu0 0.0
  %7138 = vmatpush1.msra.mxu0 %v2527
  %7139 = vmatprep.subr.mxu0 0.0
  %7140 = vmatpush1.msra.mxu0 0.0
  %7141 = vmatprep.subr.mxu0 0.0
  %7142 = vmatpush1.msra.mxu0 0.0
  %7143 = vmatprep.subr.mxu0 0.0
  %7144 = vmatpush1.msra.mxu0 0.0
  %7145 = vmatprep.subr.mxu0 0.0
  %7146 = vmatpush1.msra.mxu0 0.0
  %7147 = vmatprep.subr.mxu0 0.0
  %7148 = vmatpush1.msra.mxu0 0.0
  %7149 = vmatprep.subr.mxu0 0.0
  %7150 = vmatpush1.msra.mxu0 0.0
  %7151 = vmatprep.subr.mxu0 0.0
  %7152 = vmatpush1.msra.mxu0 0.0
  %7153 = vmatprep.subr.mxu0 0.0
  %7154 = vmatpush1.msra.mxu0 0.0
  %7155 = vmatprep.subr.mxu0 0.0
  %7156 = vmatpush1.msra.mxu0 0.0
  %7157 = vmatprep.subr.mxu0 0.0
  %7158 = vmatpush1.msra.mxu0 0.0
  %7159 = vmatprep.subr.mxu0 0.0
  %7160 = vmatpush1.msra.mxu0 0.0
  %7161 = vmatprep.subr.mxu0 0.0
  %7162 = vmatpush1.msra.mxu0 0.0
  %7163 = vmatprep.subr.mxu0 0.0
  %7164 = vmatpush1.msra.mxu0 0.0
  %7165 = vmatprep.subr.mxu0 0.0
  %7166 = vmatpush1.msra.mxu0 0.0
  %7167 = vmatprep.subr.mxu0 0.0
  %7168 = vmatpush1.msra.mxu0 0.0
  %7169 = vmatprep.subr.mxu0 0.0
  %7170 = vmatpush1.msra.mxu0 0.0
  %7171 = vmatprep.subr.mxu0 0.0
  %7172 = vmatpush1.msra.mxu0 0.0
  %7173 = vmatprep.subr.mxu0 0.0
  %7174 = vmatpush1.msra.mxu0 0.0
  %7175 = vmatprep.subr.mxu0 0.0
  %7176 = vmatpush1.msra.mxu0 0.0
  %7177 = vmatprep.subr.mxu0 0.0
  %7178 = vmatpush1.msra.mxu0 0.0
  %7179 = vmatprep.subr.mxu0 0.0
  %7180 = vmatpush1.msra.mxu0 0.0
  %7181 = vmatprep.subr.mxu0 0.0
  %7182 = vmatpush1.msra.mxu0 0.0
  %7183 = vmatprep.subr.mxu0 0.0
  %7184 = vmatpush1.msra.mxu0 0.0
  %7185 = vmatprep.subr.mxu0 0.0
  %7186 = vmatpush1.msra.mxu0 0.0
  %7187 = vmatprep.subr.mxu0 0.0
  %7188 = vmatpush1.msra.mxu0 0.0
  %7189 = vmatprep.subr.mxu0 0.0
  %7190 = vmatpush1.msra.mxu0 0.0
  %7191 = vmatprep.subr.mxu0 0.0
  %7192 = vmatpush1.msra.mxu0 0.0
  %7193 = vmatprep.subr.mxu0 0.0
  %7194 = vmatpush1.msra.mxu0 0.0
  %7195 = vmatprep.mubr.f32.mxu0 0.0
  %7196 = vmatmul.mubr.f32.gmra.mrb[0].mxu0 %v7129
  %v7197 = vpop.f32.mrb[0].mxu0
  %v7198 = vadd.f32 %v2538, %v7197
  %v7199 = vpop.f32.mrb[0].mxu0
  %7200 = vdwg.mxu0
  %7201 = vmatprep.subr.mxu0 0.0
  %7202 = vmatpush1.msra.mxu0 %v2529
  %7203 = vmatprep.subr.mxu0 0.0
  %7204 = vmatpush1.msra.mxu0 %v2530
  %7205 = vmatprep.subr.mxu0 0.0
  %7206 = vmatpush1.msra.mxu0 %v2531
  %7207 = vmatprep.subr.mxu0 0.0
  %7208 = vmatpush1.msra.mxu0 %v2532
  %7209 = vmatprep.subr.mxu0 0.0
  %7210 = vmatpush1.msra.mxu0 0.0
  %7211 = vmatprep.subr.mxu0 0.0
  %7212 = vmatpush1.msra.mxu0 0.0
  %7213 = vmatprep.subr.mxu0 0.0
  %7214 = vmatpush1.msra.mxu0 0.0
  %7215 = vmatprep.subr.mxu0 0.0
  %7216 = vmatpush1.msra.mxu0 0.0
  %7217 = vmatprep.subr.mxu0 0.0
  %7218 = vmatpush1.msra.mxu0 0.0
  %7219 = vmatprep.subr.mxu0 0.0
  %7220 = vmatpush1.msra.mxu0 0.0
  %7221 = vmatprep.subr.mxu0 0.0
  %7222 = vmatpush1.msra.mxu0 0.0
  %7223 = vmatprep.subr.mxu0 0.0
  %7224 = vmatpush1.msra.mxu0 0.0
  %7225 = vmatprep.subr.mxu0 0.0
  %7226 = vmatpush1.msra.mxu0 0.0
  %7227 = vmatprep.subr.mxu0 0.0
  %7228 = vmatpush1.msra.mxu0 0.0
  %7229 = vmatprep.subr.mxu0 0.0
  %7230 = vmatpush1.msra.mxu0 0.0
  %7231 = vmatprep.subr.mxu0 0.0
  %7232 = vmatpush1.msra.mxu0 0.0
  %7233 = vmatprep.subr.mxu0 0.0
  %7234 = vmatpush1.msra.mxu0 0.0
  %7235 = vmatprep.subr.mxu0 0.0
  %7236 = vmatpush1.msra.mxu0 0.0
  %7237 = vmatprep.subr.mxu0 0.0
  %7238 = vmatpush1.msra.mxu0 0.0
  %7239 = vmatprep.subr.mxu0 0.0
  %7240 = vmatpush1.msra.mxu0 0.0
  %7241 = vmatprep.subr.mxu0 0.0
  %7242 = vmatpush1.msra.mxu0 0.0
  %7243 = vmatprep.subr.mxu0 0.0
  %7244 = vmatpush1.msra.mxu0 0.0
  %7245 = vmatprep.subr.mxu0 0.0
  %7246 = vmatpush1.msra.mxu0 0.0
  %7247 = vmatprep.subr.mxu0 0.0
  %7248 = vmatpush1.msra.mxu0 0.0
  %7249 = vmatprep.subr.mxu0 0.0
  %7250 = vmatpush1.msra.mxu0 0.0
  %7251 = vmatprep.subr.mxu0 0.0
  %7252 = vmatpush1.msra.mxu0 0.0
  %7253 = vmatprep.subr.mxu0 0.0
  %7254 = vmatpush1.msra.mxu0 0.0
  %7255 = vmatprep.subr.mxu0 0.0
  %7256 = vmatpush1.msra.mxu0 0.0
  %7257 = vmatprep.subr.mxu0 0.0
  %7258 = vmatpush1.msra.mxu0 0.0
  %7259 = vmatprep.subr.mxu0 0.0
  %7260 = vmatpush1.msra.mxu0 0.0
  %7261 = vmatprep.subr.mxu0 0.0
  %7262 = vmatpush1.msra.mxu0 0.0
  %7263 = vmatprep.subr.mxu0 0.0
  %7264 = vmatpush1.msra.mxu0 0.0
  %7265 = vmatprep.mubr.f32.mxu0 0.0
  %7266 = vmatmul.mubr.f32.gmra.mrb[0].mxu0 %v7129
  %v7267 = vpop.f32.mrb[0].mxu0
  %v7268 = vadd.f32 %v2540, %v7267
  %v7269 = vpop.f32.mrb[0].mxu0
  %7270 = vdwg.mxu0
  %7271 = vmatprep.subr.mxu0 0.0
  %7272 = vmatpush1.msra.mxu0 %v2534
  %7273 = vmatprep.subr.mxu0 0.0
  %7274 = vmatpush1.msra.mxu0 %v2535
  %7275 = vmatprep.subr.mxu0 0.0
  %7276 = vmatpush1.msra.mxu0 %v2536
  %7277 = vmatprep.subr.mxu0 0.0
  %7278 = vmatpush1.msra.mxu0 %v2537
  %7279 = vmatprep.subr.mxu0 0.0
  %7280 = vmatpush1.msra.mxu0 0.0
  %7281 = vmatprep.subr.mxu0 0.0
  %7282 = vmatpush1.msra.mxu0 0.0
  %7283 = vmatprep.subr.mxu0 0.0
  %7284 = vmatpush1.msra.mxu0 0.0
  %7285 = vmatprep.subr.mxu0 0.0
  %7286 = vmatpush1.msra.mxu0 0.0
  %7287 = vmatprep.subr.mxu0 0.0
  %7288 = vmatpush1.msra.mxu0 0.0
  %7289 = vmatprep.subr.mxu0 0.0
  %7290 = vmatpush1.msra.mxu0 0.0
  %7291 = vmatprep.subr.mxu0 0.0
  %7292 = vmatpush1.msra.mxu0 0.0
  %7293 = vmatprep.subr.mxu0 0.0
  %7294 = vmatpush1.msra.mxu0 0.0
  %7295 = vmatprep.subr.mxu0 0.0
  %7296 = vmatpush1.msra.mxu0 0.0
  %7297 = vmatprep.subr.mxu0 0.0
  %7298 = vmatpush1.msra.mxu0 0.0
  %7299 = vmatprep.subr.mxu0 0.0
  %7300 = vmatpush1.msra.mxu0 0.0
  %7301 = vmatprep.subr.mxu0 0.0
  %7302 = vmatpush1.msra.mxu0 0.0
  %7303 = vmatprep.subr.mxu0 0.0
  %7304 = vmatpush1.msra.mxu0 0.0
  %7305 = vmatprep.subr.mxu0 0.0
  %7306 = vmatpush1.msra.mxu0 0.0
  %7307 = vmatprep.subr.mxu0 0.0
  %7308 = vmatpush1.msra.mxu0 0.0
  %7309 = vmatprep.subr.mxu0 0.0
  %7310 = vmatpush1.msra.mxu0 0.0
  %7311 = vmatprep.subr.mxu0 0.0
  %7312 = vmatpush1.msra.mxu0 0.0
  %7313 = vmatprep.subr.mxu0 0.0
  %7314 = vmatpush1.msra.mxu0 0.0
  %7315 = vmatprep.subr.mxu0 0.0
  %7316 = vmatpush1.msra.mxu0 0.0
  %7317 = vmatprep.subr.mxu0 0.0
  %7318 = vmatpush1.msra.mxu0 0.0
  %7319 = vmatprep.subr.mxu0 0.0
  %7320 = vmatpush1.msra.mxu0 0.0
  %7321 = vmatprep.subr.mxu0 0.0
  %7322 = vmatpush1.msra.mxu0 0.0
  %7323 = vmatprep.subr.mxu0 0.0
  %7324 = vmatpush1.msra.mxu0 0.0
  %7325 = vmatprep.subr.mxu0 0.0
  %7326 = vmatpush1.msra.mxu0 0.0
  %7327 = vmatprep.subr.mxu0 0.0
  %7328 = vmatpush1.msra.mxu0 0.0
  %7329 = vmatprep.subr.mxu0 0.0
  %7330 = vmatpush1.msra.mxu0 0.0
  %7331 = vmatprep.subr.mxu0 0.0
  %7332 = vmatpush1.msra.mxu0 0.0
  %7333 = vmatprep.subr.mxu0 0.0
  %7334 = vmatpush1.msra.mxu0 0.0
  %7335 = vmatprep.mubr.f32.mxu0 0.0
  %7336 = vmatmul.mubr.f32.gmra.mrb[0].mxu0 %v7129
  %v7337 = vpop.f32.mrb[0].mxu0
  %v7338 = vadd.f32 %v2542, %v7337
  %v7339 = vpop.f32.mrb[0].mxu0
  %7340 = vdwg.mxu0
  %v7341 = vadd.f32 %v6985, %v7198
  %v7342 = vxor.u32 %v7341, 2147483648
  %v7343 = vmul.f32 %v7342, 1.442695
  %v7344 = vpow.pop %v7343
  %v7345 = vadd.f32 %v7344, 1.0
  %v7346 = vrcp.pop %v7345
  %v7347 = vmul.f32 1.0, %v7346
  %v7348 = vadd.f32 %v7055, %v7268
  %v7349 = vxor.u32 %v7348, 2147483648
  %v7350 = vmul.f32 %v7349, 1.442695
  %v7351 = vpow.pop %v7350
  %v7352 = vadd.f32 %v7351, 1.0
  %v7353 = vrcp.pop %v7352
  %v7354 = vmul.f32 1.0, %v7353
  %v7355 = vmul.f32 %v7347, %v7338
  %v7356 = vadd.f32 %v7125, %v7355
  %v7357 = vtanh.pop %v7356
  %v7358 = vsub.f32 1.0, %v7354
  %v7359 = vmul.f32 %v7358, %v7357
  %v7360 = vmul.f32 %v7354, %v6671
  %v7361 = vadd.f32 %v7359, %v7360
  %7362 = vmatprep.subr.mxu0 0.0
  %7363 = vmatpush1.msra.mxu0 %v2486
  %7364 = vmatprep.subr.mxu0 0.0
  %7365 = vmatpush1.msra.mxu0 %v2487
  %7366 = vmatprep.subr.mxu0 0.0
  %7367 = vmatpush1.msra.mxu0 %v2488
  %7368 = vmatprep.subr.mxu0 0.0
  %7369 = vmatpush1.msra.mxu0 %v2489
  %7370 = vmatprep.subr.mxu0 0.0
  %7371 = vmatpush1.msra.mxu0 0.0
  %7372 = vmatprep.subr.mxu0 0.0
  %7373 = vmatpush1.msra.mxu0 0.0
  %7374 = vmatprep.subr.mxu0 0.0
  %7375 = vmatpush1.msra.mxu0 0.0
  %7376 = vmatprep.subr.mxu0 0.0
  %7377 = vmatpush1.msra.mxu0 0.0
  %7378 = vmatprep.subr.mxu0 0.0
  %7379 = vmatpush1.msra.mxu0 0.0
  %7380 = vmatprep.subr.mxu0 0.0
  %7381 = vmatpush1.msra.mxu0 0.0
  %7382 = vmatprep.subr.mxu0 0.0
  %7383 = vmatpush1.msra.mxu0 0.0
  %7384 = vmatprep.subr.mxu0 0.0
  %7385 = vmatpush1.msra.mxu0 0.0
  %7386 = vmatprep.subr.mxu0 0.0
  %7387 = vmatpush1.msra.mxu0 0.0
  %7388 = vmatprep.subr.mxu0 0.0
  %7389 = vmatpush1.msra.mxu0 0.0
  %7390 = vmatprep.subr.mxu0 0.0
  %7391 = vmatpush1.msra.mxu0 0.0
  %7392 = vmatprep.subr.mxu0 0.0
  %7393 = vmatpush1.msra.mxu0 0.0
  %7394 = vmatprep.subr.mxu0 0.0
  %7395 = vmatpush1.msra.mxu0 0.0
  %7396 = vmatprep.subr.mxu0 0.0
  %7397 = vmatpush1.msra.mxu0 0.0
  %7398 = vmatprep.subr.mxu0 0.0
  %7399 = vmatpush1.msra.mxu0 0.0
  %7400 = vmatprep.subr.mxu0 0.0
  %7401 = vmatpush1.msra.mxu0 0.0
  %7402 = vmatprep.subr.mxu0 0.0
  %7403 = vmatpush1.msra.mxu0 0.0
  %7404 = vmatprep.subr.mxu0 0.0
  %7405 = vmatpush1.msra.mxu0 0.0
  %7406 = vmatprep.subr.mxu0 0.0
  %7407 = vmatpush1.msra.mxu0 0.0
  %7408 = vmatprep.subr.mxu0 0.0
  %7409 = vmatpush1.msra.mxu0 0.0
  %7410 = vmatprep.subr.mxu0 0.0
  %7411 = vmatpush1.msra.mxu0 0.0
  %7412 = vmatprep.subr.mxu0 0.0
  %7413 = vmatpush1.msra.mxu0 0.0
  %7414 = vmatprep.subr.mxu0 0.0
  %7415 = vmatpush1.msra.mxu0 0.0
  %7416 = vmatprep.subr.mxu0 0.0
  %7417 = vmatpush1.msra.mxu0 0.0
  %7418 = vmatprep.subr.mxu0 0.0
  %7419 = vmatpush1.msra.mxu0 0.0
  %7420 = vmatprep.subr.mxu0 0.0
  %7421 = vmatpush1.msra.mxu0 0.0
  %7422 = vmatprep.subr.mxu0 0.0
  %7423 = vmatpush1.msra.mxu0 0.0
  %7424 = vmatprep.subr.mxu0 0.0
  %7425 = vmatpush1.msra.mxu0 0.0
  %7426 = vmatprep.mubr.f32.mxu0 0.0
  %7427 = vmatmul.mubr.f32.gmra.mrb[0].mxu0 %v6916
  %v7428 = vpop.f32.mrb[0].mxu0
  %v7429 = vadd.f32 %v2500, %v7428
  %v7430 = vpop.f32.mrb[0].mxu0
  %7431 = vdwg.mxu0
  %7432 = vmatprep.subr.mxu0 0.0
  %7433 = vmatpush1.msra.mxu0 %v2491
  %7434 = vmatprep.subr.mxu0 0.0
  %7435 = vmatpush1.msra.mxu0 %v2492
  %7436 = vmatprep.subr.mxu0 0.0
  %7437 = vmatpush1.msra.mxu0 %v2493
  %7438 = vmatprep.subr.mxu0 0.0
  %7439 = vmatpush1.msra.mxu0 %v2494
  %7440 = vmatprep.subr.mxu0 0.0
  %7441 = vmatpush1.msra.mxu0 0.0
  %7442 = vmatprep.subr.mxu0 0.0
  %7443 = vmatpush1.msra.mxu0 0.0
  %7444 = vmatprep.subr.mxu0 0.0
  %7445 = vmatpush1.msra.mxu0 0.0
  %7446 = vmatprep.subr.mxu0 0.0
  %7447 = vmatpush1.msra.mxu0 0.0
  %7448 = vmatprep.subr.mxu0 0.0
  %7449 = vmatpush1.msra.mxu0 0.0
  %7450 = vmatprep.subr.mxu0 0.0
  %7451 = vmatpush1.msra.mxu0 0.0
  %7452 = vmatprep.subr.mxu0 0.0
  %7453 = vmatpush1.msra.mxu0 0.0
  %7454 = vmatprep.subr.mxu0 0.0
  %7455 = vmatpush1.msra.mxu0 0.0
  %7456 = vmatprep.subr.mxu0 0.0
  %7457 = vmatpush1.msra.mxu0 0.0
  %7458 = vmatprep.subr.mxu0 0.0
  %7459 = vmatpush1.msra.mxu0 0.0
  %7460 = vmatprep.subr.mxu0 0.0
  %7461 = vmatpush1.msra.mxu0 0.0
  %7462 = vmatprep.subr.mxu0 0.0
  %7463 = vmatpush1.msra.mxu0 0.0
  %7464 = vmatprep.subr.mxu0 0.0
  %7465 = vmatpush1.msra.mxu0 0.0
  %7466 = vmatprep.subr.mxu0 0.0
  %7467 = vmatpush1.msra.mxu0 0.0
  %7468 = vmatprep.subr.mxu0 0.0
  %7469 = vmatpush1.msra.mxu0 0.0
  %7470 = vmatprep.subr.mxu0 0.0
  %7471 = vmatpush1.msra.mxu0 0.0
  %7472 = vmatprep.subr.mxu0 0.0
  %7473 = vmatpush1.msra.mxu0 0.0
  %7474 = vmatprep.subr.mxu0 0.0
  %7475 = vmatpush1.msra.mxu0 0.0
  %7476 = vmatprep.subr.mxu0 0.0
  %7477 = vmatpush1.msra.mxu0 0.0
  %7478 = vmatprep.subr.mxu0 0.0
  %7479 = vmatpush1.msra.mxu0 0.0
  %7480 = vmatprep.subr.mxu0 0.0
  %7481 = vmatpush1.msra.mxu0 0.0
  %7482 = vmatprep.subr.mxu0 0.0
  %7483 = vmatpush1.msra.mxu0 0.0
  %7484 = vmatprep.subr.mxu0 0.0
  %7485 = vmatpush1.msra.mxu0 0.0
  %7486 = vmatprep.subr.mxu0 0.0
  %7487 = vmatpush1.msra.mxu0 0.0
  %7488 = vmatprep.subr.mxu0 0.0
  %7489 = vmatpush1.msra.mxu0 0.0
  %7490 = vmatprep.subr.mxu0 0.0
  %7491 = vmatpush1.msra.mxu0 0.0
  %7492 = vmatprep.subr.mxu0 0.0
  %7493 = vmatpush1.msra.mxu0 0.0
  %7494 = vmatprep.subr.mxu0 0.0
  %7495 = vmatpush1.msra.mxu0 0.0
  %7496 = vmatprep.mubr.f32.mxu0 0.0
  %7497 = vmatmul.mubr.f32.gmra.mrb[0].mxu0 %v6916
  %v7498 = vpop.f32.mrb[0].mxu0
  %v7499 = vadd.f32 %v2502, %v7498
  %v7500 = vpop.f32.mrb[0].mxu0
  %7501 = vdwg.mxu0
  %7502 = vmatprep.subr.mxu0 0.0
  %7503 = vmatpush1.msra.mxu0 %v2496
  %7504 = vmatprep.subr.mxu0 0.0
  %7505 = vmatpush1.msra.mxu0 %v2497
  %7506 = vmatprep.subr.mxu0 0.0
  %7507 = vmatpush1.msra.mxu0 %v2498
  %7508 = vmatprep.subr.mxu0 0.0
  %7509 = vmatpush1.msra.mxu0 %v2499
  %7510 = vmatprep.subr.mxu0 0.0
  %7511 = vmatpush1.msra.mxu0 0.0
  %7512 = vmatprep.subr.mxu0 0.0
  %7513 = vmatpush1.msra.mxu0 0.0
  %7514 = vmatprep.subr.mxu0 0.0
  %7515 = vmatpush1.msra.mxu0 0.0
  %7516 = vmatprep.subr.mxu0 0.0
  %7517 = vmatpush1.msra.mxu0 0.0
  %7518 = vmatprep.subr.mxu0 0.0
  %7519 = vmatpush1.msra.mxu0 0.0
  %7520 = vmatprep.subr.mxu0 0.0
  %7521 = vmatpush1.msra.mxu0 0.0
  %7522 = vmatprep.subr.mxu0 0.0
  %7523 = vmatpush1.msra.mxu0 0.0
  %7524 = vmatprep.subr.mxu0 0.0
  %7525 = vmatpush1.msra.mxu0 0.0
  %7526 = vmatprep.subr.mxu0 0.0
  %7527 = vmatpush1.msra.mxu0 0.0
  %7528 = vmatprep.subr.mxu0 0.0
  %7529 = vmatpush1.msra.mxu0 0.0
  %7530 = vmatprep.subr.mxu0 0.0
  %7531 = vmatpush1.msra.mxu0 0.0
  %7532 = vmatprep.subr.mxu0 0.0
  %7533 = vmatpush1.msra.mxu0 0.0
  %7534 = vmatprep.subr.mxu0 0.0
  %7535 = vmatpush1.msra.mxu0 0.0
  %7536 = vmatprep.subr.mxu0 0.0
  %7537 = vmatpush1.msra.mxu0 0.0
  %7538 = vmatprep.subr.mxu0 0.0
  %7539 = vmatpush1.msra.mxu0 0.0
  %7540 = vmatprep.subr.mxu0 0.0
  %7541 = vmatpush1.msra.mxu0 0.0
  %7542 = vmatprep.subr.mxu0 0.0
  %7543 = vmatpush1.msra.mxu0 0.0
  %7544 = vmatprep.subr.mxu0 0.0
  %7545 = vmatpush1.msra.mxu0 0.0
  %7546 = vmatprep.subr.mxu0 0.0
  %7547 = vmatpush1.msra.mxu0 0.0
  %7548 = vmatprep.subr.mxu0 0.0
  %7549 = vmatpush1.msra.mxu0 0.0
  %7550 = vmatprep.subr.mxu0 0.0
  %7551 = vmatpush1.msra.mxu0 0.0
  %7552 = vmatprep.subr.mxu0 0.0
  %7553 = vmatpush1.msra.mxu0 0.0
  %7554 = vmatprep.subr.mxu0 0.0
  %7555 = vmatpush1.msra.mxu0 0.0
  %7556 = vmatprep.subr.mxu0 0.0
  %7557 = vmatpush1.msra.mxu0 0.0
  %7558 = vmatprep.subr.mxu0 0.0
  %7559 = vmatpush1.msra.mxu0 0.0
  %7560 = vmatprep.subr.mxu0 0.0
  %7561 = vmatpush1.msra.mxu0 0.0
  %7562 = vmatprep.subr.mxu0 0.0
  %7563 = vmatpush1.msra.mxu0 0.0
  %7564 = vmatprep.subr.mxu0 0.0
  %7565 = vmatpush1.msra.mxu0 0.0
  %7566 = vmatprep.mubr.f32.mxu0 0.0
  %7567 = vmatmul.mubr.f32.gmra.mrb[0].mxu0 %v6916
  %v7568 = vpop.f32.mrb[0].mxu0
  %v7569 = vadd.f32 %v2504, %v7568
  %v7570 = vpop.f32.mrb[0].mxu0
  %7571 = vdwg.mxu0
  %v7573 = vrot.slane %v7429, 1
  %v7575 = vadd.f32 %v1747, %v7573
  %v7576 = vxor.u32 %v7575, 2147483648
  %v7577 = vmul.f32 %v7576, 1.442695
  %v7578 = vpow.pop %v7577
  %v7579 = vadd.f32 %v7578, 1.0
  %v7580 = vrcp.pop %v7579
  %v7581 = vmul.f32 1.0, %v7580
  %v7583 = vrot.slane %v7499, 1
  %v7585 = vadd.f32 %v2116, %v7583
  %v7586 = vxor.u32 %v7585, 2147483648
  %v7587 = vmul.f32 %v7586, 1.442695
  %v7588 = vpow.pop %v7587
  %v7589 = vadd.f32 %v7588, 1.0
  %v7590 = vrcp.pop %v7589
  %v7591 = vmul.f32 1.0, %v7590
  %v7593 = vrot.slane %v7569, 1
  %v7595 = vmul.f32 %v7581, %v7593
  %v7596 = vadd.f32 %v2485, %v7595
  %v7597 = vtanh.pop %v7596
  %v7598 = vsub.f32 1.0, %v7591
  %v7599 = vmul.f32 %v7598, %v7597
  %v7600 = vrot.slane %v6913, 7
  %v7602 = vmul.f32 %v7591, %v7600
  %v7603 = vadd.f32 %v7599, %v7602
  %v7605 = vrot.slane %v7603, 7
  %v7606 = vsel %vm2543, %v7605, 0
  %7608 = vmatprep.subr.mxu0 0.0
  %7609 = vmatpush1.msra.mxu0 %v2505
  %7610 = vmatprep.subr.mxu0 0.0
  %7611 = vmatpush1.msra.mxu0 %v2506
  %7612 = vmatprep.subr.mxu0 0.0
  %7613 = vmatpush1.msra.mxu0 %v2507
  %7614 = vmatprep.subr.mxu0 0.0
  %7615 = vmatpush1.msra.mxu0 %v2508
  %7616 = vmatprep.subr.mxu0 0.0
  %7617 = vmatpush1.msra.mxu0 0.0
  %7618 = vmatprep.subr.mxu0 0.0
  %7619 = vmatpush1.msra.mxu0 0.0
  %7620 = vmatprep.subr.mxu0 0.0
  %7621 = vmatpush1.msra.mxu0 0.0
  %7622 = vmatprep.subr.mxu0 0.0
  %7623 = vmatpush1.msra.mxu0 0.0
  %7624 = vmatprep.subr.mxu0 0.0
  %7625 = vmatpush1.msra.mxu0 0.0
  %7626 = vmatprep.subr.mxu0 0.0
  %7627 = vmatpush1.msra.mxu0 0.0
  %7628 = vmatprep.subr.mxu0 0.0
  %7629 = vmatpush1.msra.mxu0 0.0
  %7630 = vmatprep.subr.mxu0 0.0
  %7631 = vmatpush1.msra.mxu0 0.0
  %7632 = vmatprep.subr.mxu0 0.0
  %7633 = vmatpush1.msra.mxu0 0.0
  %7634 = vmatprep.subr.mxu0 0.0
  %7635 = vmatpush1.msra.mxu0 0.0
  %7636 = vmatprep.subr.mxu0 0.0
  %7637 = vmatpush1.msra.mxu0 0.0
  %7638 = vmatprep.subr.mxu0 0.0
  %7639 = vmatpush1.msra.mxu0 0.0
  %7640 = vmatprep.subr.mxu0 0.0
  %7641 = vmatpush1.msra.mxu0 0.0
  %7642 = vmatprep.subr.mxu0 0.0
  %7643 = vmatpush1.msra.mxu0 0.0
  %7644 = vmatprep.subr.mxu0 0.0
  %7645 = vmatpush1.msra.mxu0 0.0
  %7646 = vmatprep.subr.mxu0 0.0
  %7647 = vmatpush1.msra.mxu0 0.0
  %7648 = vmatprep.subr.mxu0 0.0
  %7649 = vmatpush1.msra.mxu0 0.0
  %7650 = vmatprep.subr.mxu0 0.0
  %7651 = vmatpush1.msra.mxu0 0.0
  %7652 = vmatprep.subr.mxu0 0.0
  %7653 = vmatpush1.msra.mxu0 0.0
  %7654 = vmatprep.subr.mxu0 0.0
  %7655 = vmatpush1.msra.mxu0 0.0
  %7656 = vmatprep.subr.mxu0 0.0
  %7657 = vmatpush1.msra.mxu0 0.0
  %7658 = vmatprep.subr.mxu0 0.0
  %7659 = vmatpush1.msra.mxu0 0.0
  %7660 = vmatprep.subr.mxu0 0.0
  %7661 = vmatpush1.msra.mxu0 0.0
  %7662 = vmatprep.subr.mxu0 0.0
  %7663 = vmatpush1.msra.mxu0 0.0
  %7664 = vmatprep.subr.mxu0 0.0
  %7665 = vmatpush1.msra.mxu0 0.0
  %7666 = vmatprep.subr.mxu0 0.0
  %7667 = vmatpush1.msra.mxu0 0.0
  %7668 = vmatprep.subr.mxu0 0.0
  %7669 = vmatpush1.msra.mxu0 0.0
  %7670 = vmatprep.subr.mxu0 0.0
  %7671 = vmatpush1.msra.mxu0 0.0
  %7672 = vmatprep.mubr.f32.mxu0 0.0
  %7673 = vmatmul.mubr.f32.gmra.mrb[0].mxu0 %v7606
  %v7674 = vpop.f32.mrb[0].mxu0
  %v7675 = vadd.f32 %v2519, %v7674
  %v7676 = vpop.f32.mrb[0].mxu0
  %7677 = vdwg.mxu0
  %7678 = vmatprep.subr.mxu0 0.0
  %7679 = vmatpush1.msra.mxu0 %v2510
  %7680 = vmatprep.subr.mxu0 0.0
  %7681 = vmatpush1.msra.mxu0 %v2511
  %7682 = vmatprep.subr.mxu0 0.0
  %7683 = vmatpush1.msra.mxu0 %v2512
  %7684 = vmatprep.subr.mxu0 0.0
  %7685 = vmatpush1.msra.mxu0 %v2513
  %7686 = vmatprep.subr.mxu0 0.0
  %7687 = vmatpush1.msra.mxu0 0.0
  %7688 = vmatprep.subr.mxu0 0.0
  %7689 = vmatpush1.msra.mxu0 0.0
  %7690 = vmatprep.subr.mxu0 0.0
  %7691 = vmatpush1.msra.mxu0 0.0
  %7692 = vmatprep.subr.mxu0 0.0
  %7693 = vmatpush1.msra.mxu0 0.0
  %7694 = vmatprep.subr.mxu0 0.0
  %7695 = vmatpush1.msra.mxu0 0.0
  %7696 = vmatprep.subr.mxu0 0.0
  %7697 = vmatpush1.msra.mxu0 0.0
  %7698 = vmatprep.subr.mxu0 0.0
  %7699 = vmatpush1.msra.mxu0 0.0
  %7700 = vmatprep.subr.mxu0 0.0
  %7701 = vmatpush1.msra.mxu0 0.0
  %7702 = vmatprep.subr.mxu0 0.0
  %7703 = vmatpush1.msra.mxu0 0.0
  %7704 = vmatprep.subr.mxu0 0.0
  %7705 = vmatpush1.msra.mxu0 0.0
  %7706 = vmatprep.subr.mxu0 0.0
  %7707 = vmatpush1.msra.mxu0 0.0
  %7708 = vmatprep.subr.mxu0 0.0
  %7709 = vmatpush1.msra.mxu0 0.0
  %7710 = vmatprep.subr.mxu0 0.0
  %7711 = vmatpush1.msra.mxu0 0.0
  %7712 = vmatprep.subr.mxu0 0.0
  %7713 = vmatpush1.msra.mxu0 0.0
  %7714 = vmatprep.subr.mxu0 0.0
  %7715 = vmatpush1.msra.mxu0 0.0
  %7716 = vmatprep.subr.mxu0 0.0
  %7717 = vmatpush1.msra.mxu0 0.0
  %7718 = vmatprep.subr.mxu0 0.0
  %7719 = vmatpush1.msra.mxu0 0.0
  %7720 = vmatprep.subr.mxu0 0.0
  %7721 = vmatpush1.msra.mxu0 0.0
  %7722 = vmatprep.subr.mxu0 0.0
  %7723 = vmatpush1.msra.mxu0 0.0
  %7724 = vmatprep.subr.mxu0 0.0
  %7725 = vmatpush1.msra.mxu0 0.0
  %7726 = vmatprep.subr.mxu0 0.0
  %7727 = vmatpush1.msra.mxu0 0.0
  %7728 = vmatprep.subr.mxu0 0.0
  %7729 = vmatpush1.msra.mxu0 0.0
  %7730 = vmatprep.subr.mxu0 0.0
  %7731 = vmatpush1.msra.mxu0 0.0
  %7732 = vmatprep.subr.mxu0 0.0
  %7733 = vmatpush1.msra.mxu0 0.0
  %7734 = vmatprep.subr.mxu0 0.0
  %7735 = vmatpush1.msra.mxu0 0.0
  %7736 = vmatprep.subr.mxu0 0.0
  %7737 = vmatpush1.msra.mxu0 0.0
  %7738 = vmatprep.subr.mxu0 0.0
  %7739 = vmatpush1.msra.mxu0 0.0
  %7740 = vmatprep.subr.mxu0 0.0
  %7741 = vmatpush1.msra.mxu0 0.0
  %7742 = vmatprep.mubr.f32.mxu0 0.0
  %7743 = vmatmul.mubr.f32.gmra.mrb[0].mxu0 %v7606
  %v7744 = vpop.f32.mrb[0].mxu0
  %v7745 = vadd.f32 %v2521, %v7744
  %v7746 = vpop.f32.mrb[0].mxu0
  %7747 = vdwg.mxu0
  %7748 = vmatprep.subr.mxu0 0.0
  %7749 = vmatpush1.msra.mxu0 %v2515
  %7750 = vmatprep.subr.mxu0 0.0
  %7751 = vmatpush1.msra.mxu0 %v2516
  %7752 = vmatprep.subr.mxu0 0.0
  %7753 = vmatpush1.msra.mxu0 %v2517
  %7754 = vmatprep.subr.mxu0 0.0
  %7755 = vmatpush1.msra.mxu0 %v2518
  %7756 = vmatprep.subr.mxu0 0.0
  %7757 = vmatpush1.msra.mxu0 0.0
  %7758 = vmatprep.subr.mxu0 0.0
  %7759 = vmatpush1.msra.mxu0 0.0
  %7760 = vmatprep.subr.mxu0 0.0
  %7761 = vmatpush1.msra.mxu0 0.0
  %7762 = vmatprep.subr.mxu0 0.0
  %7763 = vmatpush1.msra.mxu0 0.0
  %7764 = vmatprep.subr.mxu0 0.0
  %7765 = vmatpush1.msra.mxu0 0.0
  %7766 = vmatprep.subr.mxu0 0.0
  %7767 = vmatpush1.msra.mxu0 0.0
  %7768 = vmatprep.subr.mxu0 0.0
  %7769 = vmatpush1.msra.mxu0 0.0
  %7770 = vmatprep.subr.mxu0 0.0
  %7771 = vmatpush1.msra.mxu0 0.0
  %7772 = vmatprep.subr.mxu0 0.0
  %7773 = vmatpush1.msra.mxu0 0.0
  %7774 = vmatprep.subr.mxu0 0.0
  %7775 = vmatpush1.msra.mxu0 0.0
  %7776 = vmatprep.subr.mxu0 0.0
  %7777 = vmatpush1.msra.mxu0 0.0
  %7778 = vmatprep.subr.mxu0 0.0
  %7779 = vmatpush1.msra.mxu0 0.0
  %7780 = vmatprep.subr.mxu0 0.0
  %7781 = vmatpush1.msra.mxu0 0.0
  %7782 = vmatprep.subr.mxu0 0.0
  %7783 = vmatpush1.msra.mxu0 0.0
  %7784 = vmatprep.subr.mxu0 0.0
  %7785 = vmatpush1.msra.mxu0 0.0
  %7786 = vmatprep.subr.mxu0 0.0
  %7787 = vmatpush1.msra.mxu0 0.0
  %7788 = vmatprep.subr.mxu0 0.0
  %7789 = vmatpush1.msra.mxu0 0.0
  %7790 = vmatprep.subr.mxu0 0.0
  %7791 = vmatpush1.msra.mxu0 0.0
  %7792 = vmatprep.subr.mxu0 0.0
  %7793 = vmatpush1.msra.mxu0 0.0
  %7794 = vmatprep.subr.mxu0 0.0
  %7795 = vmatpush1.msra.mxu0 0.0
  %7796 = vmatprep.subr.mxu0 0.0
  %7797 = vmatpush1.msra.mxu0 0.0
  %7798 = vmatprep.subr.mxu0 0.0
  %7799 = vmatpush1.msra.mxu0 0.0
  %7800 = vmatprep.subr.mxu0 0.0
  %7801 = vmatpush1.msra.mxu0 0.0
  %7802 = vmatprep.subr.mxu0 0.0
  %7803 = vmatpush1.msra.mxu0 0.0
  %7804 = vmatprep.subr.mxu0 0.0
  %7805 = vmatpush1.msra.mxu0 0.0
  %7806 = vmatprep.subr.mxu0 0.0
  %7807 = vmatpush1.msra.mxu0 0.0
  %7808 = vmatprep.subr.mxu0 0.0
  %7809 = vmatpush1.msra.mxu0 0.0
  %7810 = vmatprep.subr.mxu0 0.0
  %7811 = vmatpush1.msra.mxu0 0.0
  %7812 = vmatprep.mubr.f32.mxu0 0.0
  %7813 = vmatmul.mubr.f32.gmra.mrb[0].mxu0 %v7606
  %v7814 = vpop.f32.mrb[0].mxu0
  %v7815 = vadd.f32 %v2523, %v7814
  %v7816 = vpop.f32.mrb[0].mxu0
  %7817 = vdwg.mxu0
  %v7819 = vsel %vm2543, %v7361, 0
  %7821 = vmatprep.subr.mxu0 0.0
  %7822 = vmatpush1.msra.mxu0 %v2524
  %7823 = vmatprep.subr.mxu0 0.0
  %7824 = vmatpush1.msra.mxu0 %v2525
  %7825 = vmatprep.subr.mxu0 0.0
  %7826 = vmatpush1.msra.mxu0 %v2526
  %7827 = vmatprep.subr.mxu0 0.0
  %7828 = vmatpush1.msra.mxu0 %v2527
  %7829 = vmatprep.subr.mxu0 0.0
  %7830 = vmatpush1.msra.mxu0 0.0
  %7831 = vmatprep.subr.mxu0 0.0
  %7832 = vmatpush1.msra.mxu0 0.0
  %7833 = vmatprep.subr.mxu0 0.0
  %7834 = vmatpush1.msra.mxu0 0.0
  %7835 = vmatprep.subr.mxu0 0.0
  %7836 = vmatpush1.msra.mxu0 0.0
  %7837 = vmatprep.subr.mxu0 0.0
  %7838 = vmatpush1.msra.mxu0 0.0
  %7839 = vmatprep.subr.mxu0 0.0
  %7840 = vmatpush1.msra.mxu0 0.0
  %7841 = vmatprep.subr.mxu0 0.0
  %7842 = vmatpush1.msra.mxu0 0.0
  %7843 = vmatprep.subr.mxu0 0.0
  %7844 = vmatpush1.msra.mxu0 0.0
  %7845 = vmatprep.subr.mxu0 0.0
  %7846 = vmatpush1.msra.mxu0 0.0
  %7847 = vmatprep.subr.mxu0 0.0
  %7848 = vmatpush1.msra.mxu0 0.0
  %7849 = vmatprep.subr.mxu0 0.0
  %7850 = vmatpush1.msra.mxu0 0.0
  %7851 = vmatprep.subr.mxu0 0.0
  %7852 = vmatpush1.msra.mxu0 0.0
  %7853 = vmatprep.subr.mxu0 0.0
  %7854 = vmatpush1.msra.mxu0 0.0
  %7855 = vmatprep.subr.mxu0 0.0
  %7856 = vmatpush1.msra.mxu0 0.0
  %7857 = vmatprep.subr.mxu0 0.0
  %7858 = vmatpush1.msra.mxu0 0.0
  %7859 = vmatprep.subr.mxu0 0.0
  %7860 = vmatpush1.msra.mxu0 0.0
  %7861 = vmatprep.subr.mxu0 0.0
  %7862 = vmatpush1.msra.mxu0 0.0
  %7863 = vmatprep.subr.mxu0 0.0
  %7864 = vmatpush1.msra.mxu0 0.0
  %7865 = vmatprep.subr.mxu0 0.0
  %7866 = vmatpush1.msra.mxu0 0.0
  %7867 = vmatprep.subr.mxu0 0.0
  %7868 = vmatpush1.msra.mxu0 0.0
  %7869 = vmatprep.subr.mxu0 0.0
  %7870 = vmatpush1.msra.mxu0 0.0
  %7871 = vmatprep.subr.mxu0 0.0
  %7872 = vmatpush1.msra.mxu0 0.0
  %7873 = vmatprep.subr.mxu0 0.0
  %7874 = vmatpush1.msra.mxu0 0.0
  %7875 = vmatprep.subr.mxu0 0.0
  %7876 = vmatpush1.msra.mxu0 0.0
  %7877 = vmatprep.subr.mxu0 0.0
  %7878 = vmatpush1.msra.mxu0 0.0
  %7879 = vmatprep.subr.mxu0 0.0
  %7880 = vmatpush1.msra.mxu0 0.0
  %7881 = vmatprep.subr.mxu0 0.0
  %7882 = vmatpush1.msra.mxu0 0.0
  %7883 = vmatprep.subr.mxu0 0.0
  %7884 = vmatpush1.msra.mxu0 0.0
  %7885 = vmatprep.mubr.f32.mxu0 0.0
  %7886 = vmatmul.mubr.f32.gmra.mrb[0].mxu0 %v7819
  %v7887 = vpop.f32.mrb[0].mxu0
  %v7888 = vadd.f32 %v2538, %v7887
  %v7889 = vpop.f32.mrb[0].mxu0
  %7890 = vdwg.mxu0
  %7891 = vmatprep.subr.mxu0 0.0
  %7892 = vmatpush1.msra.mxu0 %v2529
  %7893 = vmatprep.subr.mxu0 0.0
  %7894 = vmatpush1.msra.mxu0 %v2530
  %7895 = vmatprep.subr.mxu0 0.0
  %7896 = vmatpush1.msra.mxu0 %v2531
  %7897 = vmatprep.subr.mxu0 0.0
  %7898 = vmatpush1.msra.mxu0 %v2532
  %7899 = vmatprep.subr.mxu0 0.0
  %7900 = vmatpush1.msra.mxu0 0.0
  %7901 = vmatprep.subr.mxu0 0.0
  %7902 = vmatpush1.msra.mxu0 0.0
  %7903 = vmatprep.subr.mxu0 0.0
  %7904 = vmatpush1.msra.mxu0 0.0
  %7905 = vmatprep.subr.mxu0 0.0
  %7906 = vmatpush1.msra.mxu0 0.0
  %7907 = vmatprep.subr.mxu0 0.0
  %7908 = vmatpush1.msra.mxu0 0.0
  %7909 = vmatprep.subr.mxu0 0.0
  %7910 = vmatpush1.msra.mxu0 0.0
  %7911 = vmatprep.subr.mxu0 0.0
  %7912 = vmatpush1.msra.mxu0 0.0
  %7913 = vmatprep.subr.mxu0 0.0
  %7914 = vmatpush1.msra.mxu0 0.0
  %7915 = vmatprep.subr.mxu0 0.0
  %7916 = vmatpush1.msra.mxu0 0.0
  %7917 = vmatprep.subr.mxu0 0.0
  %7918 = vmatpush1.msra.mxu0 0.0
  %7919 = vmatprep.subr.mxu0 0.0
  %7920 = vmatpush1.msra.mxu0 0.0
  %7921 = vmatprep.subr.mxu0 0.0
  %7922 = vmatpush1.msra.mxu0 0.0
  %7923 = vmatprep.subr.mxu0 0.0
  %7924 = vmatpush1.msra.mxu0 0.0
  %7925 = vmatprep.subr.mxu0 0.0
  %7926 = vmatpush1.msra.mxu0 0.0
  %7927 = vmatprep.subr.mxu0 0.0
  %7928 = vmatpush1.msra.mxu0 0.0
  %7929 = vmatprep.subr.mxu0 0.0
  %7930 = vmatpush1.msra.mxu0 0.0
  %7931 = vmatprep.subr.mxu0 0.0
  %7932 = vmatpush1.msra.mxu0 0.0
  %7933 = vmatprep.subr.mxu0 0.0
  %7934 = vmatpush1.msra.mxu0 0.0
  %7935 = vmatprep.subr.mxu0 0.0
  %7936 = vmatpush1.msra.mxu0 0.0
  %7937 = vmatprep.subr.mxu0 0.0
  %7938 = vmatpush1.msra.mxu0 0.0
  %7939 = vmatprep.subr.mxu0 0.0
  %7940 = vmatpush1.msra.mxu0 0.0
  %7941 = vmatprep.subr.mxu0 0.0
  %7942 = vmatpush1.msra.mxu0 0.0
  %7943 = vmatprep.subr.mxu0 0.0
  %7944 = vmatpush1.msra.mxu0 0.0
  %7945 = vmatprep.subr.mxu0 0.0
  %7946 = vmatpush1.msra.mxu0 0.0
  %7947 = vmatprep.subr.mxu0 0.0
  %7948 = vmatpush1.msra.mxu0 0.0
  %7949 = vmatprep.subr.mxu0 0.0
  %7950 = vmatpush1.msra.mxu0 0.0
  %7951 = vmatprep.subr.mxu0 0.0
  %7952 = vmatpush1.msra.mxu0 0.0
  %7953 = vmatprep.subr.mxu0 0.0
  %7954 = vmatpush1.msra.mxu0 0.0
  %7955 = vmatprep.mubr.f32.mxu0 0.0
  %7956 = vmatmul.mubr.f32.gmra.mrb[0].mxu0 %v7819
  %v7957 = vpop.f32.mrb[0].mxu0
  %v7958 = vadd.f32 %v2540, %v7957
  %v7959 = vpop.f32.mrb[0].mxu0
  %7960 = vdwg.mxu0
  %7961 = vmatprep.subr.mxu0 0.0
  %7962 = vmatpush1.msra.mxu0 %v2534
  %7963 = vmatprep.subr.mxu0 0.0
  %7964 = vmatpush1.msra.mxu0 %v2535
  %7965 = vmatprep.subr.mxu0 0.0
  %7966 = vmatpush1.msra.mxu0 %v2536
  %7967 = vmatprep.subr.mxu0 0.0
  %7968 = vmatpush1.msra.mxu0 %v2537
  %7969 = vmatprep.subr.mxu0 0.0
  %7970 = vmatpush1.msra.mxu0 0.0
  %7971 = vmatprep.subr.mxu0 0.0
  %7972 = vmatpush1.msra.mxu0 0.0
  %7973 = vmatprep.subr.mxu0 0.0
  %7974 = vmatpush1.msra.mxu0 0.0
  %7975 = vmatprep.subr.mxu0 0.0
  %7976 = vmatpush1.msra.mxu0 0.0
  %7977 = vmatprep.subr.mxu0 0.0
  %7978 = vmatpush1.msra.mxu0 0.0
  %7979 = vmatprep.subr.mxu0 0.0
  %7980 = vmatpush1.msra.mxu0 0.0
  %7981 = vmatprep.subr.mxu0 0.0
  %7982 = vmatpush1.msra.mxu0 0.0
  %7983 = vmatprep.subr.mxu0 0.0
  %7984 = vmatpush1.msra.mxu0 0.0
  %7985 = vmatprep.subr.mxu0 0.0
  %7986 = vmatpush1.msra.mxu0 0.0
  %7987 = vmatprep.subr.mxu0 0.0
  %7988 = vmatpush1.msra.mxu0 0.0
  %7989 = vmatprep.subr.mxu0 0.0
  %7990 = vmatpush1.msra.mxu0 0.0
  %7991 = vmatprep.subr.mxu0 0.0
  %7992 = vmatpush1.msra.mxu0 0.0
  %7993 = vmatprep.subr.mxu0 0.0
  %7994 = vmatpush1.msra.mxu0 0.0
  %7995 = vmatprep.subr.mxu0 0.0
  %7996 = vmatpush1.msra.mxu0 0.0
  %7997 = vmatprep.subr.mxu0 0.0
  %7998 = vmatpush1.msra.mxu0 0.0
  %7999 = vmatprep.subr.mxu0 0.0
  %8000 = vmatpush1.msra.mxu0 0.0
  %8001 = vmatprep.subr.mxu0 0.0
  %8002 = vmatpush1.msra.mxu0 0.0
  %8003 = vmatprep.subr.mxu0 0.0
  %8004 = vmatpush1.msra.mxu0 0.0
  %8005 = vmatprep.subr.mxu0 0.0
  %8006 = vmatpush1.msra.mxu0 0.0
  %8007 = vmatprep.subr.mxu0 0.0
  %8008 = vmatpush1.msra.mxu0 0.0
  %8009 = vmatprep.subr.mxu0 0.0
  %8010 = vmatpush1.msra.mxu0 0.0
  %8011 = vmatprep.subr.mxu0 0.0
  %8012 = vmatpush1.msra.mxu0 0.0
  %8013 = vmatprep.subr.mxu0 0.0
  %8014 = vmatpush1.msra.mxu0 0.0
  %8015 = vmatprep.subr.mxu0 0.0
  %8016 = vmatpush1.msra.mxu0 0.0
  %8017 = vmatprep.subr.mxu0 0.0
  %8018 = vmatpush1.msra.mxu0 0.0
  %8019 = vmatprep.subr.mxu0 0.0
  %8020 = vmatpush1.msra.mxu0 0.0
  %8021 = vmatprep.subr.mxu0 0.0
  %8022 = vmatpush1.msra.mxu0 0.0
  %8023 = vmatprep.subr.mxu0 0.0
  %8024 = vmatpush1.msra.mxu0 0.0
  %8025 = vmatprep.mubr.f32.mxu0 0.0
  %8026 = vmatmul.mubr.f32.gmra.mrb[0].mxu0 %v7819
  %v8027 = vpop.f32.mrb[0].mxu0
  %v8028 = vadd.f32 %v2542, %v8027
  %v8029 = vpop.f32.mrb[0].mxu0
  %8030 = vdwg.mxu0
  %v8031 = vadd.f32 %v7675, %v7888
  %v8032 = vxor.u32 %v8031, 2147483648
  %v8033 = vmul.f32 %v8032, 1.442695
  %v8034 = vpow.pop %v8033
  %v8035 = vadd.f32 %v8034, 1.0
  %v8036 = vrcp.pop %v8035
  %v8037 = vmul.f32 1.0, %v8036
  %v8038 = vadd.f32 %v7745, %v7958
  %v8039 = vxor.u32 %v8038, 2147483648
  %v8040 = vmul.f32 %v8039, 1.442695
  %v8041 = vpow.pop %v8040
  %v8042 = vadd.f32 %v8041, 1.0
  %v8043 = vrcp.pop %v8042
  %v8044 = vmul.f32 1.0, %v8043
  %v8045 = vmul.f32 %v8037, %v8028
  %v8046 = vadd.f32 %v7815, %v8045
  %v8047 = vtanh.pop %v8046
  %v8048 = vsub.f32 1.0, %v8044
  %v8049 = vmul.f32 %v8048, %v8047
  %v8050 = vmul.f32 %v8044, %v7361
  %v8051 = vadd.f32 %v8049, %v8050
  %v8052 = vrot.slane %v3911, 7
  %v8054 = vrot.slane %v4601, 6
  %v8056 = vrot.slane %v5291, 5
  %v8058 = vrot.slane %v5981, 4
  %v8060 = vrot.slane %v6671, 3
  %v8062 = vrot.slane %v7361, 2
  %v8065 = vrot.slane %v8051, 1
  %vm8067 = vcmask 1040384
  %v8068 = vsel %vm8067, %v3221, %v8052
  %v8069 = vsel %vm424, %v8068, %v8054
  %vm8070 = vcmask 1042432
  %v8071 = vsel %vm8070, %v8069, %v8056
  %v8072 = vsel %vm1049, %v8071, %v8058
  %vm8073 = vcmask 1044480
  %v8074 = vsel %vm8073, %v8072, %v8060
  %vm8075 = vcmask 1045504
  %v8076 = vsel %vm8075, %v8074, %v8062
  %vm8077 = vcmask 1046528
  %v8078 = vsel %vm8077, %v8076, %v8065
  %v8079 = vld [vmem:[%s23] sm:$0xff]
  %v8080 = vld [vmem:[%s23 + $0x8] sm:$0xff]
  %v8081 = vld [vmem:[%s23 + $0x10] sm:$0xff]
  %v8082 = vld [vmem:[%s23 + $0x18] sm:$0xff]
  %v8083 = vld [vmem:[%s23 + $0x20] sm:$0xff]
  %v8084 = vld [vmem:[%s23 + $0x28] sm:$0xff]
  %v8085 = vld [vmem:[%s23 + $0x30] sm:$0xff]
  %v8086 = vld [vmem:[%s23 + $0x38] sm:$0xff]
  %v8087 = vld [vmem:[%s23 + $0x40] sm:$0xff]
  %v8088 = vld [vmem:[%s23 + $0x48] sm:$0xff]
  %v8089 = vld [vmem:[%s23 + $0x50] sm:$0xff]
  %v8090 = vld [vmem:[%s23 + $0x58] sm:$0xff]
  %v8091 = vld [vmem:[%s23 + $0x60] sm:$0xff]
  %v8092 = vld [vmem:[%s23 + $0x68] sm:$0xff]
  %v8093 = vld [vmem:[%s23 + $0x70] sm:$0xff]
  %v8094 = vld [vmem:[%s23 + $0x78] sm:$0xff]
  %v8095 = vld [vmem:[%s23 + $0x80] sm:$0xff]
  %v8096 = vld [vmem:[%s23 + $0x88] sm:$0xff]
  %v8097 = vld [vmem:[%s23 + $0x90] sm:$0xff]
  %v8098 = vld [vmem:[%s23 + $0x98] sm:$0xff]
  %v8099 = vld [vmem:[%s23 + $0xa0] sm:$0xff]
  %v8100 = vld [vmem:[%s23 + $0xa8] sm:$0xff]
  %v8101 = vld [vmem:[%s23 + $0xb0] sm:$0xff]
  %v8102 = vld [vmem:[%s23 + $0xb8] sm:$0xff]
  %v8103 = vld [vmem:[%s23 + $0xc0] sm:$0xff]
  %v8104 = vld [vmem:[%s23 + $0xc8] sm:$0xff]
  %v8105 = vld [vmem:[%s23 + $0xd0] sm:$0xff]
  %v8106 = vld [vmem:[%s23 + $0xd8] sm:$0xff]
  %v8107 = vld [vmem:[%s23 + $0xe0] sm:$0xff]
  %v8108 = vld [vmem:[%s23 + $0xe8] sm:$0xff]
  %v8109 = vld [vmem:[%s23 + $0xf0] sm:$0xff]
  %v8110 = vld [vmem:[%s23 + $0xf8] sm:$0xff]
  %v8111 = vpack.c.bf16 %v8078, %v8078
  %v8112 = vld [vmem:[%s24] sm:$0xff]
  %v8113 = vld [vmem:[%s24 + $0x8] sm:$0xff]
  %v8116 = vlaneseq
  %v8117 = vshrl.u32 %v8116, 7
  %v8118 = vsub.s32 0, %v8117
  %v8119 = vrot.slane %v8112, %v8118
  %v8120 = vlaneseq
  %v8121 = vshrl.u32 %v8120, 7
  %v8122 = vsub.s32 1, %v8121
  %v8123 = vrot.slane %v8112, %v8122
  %v8124 = vlaneseq
  %v8125 = vshrl.u32 %v8124, 7
  %v8126 = vsub.s32 2, %v8125
  %v8127 = vrot.slane %v8112, %v8126
  %v8128 = vlaneseq
  %v8129 = vshrl.u32 %v8128, 7
  %v8130 = vsub.s32 3, %v8129
  %v8131 = vrot.slane %v8112, %v8130
  %v8132 = vlaneseq
  %v8133 = vshrl.u32 %v8132, 7
  %v8134 = vsub.s32 4, %v8133
  %v8135 = vrot.slane %v8112, %v8134
  %v8136 = vlaneseq
  %v8137 = vshrl.u32 %v8136, 7
  %v8138 = vsub.s32 5, %v8137
  %v8139 = vrot.slane %v8112, %v8138
  %v8140 = vlaneseq
  %v8141 = vshrl.u32 %v8140, 7
  %v8142 = vsub.s32 6, %v8141
  %v8143 = vrot.slane %v8112, %v8142
  %v8144 = vlaneseq
  %v8145 = vshrl.u32 %v8144, 7
  %v8146 = vsub.s32 7, %v8145
  %v8147 = vrot.slane %v8112, %v8146
  %v8148 = vlaneseq
  %v8149 = vshrl.u32 %v8148, 7
  %v8150 = vsub.s32 0, %v8149
  %v8151 = vrot.slane %v8113, %v8150
  %v8152 = vlaneseq
  %v8153 = vshrl.u32 %v8152, 7
  %v8154 = vsub.s32 1, %v8153
  %v8155 = vrot.slane %v8113, %v8154
  %v8156 = vlaneseq
  %v8157 = vshrl.u32 %v8156, 7
  %v8158 = vsub.s32 2, %v8157
  %v8159 = vrot.slane %v8113, %v8158
  %v8160 = vlaneseq
  %v8161 = vshrl.u32 %v8160, 7
  %v8162 = vsub.s32 3, %v8161
  %v8163 = vrot.slane %v8113, %v8162
  %v8164 = vlaneseq
  %v8165 = vshrl.u32 %v8164, 7
  %v8166 = vsub.s32 4, %v8165
  %v8167 = vrot.slane %v8113, %v8166
  %v8168 = vlaneseq
  %v8169 = vshrl.u32 %v8168, 7
  %v8170 = vsub.s32 5, %v8169
  %v8171 = vrot.slane %v8113, %v8170
  %v8172 = vlaneseq
  %v8173 = vshrl.u32 %v8172, 7
  %v8174 = vsub.s32 6, %v8173
  %v8175 = vrot.slane %v8113, %v8174
  %v8176 = vlaneseq
  %v8177 = vshrl.u32 %v8176, 7
  %v8178 = vsub.s32 7, %v8177
  %v8179 = vrot.slane %v8113, %v8178
  %v8228 = vunpack.c.l.b16 %v8079
  %v8229 = vunpack.c.h.b16 %v8079
  %v8230 = vunpack.c.l.b16 %v8080
  %v8231 = vunpack.c.h.b16 %v8080
  %v8232 = vunpack.c.l.b16 %v8081
  %v8233 = vunpack.c.h.b16 %v8081
  %v8234 = vunpack.c.l.b16 %v8082
  %v8235 = vunpack.c.h.b16 %v8082
  %v8236 = vunpack.c.l.b16 %v8083
  %v8237 = vunpack.c.h.b16 %v8083
  %v8238 = vunpack.c.l.b16 %v8084
  %v8239 = vunpack.c.h.b16 %v8084
  %v8240 = vunpack.c.l.b16 %v8085
  %v8241 = vunpack.c.h.b16 %v8085
  %v8242 = vunpack.c.l.b16 %v8086
  %v8243 = vunpack.c.h.b16 %v8086
  %v8244 = vunpack.c.l.b16 %v8087
  %v8245 = vunpack.c.h.b16 %v8087
  %v8246 = vunpack.c.l.b16 %v8088
  %v8247 = vunpack.c.h.b16 %v8088
  %v8248 = vunpack.c.l.b16 %v8089
  %v8249 = vunpack.c.h.b16 %v8089
  %v8250 = vunpack.c.l.b16 %v8090
  %v8251 = vunpack.c.h.b16 %v8090
  %v8252 = vunpack.c.l.b16 %v8091
  %v8253 = vunpack.c.h.b16 %v8091
  %v8254 = vunpack.c.l.b16 %v8092
  %v8255 = vunpack.c.h.b16 %v8092
  %v8256 = vunpack.c.l.b16 %v8093
  %v8257 = vunpack.c.h.b16 %v8093
  %v8258 = vunpack.c.l.b16 %v8094
  %v8259 = vunpack.c.h.b16 %v8094
  %v8260 = vunpack.c.l.b16 %v8095
  %v8261 = vunpack.c.h.b16 %v8095
  %v8262 = vunpack.c.l.b16 %v8096
  %v8263 = vunpack.c.h.b16 %v8096
  %v8264 = vunpack.c.l.b16 %v8097
  %v8265 = vunpack.c.h.b16 %v8097
  %v8266 = vunpack.c.l.b16 %v8098
  %v8267 = vunpack.c.h.b16 %v8098
  %v8268 = vunpack.c.l.b16 %v8099
  %v8269 = vunpack.c.h.b16 %v8099
  %v8270 = vunpack.c.l.b16 %v8100
  %v8271 = vunpack.c.h.b16 %v8100
  %v8272 = vunpack.c.l.b16 %v8101
  %v8273 = vunpack.c.h.b16 %v8101
  %v8274 = vunpack.c.l.b16 %v8102
  %v8275 = vunpack.c.h.b16 %v8102
  %v8276 = vunpack.c.l.b16 %v8103
  %v8277 = vunpack.c.h.b16 %v8103
  %v8278 = vunpack.c.l.b16 %v8104
  %v8279 = vunpack.c.h.b16 %v8104
  %v8280 = vunpack.c.l.b16 %v8105
  %v8281 = vunpack.c.h.b16 %v8105
  %v8282 = vunpack.c.l.b16 %v8106
  %v8283 = vunpack.c.h.b16 %v8106
  %v8284 = vunpack.c.l.b16 %v8107
  %v8285 = vunpack.c.h.b16 %v8107
  %v8286 = vunpack.c.l.b16 %v8108
  %v8287 = vunpack.c.h.b16 %v8108
  %v8288 = vunpack.c.l.b16 %v8109
  %v8289 = vunpack.c.h.b16 %v8109
  %v8290 = vunpack.c.l.b16 %v8110
  %v8291 = vunpack.c.h.b16 %v8110
  %v8292 = vpack.c.b16 %v8244, %v8228
  %v8293 = vpack.c.b16 %v8245, %v8229
  %v8294 = vpack.c.b16 %v8246, %v8230
  %v8295 = vpack.c.b16 %v8247, %v8231
  %v8296 = vpack.c.b16 %v8248, %v8232
  %v8297 = vpack.c.b16 %v8249, %v8233
  %v8298 = vpack.c.b16 %v8250, %v8234
  %v8299 = vpack.c.b16 %v8251, %v8235
  %v8300 = vpack.c.b16 %v8252, %v8236
  %v8301 = vpack.c.b16 %v8253, %v8237
  %v8302 = vpack.c.b16 %v8254, %v8238
  %v8303 = vpack.c.b16 %v8255, %v8239
  %v8304 = vpack.c.b16 %v8256, %v8240
  %v8305 = vpack.c.b16 %v8257, %v8241
  %v8306 = vpack.c.b16 %v8258, %v8242
  %v8307 = vpack.c.b16 %v8259, %v8243
  %v8308 = vpack.c.b16 %v8276, %v8260
  %v8309 = vpack.c.b16 %v8277, %v8261
  %v8310 = vpack.c.b16 %v8278, %v8262
  %v8311 = vpack.c.b16 %v8279, %v8263
  %v8312 = vpack.c.b16 %v8280, %v8264
  %v8313 = vpack.c.b16 %v8281, %v8265
  %v8314 = vpack.c.b16 %v8282, %v8266
  %v8315 = vpack.c.b16 %v8283, %v8267
  %v8316 = vpack.c.b16 %v8284, %v8268
  %v8317 = vpack.c.b16 %v8285, %v8269
  %v8318 = vpack.c.b16 %v8286, %v8270
  %v8319 = vpack.c.b16 %v8287, %v8271
  %v8320 = vpack.c.b16 %v8288, %v8272
  %v8321 = vpack.c.b16 %v8289, %v8273
  %v8322 = vpack.c.b16 %v8290, %v8274
  %v8323 = vpack.c.b16 %v8291, %v8275
  %v8357 = vsel %vm2543, %v8111, 0
  %8359 = vmatprep.subr.bf16.mxu0 %v8293
  %8360 = vmatpush1.bf16.msra.mxu0 %v8292
  %8361 = vmatprep.subr.bf16.mxu0 %v8309
  %8362 = vmatpush1.bf16.msra.mxu0 %v8308
  %8363 = vmatprep.subr.bf16.mxu0 0
  %8364 = vmatpush1.bf16.msra.mxu0 0
  %8365 = vmatprep.subr.bf16.mxu0 0
  %8366 = vmatpush1.bf16.msra.mxu0 0
  %8367 = vmatprep.subr.bf16.mxu0 0
  %8368 = vmatpush1.bf16.msra.mxu0 0
  %8369 = vmatprep.subr.bf16.mxu0 0
  %8370 = vmatpush1.bf16.msra.mxu0 0
  %8371 = vmatprep.subr.bf16.mxu0 0
  %8372 = vmatpush1.bf16.msra.mxu0 0
  %8373 = vmatprep.subr.bf16.mxu0 0
  %8374 = vmatpush1.bf16.msra.mxu0 0
  %8375 = vmatprep.subr.bf16.mxu0 0
  %8376 = vmatpush1.bf16.msra.mxu0 0
  %8377 = vmatprep.subr.bf16.mxu0 0
  %8378 = vmatpush1.bf16.msra.mxu0 0
  %8379 = vmatprep.subr.bf16.mxu0 0
  %8380 = vmatpush1.bf16.msra.mxu0 0
  %8381 = vmatprep.subr.bf16.mxu0 0
  %8382 = vmatpush1.bf16.msra.mxu0 0
  %8383 = vmatprep.subr.bf16.mxu0 0
  %8384 = vmatpush1.bf16.msra.mxu0 0
  %8385 = vmatprep.subr.bf16.mxu0 0
  %8386 = vmatpush1.bf16.msra.mxu0 0
  %8387 = vmatprep.subr.bf16.mxu0 0
  %8388 = vmatpush1.bf16.msra.mxu0 0
  %8389 = vmatprep.subr.bf16.mxu0 0
  %8390 = vmatpush1.bf16.msra.mxu0 0
  %8391 = vmatprep.mubr.bf16.mxu0 0
  %8392 = vmatmul.mubr.bf16.gmra.mrb[0].mxu0 %v8357
  %v8393 = vpop.f32.mrb[0].mxu0
  %v8394 = vadd.f32 %v8119, %v8393
  %v8395 = vpop.f32.mrb[0].mxu0
  %v8396 = vadd.f32 %v8123, %v8395
  %v8397 = vpop.f32.mrb[0].mxu0
  %v8398 = vpop.f32.mrb[0].mxu0
  %8399 = vdwg.mxu0
  %8400 = vmatprep.subr.bf16.mxu0 %v8295
  %8401 = vmatpush1.bf16.msra.mxu0 %v8294
  %8402 = vmatprep.subr.bf16.mxu0 %v8311
  %8403 = vmatpush1.bf16.msra.mxu0 %v8310
  %8404 = vmatprep.subr.bf16.mxu0 0
  %8405 = vmatpush1.bf16.msra.mxu0 0
  %8406 = vmatprep.subr.bf16.mxu0 0
  %8407 = vmatpush1.bf16.msra.mxu0 0
  %8408 = vmatprep.subr.bf16.mxu0 0
  %8409 = vmatpush1.bf16.msra.mxu0 0
  %8410 = vmatprep.subr.bf16.mxu0 0
  %8411 = vmatpush1.bf16.msra.mxu0 0
  %8412 = vmatprep.subr.bf16.mxu0 0
  %8413 = vmatpush1.bf16.msra.mxu0 0
  %8414 = vmatprep.subr.bf16.mxu0 0
  %8415 = vmatpush1.bf16.msra.mxu0 0
  %8416 = vmatprep.subr.bf16.mxu0 0
  %8417 = vmatpush1.bf16.msra.mxu0 0
  %8418 = vmatprep.subr.bf16.mxu0 0
  %8419 = vmatpush1.bf16.msra.mxu0 0
  %8420 = vmatprep.subr.bf16.mxu0 0
  %8421 = vmatpush1.bf16.msra.mxu0 0
  %8422 = vmatprep.subr.bf16.mxu0 0
  %8423 = vmatpush1.bf16.msra.mxu0 0
  %8424 = vmatprep.subr.bf16.mxu0 0
  %8425 = vmatpush1.bf16.msra.mxu0 0
  %8426 = vmatprep.subr.bf16.mxu0 0
  %8427 = vmatpush1.bf16.msra.mxu0 0
  %8428 = vmatprep.subr.bf16.mxu0 0
  %8429 = vmatpush1.bf16.msra.mxu0 0
  %8430 = vmatprep.subr.bf16.mxu0 0
  %8431 = vmatpush1.bf16.msra.mxu0 0
  %8432 = vmatprep.mubr.bf16.mxu0 0
  %8433 = vmatmul.mubr.bf16.gmra.mrb[0].mxu0 %v8357
  %v8434 = vpop.f32.mrb[0].mxu0
  %v8435 = vadd.f32 %v8127, %v8434
  %v8436 = vpop.f32.mrb[0].mxu0
  %v8437 = vadd.f32 %v8131, %v8436
  %v8438 = vpop.f32.mrb[0].mxu0
  %v8439 = vpop.f32.mrb[0].mxu0
  %8440 = vdwg.mxu0
  %8441 = vmatprep.subr.bf16.mxu0 %v8297
  %8442 = vmatpush1.bf16.msra.mxu0 %v8296
  %8443 = vmatprep.subr.bf16.mxu0 %v8313
  %8444 = vmatpush1.bf16.msra.mxu0 %v8312
  %8445 = vmatprep.subr.bf16.mxu0 0
  %8446 = vmatpush1.bf16.msra.mxu0 0
  %8447 = vmatprep.subr.bf16.mxu0 0
  %8448 = vmatpush1.bf16.msra.mxu0 0
  %8449 = vmatprep.subr.bf16.mxu0 0
  %8450 = vmatpush1.bf16.msra.mxu0 0
  %8451 = vmatprep.subr.bf16.mxu0 0
  %8452 = vmatpush1.bf16.msra.mxu0 0
  %8453 = vmatprep.subr.bf16.mxu0 0
  %8454 = vmatpush1.bf16.msra.mxu0 0
  %8455 = vmatprep.subr.bf16.mxu0 0
  %8456 = vmatpush1.bf16.msra.mxu0 0
  %8457 = vmatprep.subr.bf16.mxu0 0
  %8458 = vmatpush1.bf16.msra.mxu0 0
  %8459 = vmatprep.subr.bf16.mxu0 0
  %8460 = vmatpush1.bf16.msra.mxu0 0
  %8461 = vmatprep.subr.bf16.mxu0 0
  %8462 = vmatpush1.bf16.msra.mxu0 0
  %8463 = vmatprep.subr.bf16.mxu0 0
  %8464 = vmatpush1.bf16.msra.mxu0 0
  %8465 = vmatprep.subr.bf16.mxu0 0
  %8466 = vmatpush1.bf16.msra.mxu0 0
  %8467 = vmatprep.subr.bf16.mxu0 0
  %8468 = vmatpush1.bf16.msra.mxu0 0
  %8469 = vmatprep.subr.bf16.mxu0 0
  %8470 = vmatpush1.bf16.msra.mxu0 0
  %8471 = vmatprep.subr.bf16.mxu0 0
  %8472 = vmatpush1.bf16.msra.mxu0 0
  %8473 = vmatprep.mubr.bf16.mxu0 0
  %8474 = vmatmul.mubr.bf16.gmra.mrb[0].mxu0 %v8357
  %v8475 = vpop.f32.mrb[0].mxu0
  %v8476 = vadd.f32 %v8135, %v8475
  %v8477 = vpop.f32.mrb[0].mxu0
  %v8478 = vadd.f32 %v8139, %v8477
  %v8479 = vpop.f32.mrb[0].mxu0
  %v8480 = vpop.f32.mrb[0].mxu0
  %8481 = vdwg.mxu0
  %8482 = vmatprep.subr.bf16.mxu0 %v8299
  %8483 = vmatpush1.bf16.msra.mxu0 %v8298
  %8484 = vmatprep.subr.bf16.mxu0 %v8315
  %8485 = vmatpush1.bf16.msra.mxu0 %v8314
  %8486 = vmatprep.subr.bf16.mxu0 0
  %8487 = vmatpush1.bf16.msra.mxu0 0
  %8488 = vmatprep.subr.bf16.mxu0 0
  %8489 = vmatpush1.bf16.msra.mxu0 0
  %8490 = vmatprep.subr.bf16.mxu0 0
  %8491 = vmatpush1.bf16.msra.mxu0 0
  %8492 = vmatprep.subr.bf16.mxu0 0
  %8493 = vmatpush1.bf16.msra.mxu0 0
  %8494 = vmatprep.subr.bf16.mxu0 0
  %8495 = vmatpush1.bf16.msra.mxu0 0
  %8496 = vmatprep.subr.bf16.mxu0 0
  %8497 = vmatpush1.bf16.msra.mxu0 0
  %8498 = vmatprep.subr.bf16.mxu0 0
  %8499 = vmatpush1.bf16.msra.mxu0 0
  %8500 = vmatprep.subr.bf16.mxu0 0
  %8501 = vmatpush1.bf16.msra.mxu0 0
  %8502 = vmatprep.subr.bf16.mxu0 0
  %8503 = vmatpush1.bf16.msra.mxu0 0
  %8504 = vmatprep.subr.bf16.mxu0 0
  %8505 = vmatpush1.bf16.msra.mxu0 0
  %8506 = vmatprep.subr.bf16.mxu0 0
  %8507 = vmatpush1.bf16.msra.mxu0 0
  %8508 = vmatprep.subr.bf16.mxu0 0
  %8509 = vmatpush1.bf16.msra.mxu0 0
  %8510 = vmatprep.subr.bf16.mxu0 0
  %8511 = vmatpush1.bf16.msra.mxu0 0
  %8512 = vmatprep.subr.bf16.mxu0 0
  %8513 = vmatpush1.bf16.msra.mxu0 0
  %8514 = vmatprep.mubr.bf16.mxu0 0
  %8515 = vmatmul.mubr.bf16.gmra.mrb[0].mxu0 %v8357
  %v8516 = vpop.f32.mrb[0].mxu0
  %v8517 = vadd.f32 %v8143, %v8516
  %v8518 = vpop.f32.mrb[0].mxu0
  %v8519 = vadd.f32 %v8147, %v8518
  %v8520 = vpop.f32.mrb[0].mxu0
  %v8521 = vpop.f32.mrb[0].mxu0
  %8522 = vdwg.mxu0
  %8523 = vmatprep.subr.bf16.mxu0 %v8301
  %8524 = vmatpush1.bf16.msra.mxu0 %v8300
  %8525 = vmatprep.subr.bf16.mxu0 %v8317
  %8526 = vmatpush1.bf16.msra.mxu0 %v8316
  %8527 = vmatprep.subr.bf16.mxu0 0
  %8528 = vmatpush1.bf16.msra.mxu0 0
  %8529 = vmatprep.subr.bf16.mxu0 0
  %8530 = vmatpush1.bf16.msra.mxu0 0
  %8531 = vmatprep.subr.bf16.mxu0 0
  %8532 = vmatpush1.bf16.msra.mxu0 0
  %8533 = vmatprep.subr.bf16.mxu0 0
  %8534 = vmatpush1.bf16.msra.mxu0 0
  %8535 = vmatprep.subr.bf16.mxu0 0
  %8536 = vmatpush1.bf16.msra.mxu0 0
  %8537 = vmatprep.subr.bf16.mxu0 0
  %8538 = vmatpush1.bf16.msra.mxu0 0
  %8539 = vmatprep.subr.bf16.mxu0 0
  %8540 = vmatpush1.bf16.msra.mxu0 0
  %8541 = vmatprep.subr.bf16.mxu0 0
  %8542 = vmatpush1.bf16.msra.mxu0 0
  %8543 = vmatprep.subr.bf16.mxu0 0
  %8544 = vmatpush1.bf16.msra.mxu0 0
  %8545 = vmatprep.subr.bf16.mxu0 0
  %8546 = vmatpush1.bf16.msra.mxu0 0
  %8547 = vmatprep.subr.bf16.mxu0 0
  %8548 = vmatpush1.bf16.msra.mxu0 0
  %8549 = vmatprep.subr.bf16.mxu0 0
  %8550 = vmatpush1.bf16.msra.mxu0 0
  %8551 = vmatprep.subr.bf16.mxu0 0
  %8552 = vmatpush1.bf16.msra.mxu0 0
  %8553 = vmatprep.subr.bf16.mxu0 0
  %8554 = vmatpush1.bf16.msra.mxu0 0
  %8555 = vmatprep.mubr.bf16.mxu0 0
  %8556 = vmatmul.mubr.bf16.gmra.mrb[0].mxu0 %v8357
  %v8557 = vpop.f32.mrb[0].mxu0
  %v8558 = vadd.f32 %v8151, %v8557
  %v8559 = vpop.f32.mrb[0].mxu0
  %v8560 = vadd.f32 %v8155, %v8559
  %v8561 = vpop.f32.mrb[0].mxu0
  %v8562 = vpop.f32.mrb[0].mxu0
  %8563 = vdwg.mxu0
  %8564 = vmatprep.subr.bf16.mxu0 %v8303
  %8565 = vmatpush1.bf16.msra.mxu0 %v8302
  %8566 = vmatprep.subr.bf16.mxu0 %v8319
  %8567 = vmatpush1.bf16.msra.mxu0 %v8318
  %8568 = vmatprep.subr.bf16.mxu0 0
  %8569 = vmatpush1.bf16.msra.mxu0 0
  %8570 = vmatprep.subr.bf16.mxu0 0
  %8571 = vmatpush1.bf16.msra.mxu0 0
  %8572 = vmatprep.subr.bf16.mxu0 0
  %8573 = vmatpush1.bf16.msra.mxu0 0
  %8574 = vmatprep.subr.bf16.mxu0 0
  %8575 = vmatpush1.bf16.msra.mxu0 0
  %8576 = vmatprep.subr.bf16.mxu0 0
  %8577 = vmatpush1.bf16.msra.mxu0 0
  %8578 = vmatprep.subr.bf16.mxu0 0
  %8579 = vmatpush1.bf16.msra.mxu0 0
  %8580 = vmatprep.subr.bf16.mxu0 0
  %8581 = vmatpush1.bf16.msra.mxu0 0
  %8582 = vmatprep.subr.bf16.mxu0 0
  %8583 = vmatpush1.bf16.msra.mxu0 0
  %8584 = vmatprep.subr.bf16.mxu0 0
  %8585 = vmatpush1.bf16.msra.mxu0 0
  %8586 = vmatprep.subr.bf16.mxu0 0
  %8587 = vmatpush1.bf16.msra.mxu0 0
  %8588 = vmatprep.subr.bf16.mxu0 0
  %8589 = vmatpush1.bf16.msra.mxu0 0
  %8590 = vmatprep.subr.bf16.mxu0 0
  %8591 = vmatpush1.bf16.msra.mxu0 0
  %8592 = vmatprep.subr.bf16.mxu0 0
  %8593 = vmatpush1.bf16.msra.mxu0 0
  %8594 = vmatprep.subr.bf16.mxu0 0
  %8595 = vmatpush1.bf16.msra.mxu0 0
  %8596 = vmatprep.mubr.bf16.mxu0 0
  %8597 = vmatmul.mubr.bf16.gmra.mrb[0].mxu0 %v8357
  %v8598 = vpop.f32.mrb[0].mxu0
  %v8599 = vadd.f32 %v8159, %v8598
  %v8600 = vpop.f32.mrb[0].mxu0
  %v8601 = vadd.f32 %v8163, %v8600
  %v8602 = vpop.f32.mrb[0].mxu0
  %v8603 = vpop.f32.mrb[0].mxu0
  %8604 = vdwg.mxu0
  %8605 = vmatprep.subr.bf16.mxu0 %v8305
  %8606 = vmatpush1.bf16.msra.mxu0 %v8304
  %8607 = vmatprep.subr.bf16.mxu0 %v8321
  %8608 = vmatpush1.bf16.msra.mxu0 %v8320
  %8609 = vmatprep.subr.bf16.mxu0 0
  %8610 = vmatpush1.bf16.msra.mxu0 0
  %8611 = vmatprep.subr.bf16.mxu0 0
  %8612 = vmatpush1.bf16.msra.mxu0 0
  %8613 = vmatprep.subr.bf16.mxu0 0
  %8614 = vmatpush1.bf16.msra.mxu0 0
  %8615 = vmatprep.subr.bf16.mxu0 0
  %8616 = vmatpush1.bf16.msra.mxu0 0
  %8617 = vmatprep.subr.bf16.mxu0 0
  %8618 = vmatpush1.bf16.msra.mxu0 0
  %8619 = vmatprep.subr.bf16.mxu0 0
  %8620 = vmatpush1.bf16.msra.mxu0 0
  %8621 = vmatprep.subr.bf16.mxu0 0
  %8622 = vmatpush1.bf16.msra.mxu0 0
  %8623 = vmatprep.subr.bf16.mxu0 0
  %8624 = vmatpush1.bf16.msra.mxu0 0
  %8625 = vmatprep.subr.bf16.mxu0 0
  %8626 = vmatpush1.bf16.msra.mxu0 0
  %8627 = vmatprep.subr.bf16.mxu0 0
  %8628 = vmatpush1.bf16.msra.mxu0 0
  %8629 = vmatprep.subr.bf16.mxu0 0
  %8630 = vmatpush1.bf16.msra.mxu0 0
  %8631 = vmatprep.subr.bf16.mxu0 0
  %8632 = vmatpush1.bf16.msra.mxu0 0
  %8633 = vmatprep.subr.bf16.mxu0 0
  %8634 = vmatpush1.bf16.msra.mxu0 0
  %8635 = vmatprep.subr.bf16.mxu0 0
  %8636 = vmatpush1.bf16.msra.mxu0 0
  %8637 = vmatprep.mubr.bf16.mxu0 0
  %8638 = vmatmul.mubr.bf16.gmra.mrb[0].mxu0 %v8357
  %v8639 = vpop.f32.mrb[0].mxu0
  %v8640 = vadd.f32 %v8167, %v8639
  %v8641 = vpop.f32.mrb[0].mxu0
  %v8642 = vadd.f32 %v8171, %v8641
  %v8643 = vpop.f32.mrb[0].mxu0
  %v8644 = vpop.f32.mrb[0].mxu0
  %8645 = vdwg.mxu0
  %8646 = vmatprep.subr.bf16.mxu0 %v8307
  %8647 = vmatpush1.bf16.msra.mxu0 %v8306
  %8648 = vmatprep.subr.bf16.mxu0 %v8323
  %8649 = vmatpush1.bf16.msra.mxu0 %v8322
  %8650 = vmatprep.subr.bf16.mxu0 0
  %8651 = vmatpush1.bf16.msra.mxu0 0
  %8652 = vmatprep.subr.bf16.mxu0 0
  %8653 = vmatpush1.bf16.msra.mxu0 0
  %8654 = vmatprep.subr.bf16.mxu0 0
  %8655 = vmatpush1.bf16.msra.mxu0 0
  %8656 = vmatprep.subr.bf16.mxu0 0
  %8657 = vmatpush1.bf16.msra.mxu0 0
  %8658 = vmatprep.subr.bf16.mxu0 0
  %8659 = vmatpush1.bf16.msra.mxu0 0
  %8660 = vmatprep.subr.bf16.mxu0 0
  %8661 = vmatpush1.bf16.msra.mxu0 0
  %8662 = vmatprep.subr.bf16.mxu0 0
  %8663 = vmatpush1.bf16.msra.mxu0 0
  %8664 = vmatprep.subr.bf16.mxu0 0
  %8665 = vmatpush1.bf16.msra.mxu0 0
  %8666 = vmatprep.subr.bf16.mxu0 0
  %8667 = vmatpush1.bf16.msra.mxu0 0
  %8668 = vmatprep.subr.bf16.mxu0 0
  %8669 = vmatpush1.bf16.msra.mxu0 0
  %8670 = vmatprep.subr.bf16.mxu0 0
  %8671 = vmatpush1.bf16.msra.mxu0 0
  %8672 = vmatprep.subr.bf16.mxu0 0
  %8673 = vmatpush1.bf16.msra.mxu0 0
  %8674 = vmatprep.subr.bf16.mxu0 0
  %8675 = vmatpush1.bf16.msra.mxu0 0
  %8676 = vmatprep.subr.bf16.mxu0 0
  %8677 = vmatpush1.bf16.msra.mxu0 0
  %8678 = vmatprep.mubr.bf16.mxu0 0
  %8679 = vmatmul.mubr.bf16.gmra.mrb[0].mxu0 %v8357
  %v8680 = vpop.f32.mrb[0].mxu0
  %v8681 = vadd.f32 %v8175, %v8680
  %v8682 = vpop.f32.mrb[0].mxu0
  %v8683 = vadd.f32 %v8179, %v8682
  %v8684 = vpop.f32.mrb[0].mxu0
  %v8685 = vpop.f32.mrb[0].mxu0
  %8686 = vdwg.mxu0
  %v8687 = vmax.f32 %v8394, 0.0
  %v8688 = vmax.f32 %v8396, 0.0
  %v8689 = vmax.f32 %v8435, 0.0
  %v8690 = vmax.f32 %v8437, 0.0
  %v8691 = vmax.f32 %v8476, 0.0
  %v8692 = vmax.f32 %v8478, 0.0
  %v8693 = vmax.f32 %v8517, 0.0
  %v8694 = vmax.f32 %v8519, 0.0
  %v8695 = vmax.f32 %v8558, 0.0
  %v8696 = vmax.f32 %v8560, 0.0
  %v8697 = vmax.f32 %v8599, 0.0
  %v8698 = vmax.f32 %v8601, 0.0
  %v8699 = vmax.f32 %v8640, 0.0
  %v8700 = vmax.f32 %v8642, 0.0
  %v8701 = vmax.f32 %v8681, 0.0
  %v8702 = vmax.f32 %v8683, 0.0
  %v8703 = vld [vmem:[%s25] sm:$0xff]
  %v8704 = vld [vmem:[%s25 + $0x8] sm:$0xff]
  %v8705 = vld [vmem:[%s25 + $0x10] sm:$0xff]
  %v8706 = vld [vmem:[%s25 + $0x18] sm:$0xff]
  %v8707 = vld [vmem:[%s25 + $0x20] sm:$0xff]
  %v8708 = vld [vmem:[%s25 + $0x28] sm:$0xff]
  %v8709 = vld [vmem:[%s25 + $0x30] sm:$0xff]
  %v8710 = vld [vmem:[%s25 + $0x38] sm:$0xff]
  %v8711 = vld [vmem:[%s25 + $0x40] sm:$0xff]
  %v8712 = vld [vmem:[%s25 + $0x48] sm:$0xff]
  %v8713 = vld [vmem:[%s25 + $0x50] sm:$0xff]
  %v8714 = vld [vmem:[%s25 + $0x58] sm:$0xff]
  %v8715 = vld [vmem:[%s25 + $0x60] sm:$0xff]
  %v8716 = vld [vmem:[%s25 + $0x68] sm:$0xff]
  %v8717 = vld [vmem:[%s25 + $0x70] sm:$0xff]
  %v8718 = vld [vmem:[%s25 + $0x78] sm:$0xff]
  %v8719 = vld [vmem:[%s25 + $0x80] sm:$0xff]
  %v8720 = vld [vmem:[%s25 + $0x88] sm:$0xff]
  %v8721 = vld [vmem:[%s25 + $0x90] sm:$0xff]
  %v8722 = vld [vmem:[%s25 + $0x98] sm:$0xff]
  %v8723 = vld [vmem:[%s25 + $0xa0] sm:$0xff]
  %v8724 = vld [vmem:[%s25 + $0xa8] sm:$0xff]
  %v8725 = vld [vmem:[%s25 + $0xb0] sm:$0xff]
  %v8726 = vld [vmem:[%s25 + $0xb8] sm:$0xff]
  %v8727 = vld [vmem:[%s25 + $0xc0] sm:$0xff]
  %v8728 = vld [vmem:[%s25 + $0xc8] sm:$0xff]
  %v8729 = vld [vmem:[%s25 + $0xd0] sm:$0xff]
  %v8730 = vld [vmem:[%s25 + $0xd8] sm:$0xff]
  %v8731 = vld [vmem:[%s25 + $0xe0] sm:$0xff]
  %v8732 = vld [vmem:[%s25 + $0xe8] sm:$0xff]
  %v8733 = vld [vmem:[%s25 + $0xf0] sm:$0xff]
  %v8734 = vld [vmem:[%s25 + $0xf8] sm:$0xff]
  %v8735 = vld [vmem:[%s25 + $0x100] sm:$0xff]
  %v8736 = vld [vmem:[%s25 + $0x108] sm:$0xff]
  %v8737 = vld [vmem:[%s25 + $0x110] sm:$0xff]
  %v8738 = vld [vmem:[%s25 + $0x118] sm:$0xff]
  %v8739 = vld [vmem:[%s25 + $0x120] sm:$0xff]
  %v8740 = vld [vmem:[%s25 + $0x128] sm:$0xff]
  %v8741 = vld [vmem:[%s25 + $0x130] sm:$0xff]
  %v8742 = vld [vmem:[%s25 + $0x138] sm:$0xff]
  %v8743 = vld [vmem:[%s25 + $0x140] sm:$0xff]
  %v8744 = vld [vmem:[%s25 + $0x148] sm:$0xff]
  %v8745 = vld [vmem:[%s25 + $0x150] sm:$0xff]
  %v8746 = vld [vmem:[%s25 + $0x158] sm:$0xff]
  %v8747 = vld [vmem:[%s25 + $0x160] sm:$0xff]
  %v8748 = vld [vmem:[%s25 + $0x168] sm:$0xff]
  %v8749 = vld [vmem:[%s25 + $0x170] sm:$0xff]
  %v8750 = vld [vmem:[%s25 + $0x178] sm:$0xff]
  %v8751 = vld [vmem:[%s25 + $0x180] sm:$0xff]
  %v8752 = vld [vmem:[%s25 + $0x188] sm:$0xff]
  %v8753 = vld [vmem:[%s25 + $0x190] sm:$0xff]
  %v8754 = vld [vmem:[%s25 + $0x198] sm:$0xff]
  %v8755 = vld [vmem:[%s25 + $0x1a0] sm:$0xff]
  %v8756 = vld [vmem:[%s25 + $0x1a8] sm:$0xff]
  %v8757 = vld [vmem:[%s25 + $0x1b0] sm:$0xff]
  %v8758 = vld [vmem:[%s25 + $0x1b8] sm:$0xff]
  %v8759 = vld [vmem:[%s25 + $0x1c0] sm:$0xff]
  %v8760 = vld [vmem:[%s25 + $0x1c8] sm:$0xff]
  %v8761 = vld [vmem:[%s25 + $0x1d0] sm:$0xff]
  %v8762 = vld [vmem:[%s25 + $0x1d8] sm:$0xff]
  %v8763 = vld [vmem:[%s25 + $0x1e0] sm:$0xff]
  %v8764 = vld [vmem:[%s25 + $0x1e8] sm:$0xff]
  %v8765 = vld [vmem:[%s25 + $0x1f0] sm:$0xff]
  %v8766 = vld [vmem:[%s25 + $0x1f8] sm:$0xff]
  %v8767 = vld [vmem:[%s25 + $0x200] sm:$0xff]
  %v8768 = vld [vmem:[%s25 + $0x208] sm:$0xff]
  %v8769 = vld [vmem:[%s25 + $0x210] sm:$0xff]
  %v8770 = vld [vmem:[%s25 + $0x218] sm:$0xff]
  %v8771 = vld [vmem:[%s25 + $0x220] sm:$0xff]
  %v8772 = vld [vmem:[%s25 + $0x228] sm:$0xff]
  %v8773 = vld [vmem:[%s25 + $0x230] sm:$0xff]
  %v8774 = vld [vmem:[%s25 + $0x238] sm:$0xff]
  %v8775 = vld [vmem:[%s25 + $0x240] sm:$0xff]
  %v8776 = vld [vmem:[%s25 + $0x248] sm:$0xff]
  %v8777 = vld [vmem:[%s25 + $0x250] sm:$0xff]
  %v8778 = vld [vmem:[%s25 + $0x258] sm:$0xff]
  %v8779 = vld [vmem:[%s25 + $0x260] sm:$0xff]
  %v8780 = vld [vmem:[%s25 + $0x268] sm:$0xff]
  %v8781 = vld [vmem:[%s25 + $0x270] sm:$0xff]
  %v8782 = vld [vmem:[%s25 + $0x278] sm:$0xff]
  %v8783 = vld [vmem:[%s25 + $0x280] sm:$0xff]
  %v8784 = vld [vmem:[%s25 + $0x288] sm:$0xff]
  %v8785 = vld [vmem:[%s25 + $0x290] sm:$0xff]
  %v8786 = vld [vmem:[%s25 + $0x298] sm:$0xff]
  %v8787 = vld [vmem:[%s25 + $0x2a0] sm:$0xff]
  %v8788 = vld [vmem:[%s25 + $0x2a8] sm:$0xff]
  %v8789 = vld [vmem:[%s25 + $0x2b0] sm:$0xff]
  %v8790 = vld [vmem:[%s25 + $0x2b8] sm:$0xff]
  %v8791 = vld [vmem:[%s25 + $0x2c0] sm:$0xff]
  %v8792 = vld [vmem:[%s25 + $0x2c8] sm:$0xff]
  %v8793 = vld [vmem:[%s25 + $0x2d0] sm:$0xff]
  %v8794 = vld [vmem:[%s25 + $0x2d8] sm:$0xff]
  %v8795 = vld [vmem:[%s25 + $0x2e0] sm:$0xff]
  %v8796 = vld [vmem:[%s25 + $0x2e8] sm:$0xff]
  %v8797 = vld [vmem:[%s25 + $0x2f0] sm:$0xff]
  %v8798 = vld [vmem:[%s25 + $0x2f8] sm:$0xff]
  %v8799 = vld [vmem:[%s25 + $0x300] sm:$0xff]
  %v8800 = vld [vmem:[%s25 + $0x308] sm:$0xff]
  %v8801 = vld [vmem:[%s25 + $0x310] sm:$0xff]
  %v8802 = vld [vmem:[%s25 + $0x318] sm:$0xff]
  %v8803 = vld [vmem:[%s25 + $0x320] sm:$0xff]
  %v8804 = vld [vmem:[%s25 + $0x328] sm:$0xff]
  %v8805 = vld [vmem:[%s25 + $0x330] sm:$0xff]
  %v8806 = vld [vmem:[%s25 + $0x338] sm:$0xff]
  %v8807 = vld [vmem:[%s25 + $0x340] sm:$0xff]
  %v8808 = vld [vmem:[%s25 + $0x348] sm:$0xff]
  %v8809 = vld [vmem:[%s25 + $0x350] sm:$0xff]
  %v8810 = vld [vmem:[%s25 + $0x358] sm:$0xff]
  %v8811 = vld [vmem:[%s25 + $0x360] sm:$0xff]
  %v8812 = vld [vmem:[%s25 + $0x368] sm:$0xff]
  %v8813 = vld [vmem:[%s25 + $0x370] sm:$0xff]
  %v8814 = vld [vmem:[%s25 + $0x378] sm:$0xff]
  %v8815 = vld [vmem:[%s25 + $0x380] sm:$0xff]
  %v8816 = vld [vmem:[%s25 + $0x388] sm:$0xff]
  %v8817 = vld [vmem:[%s25 + $0x390] sm:$0xff]
  %v8818 = vld [vmem:[%s25 + $0x398] sm:$0xff]
  %v8819 = vld [vmem:[%s25 + $0x3a0] sm:$0xff]
  %v8820 = vld [vmem:[%s25 + $0x3a8] sm:$0xff]
  %v8821 = vld [vmem:[%s25 + $0x3b0] sm:$0xff]
  %v8822 = vld [vmem:[%s25 + $0x3b8] sm:$0xff]
  %v8823 = vld [vmem:[%s25 + $0x3c0] sm:$0xff]
  %v8824 = vld [vmem:[%s25 + $0x3c8] sm:$0xff]
  %v8825 = vld [vmem:[%s25 + $0x3d0] sm:$0xff]
  %v8826 = vld [vmem:[%s25 + $0x3d8] sm:$0xff]
  %v8827 = vld [vmem:[%s25 + $0x3e0] sm:$0xff]
  %v8828 = vld [vmem:[%s25 + $0x3e8] sm:$0xff]
  %v8829 = vld [vmem:[%s25 + $0x3f0] sm:$0xff]
  %v8830 = vld [vmem:[%s25 + $0x3f8] sm:$0xff]
  %v8831 = vld [vmem:[%s25 + $0x400] sm:$0xff]
  %v8832 = vld [vmem:[%s25 + $0x408] sm:$0xff]
  %v8833 = vld [vmem:[%s25 + $0x410] sm:$0xff]
  %v8834 = vld [vmem:[%s25 + $0x418] sm:$0xff]
  %v8835 = vld [vmem:[%s25 + $0x420] sm:$0xff]
  %v8836 = vld [vmem:[%s25 + $0x428] sm:$0xff]
  %v8837 = vld [vmem:[%s25 + $0x430] sm:$0xff]
  %v8838 = vld [vmem:[%s25 + $0x438] sm:$0xff]
  %v8839 = vld [vmem:[%s25 + $0x440] sm:$0xff]
  %v8840 = vld [vmem:[%s25 + $0x448] sm:$0xff]
  %v8841 = vld [vmem:[%s25 + $0x450] sm:$0xff]
  %v8842 = vld [vmem:[%s25 + $0x458] sm:$0xff]
  %v8843 = vld [vmem:[%s25 + $0x460] sm:$0xff]
  %v8844 = vld [vmem:[%s25 + $0x468] sm:$0xff]
  %v8845 = vld [vmem:[%s25 + $0x470] sm:$0xff]
  %v8846 = vld [vmem:[%s25 + $0x478] sm:$0xff]
  %v8847 = vld [vmem:[%s25 + $0x480] sm:$0xff]
  %v8848 = vld [vmem:[%s25 + $0x488] sm:$0xff]
  %v8849 = vld [vmem:[%s25 + $0x490] sm:$0xff]
  %v8850 = vld [vmem:[%s25 + $0x498] sm:$0xff]
  %v8851 = vld [vmem:[%s25 + $0x4a0] sm:$0xff]
  %v8852 = vld [vmem:[%s25 + $0x4a8] sm:$0xff]
  %v8853 = vld [vmem:[%s25 + $0x4b0] sm:$0xff]
  %v8854 = vld [vmem:[%s25 + $0x4b8] sm:$0xff]
  %v8855 = vld [vmem:[%s25 + $0x4c0] sm:$0xff]
  %v8856 = vld [vmem:[%s25 + $0x4c8] sm:$0xff]
  %v8857 = vld [vmem:[%s25 + $0x4d0] sm:$0xff]
  %v8858 = vld [vmem:[%s25 + $0x4d8] sm:$0xff]
  %v8859 = vld [vmem:[%s25 + $0x4e0] sm:$0xff]
  %v8860 = vld [vmem:[%s25 + $0x4e8] sm:$0xff]
  %v8861 = vld [vmem:[%s25 + $0x4f0] sm:$0xff]
  %v8862 = vld [vmem:[%s25 + $0x4f8] sm:$0xff]
  %v8863 = vld [vmem:[%s25 + $0x500] sm:$0xff]
  %v8864 = vld [vmem:[%s25 + $0x508] sm:$0xff]
  %v8865 = vld [vmem:[%s25 + $0x510] sm:$0xff]
  %v8866 = vld [vmem:[%s25 + $0x518] sm:$0xff]
  %v8867 = vld [vmem:[%s25 + $0x520] sm:$0xff]
  %v8868 = vld [vmem:[%s25 + $0x528] sm:$0xff]
  %v8869 = vld [vmem:[%s25 + $0x530] sm:$0xff]
  %v8870 = vld [vmem:[%s25 + $0x538] sm:$0xff]
  %v8871 = vld [vmem:[%s25 + $0x540] sm:$0xff]
  %v8872 = vld [vmem:[%s25 + $0x548] sm:$0xff]
  %v8873 = vld [vmem:[%s25 + $0x550] sm:$0xff]
  %v8874 = vld [vmem:[%s25 + $0x558] sm:$0xff]
  %v8875 = vld [vmem:[%s25 + $0x560] sm:$0xff]
  %v8876 = vld [vmem:[%s25 + $0x568] sm:$0xff]
  %v8877 = vld [vmem:[%s25 + $0x570] sm:$0xff]
  %v8878 = vld [vmem:[%s25 + $0x578] sm:$0xff]
  %v8879 = vld [vmem:[%s25 + $0x580] sm:$0xff]
  %v8880 = vld [vmem:[%s25 + $0x588] sm:$0xff]
  %v8881 = vld [vmem:[%s25 + $0x590] sm:$0xff]
  %v8882 = vld [vmem:[%s25 + $0x598] sm:$0xff]
  %v8883 = vld [vmem:[%s25 + $0x5a0] sm:$0xff]
  %v8884 = vld [vmem:[%s25 + $0x5a8] sm:$0xff]
  %v8885 = vld [vmem:[%s25 + $0x5b0] sm:$0xff]
  %v8886 = vld [vmem:[%s25 + $0x5b8] sm:$0xff]
  %v8887 = vld [vmem:[%s25 + $0x5c0] sm:$0xff]
  %v8888 = vld [vmem:[%s25 + $0x5c8] sm:$0xff]
  %v8889 = vld [vmem:[%s25 + $0x5d0] sm:$0xff]
  %v8890 = vld [vmem:[%s25 + $0x5d8] sm:$0xff]
  %v8891 = vld [vmem:[%s25 + $0x5e0] sm:$0xff]
  %v8892 = vld [vmem:[%s25 + $0x5e8] sm:$0xff]
  %v8893 = vld [vmem:[%s25 + $0x5f0] sm:$0xff]
  %v8894 = vld [vmem:[%s25 + $0x5f8] sm:$0xff]
  %v8895 = vld [vmem:[%s25 + $0x600] sm:$0xff]
  %v8896 = vld [vmem:[%s25 + $0x608] sm:$0xff]
  %v8897 = vld [vmem:[%s25 + $0x610] sm:$0xff]
  %v8898 = vld [vmem:[%s25 + $0x618] sm:$0xff]
  %v8899 = vld [vmem:[%s25 + $0x620] sm:$0xff]
  %v8900 = vld [vmem:[%s25 + $0x628] sm:$0xff]
  %v8901 = vld [vmem:[%s25 + $0x630] sm:$0xff]
  %v8902 = vld [vmem:[%s25 + $0x638] sm:$0xff]
  %v8903 = vld [vmem:[%s25 + $0x640] sm:$0xff]
  %v8904 = vld [vmem:[%s25 + $0x648] sm:$0xff]
  %v8905 = vld [vmem:[%s25 + $0x650] sm:$0xff]
  %v8906 = vld [vmem:[%s25 + $0x658] sm:$0xff]
  %v8907 = vld [vmem:[%s25 + $0x660] sm:$0xff]
  %v8908 = vld [vmem:[%s25 + $0x668] sm:$0xff]
  %v8909 = vld [vmem:[%s25 + $0x670] sm:$0xff]
  %v8910 = vld [vmem:[%s25 + $0x678] sm:$0xff]
  %v8911 = vld [vmem:[%s25 + $0x680] sm:$0xff]
  %v8912 = vld [vmem:[%s25 + $0x688] sm:$0xff]
  %v8913 = vld [vmem:[%s25 + $0x690] sm:$0xff]
  %v8914 = vld [vmem:[%s25 + $0x698] sm:$0xff]
  %v8915 = vld [vmem:[%s25 + $0x6a0] sm:$0xff]
  %v8916 = vld [vmem:[%s25 + $0x6a8] sm:$0xff]
  %v8917 = vld [vmem:[%s25 + $0x6b0] sm:$0xff]
  %v8918 = vld [vmem:[%s25 + $0x6b8] sm:$0xff]
  %v8919 = vld [vmem:[%s25 + $0x6c0] sm:$0xff]
  %v8920 = vld [vmem:[%s25 + $0x6c8] sm:$0xff]
  %v8921 = vld [vmem:[%s25 + $0x6d0] sm:$0xff]
  %v8922 = vld [vmem:[%s25 + $0x6d8] sm:$0xff]
  %v8923 = vld [vmem:[%s25 + $0x6e0] sm:$0xff]
  %v8924 = vld [vmem:[%s25 + $0x6e8] sm:$0xff]
  %v8925 = vld [vmem:[%s25 + $0x6f0] sm:$0xff]
  %v8926 = vld [vmem:[%s25 + $0x6f8] sm:$0xff]
  %v8927 = vld [vmem:[%s25 + $0x700] sm:$0xff]
  %v8928 = vld [vmem:[%s25 + $0x708] sm:$0xff]
  %v8929 = vld [vmem:[%s25 + $0x710] sm:$0xff]
  %v8930 = vld [vmem:[%s25 + $0x718] sm:$0xff]
  %v8931 = vld [vmem:[%s25 + $0x720] sm:$0xff]
  %v8932 = vld [vmem:[%s25 + $0x728] sm:$0xff]
  %v8933 = vld [vmem:[%s25 + $0x730] sm:$0xff]
  %v8934 = vld [vmem:[%s25 + $0x738] sm:$0xff]
  %v8935 = vld [vmem:[%s25 + $0x740] sm:$0xff]
  %v8936 = vld [vmem:[%s25 + $0x748] sm:$0xff]
  %v8937 = vld [vmem:[%s25 + $0x750] sm:$0xff]
  %v8938 = vld [vmem:[%s25 + $0x758] sm:$0xff]
  %v8939 = vld [vmem:[%s25 + $0x760] sm:$0xff]
  %v8940 = vld [vmem:[%s25 + $0x768] sm:$0xff]
  %v8941 = vld [vmem:[%s25 + $0x770] sm:$0xff]
  %v8942 = vld [vmem:[%s25 + $0x778] sm:$0xff]
  %v8943 = vld [vmem:[%s25 + $0x780] sm:$0xff]
  %v8944 = vld [vmem:[%s25 + $0x788] sm:$0xff]
  %v8945 = vld [vmem:[%s25 + $0x790] sm:$0xff]
  %v8946 = vld [vmem:[%s25 + $0x798] sm:$0xff]
  %v8947 = vld [vmem:[%s25 + $0x7a0] sm:$0xff]
  %v8948 = vld [vmem:[%s25 + $0x7a8] sm:$0xff]
  %v8949 = vld [vmem:[%s25 + $0x7b0] sm:$0xff]
  %v8950 = vld [vmem:[%s25 + $0x7b8] sm:$0xff]
  %v8951 = vld [vmem:[%s25 + $0x7c0] sm:$0xff]
  %v8952 = vld [vmem:[%s25 + $0x7c8] sm:$0xff]
  %v8953 = vld [vmem:[%s25 + $0x7d0] sm:$0xff]
  %v8954 = vld [vmem:[%s25 + $0x7d8] sm:$0xff]
  %v8955 = vld [vmem:[%s25 + $0x7e0] sm:$0xff]
  %v8956 = vld [vmem:[%s25 + $0x7e8] sm:$0xff]
  %v8957 = vld [vmem:[%s25 + $0x7f0] sm:$0xff]
  %v8958 = vld [vmem:[%s25 + $0x7f8] sm:$0xff]
  %v8959 = vld [vmem:[%s26] sm:$0x1]
  %v8961 = vlaneseq
  %v8962 = vshrl.u32 %v8961, 7
  %v8963 = vsub.s32 0, %v8962
  %v8964 = vrot.slane %v8959, %v8963
  %8966 = vmatprep.subr.mxu0 0.0
  %8967 = vmatpush1.msra.mxu0 %v8703
  %8968 = vmatprep.subr.mxu0 0.0
  %8969 = vmatpush1.msra.mxu0 %v8704
  %8970 = vmatprep.subr.mxu0 0.0
  %8971 = vmatpush1.msra.mxu0 %v8705
  %8972 = vmatprep.subr.mxu0 0.0
  %8973 = vmatpush1.msra.mxu0 %v8706
  %8974 = vmatprep.subr.mxu0 0.0
  %8975 = vmatpush1.msra.mxu0 %v8707
  %8976 = vmatprep.subr.mxu0 0.0
  %8977 = vmatpush1.msra.mxu0 %v8708
  %8978 = vmatprep.subr.mxu0 0.0
  %8979 = vmatpush1.msra.mxu0 %v8709
  %8980 = vmatprep.subr.mxu0 0.0
  %8981 = vmatpush1.msra.mxu0 %v8710
  %8982 = vmatprep.subr.mxu0 0.0
  %8983 = vmatpush1.msra.mxu0 %v8711
  %8984 = vmatprep.subr.mxu0 0.0
  %8985 = vmatpush1.msra.mxu0 %v8712
  %8986 = vmatprep.subr.mxu0 0.0
  %8987 = vmatpush1.msra.mxu0 %v8713
  %8988 = vmatprep.subr.mxu0 0.0
  %8989 = vmatpush1.msra.mxu0 %v8714
  %8990 = vmatprep.subr.mxu0 0.0
  %8991 = vmatpush1.msra.mxu0 %v8715
  %8992 = vmatprep.subr.mxu0 0.0
  %8993 = vmatpush1.msra.mxu0 %v8716
  %8994 = vmatprep.subr.mxu0 0.0
  %8995 = vmatpush1.msra.mxu0 %v8717
  %8996 = vmatprep.subr.mxu0 0.0
  %8997 = vmatpush1.msra.mxu0 %v8718
  %8998 = vmatprep.subr.mxu0 0.0
  %8999 = vmatpush1.msra.mxu0 %v8719
  %9000 = vmatprep.subr.mxu0 0.0
  %9001 = vmatpush1.msra.mxu0 %v8720
  %9002 = vmatprep.subr.mxu0 0.0
  %9003 = vmatpush1.msra.mxu0 %v8721
  %9004 = vmatprep.subr.mxu0 0.0
  %9005 = vmatpush1.msra.mxu0 %v8722
  %9006 = vmatprep.subr.mxu0 0.0
  %9007 = vmatpush1.msra.mxu0 %v8723
  %9008 = vmatprep.subr.mxu0 0.0
  %9009 = vmatpush1.msra.mxu0 %v8724
  %9010 = vmatprep.subr.mxu0 0.0
  %9011 = vmatpush1.msra.mxu0 %v8725
  %9012 = vmatprep.subr.mxu0 0.0
  %9013 = vmatpush1.msra.mxu0 %v8726
  %9014 = vmatprep.subr.mxu0 0.0
  %9015 = vmatpush1.msra.mxu0 %v8727
  %9016 = vmatprep.subr.mxu0 0.0
  %9017 = vmatpush1.msra.mxu0 %v8728
  %9018 = vmatprep.subr.mxu0 0.0
  %9019 = vmatpush1.msra.mxu0 %v8729
  %9020 = vmatprep.subr.mxu0 0.0
  %9021 = vmatpush1.msra.mxu0 %v8730
  %9022 = vmatprep.subr.mxu0 0.0
  %9023 = vmatpush1.msra.mxu0 %v8731
  %9024 = vmatprep.subr.mxu0 0.0
  %9025 = vmatpush1.msra.mxu0 %v8732
  %9026 = vmatprep.subr.mxu0 0.0
  %9027 = vmatpush1.msra.mxu0 %v8733
  %9028 = vmatprep.subr.mxu0 0.0
  %9029 = vmatpush1.msra.mxu0 %v8734
  %9030 = vmatprep.mubr.f32.mxu0 %v8688
  %9031 = vmatmul.mubr.f32.gmra.mrb[0].mxu0 %v8687
  %v9032 = vpop.f32.mrb[0].mxu0
  %v9033 = vadd.f32 %v8964, %v9032
  %v9034 = vpop.f32.mrb[0].mxu0
  %9035 = vdwg.mxu0
  %9036 = vmatprep.subr.mxu0 0.0
  %9037 = vmatpush1.msra.mxu0 %v8735
  %9038 = vmatprep.subr.mxu0 0.0
  %9039 = vmatpush1.msra.mxu0 %v8736
  %9040 = vmatprep.subr.mxu0 0.0
  %9041 = vmatpush1.msra.mxu0 %v8737
  %9042 = vmatprep.subr.mxu0 0.0
  %9043 = vmatpush1.msra.mxu0 %v8738
  %9044 = vmatprep.subr.mxu0 0.0
  %9045 = vmatpush1.msra.mxu0 %v8739
  %9046 = vmatprep.subr.mxu0 0.0
  %9047 = vmatpush1.msra.mxu0 %v8740
  %9048 = vmatprep.subr.mxu0 0.0
  %9049 = vmatpush1.msra.mxu0 %v8741
  %9050 = vmatprep.subr.mxu0 0.0
  %9051 = vmatpush1.msra.mxu0 %v8742
  %9052 = vmatprep.subr.mxu0 0.0
  %9053 = vmatpush1.msra.mxu0 %v8743
  %9054 = vmatprep.subr.mxu0 0.0
  %9055 = vmatpush1.msra.mxu0 %v8744
  %9056 = vmatprep.subr.mxu0 0.0
  %9057 = vmatpush1.msra.mxu0 %v8745
  %9058 = vmatprep.subr.mxu0 0.0
  %9059 = vmatpush1.msra.mxu0 %v8746
  %9060 = vmatprep.subr.mxu0 0.0
  %9061 = vmatpush1.msra.mxu0 %v8747
  %9062 = vmatprep.subr.mxu0 0.0
  %9063 = vmatpush1.msra.mxu0 %v8748
  %9064 = vmatprep.subr.mxu0 0.0
  %9065 = vmatpush1.msra.mxu0 %v8749
  %9066 = vmatprep.subr.mxu0 0.0
  %9067 = vmatpush1.msra.mxu0 %v8750
  %9068 = vmatprep.subr.mxu0 0.0
  %9069 = vmatpush1.msra.mxu0 %v8751
  %9070 = vmatprep.subr.mxu0 0.0
  %9071 = vmatpush1.msra.mxu0 %v8752
  %9072 = vmatprep.subr.mxu0 0.0
  %9073 = vmatpush1.msra.mxu0 %v8753
  %9074 = vmatprep.subr.mxu0 0.0
  %9075 = vmatpush1.msra.mxu0 %v8754
  %9076 = vmatprep.subr.mxu0 0.0
  %9077 = vmatpush1.msra.mxu0 %v8755
  %9078 = vmatprep.subr.mxu0 0.0
  %9079 = vmatpush1.msra.mxu0 %v8756
  %9080 = vmatprep.subr.mxu0 0.0
  %9081 = vmatpush1.msra.mxu0 %v8757
  %9082 = vmatprep.subr.mxu0 0.0
  %9083 = vmatpush1.msra.mxu0 %v8758
  %9084 = vmatprep.subr.mxu0 0.0
  %9085 = vmatpush1.msra.mxu0 %v8759
  %9086 = vmatprep.subr.mxu0 0.0
  %9087 = vmatpush1.msra.mxu0 %v8760
  %9088 = vmatprep.subr.mxu0 0.0
  %9089 = vmatpush1.msra.mxu0 %v8761
  %9090 = vmatprep.subr.mxu0 0.0
  %9091 = vmatpush1.msra.mxu0 %v8762
  %9092 = vmatprep.subr.mxu0 0.0
  %9093 = vmatpush1.msra.mxu0 %v8763
  %9094 = vmatprep.subr.mxu0 0.0
  %9095 = vmatpush1.msra.mxu0 %v8764
  %9096 = vmatprep.subr.mxu0 0.0
  %9097 = vmatpush1.msra.mxu0 %v8765
  %9098 = vmatprep.subr.mxu0 0.0
  %9099 = vmatpush1.msra.mxu0 %v8766
  %9100 = vmatprep.mubr.f32.mxu0 %v8690
  %9101 = vmatmul.mubr.f32.gmra.mrb[0].mxu0 %v8689
  %v9102 = vpop.f32.mrb[0].mxu0
  %v9103 = vadd.f32 %v9033, %v9102
  %v9104 = vpop.f32.mrb[0].mxu0
  %9105 = vdwg.mxu0
  %9106 = vmatprep.subr.mxu0 0.0
  %9107 = vmatpush1.msra.mxu0 %v8767
  %9108 = vmatprep.subr.mxu0 0.0
  %9109 = vmatpush1.msra.mxu0 %v8768
  %9110 = vmatprep.subr.mxu0 0.0
  %9111 = vmatpush1.msra.mxu0 %v8769
  %9112 = vmatprep.subr.mxu0 0.0
  %9113 = vmatpush1.msra.mxu0 %v8770
  %9114 = vmatprep.subr.mxu0 0.0
  %9115 = vmatpush1.msra.mxu0 %v8771
  %9116 = vmatprep.subr.mxu0 0.0
  %9117 = vmatpush1.msra.mxu0 %v8772
  %9118 = vmatprep.subr.mxu0 0.0
  %9119 = vmatpush1.msra.mxu0 %v8773
  %9120 = vmatprep.subr.mxu0 0.0
  %9121 = vmatpush1.msra.mxu0 %v8774
  %9122 = vmatprep.subr.mxu0 0.0
  %9123 = vmatpush1.msra.mxu0 %v8775
  %9124 = vmatprep.subr.mxu0 0.0
  %9125 = vmatpush1.msra.mxu0 %v8776
  %9126 = vmatprep.subr.mxu0 0.0
  %9127 = vmatpush1.msra.mxu0 %v8777
  %9128 = vmatprep.subr.mxu0 0.0
  %9129 = vmatpush1.msra.mxu0 %v8778
  %9130 = vmatprep.subr.mxu0 0.0
  %9131 = vmatpush1.msra.mxu0 %v8779
  %9132 = vmatprep.subr.mxu0 0.0
  %9133 = vmatpush1.msra.mxu0 %v8780
  %9134 = vmatprep.subr.mxu0 0.0
  %9135 = vmatpush1.msra.mxu0 %v8781
  %9136 = vmatprep.subr.mxu0 0.0
  %9137 = vmatpush1.msra.mxu0 %v8782
  %9138 = vmatprep.subr.mxu0 0.0
  %9139 = vmatpush1.msra.mxu0 %v8783
  %9140 = vmatprep.subr.mxu0 0.0
  %9141 = vmatpush1.msra.mxu0 %v8784
  %9142 = vmatprep.subr.mxu0 0.0
  %9143 = vmatpush1.msra.mxu0 %v8785
  %9144 = vmatprep.subr.mxu0 0.0
  %9145 = vmatpush1.msra.mxu0 %v8786
  %9146 = vmatprep.subr.mxu0 0.0
  %9147 = vmatpush1.msra.mxu0 %v8787
  %9148 = vmatprep.subr.mxu0 0.0
  %9149 = vmatpush1.msra.mxu0 %v8788
  %9150 = vmatprep.subr.mxu0 0.0
  %9151 = vmatpush1.msra.mxu0 %v8789
  %9152 = vmatprep.subr.mxu0 0.0
  %9153 = vmatpush1.msra.mxu0 %v8790
  %9154 = vmatprep.subr.mxu0 0.0
  %9155 = vmatpush1.msra.mxu0 %v8791
  %9156 = vmatprep.subr.mxu0 0.0
  %9157 = vmatpush1.msra.mxu0 %v8792
  %9158 = vmatprep.subr.mxu0 0.0
  %9159 = vmatpush1.msra.mxu0 %v8793
  %9160 = vmatprep.subr.mxu0 0.0
  %9161 = vmatpush1.msra.mxu0 %v8794
  %9162 = vmatprep.subr.mxu0 0.0
  %9163 = vmatpush1.msra.mxu0 %v8795
  %9164 = vmatprep.subr.mxu0 0.0
  %9165 = vmatpush1.msra.mxu0 %v8796
  %9166 = vmatprep.subr.mxu0 0.0
  %9167 = vmatpush1.msra.mxu0 %v8797
  %9168 = vmatprep.subr.mxu0 0.0
  %9169 = vmatpush1.msra.mxu0 %v8798
  %9170 = vmatprep.mubr.f32.mxu0 %v8692
  %9171 = vmatmul.mubr.f32.gmra.mrb[0].mxu0 %v8691
  %v9172 = vpop.f32.mrb[0].mxu0
  %v9173 = vadd.f32 %v9103, %v9172
  %v9174 = vpop.f32.mrb[0].mxu0
  %9175 = vdwg.mxu0
  %9176 = vmatprep.subr.mxu0 0.0
  %9177 = vmatpush1.msra.mxu0 %v8799
  %9178 = vmatprep.subr.mxu0 0.0
  %9179 = vmatpush1.msra.mxu0 %v8800
  %9180 = vmatprep.subr.mxu0 0.0
  %9181 = vmatpush1.msra.mxu0 %v8801
  %9182 = vmatprep.subr.mxu0 0.0
  %9183 = vmatpush1.msra.mxu0 %v8802
  %9184 = vmatprep.subr.mxu0 0.0
  %9185 = vmatpush1.msra.mxu0 %v8803
  %9186 = vmatprep.subr.mxu0 0.0
  %9187 = vmatpush1.msra.mxu0 %v8804
  %9188 = vmatprep.subr.mxu0 0.0
  %9189 = vmatpush1.msra.mxu0 %v8805
  %9190 = vmatprep.subr.mxu0 0.0
  %9191 = vmatpush1.msra.mxu0 %v8806
  %9192 = vmatprep.subr.mxu0 0.0
  %9193 = vmatpush1.msra.mxu0 %v8807
  %9194 = vmatprep.subr.mxu0 0.0
  %9195 = vmatpush1.msra.mxu0 %v8808
  %9196 = vmatprep.subr.mxu0 0.0
  %9197 = vmatpush1.msra.mxu0 %v8809
  %9198 = vmatprep.subr.mxu0 0.0
  %9199 = vmatpush1.msra.mxu0 %v8810
  %9200 = vmatprep.subr.mxu0 0.0
  %9201 = vmatpush1.msra.mxu0 %v8811
  %9202 = vmatprep.subr.mxu0 0.0
  %9203 = vmatpush1.msra.mxu0 %v8812
  %9204 = vmatprep.subr.mxu0 0.0
  %9205 = vmatpush1.msra.mxu0 %v8813
  %9206 = vmatprep.subr.mxu0 0.0
  %9207 = vmatpush1.msra.mxu0 %v8814
  %9208 = vmatprep.subr.mxu0 0.0
  %9209 = vmatpush1.msra.mxu0 %v8815
  %9210 = vmatprep.subr.mxu0 0.0
  %9211 = vmatpush1.msra.mxu0 %v8816
  %9212 = vmatprep.subr.mxu0 0.0
  %9213 = vmatpush1.msra.mxu0 %v8817
  %9214 = vmatprep.subr.mxu0 0.0
  %9215 = vmatpush1.msra.mxu0 %v8818
  %9216 = vmatprep.subr.mxu0 0.0
  %9217 = vmatpush1.msra.mxu0 %v8819
  %9218 = vmatprep.subr.mxu0 0.0
  %9219 = vmatpush1.msra.mxu0 %v8820
  %9220 = vmatprep.subr.mxu0 0.0
  %9221 = vmatpush1.msra.mxu0 %v8821
  %9222 = vmatprep.subr.mxu0 0.0
  %9223 = vmatpush1.msra.mxu0 %v8822
  %9224 = vmatprep.subr.mxu0 0.0
  %9225 = vmatpush1.msra.mxu0 %v8823
  %9226 = vmatprep.subr.mxu0 0.0
  %9227 = vmatpush1.msra.mxu0 %v8824
  %9228 = vmatprep.subr.mxu0 0.0
  %9229 = vmatpush1.msra.mxu0 %v8825
  %9230 = vmatprep.subr.mxu0 0.0
  %9231 = vmatpush1.msra.mxu0 %v8826
  %9232 = vmatprep.subr.mxu0 0.0
  %9233 = vmatpush1.msra.mxu0 %v8827
  %9234 = vmatprep.subr.mxu0 0.0
  %9235 = vmatpush1.msra.mxu0 %v8828
  %9236 = vmatprep.subr.mxu0 0.0
  %9237 = vmatpush1.msra.mxu0 %v8829
  %9238 = vmatprep.subr.mxu0 0.0
  %9239 = vmatpush1.msra.mxu0 %v8830
  %9240 = vmatprep.mubr.f32.mxu0 %v8694
  %9241 = vmatmul.mubr.f32.gmra.mrb[0].mxu0 %v8693
  %v9242 = vpop.f32.mrb[0].mxu0
  %v9243 = vadd.f32 %v9173, %v9242
  %v9244 = vpop.f32.mrb[0].mxu0
  %9245 = vdwg.mxu0
  %9246 = vmatprep.subr.mxu0 0.0
  %9247 = vmatpush1.msra.mxu0 %v8831
  %9248 = vmatprep.subr.mxu0 0.0
  %9249 = vmatpush1.msra.mxu0 %v8832
  %9250 = vmatprep.subr.mxu0 0.0
  %9251 = vmatpush1.msra.mxu0 %v8833
  %9252 = vmatprep.subr.mxu0 0.0
  %9253 = vmatpush1.msra.mxu0 %v8834
  %9254 = vmatprep.subr.mxu0 0.0
  %9255 = vmatpush1.msra.mxu0 %v8835
  %9256 = vmatprep.subr.mxu0 0.0
  %9257 = vmatpush1.msra.mxu0 %v8836
  %9258 = vmatprep.subr.mxu0 0.0
  %9259 = vmatpush1.msra.mxu0 %v8837
  %9260 = vmatprep.subr.mxu0 0.0
  %9261 = vmatpush1.msra.mxu0 %v8838
  %9262 = vmatprep.subr.mxu0 0.0
  %9263 = vmatpush1.msra.mxu0 %v8839
  %9264 = vmatprep.subr.mxu0 0.0
  %9265 = vmatpush1.msra.mxu0 %v8840
  %9266 = vmatprep.subr.mxu0 0.0
  %9267 = vmatpush1.msra.mxu0 %v8841
  %9268 = vmatprep.subr.mxu0 0.0
  %9269 = vmatpush1.msra.mxu0 %v8842
  %9270 = vmatprep.subr.mxu0 0.0
  %9271 = vmatpush1.msra.mxu0 %v8843
  %9272 = vmatprep.subr.mxu0 0.0
  %9273 = vmatpush1.msra.mxu0 %v8844
  %9274 = vmatprep.subr.mxu0 0.0
  %9275 = vmatpush1.msra.mxu0 %v8845
  %9276 = vmatprep.subr.mxu0 0.0
  %9277 = vmatpush1.msra.mxu0 %v8846
  %9278 = vmatprep.subr.mxu0 0.0
  %9279 = vmatpush1.msra.mxu0 %v8847
  %9280 = vmatprep.subr.mxu0 0.0
  %9281 = vmatpush1.msra.mxu0 %v8848
  %9282 = vmatprep.subr.mxu0 0.0
  %9283 = vmatpush1.msra.mxu0 %v8849
  %9284 = vmatprep.subr.mxu0 0.0
  %9285 = vmatpush1.msra.mxu0 %v8850
  %9286 = vmatprep.subr.mxu0 0.0
  %9287 = vmatpush1.msra.mxu0 %v8851
  %9288 = vmatprep.subr.mxu0 0.0
  %9289 = vmatpush1.msra.mxu0 %v8852
  %9290 = vmatprep.subr.mxu0 0.0
  %9291 = vmatpush1.msra.mxu0 %v8853
  %9292 = vmatprep.subr.mxu0 0.0
  %9293 = vmatpush1.msra.mxu0 %v8854
  %9294 = vmatprep.subr.mxu0 0.0
  %9295 = vmatpush1.msra.mxu0 %v8855
  %9296 = vmatprep.subr.mxu0 0.0
  %9297 = vmatpush1.msra.mxu0 %v8856
  %9298 = vmatprep.subr.mxu0 0.0
  %9299 = vmatpush1.msra.mxu0 %v8857
  %9300 = vmatprep.subr.mxu0 0.0
  %9301 = vmatpush1.msra.mxu0 %v8858
  %9302 = vmatprep.subr.mxu0 0.0
  %9303 = vmatpush1.msra.mxu0 %v8859
  %9304 = vmatprep.subr.mxu0 0.0
  %9305 = vmatpush1.msra.mxu0 %v8860
  %9306 = vmatprep.subr.mxu0 0.0
  %9307 = vmatpush1.msra.mxu0 %v8861
  %9308 = vmatprep.subr.mxu0 0.0
  %9309 = vmatpush1.msra.mxu0 %v8862
  %9310 = vmatprep.mubr.f32.mxu0 %v8696
  %9311 = vmatmul.mubr.f32.gmra.mrb[0].mxu0 %v8695
  %v9312 = vpop.f32.mrb[0].mxu0
  %v9313 = vadd.f32 %v9243, %v9312
  %v9314 = vpop.f32.mrb[0].mxu0
  %9315 = vdwg.mxu0
  %9316 = vmatprep.subr.mxu0 0.0
  %9317 = vmatpush1.msra.mxu0 %v8863
  %9318 = vmatprep.subr.mxu0 0.0
  %9319 = vmatpush1.msra.mxu0 %v8864
  %9320 = vmatprep.subr.mxu0 0.0
  %9321 = vmatpush1.msra.mxu0 %v8865
  %9322 = vmatprep.subr.mxu0 0.0
  %9323 = vmatpush1.msra.mxu0 %v8866
  %9324 = vmatprep.subr.mxu0 0.0
  %9325 = vmatpush1.msra.mxu0 %v8867
  %9326 = vmatprep.subr.mxu0 0.0
  %9327 = vmatpush1.msra.mxu0 %v8868
  %9328 = vmatprep.subr.mxu0 0.0
  %9329 = vmatpush1.msra.mxu0 %v8869
  %9330 = vmatprep.subr.mxu0 0.0
  %9331 = vmatpush1.msra.mxu0 %v8870
  %9332 = vmatprep.subr.mxu0 0.0
  %9333 = vmatpush1.msra.mxu0 %v8871
  %9334 = vmatprep.subr.mxu0 0.0
  %9335 = vmatpush1.msra.mxu0 %v8872
  %9336 = vmatprep.subr.mxu0 0.0
  %9337 = vmatpush1.msra.mxu0 %v8873
  %9338 = vmatprep.subr.mxu0 0.0
  %9339 = vmatpush1.msra.mxu0 %v8874
  %9340 = vmatprep.subr.mxu0 0.0
  %9341 = vmatpush1.msra.mxu0 %v8875
  %9342 = vmatprep.subr.mxu0 0.0
  %9343 = vmatpush1.msra.mxu0 %v8876
  %9344 = vmatprep.subr.mxu0 0.0
  %9345 = vmatpush1.msra.mxu0 %v8877
  %9346 = vmatprep.subr.mxu0 0.0
  %9347 = vmatpush1.msra.mxu0 %v8878
  %9348 = vmatprep.subr.mxu0 0.0
  %9349 = vmatpush1.msra.mxu0 %v8879
  %9350 = vmatprep.subr.mxu0 0.0
  %9351 = vmatpush1.msra.mxu0 %v8880
  %9352 = vmatprep.subr.mxu0 0.0
  %9353 = vmatpush1.msra.mxu0 %v8881
  %9354 = vmatprep.subr.mxu0 0.0
  %9355 = vmatpush1.msra.mxu0 %v8882
  %9356 = vmatprep.subr.mxu0 0.0
  %9357 = vmatpush1.msra.mxu0 %v8883
  %9358 = vmatprep.subr.mxu0 0.0
  %9359 = vmatpush1.msra.mxu0 %v8884
  %9360 = vmatprep.subr.mxu0 0.0
  %9361 = vmatpush1.msra.mxu0 %v8885
  %9362 = vmatprep.subr.mxu0 0.0
  %9363 = vmatpush1.msra.mxu0 %v8886
  %9364 = vmatprep.subr.mxu0 0.0
  %9365 = vmatpush1.msra.mxu0 %v8887
  %9366 = vmatprep.subr.mxu0 0.0
  %9367 = vmatpush1.msra.mxu0 %v8888
  %9368 = vmatprep.subr.mxu0 0.0
  %9369 = vmatpush1.msra.mxu0 %v8889
  %9370 = vmatprep.subr.mxu0 0.0
  %9371 = vmatpush1.msra.mxu0 %v8890
  %9372 = vmatprep.subr.mxu0 0.0
  %9373 = vmatpush1.msra.mxu0 %v8891
  %9374 = vmatprep.subr.mxu0 0.0
  %9375 = vmatpush1.msra.mxu0 %v8892
  %9376 = vmatprep.subr.mxu0 0.0
  %9377 = vmatpush1.msra.mxu0 %v8893
  %9378 = vmatprep.subr.mxu0 0.0
  %9379 = vmatpush1.msra.mxu0 %v8894
  %9380 = vmatprep.mubr.f32.mxu0 %v8698
  %9381 = vmatmul.mubr.f32.gmra.mrb[0].mxu0 %v8697
  %v9382 = vpop.f32.mrb[0].mxu0
  %v9383 = vadd.f32 %v9313, %v9382
  %v9384 = vpop.f32.mrb[0].mxu0
  %9385 = vdwg.mxu0
  %9386 = vmatprep.subr.mxu0 0.0
  %9387 = vmatpush1.msra.mxu0 %v8895
  %9388 = vmatprep.subr.mxu0 0.0
  %9389 = vmatpush1.msra.mxu0 %v8896
  %9390 = vmatprep.subr.mxu0 0.0
  %9391 = vmatpush1.msra.mxu0 %v8897
  %9392 = vmatprep.subr.mxu0 0.0
  %9393 = vmatpush1.msra.mxu0 %v8898
  %9394 = vmatprep.subr.mxu0 0.0
  %9395 = vmatpush1.msra.mxu0 %v8899
  %9396 = vmatprep.subr.mxu0 0.0
  %9397 = vmatpush1.msra.mxu0 %v8900
  %9398 = vmatprep.subr.mxu0 0.0
  %9399 = vmatpush1.msra.mxu0 %v8901
  %9400 = vmatprep.subr.mxu0 0.0
  %9401 = vmatpush1.msra.mxu0 %v8902
  %9402 = vmatprep.subr.mxu0 0.0
  %9403 = vmatpush1.msra.mxu0 %v8903
  %9404 = vmatprep.subr.mxu0 0.0
  %9405 = vmatpush1.msra.mxu0 %v8904
  %9406 = vmatprep.subr.mxu0 0.0
  %9407 = vmatpush1.msra.mxu0 %v8905
  %9408 = vmatprep.subr.mxu0 0.0
  %9409 = vmatpush1.msra.mxu0 %v8906
  %9410 = vmatprep.subr.mxu0 0.0
  %9411 = vmatpush1.msra.mxu0 %v8907
  %9412 = vmatprep.subr.mxu0 0.0
  %9413 = vmatpush1.msra.mxu0 %v8908
  %9414 = vmatprep.subr.mxu0 0.0
  %9415 = vmatpush1.msra.mxu0 %v8909
  %9416 = vmatprep.subr.mxu0 0.0
  %9417 = vmatpush1.msra.mxu0 %v8910
  %9418 = vmatprep.subr.mxu0 0.0
  %9419 = vmatpush1.msra.mxu0 %v8911
  %9420 = vmatprep.subr.mxu0 0.0
  %9421 = vmatpush1.msra.mxu0 %v8912
  %9422 = vmatprep.subr.mxu0 0.0
  %9423 = vmatpush1.msra.mxu0 %v8913
  %9424 = vmatprep.subr.mxu0 0.0
  %9425 = vmatpush1.msra.mxu0 %v8914
  %9426 = vmatprep.subr.mxu0 0.0
  %9427 = vmatpush1.msra.mxu0 %v8915
  %9428 = vmatprep.subr.mxu0 0.0
  %9429 = vmatpush1.msra.mxu0 %v8916
  %9430 = vmatprep.subr.mxu0 0.0
  %9431 = vmatpush1.msra.mxu0 %v8917
  %9432 = vmatprep.subr.mxu0 0.0
  %9433 = vmatpush1.msra.mxu0 %v8918
  %9434 = vmatprep.subr.mxu0 0.0
  %9435 = vmatpush1.msra.mxu0 %v8919
  %9436 = vmatprep.subr.mxu0 0.0
  %9437 = vmatpush1.msra.mxu0 %v8920
  %9438 = vmatprep.subr.mxu0 0.0
  %9439 = vmatpush1.msra.mxu0 %v8921
  %9440 = vmatprep.subr.mxu0 0.0
  %9441 = vmatpush1.msra.mxu0 %v8922
  %9442 = vmatprep.subr.mxu0 0.0
  %9443 = vmatpush1.msra.mxu0 %v8923
  %9444 = vmatprep.subr.mxu0 0.0
  %9445 = vmatpush1.msra.mxu0 %v8924
  %9446 = vmatprep.subr.mxu0 0.0
  %9447 = vmatpush1.msra.mxu0 %v8925
  %9448 = vmatprep.subr.mxu0 0.0
  %9449 = vmatpush1.msra.mxu0 %v8926
  %9450 = vmatprep.mubr.f32.mxu0 %v8700
  %9451 = vmatmul.mubr.f32.gmra.mrb[0].mxu0 %v8699
  %v9452 = vpop.f32.mrb[0].mxu0
  %v9453 = vadd.f32 %v9383, %v9452
  %v9454 = vpop.f32.mrb[0].mxu0
  %9455 = vdwg.mxu0
  %9456 = vmatprep.subr.mxu0 0.0
  %9457 = vmatpush1.msra.mxu0 %v8927
  %9458 = vmatprep.subr.mxu0 0.0
  %9459 = vmatpush1.msra.mxu0 %v8928
  %9460 = vmatprep.subr.mxu0 0.0
  %9461 = vmatpush1.msra.mxu0 %v8929
  %9462 = vmatprep.subr.mxu0 0.0
  %9463 = vmatpush1.msra.mxu0 %v8930
  %9464 = vmatprep.subr.mxu0 0.0
  %9465 = vmatpush1.msra.mxu0 %v8931
  %9466 = vmatprep.subr.mxu0 0.0
  %9467 = vmatpush1.msra.mxu0 %v8932
  %9468 = vmatprep.subr.mxu0 0.0
  %9469 = vmatpush1.msra.mxu0 %v8933
  %9470 = vmatprep.subr.mxu0 0.0
  %9471 = vmatpush1.msra.mxu0 %v8934
  %9472 = vmatprep.subr.mxu0 0.0
  %9473 = vmatpush1.msra.mxu0 %v8935
  %9474 = vmatprep.subr.mxu0 0.0
  %9475 = vmatpush1.msra.mxu0 %v8936
  %9476 = vmatprep.subr.mxu0 0.0
  %9477 = vmatpush1.msra.mxu0 %v8937
  %9478 = vmatprep.subr.mxu0 0.0
  %9479 = vmatpush1.msra.mxu0 %v8938
  %9480 = vmatprep.subr.mxu0 0.0
  %9481 = vmatpush1.msra.mxu0 %v8939
  %9482 = vmatprep.subr.mxu0 0.0
  %9483 = vmatpush1.msra.mxu0 %v8940
  %9484 = vmatprep.subr.mxu0 0.0
  %9485 = vmatpush1.msra.mxu0 %v8941
  %9486 = vmatprep.subr.mxu0 0.0
  %9487 = vmatpush1.msra.mxu0 %v8942
  %9488 = vmatprep.subr.mxu0 0.0
  %9489 = vmatpush1.msra.mxu0 %v8943
  %9490 = vmatprep.subr.mxu0 0.0
  %9491 = vmatpush1.msra.mxu0 %v8944
  %9492 = vmatprep.subr.mxu0 0.0
  %9493 = vmatpush1.msra.mxu0 %v8945
  %9494 = vmatprep.subr.mxu0 0.0
  %9495 = vmatpush1.msra.mxu0 %v8946
  %9496 = vmatprep.subr.mxu0 0.0
  %9497 = vmatpush1.msra.mxu0 %v8947
  %9498 = vmatprep.subr.mxu0 0.0
  %9499 = vmatpush1.msra.mxu0 %v8948
  %9500 = vmatprep.subr.mxu0 0.0
  %9501 = vmatpush1.msra.mxu0 %v8949
  %9502 = vmatprep.subr.mxu0 0.0
  %9503 = vmatpush1.msra.mxu0 %v8950
  %9504 = vmatprep.subr.mxu0 0.0
  %9505 = vmatpush1.msra.mxu0 %v8951
  %9506 = vmatprep.subr.mxu0 0.0
  %9507 = vmatpush1.msra.mxu0 %v8952
  %9508 = vmatprep.subr.mxu0 0.0
  %9509 = vmatpush1.msra.mxu0 %v8953
  %9510 = vmatprep.subr.mxu0 0.0
  %9511 = vmatpush1.msra.mxu0 %v8954
  %9512 = vmatprep.subr.mxu0 0.0
  %9513 = vmatpush1.msra.mxu0 %v8955
  %9514 = vmatprep.subr.mxu0 0.0
  %9515 = vmatpush1.msra.mxu0 %v8956
  %9516 = vmatprep.subr.mxu0 0.0
  %9517 = vmatpush1.msra.mxu0 %v8957
  %9518 = vmatprep.subr.mxu0 0.0
  %9519 = vmatpush1.msra.mxu0 %v8958
  %9520 = vmatprep.mubr.f32.mxu0 %v8702
  %9521 = vmatmul.mubr.f32.gmra.mrb[0].mxu0 %v8701
  %v9522 = vpop.f32.mrb[0].mxu0
  %v9523 = vadd.f32 %v9453, %v9522
  %v9524 = vpop.f32.mrb[0].mxu0
  %9525 = vdwg.mxu0
  %v9526 = vmax.f32 %v9523, 0.0
  %vm9527 = vcmask 31744
  %9528 = vst.msk [vmem:[%s27] sm:$0xff] %vm9527, %v9526
  // Predicated region
  $region110: #{gru_model_forward.1} parent=0 // pred_check
    _
  $region111: #{gru_model_forward.1} parent=0 // pred_check_branch
    %9530 = sbr.rel (0) target = $region113
  $region112: #{gru_model_forward.1} parent=0 // pred_region
    _
  $region113: #{gru_model_forward.1} parent=0 // pred_fallthru
    _
  // Predicated region
  $region114: #{gru_model_forward.1} parent=0 // pred_check
    _
  $region115: #{gru_model_forward.1} parent=0 // pred_check_branch
    %9532 = sbr.rel (0) target = $region117
  $region116: #{gru_model_forward.1} parent=0 // pred_region
    _
  $region117: #{gru_model_forward.1} parent=0 // pred_fallthru
    _

</llo_original>
